<compile_context>
chip_gen: v7x
topology: tpu7x:2x2x1
jax: 0.10.0
libtpu: 0.0.40
codegen_flags: <defaults>
</compile_context>

<pallas_src>
import jax
import jax.numpy as jnp
from jax.experimental import pallas as pl
from jax.experimental.pallas import tpu as pltpu

STRIDE = 11
DIL = 2
KS = 3
OUT_PAD = 12


# ---------------------------------------------------------------------------
# Kernel 1: fused (pixels x Cin) @ (Cin x 27*Cout) + bias, tanh
# ---------------------------------------------------------------------------
def _matmul_bias_tanh_kernel(x_ref, w_ref, b_ref, o_ref):
    acc = jnp.dot(x_ref[...], w_ref[...], preferred_element_type=jnp.float32)
    o_ref[...] = jnp.tanh(acc + b_ref[...]).astype(o_ref.dtype)


def matmul_bias_tanh(x_flat, w_flat, b_flat, *, tm=256):
    """tanh(x_flat @ w_flat + b_flat); MXU matmul with fused bias + tanh."""
    M, K = x_flat.shape
    Kw, Nc = w_flat.shape
    assert K == Kw
    # Lane-dense output: pad column count to a multiple of 128 (sliced off below).
    Np = ((Nc + 127) // 128) * 128
    if Np != Nc:
        w_flat = jnp.pad(w_flat, ((0, 0), (0, Np - Nc)))
        b_flat = jnp.pad(b_flat, ((0, Np - Nc),))
    tm = min(tm, ((M + 7) // 8) * 8)
    Mp = ((M + tm - 1) // tm) * tm
    if Mp != M:
        x_flat = jnp.pad(x_flat, ((0, Mp - M), (0, 0)))
    b2 = b_flat.reshape(1, Np)

    out = pl.pallas_call(
        _matmul_bias_tanh_kernel,
        out_shape=jax.ShapeDtypeStruct((Mp, Np), jnp.float32),
        grid_spec=pltpu.PrefetchScalarGridSpec(
            num_scalar_prefetch=0,
            grid=(Mp // tm,),
            in_specs=[
                pl.BlockSpec((tm, K), lambda i: (i, 0)),
                pl.BlockSpec((K, Np), lambda i: (0, 0)),
                pl.BlockSpec((1, Np), lambda i: (0, 0)),
            ],
            out_specs=pl.BlockSpec((tm, Np), lambda i: (i, 0)),
        ),
        compiler_params=pltpu.CompilerParams(
            dimension_semantics=("parallel",)),
    )(x_flat, w_flat, b2)
    return out[:M, :Nc]


# ---------------------------------------------------------------------------
# Step 2 (JAX prep): full H/W-interleaved tap planes
#   planes[n, di, kd, c, h, w] == output plane at D index di*STRIDE + kd*DIL
# ---------------------------------------------------------------------------
def _build_tap_planes(y, bias, N, Din, Hin, Win, Cout, Hout, Wout):
    tb = jnp.tanh(bias).astype(jnp.float32)               # (Cout,)
    gap = STRIDE - KS * DIL
    wtail = Wout - Win * STRIDE
    htail = Hout - Hin * STRIDE

    y8 = y.reshape(N, Din, Hin, Win, KS, KS, KS, Cout)     # (n,di,hi,wi,kd,kh,kw,c)
    t = jnp.transpose(y8, (0, 1, 4, 7, 2, 5, 3, 6))        # (n,di,kd,c,hi,kh,wi,kw)

    # ---- W interleave: (..., wi, kw) -> (..., Wout)
    tb_w = tb.reshape(1, 1, 1, Cout, 1, 1, 1, 1)
    fill = jnp.broadcast_to(tb_w[..., None], t.shape + (DIL - 1,))
    blk = jnp.concatenate([t[..., None], fill], axis=-1)   # (..., wi, kw, DIL)
    blk = blk.reshape(*t.shape[:-1], KS * DIL)             # (..., wi, KS*DIL)
    if gap > 0:
        gapf = jnp.broadcast_to(tb_w, t.shape[:-1] + (gap,))
        blk = jnp.concatenate([blk, gapf], axis=-1)        # (..., wi, STRIDE)
    rows = blk.reshape(N, Din, KS, Cout, Hin, KS, Win * STRIDE)
    if wtail > 0:
        tb_t = tb.reshape(1, 1, 1, Cout, 1, 1, 1)
        tailf = jnp.broadcast_to(tb_t, (N, Din, KS, Cout, Hin, KS, wtail))
        rows = jnp.concatenate([rows, tailf], axis=-1)     # (..., hi, kh, Wout)

    # ---- H interleave: (..., hi, kh, Wout) -> (..., Hout, Wout)
    tb_h = tb.reshape(1, 1, 1, Cout, 1, 1, 1, 1)
    hfill = jnp.broadcast_to(tb_h, rows.shape[:-1] + (DIL - 1, Wout))
    hblk = jnp.concatenate([rows[..., None, :], hfill], axis=-2)  # (...,hi,kh,DIL,Wout)
    hblk = hblk.reshape(N, Din, KS, Cout, Hin, KS * DIL, Wout)
    if gap > 0:
        hgap = jnp.broadcast_to(tb.reshape(1, 1, 1, Cout, 1, 1, 1),
                                (N, Din, KS, Cout, Hin, gap, Wout))
        hblk = jnp.concatenate([hblk, hgap], axis=-2)      # (..., hi, STRIDE, Wout)
    planes = hblk.reshape(N, Din, KS, Cout, Hin * STRIDE, Wout)
    if htail > 0:
        htailf = jnp.broadcast_to(tb.reshape(1, 1, 1, Cout, 1, 1),
                                  (N, Din, KS, Cout, htail, Wout))
        planes = jnp.concatenate([planes, htailf], axis=-2)  # (...,Hout,Wout)
    return planes


# ---------------------------------------------------------------------------
# Kernel 3: single-pass NCDHW output assembly (each plane written exactly once)
# ---------------------------------------------------------------------------
def _make_assembly_kernel(Din, Dout, Hout, Wout, cblk):
    tap_pos = {}
    for di in range(Din):
        for kd in range(KS):
            tap_pos[di * STRIDE + kd * DIL] = (di, kd)

    def kernel(planes_ref, tb_ref, out_ref):
        # planes_ref: (Din, KS, cblk, Hout, Wout)
        # tb_ref:     (cblk, 1, 1)        -- tanh(bias) per channel
        # out_ref:    (cblk, Dout, Hout, Wout)
        bias_plane = jnp.broadcast_to(tb_ref[...], (cblk, Hout, Wout))
        for od in range(Dout):          # static unroll; every plane written once
            if od in tap_pos:
                di, kd = tap_pos[od]
                out_ref[:, od, :, :] = planes_ref[di, kd]
            else:
                out_ref[:, od, :, :] = bias_plane

    return kernel


@jax.jit
def conv_transpose3d_tanh(x, weight, bias):
    """x: (N, Cin, D, H, W); weight: (Cin, Cout, 3, 3, 3); bias: (Cout,).

    Returns tanh(conv_transpose3d(x)) in NCDHW.
    """
    N, Cin, Din, Hin, Win = x.shape
    Cin_w, Cout = weight.shape[0], weight.shape[1]
    assert Cin_w == Cin

    Dout = (Din - 1) * STRIDE + DIL * (KS - 1) + OUT_PAD + 1
    Hout = (Hin - 1) * STRIDE + DIL * (KS - 1) + OUT_PAD + 1
    Wout = (Win - 1) * STRIDE + DIL * (KS - 1) + OUT_PAD + 1

    # Single-pass assembly relies on: no tap overlap, and every stride block
    # (plus the trailing bias-only planes) fully inside the output.
    gap = STRIDE - KS * DIL
    tail = Wout - Win * STRIDE
    assert DIL * (KS - 1) < STRIDE and gap >= 0 and tail >= 0

    # ---- 1) fused per-pixel matmul + bias + tanh (Pallas / MXU) -------------
    x_cl = jnp.transpose(x, (0, 2, 3, 4, 1)).reshape(-1, Cin)
    w_flat = jnp.transpose(weight, (0, 2, 3, 4, 1)).reshape(Cin, KS * KS * KS * Cout)
    b_flat = jnp.tile(bias, KS * KS * KS)
    y = matmul_bias_tanh(x_cl, w_flat, b_flat)             # (M, 27*Cout), tanh'd

    # ---- 2) small JAX prep: full H/W-interleaved tap planes (~6 MB) ---------
    planes = _build_tap_planes(y, bias, N, Din, Hin, Win, Cout, Hout, Wout)
    tb_c = jnp.tanh(bias).astype(jnp.float32).reshape(Cout, 1, 1)

    # ---- 3) single-pass NCDHW output assembly (Pallas) ----------------------
    cblk = 5 if Cout % 5 == 0 else 1       # 10 even grid steps for Cout=50
    kernel = _make_assembly_kernel(Din, Dout, Hout, Wout, cblk)
    out = pl.pallas_call(
        kernel,
        out_shape=jax.ShapeDtypeStruct((N, Cout, Dout, Hout, Wout), jnp.float32),
        grid_spec=pltpu.PrefetchScalarGridSpec(
            num_scalar_prefetch=0,
            grid=(N, Cout // cblk),
            in_specs=[
                pl.BlockSpec((None, Din, KS, cblk, Hout, Wout),
                             lambda n, c: (n, 0, 0, c, 0, 0)),
                pl.BlockSpec((cblk, 1, 1), lambda n, c: (c, 0, 0)),
            ],
            out_specs=pl.BlockSpec((None, cblk, Dout, Hout, Wout),
                                   lambda n, c: (n, c, 0, 0, 0)),
        ),
        compiler_params=pltpu.CompilerParams(
            dimension_semantics=("parallel", "parallel")),
    )(planes, tb_c)
    return out


# ---------------------------------------------------------------------------
# Reference (slow, pure JAX) for correctness checking
# ---------------------------------------------------------------------------
@jax.jit
def _reference_conv_transpose3d_tanh(x, weight, bias):
    N, Cin, Din, Hin, Win = x.shape
    Cout = weight.shape[1]
    Dout = (Din - 1) * STRIDE + DIL * (KS - 1) + OUT_PAD + 1
    Hout = (Hin - 1) * STRIDE + DIL * (KS - 1) + OUT_PAD + 1
    Wout = (Win - 1) * STRIDE + DIL * (KS - 1) + OUT_PAD + 1
    x_cl = jnp.transpose(x, (0, 2, 3, 4, 1)).reshape(-1, Cin)
    w_flat = jnp.transpose(weight, (0, 2, 3, 4, 1)).reshape(Cin, KS ** 3 * Cout)
    b_flat = jnp.tile(bias, KS ** 3)
    y = jnp.tanh(x_cl @ w_flat + b_flat[None, :])
    y = y.reshape(N, Din, Hin, Win, KS, KS, KS, Cout)
    out = jnp.broadcast_to(jnp.tanh(bias), (N, Dout, Hout, Wout, Cout))
    for kd in range(KS):
        for kh in range(KS):
            for kw in range(KS):
                out = out.at[
                    :,
                    kd * DIL: kd * DIL + STRIDE * (Din - 1) + 1: STRIDE,
                    kh * DIL: kh * DIL + STRIDE * (Hin - 1) + 1: STRIDE,
                    kw * DIL: kw * DIL + STRIDE * (Win - 1) + 1: STRIDE,
                    :,
                ].set(y[:, :, :, :, kd, kh, kw, :])
    return jnp.transpose(out, (0, 4, 1, 2, 3))


if __name__ == "__main__":
    key = jax.random.PRNGKey(0)
    k_w, k_b, k_x = jax.random.split(key, 3)

    Cin = Cout = 50          # fixed by the module
    N, D, H, W = 1, 4, 4, 4  # small spatial demo size

    weight = jax.random.normal(k_w, (Cin, Cout, KS, KS, KS), jnp.float32) * 0.05
    bias = jax.random.normal(k_b, (Cout,), jnp.float32) * 0.05
    x = jax.random.normal(k_x, (N, Cin, D, H, W), jnp.float32)

    out = jax.block_until_ready(conv_transpose3d_tanh(x, weight, bias))

    Dout = (D - 1) * STRIDE + DIL * (KS - 1) + OUT_PAD + 1
    assert out.shape == (N, Cout, Dout, Dout, Dout), out.shape

    ref = jax.block_until_ready(_reference_conv_transpose3d_tanh(x, weight, bias))
    err = float(jnp.max(jnp.abs(out - ref)))
    assert jnp.allclose(out, ref, rtol=2e-3, atol=2e-3), err

    print("KERNEL_OK")
</pallas_src>

<mosaic_0001>
module attributes {stable_mosaic.version = 11 : i64} {
  func.func @_matmul_bias_tanh_kernel(%arg0: i32, %arg1: memref<64x50xf32, #tpu.memory_space<vmem>>, %arg2: memref<50x1408xf32, #tpu.memory_space<vmem>>, %arg3: memref<1x1408xf32, #tpu.memory_space<vmem>>, %arg4: memref<64x1408xf32, #tpu.memory_space<vmem>>) attributes {dimension_semantics = [#tpu.dimension_semantics<parallel>], iteration_bounds = array<i64: 1>, scalar_prefetch = 0 : i64, scratch_operands = 0 : i64, tpu.core_type = #tpu.core_type<tc>, window_params = [{transform_indices = @transform_0, window_bounds = array<i64: 64, 50>}, {pipeline_mode = #tpu.pipeline_mode<synchronous>, transform_indices = @transform_1, window_bounds = array<i64: 50, 1408>}, {pipeline_mode = #tpu.pipeline_mode<synchronous>, transform_indices = @transform_2, window_bounds = array<i64: 1, 1408>}, {transform_indices = @transform_3, window_bounds = array<i64: 64, 1408>}]} {
    %c0 = arith.constant 0 : index
    %c0_0 = arith.constant 0 : index
    %0 = vector.load %arg1[%c0, %c0_0] : memref<64x50xf32, #tpu.memory_space<vmem>>, vector<64x50xf32>
    %c0_1 = arith.constant 0 : index
    %c0_2 = arith.constant 0 : index
    %1 = vector.load %arg2[%c0_1, %c0_2] : memref<50x1408xf32, #tpu.memory_space<vmem>>, vector<50x1408xf32>
    %cst = arith.constant dense<0.000000e+00> : vector<64x1408xf32>
    %2 = tpu.matmul %0, %1, %cst {dimension_numbers = #tpu.dot_dimension_numbers<[1], [0], [0], [1], [0, 0, 1, 1], [], []>} : vector<64x50xf32>, vector<50x1408xf32>, vector<64x1408xf32> -> vector<64x1408xf32>
    %c0_3 = arith.constant 0 : index
    %c0_4 = arith.constant 0 : index
    %3 = vector.load %arg3[%c0_3, %c0_4] : memref<1x1408xf32, #tpu.memory_space<vmem>>, vector<1x1408xf32>
    %4 = vector.broadcast %3 : vector<1x1408xf32> to vector<64x1408xf32>
    %5 = arith.addf %2, %4 : vector<64x1408xf32>
    %6 = math.tanh %5 : vector<64x1408xf32>
    %c0_5 = arith.constant 0 : index
    %c0_6 = arith.constant 0 : index
    %7 = vector.load %arg4[%c0_5, %c0_6] : memref<64x1408xf32, #tpu.memory_space<vmem>>, vector<64x1408xf32>
    tpu.vector_store %arg4[%c0_5, %c0_6], %6 {strides = array<i32>} : memref<64x1408xf32, #tpu.memory_space<vmem>>, vector<64x1408xf32>,
    return
  }
  func.func @transform_0(%arg0: i32) -> (i32, i32) {
    %c0_i32 = arith.constant 0 : i32
    %c0_i32_0 = arith.constant 0 : i32
    return %arg0, %c0_i32 : i32, i32
  }
  func.func @transform_1(%arg0: i32) -> (i32, i32) {
    %c0_i32 = arith.constant 0 : i32
    %c0_i32_0 = arith.constant 0 : i32
    %c0_i32_1 = arith.constant 0 : i32
    return %c0_i32, %c0_i32_0 : i32, i32
  }
  func.func @transform_2(%arg0: i32) -> (i32, i32) {
    %c0_i32 = arith.constant 0 : i32
    %c0_i32_0 = arith.constant 0 : i32
    %c0_i32_1 = arith.constant 0 : i32
    return %c0_i32, %c0_i32_0 : i32, i32
  }
  func.func @transform_3(%arg0: i32) -> (i32, i32) {
    %c0_i32 = arith.constant 0 : i32
    %c0_i32_0 = arith.constant 0 : i32
    return %arg0, %c0_i32 : i32, i32
  }
}

module attributes {stable_mosaic.version = 11 : i64} {
  func.func @kernel(%arg0: i32, %arg1: i32, %arg2: memref<1x4x3x5x50x50xf32, #tpu.memory_space<vmem>>, %arg3: memref<5x1x1xf32, #tpu.memory_space<vmem>>, %arg4: memref<1x5x50x50x50xf32, #tpu.memory_space<vmem>>) attributes {dimension_semantics = [#tpu.dimension_semantics<parallel>, #tpu.dimension_semantics<parallel>], iteration_bounds = array<i64: 1, 10>, scalar_prefetch = 0 : i64, scratch_operands = 0 : i64, tpu.core_type = #tpu.core_type<tc>, window_params = [{transform_indices = @transform_0, window_bounds = array<i64: 1, 4, 3, 5, 50, 50>}, {transform_indices = @transform_1, window_bounds = array<i64: 5, 1, 1>}, {transform_indices = @transform_2, window_bounds = array<i64: 1, 5, 50, 50, 50>}]} {
    %c0 = arith.constant 0 : index
    %c0_0 = arith.constant 0 : index
    %c0_1 = arith.constant 0 : index
    %0 = vector.load %arg3[%c0, %c0_0, %c0_1] : memref<5x1x1xf32, #tpu.memory_space<vmem>>, vector<5x1x1xf32>
    %1 = vector.shape_cast %0 : vector<5x1x1xf32> to vector<5x1x1xf32>
    %2 = vector.broadcast %1 : vector<5x1x1xf32> to vector<5x50x50xf32>
    %c0_2 = arith.constant 0 : index
    %c0_3 = arith.constant 0 : index
    %c0_4 = arith.constant 0 : index
    %c0_5 = arith.constant 0 : index
    %c0_6 = arith.constant 0 : index
    %c0_7 = arith.constant 0 : index
    %3 = vector.load %arg2[%c0_2, %c0_3, %c0_4, %c0_5, %c0_6, %c0_7] : memref<1x4x3x5x50x50xf32, #tpu.memory_space<vmem>>, vector<1x1x1x5x50x50xf32>
    %4 = vector.shape_cast %3 : vector<1x1x1x5x50x50xf32> to vector<5x50x50xf32>
    %c0_8 = arith.constant 0 : index
    %c0_9 = arith.constant 0 : index
    %c0_10 = arith.constant 0 : index
    %c0_11 = arith.constant 0 : index
    %c0_12 = arith.constant 0 : index
    %5 = vector.load %arg4[%c0_8, %c0_9, %c0_10, %c0_11, %c0_12] : memref<1x5x50x50x50xf32, #tpu.memory_space<vmem>>, vector<1x5x1x50x50xf32>
    %6 = vector.shape_cast %5 : vector<1x5x1x50x50xf32> to vector<5x50x50xf32>
    %7 = vector.shape_cast %4 : vector<5x50x50xf32> to vector<1x5x1x50x50xf32>
    tpu.vector_store %arg4[%c0_8, %c0_9, %c0_10, %c0_11, %c0_12], %7 {strides = array<i32>} : memref<1x5x50x50x50xf32, #tpu.memory_space<vmem>>, vector<1x5x1x50x50xf32>,
    %c0_13 = arith.constant 0 : index
    %c0_14 = arith.constant 0 : index
    %c1 = arith.constant 1 : index
    %c0_15 = arith.constant 0 : index
    %c0_16 = arith.constant 0 : index
    %8 = vector.load %arg4[%c0_13, %c0_14, %c1, %c0_15, %c0_16] : memref<1x5x50x50x50xf32, #tpu.memory_space<vmem>>, vector<1x5x1x50x50xf32>
    %9 = vector.shape_cast %8 : vector<1x5x1x50x50xf32> to vector<5x50x50xf32>
    %10 = vector.shape_cast %2 : vector<5x50x50xf32> to vector<1x5x1x50x50xf32>
    tpu.vector_store %arg4[%c0_13, %c0_14, %c1, %c0_15, %c0_16], %10 {strides = array<i32>} : memref<1x5x50x50x50xf32, #tpu.memory_space<vmem>>, vector<1x5x1x50x50xf32>,
    %c0_17 = arith.constant 0 : index
    %c0_18 = arith.constant 0 : index
    %c1_19 = arith.constant 1 : index
    %c0_20 = arith.constant 0 : index
    %c0_21 = arith.constant 0 : index
    %c0_22 = arith.constant 0 : index
    %11 = vector.load %arg2[%c0_17, %c0_18, %c1_19, %c0_20, %c0_21, %c0_22] : memref<1x4x3x5x50x50xf32, #tpu.memory_space<vmem>>, vector<1x1x1x5x50x50xf32>
    %12 = vector.shape_cast %11 : vector<1x1x1x5x50x50xf32> to vector<5x50x50xf32>
    %c0_23 = arith.constant 0 : index
    %c0_24 = arith.constant 0 : index
    %c2 = arith.constant 2 : index
    %c0_25 = arith.constant 0 : index
    %c0_26 = arith.constant 0 : index
    %13 = vector.load %arg4[%c0_23, %c0_24, %c2, %c0_25, %c0_26] : memref<1x5x50x50x50xf32, #tpu.memory_space<vmem>>, vector<1x5x1x50x50xf32>
    %14 = vector.shape_cast %13 : vector<1x5x1x50x50xf32> to vector<5x50x50xf32>
    %15 = vector.shape_cast %12 : vector<5x50x50xf32> to vector<1x5x1x50x50xf32>
    tpu.vector_store %arg4[%c0_23, %c0_24, %c2, %c0_25, %c0_26], %15 {strides = array<i32>} : memref<1x5x50x50x50xf32, #tpu.memory_space<vmem>>, vector<1x5x1x50x50xf32>,
    %c0_27 = arith.constant 0 : index
    %c0_28 = arith.constant 0 : index
    %c3 = arith.constant 3 : index
    %c0_29 = arith.constant 0 : index
    %c0_30 = arith.constant 0 : index
    %16 = vector.load %arg4[%c0_27, %c0_28, %c3, %c0_29, %c0_30] : memref<1x5x50x50x50xf32, #tpu.memory_space<vmem>>, vector<1x5x1x50x50xf32>
    %17 = vector.shape_cast %16 : vector<1x5x1x50x50xf32> to vector<5x50x50xf32>
    %18 = vector.shape_cast %2 : vector<5x50x50xf32> to vector<1x5x1x50x50xf32>
    tpu.vector_store %arg4[%c0_27, %c0_28, %c3, %c0_29, %c0_30], %18 {strides = array<i32>} : memref<1x5x50x50x50xf32, #tpu.memory_space<vmem>>, vector<1x5x1x50x50xf32>,
    %c0_31 = arith.constant 0 : index
    %c0_32 = arith.constant 0 : index
    %c2_33 = arith.constant 2 : index
    %c0_34 = arith.constant 0 : index
    %c0_35 = arith.constant 0 : index
    %c0_36 = arith.constant 0 : index
    %19 = vector.load %arg2[%c0_31, %c0_32, %c2_33, %c0_34, %c0_35, %c0_36] : memref<1x4x3x5x50x50xf32, #tpu.memory_space<vmem>>, vector<1x1x1x5x50x50xf32>
    %20 = vector.shape_cast %19 : vector<1x1x1x5x50x50xf32> to vector<5x50x50xf32>
    %c0_37 = arith.constant 0 : index
    %c0_38 = arith.constant 0 : index
    %c4 = arith.constant 4 : index
    %c0_39 = arith.constant 0 : index
    %c0_40 = arith.constant 0 : index
    %21 = vector.load %arg4[%c0_37, %c0_38, %c4, %c0_39, %c0_40] : memref<1x5x50x50x50xf32, #tpu.memory_space<vmem>>, vector<1x5x1x50x50xf32>
    %22 = vector.shape_cast %21 : vector<1x5x1x50x50xf32> to vector<5x50x50xf32>
    %23 = vector.shape_cast %20 : vector<5x50x50xf32> to vector<1x5x1x50x50xf32>
    tpu.vector_store %arg4[%c0_37, %c0_38, %c4, %c0_39, %c0_40], %23 {strides = array<i32>} : memref<1x5x50x50x50xf32, #tpu.memory_space<vmem>>, vector<1x5x1x50x50xf32>,
    %c0_41 = arith.constant 0 : index
    %c0_42 = arith.constant 0 : index
    %c5 = arith.constant 5 : index
    %c0_43 = arith.constant 0 : index
    %c0_44 = arith.constant 0 : index
    %24 = vector.load %arg4[%c0_41, %c0_42, %c5, %c0_43, %c0_44] : memref<1x5x50x50x50xf32, #tpu.memory_space<vmem>>, vector<1x5x1x50x50xf32>
    %25 = vector.shape_cast %24 : vector<1x5x1x50x50xf32> to vector<5x50x50xf32>
    %26 = vector.shape_cast %2 : vector<5x50x50xf32> to vector<1x5x1x50x50xf32>
    tpu.vector_store %arg4[%c0_41, %c0_42, %c5, %c0_43, %c0_44], %26 {strides = array<i32>} : memref<1x5x50x50x50xf32, #tpu.memory_space<vmem>>, vector<1x5x1x50x50xf32>,
    %c0_45 = arith.constant 0 : index
    %c0_46 = arith.constant 0 : index
    %c6 = arith.constant 6 : index
    %c0_47 = arith.constant 0 : index
    %c0_48 = arith.constant 0 : index
    %27 = vector.load %arg4[%c0_45, %c0_46, %c6, %c0_47, %c0_48] : memref<1x5x50x50x50xf32, #tpu.memory_space<vmem>>, vector<1x5x1x50x50xf32>
    %28 = vector.shape_cast %27 : vector<1x5x1x50x50xf32> to vector<5x50x50xf32>
    %29 = vector.shape_cast %2 : vector<5x50x50xf32> to vector<1x5x1x50x50xf32>
    tpu.vector_store %arg4[%c0_45, %c0_46, %c6, %c0_47, %c0_48], %29 {strides = array<i32>} : memref<1x5x50x50x50xf32, #tpu.memory_space<vmem>>, vector<1x5x1x50x50xf32>,
    %c0_49 = arith.constant 0 : index
    %c0_50 = arith.constant 0 : index
    %c7 = arith.constant 7 : index
    %c0_51 = arith.constant 0 : index
    %c0_52 = arith.constant 0 : index
    %30 = vector.load %arg4[%c0_49, %c0_50, %c7, %c0_51, %c0_52] : memref<1x5x50x50x50xf32, #tpu.memory_space<vmem>>, vector<1x5x1x50x50xf32>
    %31 = vector.shape_cast %30 : vector<1x5x1x50x50xf32> to vector<5x50x50xf32>
    %32 = vector.shape_cast %2 : vector<5x50x50xf32> to vector<1x5x1x50x50xf32>
    tpu.vector_store %arg4[%c0_49, %c0_50, %c7, %c0_51, %c0_52], %32 {strides = array<i32>} : memref<1x5x50x50x50xf32, #tpu.memory_space<vmem>>, vector<1x5x1x50x50xf32>,
    %c0_53 = arith.constant 0 : index
    %c0_54 = arith.constant 0 : index
    %c8 = arith.constant 8 : index
    %c0_55 = arith.constant 0 : index
    %c0_56 = arith.constant 0 : index
    %33 = vector.load %arg4[%c0_53, %c0_54, %c8, %c0_55, %c0_56] : memref<1x5x50x50x50xf32, #tpu.memory_space<vmem>>, vector<1x5x1x50x50xf32>
    %34 = vector.shape_cast %33 : vector<1x5x1x50x50xf32> to vector<5x50x50xf32>
    %35 = vector.shape_cast %2 : vector<5x50x50xf32> to vector<1x5x1x50x50xf32>
    tpu.vector_store %arg4[%c0_53, %c0_54, %c8, %c0_55, %c0_56], %35 {strides = array<i32>} : memref<1x5x50x50x50xf32, #tpu.memory_space<vmem>>, vector<1x5x1x50x50xf32>,
    %c0_57 = arith.constant 0 : index
    %c0_58 = arith.constant 0 : index
    %c9 = arith.constant 9 : index
    %c0_59 = arith.constant 0 : index
    %c0_60 = arith.constant 0 : index
    %36 = vector.load %arg4[%c0_57, %c0_58, %c9, %c0_59, %c0_60] : memref<1x5x50x50x50xf32, #tpu.memory_space<vmem>>, vector<1x5x1x50x50xf32>
    %37 = vector.shape_cast %36 : vector<1x5x1x50x50xf32> to vector<5x50x50xf32>
    %38 = vector.shape_cast %2 : vector<5x50x50xf32> to vector<1x5x1x50x50xf32>
    tpu.vector_store %arg4[%c0_57, %c0_58, %c9, %c0_59, %c0_60], %38 {strides = array<i32>} : memref<1x5x50x50x50xf32, #tpu.memory_space<vmem>>, vector<1x5x1x50x50xf32>,
    %c0_61 = arith.constant 0 : index
    %c0_62 = arith.constant 0 : index
    %c10 = arith.constant 10 : index
    %c0_63 = arith.constant 0 : index
    %c0_64 = arith.constant 0 : index
    %39 = vector.load %arg4[%c0_61, %c0_62, %c10, %c0_63, %c0_64] : memref<1x5x50x50x50xf32, #tpu.memory_space<vmem>>, vector<1x5x1x50x50xf32>
    %40 = vector.shape_cast %39 : vector<1x5x1x50x50xf32> to vector<5x50x50xf32>
    %41 = vector.shape_cast %2 : vector<5x50x50xf32> to vector<1x5x1x50x50xf32>
    tpu.vector_store %arg4[%c0_61, %c0_62, %c10, %c0_63, %c0_64], %41 {strides = array<i32>} : memref<1x5x50x50x50xf32, #tpu.memory_space<vmem>>, vector<1x5x1x50x50xf32>,
    %c0_65 = arith.constant 0 : index
    %c1_66 = arith.constant 1 : index
    %c0_67 = arith.constant 0 : index
    %c0_68 = arith.constant 0 : index
    %c0_69 = arith.constant 0 : index
    %c0_70 = arith.constant 0 : index
    %42 = vector.load %arg2[%c0_65, %c1_66, %c0_67, %c0_68, %c0_69, %c0_70] : memref<1x4x3x5x50x50xf32, #tpu.memory_space<vmem>>, vector<1x1x1x5x50x50xf32>
    %43 = vector.shape_cast %42 : vector<1x1x1x5x50x50xf32> to vector<5x50x50xf32>
    %c0_71 = arith.constant 0 : index
    %c0_72 = arith.constant 0 : index
    %c11 = arith.constant 11 : index
    %c0_73 = arith.constant 0 : index
    %c0_74 = arith.constant 0 : index
    %44 = vector.load %arg4[%c0_71, %c0_72, %c11, %c0_73, %c0_74] : memref<1x5x50x50x50xf32, #tpu.memory_space<vmem>>, vector<1x5x1x50x50xf32>
    %45 = vector.shape_cast %44 : vector<1x5x1x50x50xf32> to vector<5x50x50xf32>
    %46 = vector.shape_cast %43 : vector<5x50x50xf32> to vector<1x5x1x50x50xf32>
    tpu.vector_store %arg4[%c0_71, %c0_72, %c11, %c0_73, %c0_74], %46 {strides = array<i32>} : memref<1x5x50x50x50xf32, #tpu.memory_space<vmem>>, vector<1x5x1x50x50xf32>,
    %c0_75 = arith.constant 0 : index
    %c0_76 = arith.constant 0 : index
    %c12 = arith.constant 12 : index
    %c0_77 = arith.constant 0 : index
    %c0_78 = arith.constant 0 : index
    %47 = vector.load %arg4[%c0_75, %c0_76, %c12, %c0_77, %c0_78] : memref<1x5x50x50x50xf32, #tpu.memory_space<vmem>>, vector<1x5x1x50x50xf32>
    %48 = vector.shape_cast %47 : vector<1x5x1x50x50xf32> to vector<5x50x50xf32>
    %49 = vector.shape_cast %2 : vector<5x50x50xf32> to vector<1x5x1x50x50xf32>
    tpu.vector_store %arg4[%c0_75, %c0_76, %c12, %c0_77, %c0_78], %49 {strides = array<i32>} : memref<1x5x50x50x50xf32, #tpu.memory_space<vmem>>, vector<1x5x1x50x50xf32>,
    %c0_79 = arith.constant 0 : index
    %c1_80 = arith.constant 1 : index
    %c1_81 = arith.constant 1 : index
    %c0_82 = arith.constant 0 : index
    %c0_83 = arith.constant 0 : index
    %c0_84 = arith.constant 0 : index
    %50 = vector.load %arg2[%c0_79, %c1_80, %c1_81, %c0_82, %c0_83, %c0_84] : memref<1x4x3x5x50x50xf32, #tpu.memory_space<vmem>>, vector<1x1x1x5x50x50xf32>
    %51 = vector.shape_cast %50 : vector<1x1x1x5x50x50xf32> to vector<5x50x50xf32>
    %c0_85 = arith.constant 0 : index
    %c0_86 = arith.constant 0 : index
    %c13 = arith.constant 13 : index
    %c0_87 = arith.constant 0 : index
    %c0_88 = arith.constant 0 : index
    %52 = vector.load %arg4[%c0_85, %c0_86, %c13, %c0_87, %c0_88] : memref<1x5x50x50x50xf32, #tpu.memory_space<vmem>>, vector<1x5x1x50x50xf32>
    %53 = vector.shape_cast %52 : vector<1x5x1x50x50xf32> to vector<5x50x50xf32>
    %54 = vector.shape_cast %51 : vector<5x50x50xf32> to vector<1x5x1x50x50xf32>
    tpu.vector_store %arg4[%c0_85, %c0_86, %c13, %c0_87, %c0_88], %54 {strides = array<i32>} : memref<1x5x50x50x50xf32, #tpu.memory_space<vmem>>, vector<1x5x1x50x50xf32>,
    %c0_89 = arith.constant 0 : index
    %c0_90 = arith.constant 0 : index
    %c14 = arith.constant 14 : index
    %c0_91 = arith.constant 0 : index
    %c0_92 = arith.constant 0 : index
    %55 = vector.load %arg4[%c0_89, %c0_90, %c14, %c0_91, %c0_92] : memref<1x5x50x50x50xf32, #tpu.memory_space<vmem>>, vector<1x5x1x50x50xf32>
    %56 = vector.shape_cast %55 : vector<1x5x1x50x50xf32> to vector<5x50x50xf32>
    %57 = vector.shape_cast %2 : vector<5x50x50xf32> to vector<1x5x1x50x50xf32>
    tpu.vector_store %arg4[%c0_89, %c0_90, %c14, %c0_91, %c0_92], %57 {strides = array<i32>} : memref<1x5x50x50x50xf32, #tpu.memory_space<vmem>>, vector<1x5x1x50x50xf32>,
    %c0_93 = arith.constant 0 : index
    %c1_94 = arith.constant 1 : index
    %c2_95 = arith.constant 2 : index
    %c0_96 = arith.constant 0 : index
    %c0_97 = arith.constant 0 : index
    %c0_98 = arith.constant 0 : index
    %58 = vector.load %arg2[%c0_93, %c1_94, %c2_95, %c0_96, %c0_97, %c0_98] : memref<1x4x3x5x50x50xf32, #tpu.memory_space<vmem>>, vector<1x1x1x5x50x50xf32>
    %59 = vector.shape_cast %58 : vector<1x1x1x5x50x50xf32> to vector<5x50x50xf32>
    %c0_99 = arith.constant 0 : index
    %c0_100 = arith.constant 0 : index
    %c15 = arith.constant 15 : index
    %c0_101 = arith.constant 0 : index
    %c0_102 = arith.constant 0 : index
    %60 = vector.load %arg4[%c0_99, %c0_100, %c15, %c0_101, %c0_102] : memref<1x5x50x50x50xf32, #tpu.memory_space<vmem>>, vector<1x5x1x50x50xf32>
    %61 = vector.shape_cast %60 : vector<1x5x1x50x50xf32> to vector<5x50x50xf32>
    %62 = vector.shape_cast %59 : vector<5x50x50xf32> to vector<1x5x1x50x50xf32>
    tpu.vector_store %arg4[%c0_99, %c0_100, %c15, %c0_101, %c0_102], %62 {strides = array<i32>} : memref<1x5x50x50x50xf32, #tpu.memory_space<vmem>>, vector<1x5x1x50x50xf32>,
    %c0_103 = arith.constant 0 : index
    %c0_104 = arith.constant 0 : index
    %c16 = arith.constant 16 : index
    %c0_105 = arith.constant 0 : index
    %c0_106 = arith.constant 0 : index
    %63 = vector.load %arg4[%c0_103, %c0_104, %c16, %c0_105, %c0_106] : memref<1x5x50x50x50xf32, #tpu.memory_space<vmem>>, vector<1x5x1x50x50xf32>
    %64 = vector.shape_cast %63 : vector<1x5x1x50x50xf32> to vector<5x50x50xf32>
    %65 = vector.shape_cast %2 : vector<5x50x50xf32> to vector<1x5x1x50x50xf32>
    tpu.vector_store %arg4[%c0_103, %c0_104, %c16, %c0_105, %c0_106], %65 {strides = array<i32>} : memref<1x5x50x50x50xf32, #tpu.memory_space<vmem>>, vector<1x5x1x50x50xf32>,
    %c0_107 = arith.constant 0 : index
    %c0_108 = arith.constant 0 : index
    %c17 = arith.constant 17 : index
    %c0_109 = arith.constant 0 : index
    %c0_110 = arith.constant 0 : index
    %66 = vector.load %arg4[%c0_107, %c0_108, %c17, %c0_109, %c0_110] : memref<1x5x50x50x50xf32, #tpu.memory_space<vmem>>, vector<1x5x1x50x50xf32>
    %67 = vector.shape_cast %66 : vector<1x5x1x50x50xf32> to vector<5x50x50xf32>
    %68 = vector.shape_cast %2 : vector<5x50x50xf32> to vector<1x5x1x50x50xf32>
    tpu.vector_store %arg4[%c0_107, %c0_108, %c17, %c0_109, %c0_110], %68 {strides = array<i32>} : memref<1x5x50x50x50xf32, #tpu.memory_space<vmem>>, vector<1x5x1x50x50xf32>,
    %c0_111 = arith.constant 0 : index
    %c0_112 = arith.constant 0 : index
    %c18 = arith.constant 18 : index
    %c0_113 = arith.constant 0 : index
    %c0_114 = arith.constant 0 : index
    %69 = vector.load %arg4[%c0_111, %c0_112, %c18, %c0_113, %c0_114] : memref<1x5x50x50x50xf32, #tpu.memory_space<vmem>>, vector<1x5x1x50x50xf32>
    %70 = vector.shape_cast %69 : vector<1x5x1x50x50xf32> to vector<5x50x50xf32>
    %71 = vector.shape_cast %2 : vector<5x50x50xf32> to vector<1x5x1x50x50xf32>
    tpu.vector_store %arg4[%c0_111, %c0_112, %c18, %c0_113, %c0_114], %71 {strides = array<i32>} : memref<1x5x50x50x50xf32, #tpu.memory_space<vmem>>, vector<1x5x1x50x50xf32>,
    %c0_115 = arith.constant 0 : index
    %c0_116 = arith.constant 0 : index
    %c19 = arith.constant 19 : index
    %c0_117 = arith.constant 0 : index
    %c0_118 = arith.constant 0 : index
    %72 = vector.load %arg4[%c0_115, %c0_116, %c19, %c0_117, %c0_118] : memref<1x5x50x50x50xf32, #tpu.memory_space<vmem>>, vector<1x5x1x50x50xf32>
    %73 = vector.shape_cast %72 : vector<1x5x1x50x50xf32> to vector<5x50x50xf32>
    %74 = vector.shape_cast %2 : vector<5x50x50xf32> to vector<1x5x1x50x50xf32>
    tpu.vector_store %arg4[%c0_115, %c0_116, %c19, %c0_117, %c0_118], %74 {strides = array<i32>} : memref<1x5x50x50x50xf32, #tpu.memory_space<vmem>>, vector<1x5x1x50x50xf32>,
    %c0_119 = arith.constant 0 : index
    %c0_120 = arith.constant 0 : index
    %c20 = arith.constant 20 : index
    %c0_121 = arith.constant 0 : index
    %c0_122 = arith.constant 0 : index
    %75 = vector.load %arg4[%c0_119, %c0_120, %c20, %c0_121, %c0_122] : memref<1x5x50x50x50xf32, #tpu.memory_space<vmem>>, vector<1x5x1x50x50xf32>
    %76 = vector.shape_cast %75 : vector<1x5x1x50x50xf32> to vector<5x50x50xf32>
    %77 = vector.shape_cast %2 : vector<5x50x50xf32> to vector<1x5x1x50x50xf32>
    tpu.vector_store %arg4[%c0_119, %c0_120, %c20, %c0_121, %c0_122], %77 {strides = array<i32>} : memref<1x5x50x50x50xf32, #tpu.memory_space<vmem>>, vector<1x5x1x50x50xf32>,
    %c0_123 = arith.constant 0 : index
    %c0_124 = arith.constant 0 : index
    %c21 = arith.constant 21 : index
    %c0_125 = arith.constant 0 : index
    %c0_126 = arith.constant 0 : index
    %78 = vector.load %arg4[%c0_123, %c0_124, %c21, %c0_125, %c0_126] : memref<1x5x50x50x50xf32, #tpu.memory_space<vmem>>, vector<1x5x1x50x50xf32>
    %79 = vector.shape_cast %78 : vector<1x5x1x50x50xf32> to vector<5x50x50xf32>
    %80 = vector.shape_cast %2 : vector<5x50x50xf32> to vector<1x5x1x50x50xf32>
    tpu.vector_store %arg4[%c0_123, %c0_124, %c21, %c0_125, %c0_126], %80 {strides = array<i32>} : memref<1x5x50x50x50xf32, #tpu.memory_space<vmem>>, vector<1x5x1x50x50xf32>,
    %c0_127 = arith.constant 0 : index
    %c2_128 = arith.constant 2 : index
    %c0_129 = arith.constant 0 : index
    %c0_130 = arith.constant 0 : index
    %c0_131 = arith.constant 0 : index
    %c0_132 = arith.constant 0 : index
    %81 = vector.load %arg2[%c0_127, %c2_128, %c0_129, %c0_130, %c0_131, %c0_132] : memref<1x4x3x5x50x50xf32, #tpu.memory_space<vmem>>, vector<1x1x1x5x50x50xf32>
    %82 = vector.shape_cast %81 : vector<1x1x1x5x50x50xf32> to vector<5x50x50xf32>
    %c0_133 = arith.constant 0 : index
    %c0_134 = arith.constant 0 : index
    %c22 = arith.constant 22 : index
    %c0_135 = arith.constant 0 : index
    %c0_136 = arith.constant 0 : index
    %83 = vector.load %arg4[%c0_133, %c0_134, %c22, %c0_135, %c0_136] : memref<1x5x50x50x50xf32, #tpu.memory_space<vmem>>, vector<1x5x1x50x50xf32>
    %84 = vector.shape_cast %83 : vector<1x5x1x50x50xf32> to vector<5x50x50xf32>
    %85 = vector.shape_cast %82 : vector<5x50x50xf32> to vector<1x5x1x50x50xf32>
    tpu.vector_store %arg4[%c0_133, %c0_134, %c22, %c0_135, %c0_136], %85 {strides = array<i32>} : memref<1x5x50x50x50xf32, #tpu.memory_space<vmem>>, vector<1x5x1x50x50xf32>,
    %c0_137 = arith.constant 0 : index
    %c0_138 = arith.constant 0 : index
    %c23 = arith.constant 23 : index
    %c0_139 = arith.constant 0 : index
    %c0_140 = arith.constant 0 : index
    %86 = vector.load %arg4[%c0_137, %c0_138, %c23, %c0_139, %c0_140] : memref<1x5x50x50x50xf32, #tpu.memory_space<vmem>>, vector<1x5x1x50x50xf32>
    %87 = vector.shape_cast %86 : vector<1x5x1x50x50xf32> to vector<5x50x50xf32>
    %88 = vector.shape_cast %2 : vector<5x50x50xf32> to vector<1x5x1x50x50xf32>
    tpu.vector_store %arg4[%c0_137, %c0_138, %c23, %c0_139, %c0_140], %88 {strides = array<i32>} : memref<1x5x50x50x50xf32, #tpu.memory_space<vmem>>, vector<1x5x1x50x50xf32>,
    %c0_141 = arith.constant 0 : index
    %c2_142 = arith.constant 2 : index
    %c1_143 = arith.constant 1 : index
    %c0_144 = arith.constant 0 : index
    %c0_145 = arith.constant 0 : index
    %c0_146 = arith.constant 0 : index
    %89 = vector.load %arg2[%c0_141, %c2_142, %c1_143, %c0_144, %c0_145, %c0_146] : memref<1x4x3x5x50x50xf32, #tpu.memory_space<vmem>>, vector<1x1x1x5x50x50xf32>
    %90 = vector.shape_cast %89 : vector<1x1x1x5x50x50xf32> to vector<5x50x50xf32>
    %c0_147 = arith.constant 0 : index
    %c0_148 = arith.constant 0 : index
    %c24 = arith.constant 24 : index
    %c0_149 = arith.constant 0 : index
    %c0_150 = arith.constant 0 : index
    %91 = vector.load %arg4[%c0_147, %c0_148, %c24, %c0_149, %c0_150] : memref<1x5x50x50x50xf32, #tpu.memory_space<vmem>>, vector<1x5x1x50x50xf32>
    %92 = vector.shape_cast %91 : vector<1x5x1x50x50xf32> to vector<5x50x50xf32>
    %93 = vector.shape_cast %90 : vector<5x50x50xf32> to vector<1x5x1x50x50xf32>
    tpu.vector_store %arg4[%c0_147, %c0_148, %c24, %c0_149, %c0_150], %93 {strides = array<i32>} : memref<1x5x50x50x50xf32, #tpu.memory_space<vmem>>, vector<1x5x1x50x50xf32>,
    %c0_151 = arith.constant 0 : index
    %c0_152 = arith.constant 0 : index
    %c25 = arith.constant 25 : index
    %c0_153 = arith.constant 0 : index
    %c0_154 = arith.constant 0 : index
    %94 = vector.load %arg4[%c0_151, %c0_152, %c25, %c0_153, %c0_154] : memref<1x5x50x50x50xf32, #tpu.memory_space<vmem>>, vector<1x5x1x50x50xf32>
    %95 = vector.shape_cast %94 : vector<1x5x1x50x50xf32> to vector<5x50x50xf32>
    %96 = vector.shape_cast %2 : vector<5x50x50xf32> to vector<1x5x1x50x50xf32>
    tpu.vector_store %arg4[%c0_151, %c0_152, %c25, %c0_153, %c0_154], %96 {strides = array<i32>} : memref<1x5x50x50x50xf32, #tpu.memory_space<vmem>>, vector<1x5x1x50x50xf32>,
    %c0_155 = arith.constant 0 : index
    %c2_156 = arith.constant 2 : index
    %c2_157 = arith.constant 2 : index
    %c0_158 = arith.constant 0 : index
    %c0_159 = arith.constant 0 : index
    %c0_160 = arith.constant 0 : index
    %97 = vector.load %arg2[%c0_155, %c2_156, %c2_157, %c0_158, %c0_159, %c0_160] : memref<1x4x3x5x50x50xf32, #tpu.memory_space<vmem>>, vector<1x1x1x5x50x50xf32>
    %98 = vector.shape_cast %97 : vector<1x1x1x5x50x50xf32> to vector<5x50x50xf32>
    %c0_161 = arith.constant 0 : index
    %c0_162 = arith.constant 0 : index
    %c26 = arith.constant 26 : index
    %c0_163 = arith.constant 0 : index
    %c0_164 = arith.constant 0 : index
    %99 = vector.load %arg4[%c0_161, %c0_162, %c26, %c0_163, %c0_164] : memref<1x5x50x50x50xf32, #tpu.memory_space<vmem>>, vector<1x5x1x50x50xf32>
    %100 = vector.shape_cast %99 : vector<1x5x1x50x50xf32> to vector<5x50x50xf32>
    %101 = vector.shape_cast %98 : vector<5x50x50xf32> to vector<1x5x1x50x50xf32>
    tpu.vector_store %arg4[%c0_161, %c0_162, %c26, %c0_163, %c0_164], %101 {strides = array<i32>} : memref<1x5x50x50x50xf32, #tpu.memory_space<vmem>>, vector<1x5x1x50x50xf32>,
    %c0_165 = arith.constant 0 : index
    %c0_166 = arith.constant 0 : index
    %c27 = arith.constant 27 : index
    %c0_167 = arith.constant 0 : index
    %c0_168 = arith.constant 0 : index
    %102 = vector.load %arg4[%c0_165, %c0_166, %c27, %c0_167, %c0_168] : memref<1x5x50x50x50xf32, #tpu.memory_space<vmem>>, vector<1x5x1x50x50xf32>
    %103 = vector.shape_cast %102 : vector<1x5x1x50x50xf32> to vector<5x50x50xf32>
    %104 = vector.shape_cast %2 : vector<5x50x50xf32> to vector<1x5x1x50x50xf32>
    tpu.vector_store %arg4[%c0_165, %c0_166, %c27, %c0_167, %c0_168], %104 {strides = array<i32>} : memref<1x5x50x50x50xf32, #tpu.memory_space<vmem>>, vector<1x5x1x50x50xf32>,
    %c0_169 = arith.constant 0 : index
    %c0_170 = arith.constant 0 : index
    %c28 = arith.constant 28 : index
    %c0_171 = arith.constant 0 : index
    %c0_172 = arith.constant 0 : index
    %105 = vector.load %arg4[%c0_169, %c0_170, %c28, %c0_171, %c0_172] : memref<1x5x50x50x50xf32, #tpu.memory_space<vmem>>, vector<1x5x1x50x50xf32>
    %106 = vector.shape_cast %105 : vector<1x5x1x50x50xf32> to vector<5x50x50xf32>
    %107 = vector.shape_cast %2 : vector<5x50x50xf32> to vector<1x5x1x50x50xf32>
    tpu.vector_store %arg4[%c0_169, %c0_170, %c28, %c0_171, %c0_172], %107 {strides = array<i32>} : memref<1x5x50x50x50xf32, #tpu.memory_space<vmem>>, vector<1x5x1x50x50xf32>,
    %c0_173 = arith.constant 0 : index
    %c0_174 = arith.constant 0 : index
    %c29 = arith.constant 29 : index
    %c0_175 = arith.constant 0 : index
    %c0_176 = arith.constant 0 : index
    %108 = vector.load %arg4[%c0_173, %c0_174, %c29, %c0_175, %c0_176] : memref<1x5x50x50x50xf32, #tpu.memory_space<vmem>>, vector<1x5x1x50x50xf32>
    %109 = vector.shape_cast %108 : vector<1x5x1x50x50xf32> to vector<5x50x50xf32>
    %110 = vector.shape_cast %2 : vector<5x50x50xf32> to vector<1x5x1x50x50xf32>
    tpu.vector_store %arg4[%c0_173, %c0_174, %c29, %c0_175, %c0_176], %110 {strides = array<i32>} : memref<1x5x50x50x50xf32, #tpu.memory_space<vmem>>, vector<1x5x1x50x50xf32>,
    %c0_177 = arith.constant 0 : index
    %c0_178 = arith.constant 0 : index
    %c30 = arith.constant 30 : index
    %c0_179 = arith.constant 0 : index
    %c0_180 = arith.constant 0 : index
    %111 = vector.load %arg4[%c0_177, %c0_178, %c30, %c0_179, %c0_180] : memref<1x5x50x50x50xf32, #tpu.memory_space<vmem>>, vector<1x5x1x50x50xf32>
    %112 = vector.shape_cast %111 : vector<1x5x1x50x50xf32> to vector<5x50x50xf32>
    %113 = vector.shape_cast %2 : vector<5x50x50xf32> to vector<1x5x1x50x50xf32>
    tpu.vector_store %arg4[%c0_177, %c0_178, %c30, %c0_179, %c0_180], %113 {strides = array<i32>} : memref<1x5x50x50x50xf32, #tpu.memory_space<vmem>>, vector<1x5x1x50x50xf32>,
    %c0_181 = arith.constant 0 : index
    %c0_182 = arith.constant 0 : index
    %c31 = arith.constant 31 : index
    %c0_183 = arith.constant 0 : index
    %c0_184 = arith.constant 0 : index
    %114 = vector.load %arg4[%c0_181, %c0_182, %c31, %c0_183, %c0_184] : memref<1x5x50x50x50xf32, #tpu.memory_space<vmem>>, vector<1x5x1x50x50xf32>
    %115 = vector.shape_cast %114 : vector<1x5x1x50x50xf32> to vector<5x50x50xf32>
    %116 = vector.shape_cast %2 : vector<5x50x50xf32> to vector<1x5x1x50x50xf32>
    tpu.vector_store %arg4[%c0_181, %c0_182, %c31, %c0_183, %c0_184], %116 {strides = array<i32>} : memref<1x5x50x50x50xf32, #tpu.memory_space<vmem>>, vector<1x5x1x50x50xf32>,
    %c0_185 = arith.constant 0 : index
    %c0_186 = arith.constant 0 : index
    %c32 = arith.constant 32 : index
    %c0_187 = arith.constant 0 : index
    %c0_188 = arith.constant 0 : index
    %117 = vector.load %arg4[%c0_185, %c0_186, %c32, %c0_187, %c0_188] : memref<1x5x50x50x50xf32, #tpu.memory_space<vmem>>, vector<1x5x1x50x50xf32>
    %118 = vector.shape_cast %117 : vector<1x5x1x50x50xf32> to vector<5x50x50xf32>
    %119 = vector.shape_cast %2 : vector<5x50x50xf32> to vector<1x5x1x50x50xf32>
    tpu.vector_store %arg4[%c0_185, %c0_186, %c32, %c0_187, %c0_188], %119 {strides = array<i32>} : memref<1x5x50x50x50xf32, #tpu.memory_space<vmem>>, vector<1x5x1x50x50xf32>,
    %c0_189 = arith.constant 0 : index
    %c3_190 = arith.constant 3 : index
    %c0_191 = arith.constant 0 : index
    %c0_192 = arith.constant 0 : index
    %c0_193 = arith.constant 0 : index
    %c0_194 = arith.constant 0 : index
    %120 = vector.load %arg2[%c0_189, %c3_190, %c0_191, %c0_192, %c0_193, %c0_194] : memref<1x4x3x5x50x50xf32, #tpu.memory_space<vmem>>, vector<1x1x1x5x50x50xf32>
    %121 = vector.shape_cast %120 : vector<1x1x1x5x50x50xf32> to vector<5x50x50xf32>
    %c0_195 = arith.constant 0 : index
    %c0_196 = arith.constant 0 : index
    %c33 = arith.constant 33 : index
    %c0_197 = arith.constant 0 : index
    %c0_198 = arith.constant 0 : index
    %122 = vector.load %arg4[%c0_195, %c0_196, %c33, %c0_197, %c0_198] : memref<1x5x50x50x50xf32, #tpu.memory_space<vmem>>, vector<1x5x1x50x50xf32>
    %123 = vector.shape_cast %122 : vector<1x5x1x50x50xf32> to vector<5x50x50xf32>
    %124 = vector.shape_cast %121 : vector<5x50x50xf32> to vector<1x5x1x50x50xf32>
    tpu.vector_store %arg4[%c0_195, %c0_196, %c33, %c0_197, %c0_198], %124 {strides = array<i32>} : memref<1x5x50x50x50xf32, #tpu.memory_space<vmem>>, vector<1x5x1x50x50xf32>,
    %c0_199 = arith.constant 0 : index
    %c0_200 = arith.constant 0 : index
    %c34 = arith.constant 34 : index
    %c0_201 = arith.constant 0 : index
    %c0_202 = arith.constant 0 : index
    %125 = vector.load %arg4[%c0_199, %c0_200, %c34, %c0_201, %c0_202] : memref<1x5x50x50x50xf32, #tpu.memory_space<vmem>>, vector<1x5x1x50x50xf32>
    %126 = vector.shape_cast %125 : vector<1x5x1x50x50xf32> to vector<5x50x50xf32>
    %127 = vector.shape_cast %2 : vector<5x50x50xf32> to vector<1x5x1x50x50xf32>
    tpu.vector_store %arg4[%c0_199, %c0_200, %c34, %c0_201, %c0_202], %127 {strides = array<i32>} : memref<1x5x50x50x50xf32, #tpu.memory_space<vmem>>, vector<1x5x1x50x50xf32>,
    %c0_203 = arith.constant 0 : index
    %c3_204 = arith.constant 3 : index
    %c1_205 = arith.constant 1 : index
    %c0_206 = arith.constant 0 : index
    %c0_207 = arith.constant 0 : index
    %c0_208 = arith.constant 0 : index
    %128 = vector.load %arg2[%c0_203, %c3_204, %c1_205, %c0_206, %c0_207, %c0_208] : memref<1x4x3x5x50x50xf32, #tpu.memory_space<vmem>>, vector<1x1x1x5x50x50xf32>
    %129 = vector.shape_cast %128 : vector<1x1x1x5x50x50xf32> to vector<5x50x50xf32>
    %c0_209 = arith.constant 0 : index
    %c0_210 = arith.constant 0 : index
    %c35 = arith.constant 35 : index
    %c0_211 = arith.constant 0 : index
    %c0_212 = arith.constant 0 : index
    %130 = vector.load %arg4[%c0_209, %c0_210, %c35, %c0_211, %c0_212] : memref<1x5x50x50x50xf32, #tpu.memory_space<vmem>>, vector<1x5x1x50x50xf32>
    %131 = vector.shape_cast %130 : vector<1x5x1x50x50xf32> to vector<5x50x50xf32>
    %132 = vector.shape_cast %129 : vector<5x50x50xf32> to vector<1x5x1x50x50xf32>
    tpu.vector_store %arg4[%c0_209, %c0_210, %c35, %c0_211, %c0_212], %132 {strides = array<i32>} : memref<1x5x50x50x50xf32, #tpu.memory_space<vmem>>, vector<1x5x1x50x50xf32>,
    %c0_213 = arith.constant 0 : index
    %c0_214 = arith.constant 0 : index
    %c36 = arith.constant 36 : index
    %c0_215 = arith.constant 0 : index
    %c0_216 = arith.constant 0 : index
    %133 = vector.load %arg4[%c0_213, %c0_214, %c36, %c0_215, %c0_216] : memref<1x5x50x50x50xf32, #tpu.memory_space<vmem>>, vector<1x5x1x50x50xf32>
    %134 = vector.shape_cast %133 : vector<1x5x1x50x50xf32> to vector<5x50x50xf32>
    %135 = vector.shape_cast %2 : vector<5x50x50xf32> to vector<1x5x1x50x50xf32>
    tpu.vector_store %arg4[%c0_213, %c0_214, %c36, %c0_215, %c0_216], %135 {strides = array<i32>} : memref<1x5x50x50x50xf32, #tpu.memory_space<vmem>>, vector<1x5x1x50x50xf32>,
    %c0_217 = arith.constant 0 : index
    %c3_218 = arith.constant 3 : index
    %c2_219 = arith.constant 2 : index
    %c0_220 = arith.constant 0 : index
    %c0_221 = arith.constant 0 : index
    %c0_222 = arith.constant 0 : index
    %136 = vector.load %arg2[%c0_217, %c3_218, %c2_219, %c0_220, %c0_221, %c0_222] : memref<1x4x3x5x50x50xf32, #tpu.memory_space<vmem>>, vector<1x1x1x5x50x50xf32>
    %137 = vector.shape_cast %136 : vector<1x1x1x5x50x50xf32> to vector<5x50x50xf32>
    %c0_223 = arith.constant 0 : index
    %c0_224 = arith.constant 0 : index
    %c37 = arith.constant 37 : index
    %c0_225 = arith.constant 0 : index
    %c0_226 = arith.constant 0 : index
    %138 = vector.load %arg4[%c0_223, %c0_224, %c37, %c0_225, %c0_226] : memref<1x5x50x50x50xf32, #tpu.memory_space<vmem>>, vector<1x5x1x50x50xf32>
    %139 = vector.shape_cast %138 : vector<1x5x1x50x50xf32> to vector<5x50x50xf32>
    %140 = vector.shape_cast %137 : vector<5x50x50xf32> to vector<1x5x1x50x50xf32>
    tpu.vector_store %arg4[%c0_223, %c0_224, %c37, %c0_225, %c0_226], %140 {strides = array<i32>} : memref<1x5x50x50x50xf32, #tpu.memory_space<vmem>>, vector<1x5x1x50x50xf32>,
    %c0_227 = arith.constant 0 : index
    %c0_228 = arith.constant 0 : index
    %c38 = arith.constant 38 : index
    %c0_229 = arith.constant 0 : index
    %c0_230 = arith.constant 0 : index
    %141 = vector.load %arg4[%c0_227, %c0_228, %c38, %c0_229, %c0_230] : memref<1x5x50x50x50xf32, #tpu.memory_space<vmem>>, vector<1x5x1x50x50xf32>
    %142 = vector.shape_cast %141 : vector<1x5x1x50x50xf32> to vector<5x50x50xf32>
    %143 = vector.shape_cast %2 : vector<5x50x50xf32> to vector<1x5x1x50x50xf32>
    tpu.vector_store %arg4[%c0_227, %c0_228, %c38, %c0_229, %c0_230], %143 {strides = array<i32>} : memref<1x5x50x50x50xf32, #tpu.memory_space<vmem>>, vector<1x5x1x50x50xf32>,
    %c0_231 = arith.constant 0 : index
    %c0_232 = arith.constant 0 : index
    %c39 = arith.constant 39 : index
    %c0_233 = arith.constant 0 : index
    %c0_234 = arith.constant 0 : index
    %144 = vector.load %arg4[%c0_231, %c0_232, %c39, %c0_233, %c0_234] : memref<1x5x50x50x50xf32, #tpu.memory_space<vmem>>, vector<1x5x1x50x50xf32>
    %145 = vector.shape_cast %144 : vector<1x5x1x50x50xf32> to vector<5x50x50xf32>
    %146 = vector.shape_cast %2 : vector<5x50x50xf32> to vector<1x5x1x50x50xf32>
    tpu.vector_store %arg4[%c0_231, %c0_232, %c39, %c0_233, %c0_234], %146 {strides = array<i32>} : memref<1x5x50x50x50xf32, #tpu.memory_space<vmem>>, vector<1x5x1x50x50xf32>,
    %c0_235 = arith.constant 0 : index
    %c0_236 = arith.constant 0 : index
    %c40 = arith.constant 40 : index
    %c0_237 = arith.constant 0 : index
    %c0_238 = arith.constant 0 : index
    %147 = vector.load %arg4[%c0_235, %c0_236, %c40, %c0_237, %c0_238] : memref<1x5x50x50x50xf32, #tpu.memory_space<vmem>>, vector<1x5x1x50x50xf32>
    %148 = vector.shape_cast %147 : vector<1x5x1x50x50xf32> to vector<5x50x50xf32>
    %149 = vector.shape_cast %2 : vector<5x50x50xf32> to vector<1x5x1x50x50xf32>
    tpu.vector_store %arg4[%c0_235, %c0_236, %c40, %c0_237, %c0_238], %149 {strides = array<i32>} : memref<1x5x50x50x50xf32, #tpu.memory_space<vmem>>, vector<1x5x1x50x50xf32>,
    %c0_239 = arith.constant 0 : index
    %c0_240 = arith.constant 0 : index
    %c41 = arith.constant 41 : index
    %c0_241 = arith.constant 0 : index
    %c0_242 = arith.constant 0 : index
    %150 = vector.load %arg4[%c0_239, %c0_240, %c41, %c0_241, %c0_242] : memref<1x5x50x50x50xf32, #tpu.memory_space<vmem>>, vector<1x5x1x50x50xf32>
    %151 = vector.shape_cast %150 : vector<1x5x1x50x50xf32> to vector<5x50x50xf32>
    %152 = vector.shape_cast %2 : vector<5x50x50xf32> to vector<1x5x1x50x50xf32>
    tpu.vector_store %arg4[%c0_239, %c0_240, %c41, %c0_241, %c0_242], %152 {strides = array<i32>} : memref<1x5x50x50x50xf32, #tpu.memory_space<vmem>>, vector<1x5x1x50x50xf32>,
    %c0_243 = arith.constant 0 : index
    %c0_244 = arith.constant 0 : index
    %c42 = arith.constant 42 : index
    %c0_245 = arith.constant 0 : index
    %c0_246 = arith.constant 0 : index
    %153 = vector.load %arg4[%c0_243, %c0_244, %c42, %c0_245, %c0_246] : memref<1x5x50x50x50xf32, #tpu.memory_space<vmem>>, vector<1x5x1x50x50xf32>
    %154 = vector.shape_cast %153 : vector<1x5x1x50x50xf32> to vector<5x50x50xf32>
    %155 = vector.shape_cast %2 : vector<5x50x50xf32> to vector<1x5x1x50x50xf32>
    tpu.vector_store %arg4[%c0_243, %c0_244, %c42, %c0_245, %c0_246], %155 {strides = array<i32>} : memref<1x5x50x50x50xf32, #tpu.memory_space<vmem>>, vector<1x5x1x50x50xf32>,
    %c0_247 = arith.constant 0 : index
    %c0_248 = arith.constant 0 : index
    %c43 = arith.constant 43 : index
    %c0_249 = arith.constant 0 : index
    %c0_250 = arith.constant 0 : index
    %156 = vector.load %arg4[%c0_247, %c0_248, %c43, %c0_249, %c0_250] : memref<1x5x50x50x50xf32, #tpu.memory_space<vmem>>, vector<1x5x1x50x50xf32>
    %157 = vector.shape_cast %156 : vector<1x5x1x50x50xf32> to vector<5x50x50xf32>
    %158 = vector.shape_cast %2 : vector<5x50x50xf32> to vector<1x5x1x50x50xf32>
    tpu.vector_store %arg4[%c0_247, %c0_248, %c43, %c0_249, %c0_250], %158 {strides = array<i32>} : memref<1x5x50x50x50xf32, #tpu.memory_space<vmem>>, vector<1x5x1x50x50xf32>,
    %c0_251 = arith.constant 0 : index
    %c0_252 = arith.constant 0 : index
    %c44 = arith.constant 44 : index
    %c0_253 = arith.constant 0 : index
    %c0_254 = arith.constant 0 : index
    %159 = vector.load %arg4[%c0_251, %c0_252, %c44, %c0_253, %c0_254] : memref<1x5x50x50x50xf32, #tpu.memory_space<vmem>>, vector<1x5x1x50x50xf32>
    %160 = vector.shape_cast %159 : vector<1x5x1x50x50xf32> to vector<5x50x50xf32>
    %161 = vector.shape_cast %2 : vector<5x50x50xf32> to vector<1x5x1x50x50xf32>
    tpu.vector_store %arg4[%c0_251, %c0_252, %c44, %c0_253, %c0_254], %161 {strides = array<i32>} : memref<1x5x50x50x50xf32, #tpu.memory_space<vmem>>, vector<1x5x1x50x50xf32>,
    %c0_255 = arith.constant 0 : index
    %c0_256 = arith.constant 0 : index
    %c45 = arith.constant 45 : index
    %c0_257 = arith.constant 0 : index
    %c0_258 = arith.constant 0 : index
    %162 = vector.load %arg4[%c0_255, %c0_256, %c45, %c0_257, %c0_258] : memref<1x5x50x50x50xf32, #tpu.memory_space<vmem>>, vector<1x5x1x50x50xf32>
    %163 = vector.shape_cast %162 : vector<1x5x1x50x50xf32> to vector<5x50x50xf32>
    %164 = vector.shape_cast %2 : vector<5x50x50xf32> to vector<1x5x1x50x50xf32>
    tpu.vector_store %arg4[%c0_255, %c0_256, %c45, %c0_257, %c0_258], %164 {strides = array<i32>} : memref<1x5x50x50x50xf32, #tpu.memory_space<vmem>>, vector<1x5x1x50x50xf32>,
    %c0_259 = arith.constant 0 : index
    %c0_260 = arith.constant 0 : index
    %c46 = arith.constant 46 : index
    %c0_261 = arith.constant 0 : index
    %c0_262 = arith.constant 0 : index
    %165 = vector.load %arg4[%c0_259, %c0_260, %c46, %c0_261, %c0_262] : memref<1x5x50x50x50xf32, #tpu.memory_space<vmem>>, vector<1x5x1x50x50xf32>
    %166 = vector.shape_cast %165 : vector<1x5x1x50x50xf32> to vector<5x50x50xf32>
    %167 = vector.shape_cast %2 : vector<5x50x50xf32> to vector<1x5x1x50x50xf32>
    tpu.vector_store %arg4[%c0_259, %c0_260, %c46, %c0_261, %c0_262], %167 {strides = array<i32>} : memref<1x5x50x50x50xf32, #tpu.memory_space<vmem>>, vector<1x5x1x50x50xf32>,
    %c0_263 = arith.constant 0 : index
    %c0_264 = arith.constant 0 : index
    %c47 = arith.constant 47 : index
    %c0_265 = arith.constant 0 : index
    %c0_266 = arith.constant 0 : index
    %168 = vector.load %arg4[%c0_263, %c0_264, %c47, %c0_265, %c0_266] : memref<1x5x50x50x50xf32, #tpu.memory_space<vmem>>, vector<1x5x1x50x50xf32>
    %169 = vector.shape_cast %168 : vector<1x5x1x50x50xf32> to vector<5x50x50xf32>
    %170 = vector.shape_cast %2 : vector<5x50x50xf32> to vector<1x5x1x50x50xf32>
    tpu.vector_store %arg4[%c0_263, %c0_264, %c47, %c0_265, %c0_266], %170 {strides = array<i32>} : memref<1x5x50x50x50xf32, #tpu.memory_space<vmem>>, vector<1x5x1x50x50xf32>,
    %c0_267 = arith.constant 0 : index
    %c0_268 = arith.constant 0 : index
    %c48 = arith.constant 48 : index
    %c0_269 = arith.constant 0 : index
    %c0_270 = arith.constant 0 : index
    %171 = vector.load %arg4[%c0_267, %c0_268, %c48, %c0_269, %c0_270] : memref<1x5x50x50x50xf32, #tpu.memory_space<vmem>>, vector<1x5x1x50x50xf32>
    %172 = vector.shape_cast %171 : vector<1x5x1x50x50xf32> to vector<5x50x50xf32>
    %173 = vector.shape_cast %2 : vector<5x50x50xf32> to vector<1x5x1x50x50xf32>
    tpu.vector_store %arg4[%c0_267, %c0_268, %c48, %c0_269, %c0_270], %173 {strides = array<i32>} : memref<1x5x50x50x50xf32, #tpu.memory_space<vmem>>, vector<1x5x1x50x50xf32>,
    %c0_271 = arith.constant 0 : index
    %c0_272 = arith.constant 0 : index
    %c49 = arith.constant 49 : index
    %c0_273 = arith.constant 0 : index
    %c0_274 = arith.constant 0 : index
    %174 = vector.load %arg4[%c0_271, %c0_272, %c49, %c0_273, %c0_274] : memref<1x5x50x50x50xf32, #tpu.memory_space<vmem>>, vector<1x5x1x50x50xf32>
    %175 = vector.shape_cast %174 : vector<1x5x1x50x50xf32> to vector<5x50x50xf32>
    %176 = vector.shape_cast %2 : vector<5x50x50xf32> to vector<1x5x1x50x50xf32>
    tpu.vector_store %arg4[%c0_271, %c0_272, %c49, %c0_273, %c0_274], %176 {strides = array<i32>} : memref<1x5x50x50x50xf32, #tpu.memory_space<vmem>>, vector<1x5x1x50x50xf32>,
    return
  }
  func.func @transform_0(%arg0: i32, %arg1: i32) -> (i32, i32, i32, i32, i32, i32) {
    %c0_i32 = arith.constant 0 : i32
    %c0_i32_0 = arith.constant 0 : i32
    %c0_i32_1 = arith.constant 0 : i32
    %c0_i32_2 = arith.constant 0 : i32
    %c0_i32_3 = arith.constant 0 : i32
    return %arg0, %c0_i32, %c0_i32_0, %arg1, %c0_i32_1, %c0_i32_2 : i32, i32, i32, i32, i32, i32
  }
  func.func @transform_1(%arg0: i32, %arg1: i32) -> (i32, i32, i32) {
    %c0_i32 = arith.constant 0 : i32
    %c0_i32_0 = arith.constant 0 : i32
    %c0_i32_1 = arith.constant 0 : i32
    return %arg1, %c0_i32, %c0_i32_0 : i32, i32, i32
  }
  func.func @transform_2(%arg0: i32, %arg1: i32) -> (i32, i32, i32, i32, i32) {
    %c0_i32 = arith.constant 0 : i32
    %c0_i32_0 = arith.constant 0 : i32
    %c0_i32_1 = arith.constant 0 : i32
    %c0_i32_2 = arith.constant 0 : i32
    return %arg0, %arg1, %c0_i32, %c0_i32_0, %c0_i32_1 : i32, i32, i32, i32, i32
  }
}

</mosaic_0001>

<llo_original>
// kernel: tile.8
$region0: #{tile.8}
  #allocation2 [shape = 's32[1]{0}', space=sflag, size = 0x4, scoped, tag = 'scoped memory for tile.8']
  %s0 = inlined_call_operand.hbm [shape: f32[50], index: 0, kind: input, shape index: {}]
  %s1 = inlined_call_operand.vmem [shape: f32[27,50], index: 1, kind: output, shape index: {}]
  $region1: #{tile.8} parent=0
    #allocation0 [shape = 'u8[512]{0}', space=vmem, size = 0x400, scoped, tag = 'operand span for operand 0']
    #allocation1 [shape = 's32[1]{0}', space=sflag, size = 0x4, scoped, tag = 'scoped memory for tile.8']
    %2 = vsyncpa [#allocation1], 0
    // Predicated region
    $region2: #{tile.8} parent=1 // pred_check
      _
    $region3: #{tile.8} parent=1 // pred_check_branch
      %4 = sbr.rel (0) target = $region5
    $region4: #{tile.8} parent=1 // pred_region
      %s6 = ssub.s32 16, 16
      %7 = vsyncadd [#allocation1], %s6
      %s9 = sshll.u32 [#allocation0], 4
      %s10 = int_to_ptr.vmem [resolvable:$true] %s9
      %12 = dma.hbm_to_vmem [thread:$0]  %s0, 16, %s10, [#allocation1]
    $region5: #{tile.8} parent=1 // pred_fallthru
      _
    // Predicated region
    $region6: #{tile.8} parent=1 // pred_check
      _
    $region7: #{tile.8} parent=1 // pred_check_branch
      %14 = sbr.rel (0) target = $region9
    $region8: #{tile.8} parent=1 // pred_region
      %15 = dma.done [#allocation1], 16
    $region9: #{tile.8} parent=1 // pred_fallthru
      _
    %v16 = vld [vmem:[#allocation0] ss:$0 sm:$0xff]
    %17 = vst [vmem:[%s1] sm:$0xff] %v16
    %s18 = scalar_lea.vmem %s1, 8
    %19 = vst [vmem:[%s18] sm:$0xff] %v16
    %s20 = scalar_lea.vmem %s1, 16
    %21 = vst [vmem:[%s20] sm:$0xff] %v16
    %s22 = scalar_lea.vmem %s1, 24
    %23 = vst [vmem:[%s22] sm:$0xff] %v16
    %24 = vsyncpa [#allocation1], 1

// kernel: tile.9
$region0: #{tile.9}
  %s0 = inlined_call_operand.vmem [shape: f32[27,50], index: 0, kind: input, shape index: {}]
  %s1 = inlined_call_operand.vmem [shape: f32[1350], index: 1, kind: output, shape index: {}]
  %v2 = vld [vmem:[%s0] sm:$0x1]
  %vm3 = vcmask 408576
  %4 = vst.msk [vmem:[%s1] sm:$0x1] %vm3, %v2
  %s5 = scalar_lea.vmem %s0, 23
  %v6 = vld [vmem:[%s5] sm:$0x1]
  %s7 = scalar_lea.vmem %s0, 23
  %v8 = vld [vmem:[%s7] sm:$0x1]
  %vm9 = vcmask 15360
  %v10 = vsel %vm9, %v8, %v6
  %11 = vrot.lane.b32.xlu0 %v10, 126
  %v12 = vpop.permute.xlu0 %11
  %vm13 = vcmask 392192
  %s14 = scalar_lea.vmem %s1, 9
  %15 = vst.msk [vmem:[%s14] sm:$0x1] %vm13, %v12
  %vm16 = vcmask 1048560
  %s17 = scalar_lea.vmem %s1, 8
  %18 = vst.msk [vmem:[%s17] sm:$0x1] %vm16, %v12
  %s19 = scalar_lea.vmem %s0, 5
  %v20 = vld [vmem:[%s19] sm:$0x1]
  %s21 = scalar_lea.vmem %s0, 5
  %v22 = vld [vmem:[%s21] sm:$0x1]
  %vm23 = vcmask 48128
  %v24 = vsel %vm23, %v22, %v20
  %25 = vrot.lane.b32.xlu0 %v24, 122
  %v26 = vpop.permute.xlu0 %25
  %vm27 = vcmask 359424
  %s28 = scalar_lea.vmem %s1, 2
  %29 = vst.msk [vmem:[%s28] sm:$0x1] %vm27, %v26
  %vm30 = vcmask 1048528
  %s31 = scalar_lea.vmem %s1, 1
  %32 = vst.msk [vmem:[%s31] sm:$0x1] %vm30, %v26
  %s33 = scalar_lea.vmem %s0, 10
  %v34 = vld [vmem:[%s33] sm:$0x1]
  %s35 = scalar_lea.vmem %s0, 10
  %v36 = vld [vmem:[%s35] sm:$0x1]
  %vm37 = vcmask 97280
  %v38 = vsel %vm37, %v36, %v34
  %39 = vrot.lane.b32.xlu0 %v38, 116
  %v40 = vpop.permute.xlu0 %39
  %vm41 = vcmask 310272
  %s42 = scalar_lea.vmem %s1, 4
  %43 = vst.msk [vmem:[%s42] sm:$0x1] %vm41, %v40
  %vm44 = vcmask 1048480
  %s45 = scalar_lea.vmem %s1, 3
  %46 = vst.msk [vmem:[%s45] sm:$0x1] %vm44, %v40
  %s47 = scalar_lea.vmem %s0, 15
  %v48 = vld [vmem:[%s47] sm:$0x1]
  %s49 = scalar_lea.vmem %s0, 15
  %v50 = vld [vmem:[%s49] sm:$0x1]
  %vm51 = vcmask 146432
  %v52 = vsel %vm51, %v50, %v48
  %53 = vrot.lane.b32.xlu0 %v52, 110
  %v54 = vpop.permute.xlu0 %53
  %vm55 = vcmask 261120
  %s56 = scalar_lea.vmem %s1, 6
  %57 = vst.msk [vmem:[%s56] sm:$0x1] %vm55, %v54
  %vm58 = vcmask 1048432
  %s59 = scalar_lea.vmem %s1, 5
  %60 = vst.msk [vmem:[%s59] sm:$0x1] %vm58, %v54
  %s61 = scalar_lea.vmem %s0, 20
  %v62 = vld [vmem:[%s61] sm:$0x1]
  %s63 = scalar_lea.vmem %s0, 20
  %v64 = vld [vmem:[%s63] sm:$0x1]
  %vm65 = vcmask 195584
  %v66 = vsel %vm65, %v64, %v62
  %67 = vrot.lane.b32.xlu0 %v66, 104
  %v68 = vpop.permute.xlu0 %67
  %vm69 = vcmask 211968
  %s70 = scalar_lea.vmem %s1, 8
  %71 = vst.msk [vmem:[%s70] sm:$0x1] %vm69, %v68
  %vm72 = vcmask 1048384
  %s73 = scalar_lea.vmem %s1, 7
  %74 = vst.msk [vmem:[%s73] sm:$0x1] %vm72, %v68
  %s75 = scalar_lea.vmem %s0, 2
  %v76 = vld [vmem:[%s75] sm:$0x1]
  %s77 = scalar_lea.vmem %s0, 2
  %v78 = vld [vmem:[%s77] sm:$0x1]
  %vm79 = vcmask 228352
  %v80 = vsel %vm79, %v78, %v76
  %81 = vrot.lane.b32.xlu0 %v80, 100
  %v82 = vpop.permute.xlu0 %81
  %vm83 = vcmask 179200
  %s84 = scalar_lea.vmem %s1, 1
  %85 = vst.msk [vmem:[%s84] sm:$0x1] %vm83, %v82
  %vm86 = vcmask 1048352
  %87 = vst.msk [vmem:[%s1] sm:$0x1] %vm86, %v82
  %s88 = scalar_lea.vmem %s0, 25
  %v89 = vld [vmem:[%s88] sm:$0x1]
  %s90 = scalar_lea.vmem %s0, 25
  %v91 = vld [vmem:[%s90] sm:$0x1]
  %vm92 = vcmask 244736
  %v93 = vsel %vm92, %v91, %v89
  %94 = vrot.lane.b32.xlu0 %v93, 98
  %v95 = vpop.permute.xlu0 %94
  %vm96 = vcmask 162816
  %s97 = scalar_lea.vmem %s1, 10
  %98 = vst.msk [vmem:[%s97] sm:$0x1] %vm96, %v95
  %vm99 = vcmask 1048336
  %s100 = scalar_lea.vmem %s1, 9
  %101 = vst.msk [vmem:[%s100] sm:$0x1] %vm99, %v95
  %s102 = scalar_lea.vmem %s0, 7
  %v103 = vld [vmem:[%s102] sm:$0x1]
  %s104 = scalar_lea.vmem %s0, 7
  %v105 = vld [vmem:[%s104] sm:$0x1]
  %vm106 = vcmask 277504
  %v107 = vsel %vm106, %v105, %v103
  %108 = vrot.lane.b32.xlu0 %v107, 94
  %v109 = vpop.permute.xlu0 %108
  %vm110 = vcmask 130048
  %s111 = scalar_lea.vmem %s1, 3
  %112 = vst.msk [vmem:[%s111] sm:$0x1] %vm110, %v109
  %vm113 = vcmask 1048304
  %s114 = scalar_lea.vmem %s1, 2
  %115 = vst.msk [vmem:[%s114] sm:$0x1] %vm113, %v109
  %s116 = scalar_lea.vmem %s0, 12
  %v117 = vld [vmem:[%s116] sm:$0x1]
  %s118 = scalar_lea.vmem %s0, 12
  %v119 = vld [vmem:[%s118] sm:$0x1]
  %vm120 = vcmask 326656
  %v121 = vsel %vm120, %v119, %v117
  %122 = vrot.lane.b32.xlu0 %v121, 88
  %v123 = vpop.permute.xlu0 %122
  %vm124 = vcmask 80896
  %s125 = scalar_lea.vmem %s1, 5
  %126 = vst.msk [vmem:[%s125] sm:$0x1] %vm124, %v123
  %vm127 = vcmask 1048256
  %s128 = scalar_lea.vmem %s1, 4
  %129 = vst.msk [vmem:[%s128] sm:$0x1] %vm127, %v123
  %s130 = scalar_lea.vmem %s0, 17
  %v131 = vld [vmem:[%s130] sm:$0x1]
  %s132 = scalar_lea.vmem %s0, 17
  %v133 = vld [vmem:[%s132] sm:$0x1]
  %vm134 = vcmask 375808
  %v135 = vsel %vm134, %v133, %v131
  %136 = vrot.lane.b32.xlu0 %v135, 82
  %v137 = vpop.permute.xlu0 %136
  %vm138 = vcmask 31744
  %s139 = scalar_lea.vmem %s1, 7
  %140 = vst.msk [vmem:[%s139] sm:$0x1] %vm138, %v137
  %vm141 = vcmask 1048208
  %s142 = scalar_lea.vmem %s1, 6
  %143 = vst.msk [vmem:[%s142] sm:$0x1] %vm141, %v137
  %s144 = scalar_lea.vmem %s0, 22
  %v145 = vld [vmem:[%s144] sm:$0x1]
  %146 = vrot.lane.b32.xlu0 %v145, 76
  %v147 = vpop.permute.xlu0 %146
  %vm148 = vcmask 1031776
  %s149 = scalar_lea.vmem %s1, 8
  %150 = vst.msk [vmem:[%s149] sm:$0x1] %vm148, %v147
  %s151 = scalar_lea.vmem %s0, 4
  %v152 = vld [vmem:[%s151] sm:$0x1]
  %153 = vrot.lane.b32.xlu0 %v152, 72
  %v154 = vpop.permute.xlu0 %153
  %vm155 = vcmask 998976
  %s156 = scalar_lea.vmem %s1, 1
  %157 = vst.msk [vmem:[%s156] sm:$0x1] %vm155, %v154
  %s158 = scalar_lea.vmem %s0, 9
  %v159 = vld [vmem:[%s158] sm:$0x1]
  %160 = vrot.lane.b32.xlu0 %v159, 66
  %v161 = vpop.permute.xlu0 %160
  %vm162 = vcmask 949776
  %s163 = scalar_lea.vmem %s1, 3
  %164 = vst.msk [vmem:[%s163] sm:$0x1] %vm162, %v161
  %s165 = scalar_lea.vmem %s0, 14
  %v166 = vld [vmem:[%s165] sm:$0x1]
  %167 = vrot.lane.b32.xlu0 %v166, 60
  %v168 = vpop.permute.xlu0 %167
  %vm169 = vcmask 900576
  %s170 = scalar_lea.vmem %s1, 5
  %171 = vst.msk [vmem:[%s170] sm:$0x1] %vm169, %v168
  %s172 = scalar_lea.vmem %s0, 19
  %v173 = vld [vmem:[%s172] sm:$0x1]
  %174 = vrot.lane.b32.xlu0 %v173, 54
  %v175 = vpop.permute.xlu0 %174
  %vm176 = vcmask 851376
  %s177 = scalar_lea.vmem %s1, 7
  %178 = vst.msk [vmem:[%s177] sm:$0x1] %vm176, %v175
  %s179 = scalar_lea.vmem %s0, 1
  %v180 = vld [vmem:[%s179] sm:$0x1]
  %181 = vrot.lane.b32.xlu0 %v180, 50
  %v182 = vpop.permute.xlu0 %181
  %vm183 = vcmask 818576
  %184 = vst.msk [vmem:[%s1] sm:$0x1] %vm183, %v182
  %s185 = scalar_lea.vmem %s0, 24
  %v186 = vld [vmem:[%s185] sm:$0x1]
  %187 = vrot.lane.b32.xlu0 %v186, 48
  %v188 = vpop.permute.xlu0 %187
  %vm189 = vcmask 802176
  %s190 = scalar_lea.vmem %s1, 9
  %191 = vst.msk [vmem:[%s190] sm:$0x1] %vm189, %v188
  %s192 = scalar_lea.vmem %s0, 6
  %v193 = vld [vmem:[%s192] sm:$0x1]
  %194 = vrot.lane.b32.xlu0 %v193, 44
  %v195 = vpop.permute.xlu0 %194
  %vm196 = vcmask 769376
  %s197 = scalar_lea.vmem %s1, 2
  %198 = vst.msk [vmem:[%s197] sm:$0x1] %vm196, %v195
  %s199 = scalar_lea.vmem %s0, 11
  %v200 = vld [vmem:[%s199] sm:$0x1]
  %201 = vrot.lane.b32.xlu0 %v200, 38
  %v202 = vpop.permute.xlu0 %201
  %vm203 = vcmask 720176
  %s204 = scalar_lea.vmem %s1, 4
  %205 = vst.msk [vmem:[%s204] sm:$0x1] %vm203, %v202
  %s206 = scalar_lea.vmem %s0, 16
  %v207 = vld [vmem:[%s206] sm:$0x1]
  %208 = vrot.lane.b32.xlu0 %v207, 32
  %v209 = vpop.permute.xlu0 %208
  %vm210 = vcmask 670976
  %s211 = scalar_lea.vmem %s1, 6
  %212 = vst.msk [vmem:[%s211] sm:$0x1] %vm210, %v209
  %s213 = scalar_lea.vmem %s0, 21
  %v214 = vld [vmem:[%s213] sm:$0x1]
  %215 = vrot.lane.b32.xlu0 %v214, 26
  %v216 = vpop.permute.xlu0 %215
  %vm217 = vcmask 621776
  %s218 = scalar_lea.vmem %s1, 8
  %219 = vst.msk [vmem:[%s218] sm:$0x1] %vm217, %v216
  %s220 = scalar_lea.vmem %s0, 3
  %v221 = vld [vmem:[%s220] sm:$0x1]
  %222 = vrot.lane.b32.xlu0 %v221, 22
  %v223 = vpop.permute.xlu0 %222
  %vm224 = vcmask 588976
  %s225 = scalar_lea.vmem %s1, 1
  %226 = vst.msk [vmem:[%s225] sm:$0x1] %vm224, %v223
  %s227 = scalar_lea.vmem %s0, 26
  %v228 = vld [vmem:[%s227] sm:$0x1]
  %229 = vrot.lane.b32.xlu0 %v228, 20
  %v230 = vpop.permute.xlu0 %229
  %vm231 = vcmask 572576
  %s232 = scalar_lea.vmem %s1, 10
  %233 = vst.msk [vmem:[%s232] sm:$0x1] %vm231, %v230
  %s234 = scalar_lea.vmem %s0, 8
  %v235 = vld [vmem:[%s234] sm:$0x1]
  %236 = vrot.lane.b32.xlu0 %v235, 16
  %v237 = vpop.permute.xlu0 %236
  %vm238 = vcmask 539776
  %s239 = scalar_lea.vmem %s1, 3
  %240 = vst.msk [vmem:[%s239] sm:$0x1] %vm238, %v237
  %s241 = scalar_lea.vmem %s0, 13
  %v242 = vld [vmem:[%s241] sm:$0x1]
  %243 = vrot.lane.b32.xlu0 %v242, 10
  %v244 = vpop.permute.xlu0 %243
  %vm245 = vcmask 490576
  %s246 = scalar_lea.vmem %s1, 5
  %247 = vst.msk [vmem:[%s246] sm:$0x1] %vm245, %v244
  %s248 = scalar_lea.vmem %s0, 18
  %v249 = vld [vmem:[%s248] sm:$0x1]
  %250 = vrot.lane.b32.xlu0 %v249, 4
  %v251 = vpop.permute.xlu0 %250
  %vm252 = vcmask 441376
  %s253 = scalar_lea.vmem %s1, 7
  %254 = vst.msk [vmem:[%s253] sm:$0x1] %vm252, %v251

// kernel: conv_transpose3d_tanh.2
$region0: #{conv_transpose3d_tanh.2}
  #allocation0 [shape = 'u32[]', space=smem, size = 0x4, offset = 0x4, fixed_abs, tag = 'smem constant byte address 0x4 - core index']
  #allocation1 [shape = 'u32[144,128]{1,0:T(1,128)}', space=vmem, size = 0x12000, scoped, tag = 'internal scratch']
  %s0 = inlined_call_operand.vmem [shape: f32[64,50], index: 0, kind: input, shape index: {}]
  %s1 = inlined_call_operand.vmem [shape: f32[50,1408], index: 1, kind: input, shape index: {}]
  %s2 = inlined_call_operand.vmem [shape: f32[1,1408], index: 2, kind: input, shape index: {}]
  %s3 = inlined_call_operand.vmem [shape: f32[64,1408], index: 3, kind: output, shape index: {}]
  %s4 = sld [smem:[#allocation0]]
  $region22: #{conv_transpose3d_tanh.2} parent=0
    _
  %s6 = ssub.s32 1, %s4
  %s7 = scalar_select 0, %s6, %s4
  // Predicated region
  $region2: #{conv_transpose3d_tanh.2} parent=0 // pred_check
    _
  $region3: #{conv_transpose3d_tanh.2} parent=0 // pred_check_branch
    %9 = sbr.rel (0) target = $region5
  $region4: #{conv_transpose3d_tanh.2} parent=0 // pred_region
    _
  $region5: #{conv_transpose3d_tanh.2} parent=0 // pred_fallthru
    _
  // Predicated region
  $region6: #{conv_transpose3d_tanh.2} parent=0 // pred_check
    _
  $region7: #{conv_transpose3d_tanh.2} parent=0 // pred_check_branch
    %11 = sbr.rel (0) target = $region9
  $region8: #{conv_transpose3d_tanh.2} parent=0 // pred_region
    _
  $region9: #{conv_transpose3d_tanh.2} parent=0 // pred_fallthru
    _
  // Predicated region
  $region10: #{conv_transpose3d_tanh.2} parent=0 // pred_check
    _
  $region11: #{conv_transpose3d_tanh.2} parent=0 // pred_check_branch
    %13 = sbr.rel (0) target = $region13
  $region12: #{conv_transpose3d_tanh.2} parent=0 // pred_region
    _
  $region13: #{conv_transpose3d_tanh.2} parent=0 // pred_fallthru
    _
  %v14 = vld [vmem:[%s0] sm:$0xff]
  %v15 = vld [vmem:[%s0 + $0x8] sm:$0xff]
  %v16 = vld [vmem:[%s0 + $0x10] sm:$0xff]
  %v17 = vld [vmem:[%s0 + $0x18] sm:$0xff]
  %v18 = vld [vmem:[%s0 + $0x20] sm:$0xff]
  %v19 = vld [vmem:[%s0 + $0x28] sm:$0xff]
  %v20 = vld [vmem:[%s0 + $0x30] sm:$0xff]
  %v21 = vld [vmem:[%s0 + $0x38] sm:$0xff]
  %v22 = vld [vmem:[%s1] sm:$0xff]
  %v23 = vld [vmem:[%s1 + $0x8] sm:$0xff]
  %v24 = vld [vmem:[%s1 + $0x10] sm:$0xff]
  %v25 = vld [vmem:[%s1 + $0x18] sm:$0xff]
  %v26 = vld [vmem:[%s1 + $0x20] sm:$0xff]
  %v27 = vld [vmem:[%s1 + $0x28] sm:$0xff]
  %v28 = vld [vmem:[%s1 + $0x30] sm:$0xff]
  %v29 = vld [vmem:[%s1 + $0x38] sm:$0xff]
  %v30 = vld [vmem:[%s1 + $0x40] sm:$0xff]
  %v31 = vld [vmem:[%s1 + $0x48] sm:$0xff]
  %v32 = vld [vmem:[%s1 + $0x50] sm:$0xff]
  %v33 = vld [vmem:[%s1 + $0x58] sm:$0xff]
  %v34 = vld [vmem:[%s1 + $0x60] sm:$0xff]
  %v35 = vld [vmem:[%s1 + $0x68] sm:$0xff]
  %v36 = vld [vmem:[%s1 + $0x70] sm:$0xff]
  %v37 = vld [vmem:[%s1 + $0x78] sm:$0xff]
  %v38 = vld [vmem:[%s1 + $0x80] sm:$0xff]
  %v39 = vld [vmem:[%s1 + $0x88] sm:$0xff]
  %v40 = vld [vmem:[%s1 + $0x90] sm:$0xff]
  %v41 = vld [vmem:[%s1 + $0x98] sm:$0xff]
  %v42 = vld [vmem:[%s1 + $0xa0] sm:$0xff]
  %v43 = vld [vmem:[%s1 + $0xa8] sm:$0xff]
  %v44 = vld [vmem:[%s1 + $0xb0] sm:$0xff]
  %v45 = vld [vmem:[%s1 + $0xb8] sm:$0xff]
  %v46 = vld [vmem:[%s1 + $0xc0] sm:$0xff]
  %v47 = vld [vmem:[%s1 + $0xc8] sm:$0xff]
  %v48 = vld [vmem:[%s1 + $0xd0] sm:$0xff]
  %v49 = vld [vmem:[%s1 + $0xd8] sm:$0xff]
  %v50 = vld [vmem:[%s1 + $0xe0] sm:$0xff]
  %v51 = vld [vmem:[%s1 + $0xe8] sm:$0xff]
  %v52 = vld [vmem:[%s1 + $0xf0] sm:$0xff]
  %v53 = vld [vmem:[%s1 + $0xf8] sm:$0xff]
  %v54 = vld [vmem:[%s1 + $0x100] sm:$0xff]
  %v55 = vld [vmem:[%s1 + $0x108] sm:$0xff]
  %v56 = vld [vmem:[%s1 + $0x110] sm:$0xff]
  %v57 = vld [vmem:[%s1 + $0x118] sm:$0xff]
  %v58 = vld [vmem:[%s1 + $0x120] sm:$0xff]
  %v59 = vld [vmem:[%s1 + $0x128] sm:$0xff]
  %v60 = vld [vmem:[%s1 + $0x130] sm:$0xff]
  %v61 = vld [vmem:[%s1 + $0x138] sm:$0xff]
  %v62 = vld [vmem:[%s1 + $0x140] sm:$0xff]
  %v63 = vld [vmem:[%s1 + $0x148] sm:$0xff]
  %v64 = vld [vmem:[%s1 + $0x150] sm:$0xff]
  %v65 = vld [vmem:[%s1 + $0x158] sm:$0xff]
  %v66 = vld [vmem:[%s1 + $0x160] sm:$0xff]
  %v67 = vld [vmem:[%s1 + $0x168] sm:$0xff]
  %v68 = vld [vmem:[%s1 + $0x170] sm:$0xff]
  %v69 = vld [vmem:[%s1 + $0x178] sm:$0xff]
  %v70 = vld [vmem:[%s1 + $0x180] sm:$0xff]
  %v71 = vld [vmem:[%s1 + $0x188] sm:$0xff]
  %v72 = vld [vmem:[%s1 + $0x190] sm:$0xff]
  %v73 = vld [vmem:[%s1 + $0x198] sm:$0xff]
  %v74 = vld [vmem:[%s1 + $0x1a0] sm:$0xff]
  %v75 = vld [vmem:[%s1 + $0x1a8] sm:$0xff]
  %v76 = vld [vmem:[%s1 + $0x1b0] sm:$0xff]
  %v77 = vld [vmem:[%s1 + $0x1b8] sm:$0xff]
  %v78 = vld [vmem:[%s1 + $0x1c0] sm:$0xff]
  %v79 = vld [vmem:[%s1 + $0x1c8] sm:$0xff]
  %v80 = vld [vmem:[%s1 + $0x1d0] sm:$0xff]
  %v81 = vld [vmem:[%s1 + $0x1d8] sm:$0xff]
  %v82 = vld [vmem:[%s1 + $0x1e0] sm:$0xff]
  %v83 = vld [vmem:[%s1 + $0x1e8] sm:$0xff]
  %v84 = vld [vmem:[%s1 + $0x1f0] sm:$0xff]
  %v85 = vld [vmem:[%s1 + $0x1f8] sm:$0xff]
  %v86 = vld [vmem:[%s1 + $0x200] sm:$0xff]
  %v87 = vld [vmem:[%s1 + $0x208] sm:$0xff]
  %v88 = vld [vmem:[%s1 + $0x210] sm:$0x3]
  %v89 = vld [vmem:[%s1 + $0x218] sm:$0x3]
  %v90 = vld [vmem:[%s1 + $0x220] sm:$0x3]
  %v91 = vld [vmem:[%s1 + $0x228] sm:$0x3]
  %v92 = vld [vmem:[%s1 + $0x230] sm:$0x3]
  %v93 = vld [vmem:[%s1 + $0x238] sm:$0x3]
  %v94 = vld [vmem:[%s1 + $0x240] sm:$0x3]
  %v95 = vld [vmem:[%s1 + $0x248] sm:$0x3]
  %v96 = vld [vmem:[%s1 + $0x250] sm:$0x3]
  %v97 = vld [vmem:[%s1 + $0x258] sm:$0x3]
  %v98 = vld [vmem:[%s1 + $0x260] sm:$0x3]
  %v99 = vld [vmem:[%s2] sm:$0xff]
  %v100 = vld [vmem:[%s2 + $0x8] sm:$0x7]
  %v103 = vlaneseq
  %v104 = vshrl.u32 %v103, 7
  %v105 = vsub.s32 0, %v104
  %v106 = vrot.slane %v99, %v105
  %v107 = vlaneseq
  %v108 = vshrl.u32 %v107, 7
  %v109 = vsub.s32 1, %v108
  %v110 = vrot.slane %v99, %v109
  %v111 = vlaneseq
  %v112 = vshrl.u32 %v111, 7
  %v113 = vsub.s32 2, %v112
  %v114 = vrot.slane %v99, %v113
  %v115 = vlaneseq
  %v116 = vshrl.u32 %v115, 7
  %v117 = vsub.s32 3, %v116
  %v118 = vrot.slane %v99, %v117
  %v119 = vlaneseq
  %v120 = vshrl.u32 %v119, 7
  %v121 = vsub.s32 4, %v120
  %v122 = vrot.slane %v99, %v121
  %v123 = vlaneseq
  %v124 = vshrl.u32 %v123, 7
  %v125 = vsub.s32 5, %v124
  %v126 = vrot.slane %v99, %v125
  %v127 = vlaneseq
  %v128 = vshrl.u32 %v127, 7
  %v129 = vsub.s32 6, %v128
  %v130 = vrot.slane %v99, %v129
  %v131 = vlaneseq
  %v132 = vshrl.u32 %v131, 7
  %v133 = vsub.s32 7, %v132
  %v134 = vrot.slane %v99, %v133
  %v135 = vlaneseq
  %v136 = vshrl.u32 %v135, 7
  %v137 = vsub.s32 0, %v136
  %v138 = vrot.slane %v100, %v137
  %v139 = vlaneseq
  %v140 = vshrl.u32 %v139, 7
  %v141 = vsub.s32 1, %v140
  %v142 = vrot.slane %v100, %v141
  %v143 = vlaneseq
  %v144 = vshrl.u32 %v143, 7
  %v145 = vsub.s32 2, %v144
  %v146 = vrot.slane %v100, %v145
  %vm158 = vcmask 408576
  %v160 = vsel %vm158, %v14, 0
  %v163 = vsel %vm158, %v15, 0
  %v166 = vsel %vm158, %v16, 0
  %v169 = vsel %vm158, %v17, 0
  %v172 = vsel %vm158, %v18, 0
  %v175 = vsel %vm158, %v19, 0
  %v178 = vsel %vm158, %v20, 0
  %v181 = vsel %vm158, %v21, 0
  %vm183 = vcmask 1041408
  %v185 = vsel %vm183, %v88, 0
  %v188 = vsel %vm183, %v89, 0
  %v191 = vsel %vm183, %v90, 0
  %v194 = vsel %vm183, %v91, 0
  %v197 = vsel %vm183, %v92, 0
  %v200 = vsel %vm183, %v93, 0
  %v203 = vsel %vm183, %v94, 0
  %v206 = vsel %vm183, %v95, 0
  %v209 = vsel %vm183, %v96, 0
  %v212 = vsel %vm183, %v97, 0
  %v215 = vsel %vm183, %v98, 0
  %217 = vmatprep.subr.mxu0 %v23
  %218 = vmatpush1.msra.mxu0 %v22
  %219 = vmatprep.subr.mxu0 %v34
  %220 = vmatpush1.msra.mxu0 %v33
  %221 = vmatprep.subr.mxu0 %v45
  %222 = vmatpush1.msra.mxu0 %v44
  %223 = vmatprep.subr.mxu0 %v56
  %224 = vmatpush1.msra.mxu0 %v55
  %225 = vmatprep.subr.mxu0 %v67
  %226 = vmatpush1.msra.mxu0 %v66
  %227 = vmatprep.subr.mxu0 %v78
  %228 = vmatpush1.msra.mxu0 %v77
  %229 = vmatprep.subr.mxu0 %v188
  %230 = vmatpush1.msra.mxu0 %v185
  %231 = vmatprep.subr.mxu0 0.0
  %232 = vmatpush1.msra.mxu0 0.0
  %233 = vmatprep.subr.mxu0 0.0
  %234 = vmatpush1.msra.mxu0 0.0
  %235 = vmatprep.subr.mxu0 0.0
  %236 = vmatpush1.msra.mxu0 0.0
  %237 = vmatprep.subr.mxu0 0.0
  %238 = vmatpush1.msra.mxu0 0.0
  %239 = vmatprep.subr.mxu0 0.0
  %240 = vmatpush1.msra.mxu0 0.0
  %241 = vmatprep.subr.mxu0 0.0
  %242 = vmatpush1.msra.mxu0 0.0
  %243 = vmatprep.subr.mxu0 0.0
  %244 = vmatpush1.msra.mxu0 0.0
  %245 = vmatprep.subr.mxu0 0.0
  %246 = vmatpush1.msra.mxu0 0.0
  %247 = vmatprep.subr.mxu0 0.0
  %248 = vmatpush1.msra.mxu0 0.0
  %249 = vmatprep.subr.mxu0 0.0
  %250 = vmatpush1.msra.mxu0 0.0
  %251 = vmatprep.subr.mxu0 0.0
  %252 = vmatpush1.msra.mxu0 0.0
  %253 = vmatprep.subr.mxu0 0.0
  %254 = vmatpush1.msra.mxu0 0.0
  %255 = vmatprep.subr.mxu0 0.0
  %256 = vmatpush1.msra.mxu0 0.0
  %257 = vmatprep.subr.mxu0 0.0
  %258 = vmatpush1.msra.mxu0 0.0
  %259 = vmatprep.subr.mxu0 0.0
  %260 = vmatpush1.msra.mxu0 0.0
  %261 = vmatprep.subr.mxu0 0.0
  %262 = vmatpush1.msra.mxu0 0.0
  %263 = vmatprep.subr.mxu0 0.0
  %264 = vmatpush1.msra.mxu0 0.0
  %265 = vmatprep.subr.mxu0 0.0
  %266 = vmatpush1.msra.mxu0 0.0
  %267 = vmatprep.subr.mxu0 0.0
  %268 = vmatpush1.msra.mxu0 0.0
  %269 = vmatprep.subr.mxu0 0.0
  %270 = vmatpush1.msra.mxu0 0.0
  %271 = vmatprep.subr.mxu0 0.0
  %272 = vmatpush1.msra.mxu0 0.0
  %273 = vmatprep.subr.mxu0 0.0
  %274 = vmatpush1.msra.mxu0 0.0
  %275 = vmatprep.subr.mxu0 0.0
  %276 = vmatpush1.msra.mxu0 0.0
  %277 = vmatprep.subr.mxu0 0.0
  %278 = vmatpush1.msra.mxu0 0.0
  %279 = vmatprep.subr.mxu0 0.0
  %280 = vmatpush1.msra.mxu0 0.0
  %281 = vmatprep.mubr.f32.mxu0 0.0
  %282 = vmatmul.mubr.f32.gmra.mrb[0].mxu0 %v160
  %v283 = vpop.f32.mrb[0].mxu0
  %v284 = vadd.f32 %v106, %v283
  %v285 = vpop.f32.mrb[0].mxu0
  %v286 = vadd.f32 %v110, %v285
  %287 = vmatprep.mubr.f32.mxu0 0.0
  %288 = vmatmul.mubr.f32.gmra.mrb[0].mxu0 %v163
  %v289 = vpop.f32.mrb[0].mxu0
  %v290 = vadd.f32 %v106, %v289
  %v291 = vpop.f32.mrb[0].mxu0
  %v292 = vadd.f32 %v110, %v291
  %293 = vmatprep.mubr.f32.mxu0 0.0
  %294 = vmatmul.mubr.f32.gmra.mrb[0].mxu0 %v166
  %v295 = vpop.f32.mrb[0].mxu0
  %v296 = vadd.f32 %v106, %v295
  %v297 = vpop.f32.mrb[0].mxu0
  %v298 = vadd.f32 %v110, %v297
  %299 = vmatprep.mubr.f32.mxu0 0.0
  %300 = vmatmul.mubr.f32.gmra.mrb[0].mxu0 %v169
  %v301 = vpop.f32.mrb[0].mxu0
  %v302 = vadd.f32 %v106, %v301
  %v303 = vpop.f32.mrb[0].mxu0
  %v304 = vadd.f32 %v110, %v303
  %305 = vmatprep.mubr.f32.mxu0 0.0
  %306 = vmatmul.mubr.f32.gmra.mrb[0].mxu0 %v172
  %v307 = vpop.f32.mrb[0].mxu0
  %v308 = vadd.f32 %v106, %v307
  %v309 = vpop.f32.mrb[0].mxu0
  %v310 = vadd.f32 %v110, %v309
  %311 = vmatprep.mubr.f32.mxu0 0.0
  %312 = vmatmul.mubr.f32.gmra.mrb[0].mxu0 %v175
  %v313 = vpop.f32.mrb[0].mxu0
  %v314 = vadd.f32 %v106, %v313
  %v315 = vpop.f32.mrb[0].mxu0
  %v316 = vadd.f32 %v110, %v315
  %317 = vmatprep.mubr.f32.mxu0 0.0
  %318 = vmatmul.mubr.f32.gmra.mrb[0].mxu0 %v178
  %v319 = vpop.f32.mrb[0].mxu0
  %v320 = vadd.f32 %v106, %v319
  %v321 = vpop.f32.mrb[0].mxu0
  %v322 = vadd.f32 %v110, %v321
  %323 = vmatprep.mubr.f32.mxu0 0.0
  %324 = vmatmul.mubr.f32.gmra.mrb[0].mxu0 %v181
  %v325 = vpop.f32.mrb[0].mxu0
  %v326 = vadd.f32 %v106, %v325
  %v327 = vpop.f32.mrb[0].mxu0
  %v328 = vadd.f32 %v110, %v327
  %329 = vdwg.mxu0
  %330 = vmatprep.subr.mxu0 %v25
  %331 = vmatpush1.msra.mxu0 %v24
  %332 = vmatprep.subr.mxu0 %v36
  %333 = vmatpush1.msra.mxu0 %v35
  %334 = vmatprep.subr.mxu0 %v47
  %335 = vmatpush1.msra.mxu0 %v46
  %336 = vmatprep.subr.mxu0 %v58
  %337 = vmatpush1.msra.mxu0 %v57
  %338 = vmatprep.subr.mxu0 %v69
  %339 = vmatpush1.msra.mxu0 %v68
  %340 = vmatprep.subr.mxu0 %v80
  %341 = vmatpush1.msra.mxu0 %v79
  %342 = vmatprep.subr.mxu0 %v194
  %343 = vmatpush1.msra.mxu0 %v191
  %344 = vmatprep.subr.mxu0 0.0
  %345 = vmatpush1.msra.mxu0 0.0
  %346 = vmatprep.subr.mxu0 0.0
  %347 = vmatpush1.msra.mxu0 0.0
  %348 = vmatprep.subr.mxu0 0.0
  %349 = vmatpush1.msra.mxu0 0.0
  %350 = vmatprep.subr.mxu0 0.0
  %351 = vmatpush1.msra.mxu0 0.0
  %352 = vmatprep.subr.mxu0 0.0
  %353 = vmatpush1.msra.mxu0 0.0
  %354 = vmatprep.subr.mxu0 0.0
  %355 = vmatpush1.msra.mxu0 0.0
  %356 = vmatprep.subr.mxu0 0.0
  %357 = vmatpush1.msra.mxu0 0.0
  %358 = vmatprep.subr.mxu0 0.0
  %359 = vmatpush1.msra.mxu0 0.0
  %360 = vmatprep.subr.mxu0 0.0
  %361 = vmatpush1.msra.mxu0 0.0
  %362 = vmatprep.subr.mxu0 0.0
  %363 = vmatpush1.msra.mxu0 0.0
  %364 = vmatprep.subr.mxu0 0.0
  %365 = vmatpush1.msra.mxu0 0.0
  %366 = vmatprep.subr.mxu0 0.0
  %367 = vmatpush1.msra.mxu0 0.0
  %368 = vmatprep.subr.mxu0 0.0
  %369 = vmatpush1.msra.mxu0 0.0
  %370 = vmatprep.subr.mxu0 0.0
  %371 = vmatpush1.msra.mxu0 0.0
  %372 = vmatprep.subr.mxu0 0.0
  %373 = vmatpush1.msra.mxu0 0.0
  %374 = vmatprep.subr.mxu0 0.0
  %375 = vmatpush1.msra.mxu0 0.0
  %376 = vmatprep.subr.mxu0 0.0
  %377 = vmatpush1.msra.mxu0 0.0
  %378 = vmatprep.subr.mxu0 0.0
  %379 = vmatpush1.msra.mxu0 0.0
  %380 = vmatprep.subr.mxu0 0.0
  %381 = vmatpush1.msra.mxu0 0.0
  %382 = vmatprep.subr.mxu0 0.0
  %383 = vmatpush1.msra.mxu0 0.0
  %384 = vmatprep.subr.mxu0 0.0
  %385 = vmatpush1.msra.mxu0 0.0
  %386 = vmatprep.subr.mxu0 0.0
  %387 = vmatpush1.msra.mxu0 0.0
  %388 = vmatprep.subr.mxu0 0.0
  %389 = vmatpush1.msra.mxu0 0.0
  %390 = vmatprep.subr.mxu0 0.0
  %391 = vmatpush1.msra.mxu0 0.0
  %392 = vmatprep.subr.mxu0 0.0
  %393 = vmatpush1.msra.mxu0 0.0
  %394 = vmatprep.mubr.f32.mxu0 0.0
  %395 = vmatmul.mubr.f32.gmra.mrb[0].mxu0 %v160
  %v396 = vpop.f32.mrb[0].mxu0
  %v397 = vadd.f32 %v114, %v396
  %v398 = vpop.f32.mrb[0].mxu0
  %v399 = vadd.f32 %v118, %v398
  %400 = vmatprep.mubr.f32.mxu0 0.0
  %401 = vmatmul.mubr.f32.gmra.mrb[0].mxu0 %v163
  %v402 = vpop.f32.mrb[0].mxu0
  %v403 = vadd.f32 %v114, %v402
  %v404 = vpop.f32.mrb[0].mxu0
  %v405 = vadd.f32 %v118, %v404
  %406 = vmatprep.mubr.f32.mxu0 0.0
  %407 = vmatmul.mubr.f32.gmra.mrb[0].mxu0 %v166
  %v408 = vpop.f32.mrb[0].mxu0
  %v409 = vadd.f32 %v114, %v408
  %v410 = vpop.f32.mrb[0].mxu0
  %v411 = vadd.f32 %v118, %v410
  %412 = vmatprep.mubr.f32.mxu0 0.0
  %413 = vmatmul.mubr.f32.gmra.mrb[0].mxu0 %v169
  %v414 = vpop.f32.mrb[0].mxu0
  %v415 = vadd.f32 %v114, %v414
  %v416 = vpop.f32.mrb[0].mxu0
  %v417 = vadd.f32 %v118, %v416
  %418 = vmatprep.mubr.f32.mxu0 0.0
  %419 = vmatmul.mubr.f32.gmra.mrb[0].mxu0 %v172
  %v420 = vpop.f32.mrb[0].mxu0
  %v421 = vadd.f32 %v114, %v420
  %v422 = vpop.f32.mrb[0].mxu0
  %v423 = vadd.f32 %v118, %v422
  %424 = vmatprep.mubr.f32.mxu0 0.0
  %425 = vmatmul.mubr.f32.gmra.mrb[0].mxu0 %v175
  %v426 = vpop.f32.mrb[0].mxu0
  %v427 = vadd.f32 %v114, %v426
  %v428 = vpop.f32.mrb[0].mxu0
  %v429 = vadd.f32 %v118, %v428
  %430 = vmatprep.mubr.f32.mxu0 0.0
  %431 = vmatmul.mubr.f32.gmra.mrb[0].mxu0 %v178
  %v432 = vpop.f32.mrb[0].mxu0
  %v433 = vadd.f32 %v114, %v432
  %v434 = vpop.f32.mrb[0].mxu0
  %v435 = vadd.f32 %v118, %v434
  %436 = vmatprep.mubr.f32.mxu0 0.0
  %437 = vmatmul.mubr.f32.gmra.mrb[0].mxu0 %v181
  %v438 = vpop.f32.mrb[0].mxu0
  %v439 = vadd.f32 %v114, %v438
  %v440 = vpop.f32.mrb[0].mxu0
  %v441 = vadd.f32 %v118, %v440
  %442 = vdwg.mxu0
  %443 = vmatprep.subr.mxu0 %v27
  %444 = vmatpush1.msra.mxu0 %v26
  %445 = vmatprep.subr.mxu0 %v38
  %446 = vmatpush1.msra.mxu0 %v37
  %447 = vmatprep.subr.mxu0 %v49
  %448 = vmatpush1.msra.mxu0 %v48
  %449 = vmatprep.subr.mxu0 %v60
  %450 = vmatpush1.msra.mxu0 %v59
  %451 = vmatprep.subr.mxu0 %v71
  %452 = vmatpush1.msra.mxu0 %v70
  %453 = vmatprep.subr.mxu0 %v82
  %454 = vmatpush1.msra.mxu0 %v81
  %455 = vmatprep.subr.mxu0 %v200
  %456 = vmatpush1.msra.mxu0 %v197
  %457 = vmatprep.subr.mxu0 0.0
  %458 = vmatpush1.msra.mxu0 0.0
  %459 = vmatprep.subr.mxu0 0.0
  %460 = vmatpush1.msra.mxu0 0.0
  %461 = vmatprep.subr.mxu0 0.0
  %462 = vmatpush1.msra.mxu0 0.0
  %463 = vmatprep.subr.mxu0 0.0
  %464 = vmatpush1.msra.mxu0 0.0
  %465 = vmatprep.subr.mxu0 0.0
  %466 = vmatpush1.msra.mxu0 0.0
  %467 = vmatprep.subr.mxu0 0.0
  %468 = vmatpush1.msra.mxu0 0.0
  %469 = vmatprep.subr.mxu0 0.0
  %470 = vmatpush1.msra.mxu0 0.0
  %471 = vmatprep.subr.mxu0 0.0
  %472 = vmatpush1.msra.mxu0 0.0
  %473 = vmatprep.subr.mxu0 0.0
  %474 = vmatpush1.msra.mxu0 0.0
  %475 = vmatprep.subr.mxu0 0.0
  %476 = vmatpush1.msra.mxu0 0.0
  %477 = vmatprep.subr.mxu0 0.0
  %478 = vmatpush1.msra.mxu0 0.0
  %479 = vmatprep.subr.mxu0 0.0
  %480 = vmatpush1.msra.mxu0 0.0
  %481 = vmatprep.subr.mxu0 0.0
  %482 = vmatpush1.msra.mxu0 0.0
  %483 = vmatprep.subr.mxu0 0.0
  %484 = vmatpush1.msra.mxu0 0.0
  %485 = vmatprep.subr.mxu0 0.0
  %486 = vmatpush1.msra.mxu0 0.0
  %487 = vmatprep.subr.mxu0 0.0
  %488 = vmatpush1.msra.mxu0 0.0
  %489 = vmatprep.subr.mxu0 0.0
  %490 = vmatpush1.msra.mxu0 0.0
  %491 = vmatprep.subr.mxu0 0.0
  %492 = vmatpush1.msra.mxu0 0.0
  %493 = vmatprep.subr.mxu0 0.0
  %494 = vmatpush1.msra.mxu0 0.0
  %495 = vmatprep.subr.mxu0 0.0
  %496 = vmatpush1.msra.mxu0 0.0
  %497 = vmatprep.subr.mxu0 0.0
  %498 = vmatpush1.msra.mxu0 0.0
  %499 = vmatprep.subr.mxu0 0.0
  %500 = vmatpush1.msra.mxu0 0.0
  %501 = vmatprep.subr.mxu0 0.0
  %502 = vmatpush1.msra.mxu0 0.0
  %503 = vmatprep.subr.mxu0 0.0
  %504 = vmatpush1.msra.mxu0 0.0
  %505 = vmatprep.subr.mxu0 0.0
  %506 = vmatpush1.msra.mxu0 0.0
  %507 = vmatprep.mubr.f32.mxu0 0.0
  %508 = vmatmul.mubr.f32.gmra.mrb[0].mxu0 %v160
  %v509 = vpop.f32.mrb[0].mxu0
  %v510 = vadd.f32 %v122, %v509
  %v511 = vpop.f32.mrb[0].mxu0
  %v512 = vadd.f32 %v126, %v511
  %513 = vmatprep.mubr.f32.mxu0 0.0
  %514 = vmatmul.mubr.f32.gmra.mrb[0].mxu0 %v163
  %v515 = vpop.f32.mrb[0].mxu0
  %v516 = vadd.f32 %v122, %v515
  %v517 = vpop.f32.mrb[0].mxu0
  %v518 = vadd.f32 %v126, %v517
  %519 = vmatprep.mubr.f32.mxu0 0.0
  %520 = vmatmul.mubr.f32.gmra.mrb[0].mxu0 %v166
  %v521 = vpop.f32.mrb[0].mxu0
  %v522 = vadd.f32 %v122, %v521
  %v523 = vpop.f32.mrb[0].mxu0
  %v524 = vadd.f32 %v126, %v523
  %525 = vmatprep.mubr.f32.mxu0 0.0
  %526 = vmatmul.mubr.f32.gmra.mrb[0].mxu0 %v169
  %v527 = vpop.f32.mrb[0].mxu0
  %v528 = vadd.f32 %v122, %v527
  %v529 = vpop.f32.mrb[0].mxu0
  %v530 = vadd.f32 %v126, %v529
  %531 = vmatprep.mubr.f32.mxu0 0.0
  %532 = vmatmul.mubr.f32.gmra.mrb[0].mxu0 %v172
  %v533 = vpop.f32.mrb[0].mxu0
  %v534 = vadd.f32 %v122, %v533
  %v535 = vpop.f32.mrb[0].mxu0
  %v536 = vadd.f32 %v126, %v535
  %537 = vmatprep.mubr.f32.mxu0 0.0
  %538 = vmatmul.mubr.f32.gmra.mrb[0].mxu0 %v175
  %v539 = vpop.f32.mrb[0].mxu0
  %v540 = vadd.f32 %v122, %v539
  %v541 = vpop.f32.mrb[0].mxu0
  %v542 = vadd.f32 %v126, %v541
  %543 = vmatprep.mubr.f32.mxu0 0.0
  %544 = vmatmul.mubr.f32.gmra.mrb[0].mxu0 %v178
  %v545 = vpop.f32.mrb[0].mxu0
  %v546 = vadd.f32 %v122, %v545
  %v547 = vpop.f32.mrb[0].mxu0
  %v548 = vadd.f32 %v126, %v547
  %549 = vmatprep.mubr.f32.mxu0 0.0
  %550 = vmatmul.mubr.f32.gmra.mrb[0].mxu0 %v181
  %v551 = vpop.f32.mrb[0].mxu0
  %v552 = vadd.f32 %v122, %v551
  %v553 = vpop.f32.mrb[0].mxu0
  %v554 = vadd.f32 %v126, %v553
  %555 = vdwg.mxu0
  %556 = vmatprep.subr.mxu0 %v29
  %557 = vmatpush1.msra.mxu0 %v28
  %558 = vmatprep.subr.mxu0 %v40
  %559 = vmatpush1.msra.mxu0 %v39
  %560 = vmatprep.subr.mxu0 %v51
  %561 = vmatpush1.msra.mxu0 %v50
  %562 = vmatprep.subr.mxu0 %v62
  %563 = vmatpush1.msra.mxu0 %v61
  %564 = vmatprep.subr.mxu0 %v73
  %565 = vmatpush1.msra.mxu0 %v72
  %566 = vmatprep.subr.mxu0 %v84
  %567 = vmatpush1.msra.mxu0 %v83
  %568 = vmatprep.subr.mxu0 %v206
  %569 = vmatpush1.msra.mxu0 %v203
  %570 = vmatprep.subr.mxu0 0.0
  %571 = vmatpush1.msra.mxu0 0.0
  %572 = vmatprep.subr.mxu0 0.0
  %573 = vmatpush1.msra.mxu0 0.0
  %574 = vmatprep.subr.mxu0 0.0
  %575 = vmatpush1.msra.mxu0 0.0
  %576 = vmatprep.subr.mxu0 0.0
  %577 = vmatpush1.msra.mxu0 0.0
  %578 = vmatprep.subr.mxu0 0.0
  %579 = vmatpush1.msra.mxu0 0.0
  %580 = vmatprep.subr.mxu0 0.0
  %581 = vmatpush1.msra.mxu0 0.0
  %582 = vmatprep.subr.mxu0 0.0
  %583 = vmatpush1.msra.mxu0 0.0
  %584 = vmatprep.subr.mxu0 0.0
  %585 = vmatpush1.msra.mxu0 0.0
  %586 = vmatprep.subr.mxu0 0.0
  %587 = vmatpush1.msra.mxu0 0.0
  %588 = vmatprep.subr.mxu0 0.0
  %589 = vmatpush1.msra.mxu0 0.0
  %590 = vmatprep.subr.mxu0 0.0
  %591 = vmatpush1.msra.mxu0 0.0
  %592 = vmatprep.subr.mxu0 0.0
  %593 = vmatpush1.msra.mxu0 0.0
  %594 = vmatprep.subr.mxu0 0.0
  %595 = vmatpush1.msra.mxu0 0.0
  %596 = vmatprep.subr.mxu0 0.0
  %597 = vmatpush1.msra.mxu0 0.0
  %598 = vmatprep.subr.mxu0 0.0
  %599 = vmatpush1.msra.mxu0 0.0
  %600 = vmatprep.subr.mxu0 0.0
  %601 = vmatpush1.msra.mxu0 0.0
  %602 = vmatprep.subr.mxu0 0.0
  %603 = vmatpush1.msra.mxu0 0.0
  %604 = vmatprep.subr.mxu0 0.0
  %605 = vmatpush1.msra.mxu0 0.0
  %606 = vmatprep.subr.mxu0 0.0
  %607 = vmatpush1.msra.mxu0 0.0
  %608 = vmatprep.subr.mxu0 0.0
  %609 = vmatpush1.msra.mxu0 0.0
  %610 = vmatprep.subr.mxu0 0.0
  %611 = vmatpush1.msra.mxu0 0.0
  %612 = vmatprep.subr.mxu0 0.0
  %613 = vmatpush1.msra.mxu0 0.0
  %614 = vmatprep.subr.mxu0 0.0
  %615 = vmatpush1.msra.mxu0 0.0
  %616 = vmatprep.subr.mxu0 0.0
  %617 = vmatpush1.msra.mxu0 0.0
  %618 = vmatprep.subr.mxu0 0.0
  %619 = vmatpush1.msra.mxu0 0.0
  %620 = vmatprep.mubr.f32.mxu0 0.0
  %621 = vmatmul.mubr.f32.gmra.mrb[0].mxu0 %v160
  %v622 = vpop.f32.mrb[0].mxu0
  %v623 = vadd.f32 %v130, %v622
  %v624 = vpop.f32.mrb[0].mxu0
  %v625 = vadd.f32 %v134, %v624
  %626 = vmatprep.mubr.f32.mxu0 0.0
  %627 = vmatmul.mubr.f32.gmra.mrb[0].mxu0 %v163
  %v628 = vpop.f32.mrb[0].mxu0
  %v629 = vadd.f32 %v130, %v628
  %v630 = vpop.f32.mrb[0].mxu0
  %v631 = vadd.f32 %v134, %v630
  %632 = vmatprep.mubr.f32.mxu0 0.0
  %633 = vmatmul.mubr.f32.gmra.mrb[0].mxu0 %v166
  %v634 = vpop.f32.mrb[0].mxu0
  %v635 = vadd.f32 %v130, %v634
  %v636 = vpop.f32.mrb[0].mxu0
  %v637 = vadd.f32 %v134, %v636
  %638 = vmatprep.mubr.f32.mxu0 0.0
  %639 = vmatmul.mubr.f32.gmra.mrb[0].mxu0 %v169
  %v640 = vpop.f32.mrb[0].mxu0
  %v641 = vadd.f32 %v130, %v640
  %v642 = vpop.f32.mrb[0].mxu0
  %v643 = vadd.f32 %v134, %v642
  %644 = vmatprep.mubr.f32.mxu0 0.0
  %645 = vmatmul.mubr.f32.gmra.mrb[0].mxu0 %v172
  %v646 = vpop.f32.mrb[0].mxu0
  %v647 = vadd.f32 %v130, %v646
  %v648 = vpop.f32.mrb[0].mxu0
  %v649 = vadd.f32 %v134, %v648
  %650 = vmatprep.mubr.f32.mxu0 0.0
  %651 = vmatmul.mubr.f32.gmra.mrb[0].mxu0 %v175
  %v652 = vpop.f32.mrb[0].mxu0
  %v653 = vadd.f32 %v130, %v652
  %v654 = vpop.f32.mrb[0].mxu0
  %v655 = vadd.f32 %v134, %v654
  %656 = vmatprep.mubr.f32.mxu0 0.0
  %657 = vmatmul.mubr.f32.gmra.mrb[0].mxu0 %v178
  %v658 = vpop.f32.mrb[0].mxu0
  %v659 = vadd.f32 %v130, %v658
  %v660 = vpop.f32.mrb[0].mxu0
  %v661 = vadd.f32 %v134, %v660
  %662 = vmatprep.mubr.f32.mxu0 0.0
  %663 = vmatmul.mubr.f32.gmra.mrb[0].mxu0 %v181
  %v664 = vpop.f32.mrb[0].mxu0
  %v665 = vadd.f32 %v130, %v664
  %v666 = vpop.f32.mrb[0].mxu0
  %v667 = vadd.f32 %v134, %v666
  %668 = vdwg.mxu0
  %669 = vmatprep.subr.mxu0 %v31
  %670 = vmatpush1.msra.mxu0 %v30
  %671 = vmatprep.subr.mxu0 %v42
  %672 = vmatpush1.msra.mxu0 %v41
  %673 = vmatprep.subr.mxu0 %v53
  %674 = vmatpush1.msra.mxu0 %v52
  %675 = vmatprep.subr.mxu0 %v64
  %676 = vmatpush1.msra.mxu0 %v63
  %677 = vmatprep.subr.mxu0 %v75
  %678 = vmatpush1.msra.mxu0 %v74
  %679 = vmatprep.subr.mxu0 %v86
  %680 = vmatpush1.msra.mxu0 %v85
  %681 = vmatprep.subr.mxu0 %v212
  %682 = vmatpush1.msra.mxu0 %v209
  %683 = vmatprep.subr.mxu0 0.0
  %684 = vmatpush1.msra.mxu0 0.0
  %685 = vmatprep.subr.mxu0 0.0
  %686 = vmatpush1.msra.mxu0 0.0
  %687 = vmatprep.subr.mxu0 0.0
  %688 = vmatpush1.msra.mxu0 0.0
  %689 = vmatprep.subr.mxu0 0.0
  %690 = vmatpush1.msra.mxu0 0.0
  %691 = vmatprep.subr.mxu0 0.0
  %692 = vmatpush1.msra.mxu0 0.0
  %693 = vmatprep.subr.mxu0 0.0
  %694 = vmatpush1.msra.mxu0 0.0
  %695 = vmatprep.subr.mxu0 0.0
  %696 = vmatpush1.msra.mxu0 0.0
  %697 = vmatprep.subr.mxu0 0.0
  %698 = vmatpush1.msra.mxu0 0.0
  %699 = vmatprep.subr.mxu0 0.0
  %700 = vmatpush1.msra.mxu0 0.0
  %701 = vmatprep.subr.mxu0 0.0
  %702 = vmatpush1.msra.mxu0 0.0
  %703 = vmatprep.subr.mxu0 0.0
  %704 = vmatpush1.msra.mxu0 0.0
  %705 = vmatprep.subr.mxu0 0.0
  %706 = vmatpush1.msra.mxu0 0.0
  %707 = vmatprep.subr.mxu0 0.0
  %708 = vmatpush1.msra.mxu0 0.0
  %709 = vmatprep.subr.mxu0 0.0
  %710 = vmatpush1.msra.mxu0 0.0
  %711 = vmatprep.subr.mxu0 0.0
  %712 = vmatpush1.msra.mxu0 0.0
  %713 = vmatprep.subr.mxu0 0.0
  %714 = vmatpush1.msra.mxu0 0.0
  %715 = vmatprep.subr.mxu0 0.0
  %716 = vmatpush1.msra.mxu0 0.0
  %717 = vmatprep.subr.mxu0 0.0
  %718 = vmatpush1.msra.mxu0 0.0
  %719 = vmatprep.subr.mxu0 0.0
  %720 = vmatpush1.msra.mxu0 0.0
  %721 = vmatprep.subr.mxu0 0.0
  %722 = vmatpush1.msra.mxu0 0.0
  %723 = vmatprep.subr.mxu0 0.0
  %724 = vmatpush1.msra.mxu0 0.0
  %725 = vmatprep.subr.mxu0 0.0
  %726 = vmatpush1.msra.mxu0 0.0
  %727 = vmatprep.subr.mxu0 0.0
  %728 = vmatpush1.msra.mxu0 0.0
  %729 = vmatprep.subr.mxu0 0.0
  %730 = vmatpush1.msra.mxu0 0.0
  %731 = vmatprep.subr.mxu0 0.0
  %732 = vmatpush1.msra.mxu0 0.0
  %733 = vmatprep.mubr.f32.mxu0 0.0
  %734 = vmatmul.mubr.f32.gmra.mrb[0].mxu0 %v160
  %v735 = vpop.f32.mrb[0].mxu0
  %v736 = vadd.f32 %v138, %v735
  %v737 = vpop.f32.mrb[0].mxu0
  %v738 = vadd.f32 %v142, %v737
  %739 = vmatprep.mubr.f32.mxu0 0.0
  %740 = vmatmul.mubr.f32.gmra.mrb[0].mxu0 %v163
  %v741 = vpop.f32.mrb[0].mxu0
  %v742 = vadd.f32 %v138, %v741
  %v743 = vpop.f32.mrb[0].mxu0
  %v744 = vadd.f32 %v142, %v743
  %745 = vmatprep.mubr.f32.mxu0 0.0
  %746 = vmatmul.mubr.f32.gmra.mrb[0].mxu0 %v166
  %v747 = vpop.f32.mrb[0].mxu0
  %v748 = vadd.f32 %v138, %v747
  %v749 = vpop.f32.mrb[0].mxu0
  %v750 = vadd.f32 %v142, %v749
  %751 = vmatprep.mubr.f32.mxu0 0.0
  %752 = vmatmul.mubr.f32.gmra.mrb[0].mxu0 %v169
  %v753 = vpop.f32.mrb[0].mxu0
  %v754 = vadd.f32 %v138, %v753
  %v755 = vpop.f32.mrb[0].mxu0
  %v756 = vadd.f32 %v142, %v755
  %757 = vmatprep.mubr.f32.mxu0 0.0
  %758 = vmatmul.mubr.f32.gmra.mrb[0].mxu0 %v172
  %v759 = vpop.f32.mrb[0].mxu0
  %v760 = vadd.f32 %v138, %v759
  %v761 = vpop.f32.mrb[0].mxu0
  %v762 = vadd.f32 %v142, %v761
  %763 = vmatprep.mubr.f32.mxu0 0.0
  %764 = vmatmul.mubr.f32.gmra.mrb[0].mxu0 %v175
  %v765 = vpop.f32.mrb[0].mxu0
  %v766 = vadd.f32 %v138, %v765
  %v767 = vpop.f32.mrb[0].mxu0
  %v768 = vadd.f32 %v142, %v767
  %769 = vmatprep.mubr.f32.mxu0 0.0
  %770 = vmatmul.mubr.f32.gmra.mrb[0].mxu0 %v178
  %v771 = vpop.f32.mrb[0].mxu0
  %v772 = vadd.f32 %v138, %v771
  %v773 = vpop.f32.mrb[0].mxu0
  %v774 = vadd.f32 %v142, %v773
  %775 = vmatprep.mubr.f32.mxu0 0.0
  %776 = vmatmul.mubr.f32.gmra.mrb[0].mxu0 %v181
  %v777 = vpop.f32.mrb[0].mxu0
  %v778 = vadd.f32 %v138, %v777
  %v779 = vpop.f32.mrb[0].mxu0
  %v780 = vadd.f32 %v142, %v779
  %781 = vdwg.mxu0
  %782 = vmatprep.subr.mxu0 0.0
  %783 = vmatpush1.msra.mxu0 %v32
  %784 = vmatprep.subr.mxu0 0.0
  %785 = vmatpush1.msra.mxu0 %v43
  %786 = vmatprep.subr.mxu0 0.0
  %787 = vmatpush1.msra.mxu0 %v54
  %788 = vmatprep.subr.mxu0 0.0
  %789 = vmatpush1.msra.mxu0 %v65
  %790 = vmatprep.subr.mxu0 0.0
  %791 = vmatpush1.msra.mxu0 %v76
  %792 = vmatprep.subr.mxu0 0.0
  %793 = vmatpush1.msra.mxu0 %v87
  %794 = vmatprep.subr.mxu0 0.0
  %795 = vmatpush1.msra.mxu0 %v215
  %796 = vmatprep.subr.mxu0 0.0
  %797 = vmatpush1.msra.mxu0 0.0
  %798 = vmatprep.subr.mxu0 0.0
  %799 = vmatpush1.msra.mxu0 0.0
  %800 = vmatprep.subr.mxu0 0.0
  %801 = vmatpush1.msra.mxu0 0.0
  %802 = vmatprep.subr.mxu0 0.0
  %803 = vmatpush1.msra.mxu0 0.0
  %804 = vmatprep.subr.mxu0 0.0
  %805 = vmatpush1.msra.mxu0 0.0
  %806 = vmatprep.subr.mxu0 0.0
  %807 = vmatpush1.msra.mxu0 0.0
  %808 = vmatprep.subr.mxu0 0.0
  %809 = vmatpush1.msra.mxu0 0.0
  %810 = vmatprep.subr.mxu0 0.0
  %811 = vmatpush1.msra.mxu0 0.0
  %812 = vmatprep.subr.mxu0 0.0
  %813 = vmatpush1.msra.mxu0 0.0
  %814 = vmatprep.subr.mxu0 0.0
  %815 = vmatpush1.msra.mxu0 0.0
  %816 = vmatprep.subr.mxu0 0.0
  %817 = vmatpush1.msra.mxu0 0.0
  %818 = vmatprep.subr.mxu0 0.0
  %819 = vmatpush1.msra.mxu0 0.0
  %820 = vmatprep.subr.mxu0 0.0
  %821 = vmatpush1.msra.mxu0 0.0
  %822 = vmatprep.subr.mxu0 0.0
  %823 = vmatpush1.msra.mxu0 0.0
  %824 = vmatprep.subr.mxu0 0.0
  %825 = vmatpush1.msra.mxu0 0.0
  %826 = vmatprep.subr.mxu0 0.0
  %827 = vmatpush1.msra.mxu0 0.0
  %828 = vmatprep.subr.mxu0 0.0
  %829 = vmatpush1.msra.mxu0 0.0
  %830 = vmatprep.subr.mxu0 0.0
  %831 = vmatpush1.msra.mxu0 0.0
  %832 = vmatprep.subr.mxu0 0.0
  %833 = vmatpush1.msra.mxu0 0.0
  %834 = vmatprep.subr.mxu0 0.0
  %835 = vmatpush1.msra.mxu0 0.0
  %836 = vmatprep.subr.mxu0 0.0
  %837 = vmatpush1.msra.mxu0 0.0
  %838 = vmatprep.subr.mxu0 0.0
  %839 = vmatpush1.msra.mxu0 0.0
  %840 = vmatprep.subr.mxu0 0.0
  %841 = vmatpush1.msra.mxu0 0.0
  %842 = vmatprep.subr.mxu0 0.0
  %843 = vmatpush1.msra.mxu0 0.0
  %844 = vmatprep.subr.mxu0 0.0
  %845 = vmatpush1.msra.mxu0 0.0
  %846 = vmatprep.mubr.f32.mxu0 0.0
  %847 = vmatmul.mubr.f32.gmra.mrb[0].mxu0 %v160
  %v848 = vpop.f32.mrb[0].mxu0
  %v849 = vadd.f32 %v146, %v848
  %v850 = vpop.f32.mrb[0].mxu0
  %851 = vmatprep.mubr.f32.mxu0 0.0
  %852 = vmatmul.mubr.f32.gmra.mrb[0].mxu0 %v163
  %v853 = vpop.f32.mrb[0].mxu0
  %v854 = vadd.f32 %v146, %v853
  %v855 = vpop.f32.mrb[0].mxu0
  %856 = vmatprep.mubr.f32.mxu0 0.0
  %857 = vmatmul.mubr.f32.gmra.mrb[0].mxu0 %v166
  %v858 = vpop.f32.mrb[0].mxu0
  %v859 = vadd.f32 %v146, %v858
  %v860 = vpop.f32.mrb[0].mxu0
  %861 = vmatprep.mubr.f32.mxu0 0.0
  %862 = vmatmul.mubr.f32.gmra.mrb[0].mxu0 %v169
  %v863 = vpop.f32.mrb[0].mxu0
  %v864 = vadd.f32 %v146, %v863
  %v865 = vpop.f32.mrb[0].mxu0
  %866 = vmatprep.mubr.f32.mxu0 0.0
  %867 = vmatmul.mubr.f32.gmra.mrb[0].mxu0 %v172
  %v868 = vpop.f32.mrb[0].mxu0
  %v869 = vadd.f32 %v146, %v868
  %v870 = vpop.f32.mrb[0].mxu0
  %871 = vmatprep.mubr.f32.mxu0 0.0
  %872 = vmatmul.mubr.f32.gmra.mrb[0].mxu0 %v175
  %v873 = vpop.f32.mrb[0].mxu0
  %v874 = vadd.f32 %v146, %v873
  %v875 = vpop.f32.mrb[0].mxu0
  %876 = vmatprep.mubr.f32.mxu0 0.0
  %877 = vmatmul.mubr.f32.gmra.mrb[0].mxu0 %v178
  %v878 = vpop.f32.mrb[0].mxu0
  %v879 = vadd.f32 %v146, %v878
  %v880 = vpop.f32.mrb[0].mxu0
  %881 = vmatprep.mubr.f32.mxu0 0.0
  %882 = vmatmul.mubr.f32.gmra.mrb[0].mxu0 %v181
  %v883 = vpop.f32.mrb[0].mxu0
  %v884 = vadd.f32 %v146, %v883
  %v885 = vpop.f32.mrb[0].mxu0
  %886 = vdwg.mxu0
  %v887 = vtanh.pop %v284
  %v888 = vtanh.pop %v286
  %v889 = vtanh.pop %v397
  %v890 = vtanh.pop %v399
  %v891 = vtanh.pop %v510
  %v892 = vtanh.pop %v512
  %v893 = vtanh.pop %v623
  %v894 = vtanh.pop %v625
  %v895 = vtanh.pop %v736
  %v896 = vtanh.pop %v738
  %v897 = vtanh.pop %v849
  %v898 = vtanh.pop %v290
  %v899 = vtanh.pop %v292
  %v900 = vtanh.pop %v403
  %v901 = vtanh.pop %v405
  %v902 = vtanh.pop %v516
  %v903 = vtanh.pop %v518
  %v904 = vtanh.pop %v629
  %v905 = vtanh.pop %v631
  %v906 = vtanh.pop %v742
  %v907 = vtanh.pop %v744
  %v908 = vtanh.pop %v854
  %v909 = vtanh.pop %v296
  %v910 = vtanh.pop %v298
  %v911 = vtanh.pop %v409
  %v912 = vtanh.pop %v411
  %v913 = vtanh.pop %v522
  %v914 = vtanh.pop %v524
  %v915 = vtanh.pop %v635
  %v916 = vtanh.pop %v637
  %v917 = vtanh.pop %v748
  %v918 = vtanh.pop %v750
  %v919 = vtanh.pop %v859
  %v920 = vtanh.pop %v302
  %v921 = vtanh.pop %v304
  %v922 = vtanh.pop %v415
  %v923 = vtanh.pop %v417
  %v924 = vtanh.pop %v528
  %v925 = vtanh.pop %v530
  %v926 = vtanh.pop %v641
  %v927 = vtanh.pop %v643
  %v928 = vtanh.pop %v754
  %v929 = vtanh.pop %v756
  %v930 = vtanh.pop %v864
  %v931 = vtanh.pop %v308
  %v932 = vtanh.pop %v310
  %v933 = vtanh.pop %v421
  %v934 = vtanh.pop %v423
  %v935 = vtanh.pop %v534
  %v936 = vtanh.pop %v536
  %v937 = vtanh.pop %v647
  %v938 = vtanh.pop %v649
  %v939 = vtanh.pop %v760
  %v940 = vtanh.pop %v762
  %v941 = vtanh.pop %v869
  %v942 = vtanh.pop %v314
  %v943 = vtanh.pop %v316
  %v944 = vtanh.pop %v427
  %v945 = vtanh.pop %v429
  %v946 = vtanh.pop %v540
  %v947 = vtanh.pop %v542
  %v948 = vtanh.pop %v653
  %v949 = vtanh.pop %v655
  %v950 = vtanh.pop %v766
  %v951 = vtanh.pop %v768
  %v952 = vtanh.pop %v874
  %v953 = vtanh.pop %v320
  %v954 = vtanh.pop %v322
  %v955 = vtanh.pop %v433
  %v956 = vtanh.pop %v435
  %v957 = vtanh.pop %v546
  %v958 = vtanh.pop %v548
  %v959 = vtanh.pop %v659
  %v960 = vtanh.pop %v661
  %v961 = vtanh.pop %v772
  %v962 = vtanh.pop %v774
  %v963 = vtanh.pop %v879
  %v964 = vtanh.pop %v326
  %v965 = vtanh.pop %v328
  %v966 = vtanh.pop %v439
  %v967 = vtanh.pop %v441
  %v968 = vtanh.pop %v552
  %v969 = vtanh.pop %v554
  %v970 = vtanh.pop %v665
  %v971 = vtanh.pop %v667
  %v972 = vtanh.pop %v778
  %v973 = vtanh.pop %v780
  %v974 = vtanh.pop %v884
  %975 = vst [vmem:[%s3] sm:$0xff] %v887
  %976 = vst [vmem:[%s3 + $0x8] sm:$0xff] %v888
  %977 = vst [vmem:[%s3 + $0x10] sm:$0xff] %v889
  %978 = vst [vmem:[%s3 + $0x18] sm:$0xff] %v890
  %979 = vst [vmem:[%s3 + $0x20] sm:$0xff] %v891
  %980 = vst [vmem:[%s3 + $0x28] sm:$0xff] %v892
  %981 = vst [vmem:[%s3 + $0x30] sm:$0xff] %v893
  %982 = vst [vmem:[%s3 + $0x38] sm:$0xff] %v894
  %983 = vst [vmem:[%s3 + $0x40] sm:$0xff] %v895
  %984 = vst [vmem:[%s3 + $0x48] sm:$0xff] %v896
  %985 = vst [vmem:[%s3 + $0x50] sm:$0xff] %v897
  %986 = vst [vmem:[%s3 + $0x58] sm:$0xff] %v898
  %987 = vst [vmem:[%s3 + $0x60] sm:$0xff] %v899
  %988 = vst [vmem:[%s3 + $0x68] sm:$0xff] %v900
  %989 = vst [vmem:[%s3 + $0x70] sm:$0xff] %v901
  %990 = vst [vmem:[%s3 + $0x78] sm:$0xff] %v902
  %991 = vst [vmem:[%s3 + $0x80] sm:$0xff] %v903
  %992 = vst [vmem:[%s3 + $0x88] sm:$0xff] %v904
  %993 = vst [vmem:[%s3 + $0x90] sm:$0xff] %v905
  %994 = vst [vmem:[%s3 + $0x98] sm:$0xff] %v906
  %995 = vst [vmem:[%s3 + $0xa0] sm:$0xff] %v907
  %996 = vst [vmem:[%s3 + $0xa8] sm:$0xff] %v908
  %997 = vst [vmem:[%s3 + $0xb0] sm:$0xff] %v909
  %998 = vst [vmem:[%s3 + $0xb8] sm:$0xff] %v910
  %999 = vst [vmem:[%s3 + $0xc0] sm:$0xff] %v911
  %1000 = vst [vmem:[%s3 + $0xc8] sm:$0xff] %v912
  %1001 = vst [vmem:[%s3 + $0xd0] sm:$0xff] %v913
  %1002 = vst [vmem:[%s3 + $0xd8] sm:$0xff] %v914
  %1003 = vst [vmem:[%s3 + $0xe0] sm:$0xff] %v915
  %1004 = vst [vmem:[%s3 + $0xe8] sm:$0xff] %v916
  %1005 = vst [vmem:[%s3 + $0xf0] sm:$0xff] %v917
  %1006 = vst [vmem:[%s3 + $0xf8] sm:$0xff] %v918
  %1007 = vst [vmem:[%s3 + $0x100] sm:$0xff] %v919
  %1008 = vst [vmem:[%s3 + $0x108] sm:$0xff] %v920
  %1009 = vst [vmem:[%s3 + $0x110] sm:$0xff] %v921
  %1010 = vst [vmem:[%s3 + $0x118] sm:$0xff] %v922
  %1011 = vst [vmem:[%s3 + $0x120] sm:$0xff] %v923
  %1012 = vst [vmem:[%s3 + $0x128] sm:$0xff] %v924
  %1013 = vst [vmem:[%s3 + $0x130] sm:$0xff] %v925
  %1014 = vst [vmem:[%s3 + $0x138] sm:$0xff] %v926
  %1015 = vst [vmem:[%s3 + $0x140] sm:$0xff] %v927
  %1016 = vst [vmem:[%s3 + $0x148] sm:$0xff] %v928
  %1017 = vst [vmem:[%s3 + $0x150] sm:$0xff] %v929
  %1018 = vst [vmem:[%s3 + $0x158] sm:$0xff] %v930
  %1019 = vst [vmem:[%s3 + $0x160] sm:$0xff] %v931
  %1020 = vst [vmem:[%s3 + $0x168] sm:$0xff] %v932
  %1021 = vst [vmem:[%s3 + $0x170] sm:$0xff] %v933
  %1022 = vst [vmem:[%s3 + $0x178] sm:$0xff] %v934
  %1023 = vst [vmem:[%s3 + $0x180] sm:$0xff] %v935
  %1024 = vst [vmem:[%s3 + $0x188] sm:$0xff] %v936
  %1025 = vst [vmem:[%s3 + $0x190] sm:$0xff] %v937
  %1026 = vst [vmem:[%s3 + $0x198] sm:$0xff] %v938
  %1027 = vst [vmem:[%s3 + $0x1a0] sm:$0xff] %v939
  %1028 = vst [vmem:[%s3 + $0x1a8] sm:$0xff] %v940
  %1029 = vst [vmem:[%s3 + $0x1b0] sm:$0xff] %v941
  %1030 = vst [vmem:[%s3 + $0x1b8] sm:$0xff] %v942
  %1031 = vst [vmem:[%s3 + $0x1c0] sm:$0xff] %v943
  %1032 = vst [vmem:[%s3 + $0x1c8] sm:$0xff] %v944
  %1033 = vst [vmem:[%s3 + $0x1d0] sm:$0xff] %v945
  %1034 = vst [vmem:[%s3 + $0x1d8] sm:$0xff] %v946
  %1035 = vst [vmem:[%s3 + $0x1e0] sm:$0xff] %v947
  %1036 = vst [vmem:[%s3 + $0x1e8] sm:$0xff] %v948
  %1037 = vst [vmem:[%s3 + $0x1f0] sm:$0xff] %v949
  %1038 = vst [vmem:[%s3 + $0x1f8] sm:$0xff] %v950
  %1039 = vst [vmem:[%s3 + $0x200] sm:$0xff] %v951
  %1040 = vst [vmem:[%s3 + $0x208] sm:$0xff] %v952
  %1041 = vst [vmem:[%s3 + $0x210] sm:$0xff] %v953
  %1042 = vst [vmem:[%s3 + $0x218] sm:$0xff] %v954
  %1043 = vst [vmem:[%s3 + $0x220] sm:$0xff] %v955
  %1044 = vst [vmem:[%s3 + $0x228] sm:$0xff] %v956
  %1045 = vst [vmem:[%s3 + $0x230] sm:$0xff] %v957
  %1046 = vst [vmem:[%s3 + $0x238] sm:$0xff] %v958
  %1047 = vst [vmem:[%s3 + $0x240] sm:$0xff] %v959
  %1048 = vst [vmem:[%s3 + $0x248] sm:$0xff] %v960
  %1049 = vst [vmem:[%s3 + $0x250] sm:$0xff] %v961
  %1050 = vst [vmem:[%s3 + $0x258] sm:$0xff] %v962
  %1051 = vst [vmem:[%s3 + $0x260] sm:$0xff] %v963
  %1052 = vst [vmem:[%s3 + $0x268] sm:$0xff] %v964
  %1053 = vst [vmem:[%s3 + $0x270] sm:$0xff] %v965
  %1054 = vst [vmem:[%s3 + $0x278] sm:$0xff] %v966
  %1055 = vst [vmem:[%s3 + $0x280] sm:$0xff] %v967
  %1056 = vst [vmem:[%s3 + $0x288] sm:$0xff] %v968
  %1057 = vst [vmem:[%s3 + $0x290] sm:$0xff] %v969
  %1058 = vst [vmem:[%s3 + $0x298] sm:$0xff] %v970
  %1059 = vst [vmem:[%s3 + $0x2a0] sm:$0xff] %v971
  %1060 = vst [vmem:[%s3 + $0x2a8] sm:$0xff] %v972
  %1061 = vst [vmem:[%s3 + $0x2b0] sm:$0xff] %v973
  %1062 = vst [vmem:[%s3 + $0x2b8] sm:$0xff] %v974
  // Predicated region
  $region14: #{conv_transpose3d_tanh.2} parent=0 // pred_check
    _
  $region15: #{conv_transpose3d_tanh.2} parent=0 // pred_check_branch
    %1064 = sbr.rel (0) target = $region17
  $region16: #{conv_transpose3d_tanh.2} parent=0 // pred_region
    _
  $region17: #{conv_transpose3d_tanh.2} parent=0 // pred_fallthru
    _
  // Predicated region
  $region18: #{conv_transpose3d_tanh.2} parent=0 // pred_check
    _
  $region19: #{conv_transpose3d_tanh.2} parent=0 // pred_check_branch
    %1066 = sbr.rel (0) target = $region21
  $region20: #{conv_transpose3d_tanh.2} parent=0 // pred_region
    _
  $region21: #{conv_transpose3d_tanh.2} parent=0 // pred_fallthru
    _

// kernel: conv_transpose3d_tanh.3
$region0: #{conv_transpose3d_tanh.3}
  #allocation0 [shape = 'u32[]', space=smem, size = 0x4, offset = 0x4, fixed_abs, tag = 'smem constant byte address 0x4 - core index']
  #allocation1 [shape = 'u32[144,128]{1,0:T(1,128)}', space=vmem, size = 0x12000, scoped, tag = 'internal scratch']
  %s0 = inlined_call_operand.vmem [shape: f32[1,4,3,50,50,50], index: 0, kind: input, shape index: {}]
  %s1 = inlined_call_operand.vmem [shape: f32[50,1,1], index: 1, kind: input, shape index: {}]
  %s2 = inlined_call_operand.hbm [shape: f32[1,50,50,50,50], index: 2, kind: output, shape index: {}]
  %s3 = sld [smem:[#allocation0]]
  $region79: #{conv_transpose3d_tanh.3} parent=0
    _
  %s5 = ssub.s32 1, %s3
  %s6 = scalar_select 0, %s5, %s3
  $region1: #{conv_transpose3d_tanh.3} parent=0
    #allocation2 [shape = 'u8[3440640]{0}', space=vmem, size = 0x348000, scoped, tag = 'input window, operand 0']
    #allocation3 [shape = 'u8[14336000]{0}', space=vmem, size = 0xdac000, scoped, tag = 'output window, operand 0']
    #allocation4 [shape = 's32[2]{0}', space=sflag, size = 0x8, scoped, tag = 'scoped memory for conv_transpose3d_tanh.3']
    %7 = vsyncpa [#allocation4], 0
    %s8 = scalar_lea.sflag [#allocation4], 1
    %9 = vsyncpa %s8, 0
    loop: start=0, step=1, limit=12
    $region2: #{conv_transpose3d_tanh.3} parent=1 // loop_pre_header
      _
    $region3: #{conv_transpose3d_tanh.3} parent=1 // loop_header
      %s11 = sphi 0, %s15
      %p12 = scmp.ge.s32.totalorder %s11, 12
      %s18 = sphi 0, %s30
      %s19 = sphi 0, %s26
      %s20 = sphi 0, %s18
      %s21 = sphi 0, %s19
      %s22 = sphi 0, %s20
      %s23 = sphi 0, %s21
      %s35 = sphi 0, %s37
      %s38 = sphi 0, %s35
      %s39 = sphi 0, %s38
      %s55 = sphi 0, %s39
      %s61 = sphi 0, %s63
      %s64 = sphi 0, %s61
      %s65 = sphi 0, %s64
      %s81 = sphi 0, %s65
      %s89 = sphi 0, %s91
      %s92 = sphi 0, %s89
      %s93 = sphi 0, %s92
      %s109 = sphi 0, %s93
    $region4: #{conv_transpose3d_tanh.3} parent=1 // loop_header_branch
      %14 = sbr.rel (%p12) target = $region8
    $region5: #{conv_transpose3d_tanh.3} parent=1 // loop_body
      %s16 = ssub.s32 %s11, 1
      %s17 = ssub.s32 %s11, 2
      %s24 = sadd.s32 1, %s19
      %p25 = scmp.ge.s32.totalorder %s24, 10
      %s26 = scalar_select %p25, 0, %s24
      %s27 = sadd.s32 1, %s18
      %s28 = scalar_select %p25, %s27, %s18
      %p29 = scmp.ge.s32.totalorder %s28, 1
      %s30 = scalar_select %p29, 0, %s28
      %s31 = ssub.s32 %s18, %s30
      %s32 = ssub.s32 %s19, %s26
      %s33 = sor.u32 %s31, %s32
      %p34 = scmp.eq.s32.totalorder %s33, 0
      %s36 = sadd.s32 %s35, 1
      %s37 = scalar_select %p34, %s35, %s36
      %p40 = pneg %p34
      %p41 = scmp.eq.s32.totalorder %s11, 9
      %p42 = por %p40, %p41
      %p43 = scmp.ne.s32.totalorder %s35, %s38
      %p44 = scmp.eq.s32.totalorder %s11, 0
      %p45 = por %p43, %p44
      %p46 = scmp.ne.s32.totalorder %s35, %s38
      %p47 = scmp.eq.s32.totalorder %s16, 9
      %p48 = por %p46, %p47
      %p49 = scmp.ne.s32.totalorder %s38, %s39
      %p50 = scmp.eq.s32.totalorder %s16, 0
      %p51 = por %p49, %p50
      %p52 = scmp.ne.s32.totalorder %s38, %s39
      %p53 = scmp.eq.s32.totalorder %s17, 9
      %p54 = por %p52, %p53
      %p56 = scmp.ne.s32.totalorder %s39, %s55
      %p57 = scmp.eq.s32.totalorder %s17, 0
      %p58 = por %p56, %p57
      %s59 = ssub.s32 %s19, %s26
      %p60 = scmp.eq.s32.totalorder %s59, 0
      %s62 = sadd.s32 %s61, 1
      %s63 = scalar_select %p60, %s61, %s62
      %p66 = pneg %p60
      %p67 = scmp.eq.s32.totalorder %s11, 9
      %p68 = por %p66, %p67
      %p69 = scmp.ne.s32.totalorder %s61, %s64
      %p70 = scmp.eq.s32.totalorder %s11, 0
      %p71 = por %p69, %p70
      %p72 = scmp.ne.s32.totalorder %s61, %s64
      %p73 = scmp.eq.s32.totalorder %s16, 9
      %p74 = por %p72, %p73
      %p75 = scmp.ne.s32.totalorder %s64, %s65
      %p76 = scmp.eq.s32.totalorder %s16, 0
      %p77 = por %p75, %p76
      %p78 = scmp.ne.s32.totalorder %s64, %s65
      %p79 = scmp.eq.s32.totalorder %s17, 9
      %p80 = por %p78, %p79
      %p82 = scmp.ne.s32.totalorder %s65, %s81
      %p83 = scmp.eq.s32.totalorder %s17, 0
      %p84 = por %p82, %p83
      %s85 = ssub.s32 %s18, %s30
      %s86 = ssub.s32 %s19, %s26
      %s87 = sor.u32 %s85, %s86
      %p88 = scmp.eq.s32.totalorder %s87, 0
      %s90 = sadd.s32 %s89, 1
      %s91 = scalar_select %p88, %s89, %s90
      %p94 = pneg %p88
      %p95 = scmp.eq.s32.totalorder %s11, 9
      %p96 = por %p94, %p95
      %p97 = scmp.ne.s32.totalorder %s89, %s92
      %p98 = scmp.eq.s32.totalorder %s11, 0
      %p99 = por %p97, %p98
      %p100 = scmp.ne.s32.totalorder %s89, %s92
      %p101 = scmp.eq.s32.totalorder %s16, 9
      %p102 = por %p100, %p101
      %p103 = scmp.ne.s32.totalorder %s92, %s93
      %p104 = scmp.eq.s32.totalorder %s16, 0
      %p105 = por %p103, %p104
      %p106 = scmp.ne.s32.totalorder %s92, %s93
      %p107 = scmp.eq.s32.totalorder %s17, 9
      %p108 = por %p106, %p107
      %p110 = scmp.ne.s32.totalorder %s93, %s109
      %p111 = scmp.eq.s32.totalorder %s17, 0
      %p112 = por %p110, %p111
      %p113 = scmp.le.s32.totalorder 1, %s11
      %p114 = scmp.lt.s32.totalorder %s11, 11
      %p115 = pnand %p113, %p114
      %p116 = pneg %p115
      // Predicated region
      $region9: #{conv_transpose3d_tanh.3} parent=5 // pred_check
        _
      $region10: #{conv_transpose3d_tanh.3} parent=5 // pred_check_branch
        %118 = sbr.rel (%p115) target = $region12
      $region11: #{conv_transpose3d_tanh.3} parent=5 // pred_region
        %s119 = ssub.s32 %s11, 1
      $region12: #{conv_transpose3d_tanh.3} parent=5 // pred_fallthru
        _
      %p120 = scmp.lt.s32.totalorder %s11, 10
      // Predicated region
      $region13: #{conv_transpose3d_tanh.3} parent=5 // pred_check
        %p121 = pneg %p120
      $region14: #{conv_transpose3d_tanh.3} parent=5 // pred_check_branch
        %123 = sbr.rel (%p121) target = $region16
      $region15: #{conv_transpose3d_tanh.3} parent=5 // pred_region
        // Predicated region
        $region17: #{conv_transpose3d_tanh.3} parent=15 // pred_check
          %p124 = pneg %p45
        $region18: #{conv_transpose3d_tanh.3} parent=15 // pred_check_branch
          %126 = sbr.rel (%p124) target = $region20
        $region19: #{conv_transpose3d_tanh.3} parent=15 // pred_region
          %s127 = sand.u32 %s35, 1
          %s128 = sand.u32 %s35, 1
          %s129 = smul.addr %s128, 3360
          %s130 = scalar_lea.vmem [#allocation2], %s129
          %s131 = smul.u32 5, %s19
          %s132 = smul.addr %s131, 7
          %s133 = smul.addr %s18, 4200
          %s134 = sadd.s32 %s132, %s133
          %s135 = smul.addr %s134, 8
          %s136 = scalar_lea.vmem %s0, %s135
          // Predicated region
          $region21: #{conv_transpose3d_tanh.3} parent=19 // pred_check
            _
          $region22: #{conv_transpose3d_tanh.3} parent=19 // pred_check_branch
            %138 = sbr.rel (0) target = $region24
          $region23: #{conv_transpose3d_tanh.3} parent=19 // pred_region
            // Predicated region
            $region25: #{conv_transpose3d_tanh.3} parent=23 // pred_check
              _
            $region26: #{conv_transpose3d_tanh.3} parent=23 // pred_check_branch
              %140 = sbr.rel (0) target = $region28
            $region27: #{conv_transpose3d_tanh.3} parent=23 // pred_region
              // Predicated region
              $region40: #{conv_transpose3d_tanh.3} parent=27 // pred_check
                _
              $region41: #{conv_transpose3d_tanh.3} parent=27 // pred_check_branch
                %993 = sbr.rel (0) target = $region43
              $region42: #{conv_transpose3d_tanh.3} parent=27 // pred_region
                loop: start=0, step=1, limit=1
                $region44: #{conv_transpose3d_tanh.3} parent=42 // loop_pre_header
                  _
                $region45: #{conv_transpose3d_tanh.3} parent=42 // loop_header
                  %s995 = sphi 0, %s999
                  %p996 = scmp.ge.s32.totalorder %s995, 1
                  %s1000 = sphi %s136, %s136
                  %s1001 = sphi %s130, %s130
                $region46: #{conv_transpose3d_tanh.3} parent=42 // loop_header_branch
                  %998 = sbr.rel (%p996) target = $region50
                $region47: #{conv_transpose3d_tanh.3} parent=42 // loop_body
                  %v1002 = vld [vmem:[%s1000] sm:$0xff]
                  %1003 = vst [vmem:[%s1001] sm:$0xff] %v1002
                  %v1004 = vld [vmem:[%s1000 + $0x8] sm:$0xff]
                  %1005 = vst [vmem:[%s1001 + $0x8] sm:$0xff] %v1004
                  %v1006 = vld [vmem:[%s1000 + $0x10] sm:$0xff]
                  %1007 = vst [vmem:[%s1001 + $0x10] sm:$0xff] %v1006
                  %v1008 = vld [vmem:[%s1000 + $0x18] sm:$0xff]
                  %1009 = vst [vmem:[%s1001 + $0x18] sm:$0xff] %v1008
                  %v1010 = vld [vmem:[%s1000 + $0x20] sm:$0xff]
                  %1011 = vst [vmem:[%s1001 + $0x20] sm:$0xff] %v1010
                  %v1012 = vld [vmem:[%s1000 + $0x28] sm:$0xff]
                  %1013 = vst [vmem:[%s1001 + $0x28] sm:$0xff] %v1012
                  %v1014 = vld [vmem:[%s1000 + $0x30] sm:$0xff]
                  %1015 = vst [vmem:[%s1001 + $0x30] sm:$0xff] %v1014
                  %v1016 = vld [vmem:[%s1000 + $0x38] sm:$0xff]
                  %1017 = vst [vmem:[%s1001 + $0x38] sm:$0xff] %v1016
                  %v1018 = vld [vmem:[%s1000 + $0x40] sm:$0xff]
                  %1019 = vst [vmem:[%s1001 + $0x40] sm:$0xff] %v1018
                  %v1020 = vld [vmem:[%s1000 + $0x48] sm:$0xff]
                  %1021 = vst [vmem:[%s1001 + $0x48] sm:$0xff] %v1020
                  %v1022 = vld [vmem:[%s1000 + $0x50] sm:$0xff]
                  %1023 = vst [vmem:[%s1001 + $0x50] sm:$0xff] %v1022
                  %v1024 = vld [vmem:[%s1000 + $0x58] sm:$0xff]
                  %1025 = vst [vmem:[%s1001 + $0x58] sm:$0xff] %v1024
                  %v1026 = vld [vmem:[%s1000 + $0x60] sm:$0xff]
                  %1027 = vst [vmem:[%s1001 + $0x60] sm:$0xff] %v1026
                  %v1028 = vld [vmem:[%s1000 + $0x68] sm:$0xff]
                  %1029 = vst [vmem:[%s1001 + $0x68] sm:$0xff] %v1028
                  %v1030 = vld [vmem:[%s1000 + $0x70] sm:$0xff]
                  %1031 = vst [vmem:[%s1001 + $0x70] sm:$0xff] %v1030
                  %v1032 = vld [vmem:[%s1000 + $0x78] sm:$0xff]
                  %1033 = vst [vmem:[%s1001 + $0x78] sm:$0xff] %v1032
                  %v1034 = vld [vmem:[%s1000 + $0x80] sm:$0xff]
                  %1035 = vst [vmem:[%s1001 + $0x80] sm:$0xff] %v1034
                  %v1036 = vld [vmem:[%s1000 + $0x88] sm:$0xff]
                  %1037 = vst [vmem:[%s1001 + $0x88] sm:$0xff] %v1036
                  %v1038 = vld [vmem:[%s1000 + $0x90] sm:$0xff]
                  %1039 = vst [vmem:[%s1001 + $0x90] sm:$0xff] %v1038
                  %v1040 = vld [vmem:[%s1000 + $0x98] sm:$0xff]
                  %1041 = vst [vmem:[%s1001 + $0x98] sm:$0xff] %v1040
                  %v1042 = vld [vmem:[%s1000 + $0xa0] sm:$0xff]
                  %1043 = vst [vmem:[%s1001 + $0xa0] sm:$0xff] %v1042
                  %v1044 = vld [vmem:[%s1000 + $0xa8] sm:$0xff]
                  %1045 = vst [vmem:[%s1001 + $0xa8] sm:$0xff] %v1044
                  %v1046 = vld [vmem:[%s1000 + $0xb0] sm:$0xff]
                  %1047 = vst [vmem:[%s1001 + $0xb0] sm:$0xff] %v1046
                  %v1048 = vld [vmem:[%s1000 + $0xb8] sm:$0xff]
                  %1049 = vst [vmem:[%s1001 + $0xb8] sm:$0xff] %v1048
                  %v1050 = vld [vmem:[%s1000 + $0xc0] sm:$0xff]
                  %1051 = vst [vmem:[%s1001 + $0xc0] sm:$0xff] %v1050
                  %v1052 = vld [vmem:[%s1000 + $0xc8] sm:$0xff]
                  %1053 = vst [vmem:[%s1001 + $0xc8] sm:$0xff] %v1052
                  %v1054 = vld [vmem:[%s1000 + $0xd0] sm:$0xff]
                  %1055 = vst [vmem:[%s1001 + $0xd0] sm:$0xff] %v1054
                  %v1056 = vld [vmem:[%s1000 + $0xd8] sm:$0xff]
                  %1057 = vst [vmem:[%s1001 + $0xd8] sm:$0xff] %v1056
                  %v1058 = vld [vmem:[%s1000 + $0xe0] sm:$0xff]
                  %1059 = vst [vmem:[%s1001 + $0xe0] sm:$0xff] %v1058
                  %v1060 = vld [vmem:[%s1000 + $0xe8] sm:$0xff]
                  %1061 = vst [vmem:[%s1001 + $0xe8] sm:$0xff] %v1060
                  %v1062 = vld [vmem:[%s1000 + $0xf0] sm:$0xff]
                  %1063 = vst [vmem:[%s1001 + $0xf0] sm:$0xff] %v1062
                  %v1064 = vld [vmem:[%s1000 + $0xf8] sm:$0xff]
                  %1065 = vst [vmem:[%s1001 + $0xf8] sm:$0xff] %v1064
                  %v1066 = vld [vmem:[%s1000 + $0x100] sm:$0xff]
                  %1067 = vst [vmem:[%s1001 + $0x100] sm:$0xff] %v1066
                  %v1068 = vld [vmem:[%s1000 + $0x108] sm:$0xff]
                  %1069 = vst [vmem:[%s1001 + $0x108] sm:$0xff] %v1068
                  %v1070 = vld [vmem:[%s1000 + $0x110] sm:$0xff]
                  %1071 = vst [vmem:[%s1001 + $0x110] sm:$0xff] %v1070
                  %v1072 = vld [vmem:[%s1000 + $0xaf0] sm:$0xff]
                  %1073 = vst [vmem:[%s1001 + $0x118] sm:$0xff] %v1072
                  %v1074 = vld [vmem:[%s1000 + $0xaf8] sm:$0xff]
                  %1075 = vst [vmem:[%s1001 + $0x120] sm:$0xff] %v1074
                  %v1076 = vld [vmem:[%s1000 + $0xb00] sm:$0xff]
                  %1077 = vst [vmem:[%s1001 + $0x128] sm:$0xff] %v1076
                  %v1078 = vld [vmem:[%s1000 + $0xb08] sm:$0xff]
                  %1079 = vst [vmem:[%s1001 + $0x130] sm:$0xff] %v1078
                  %v1080 = vld [vmem:[%s1000 + $0xb10] sm:$0xff]
                  %1081 = vst [vmem:[%s1001 + $0x138] sm:$0xff] %v1080
                  %v1082 = vld [vmem:[%s1000 + $0xb18] sm:$0xff]
                  %1083 = vst [vmem:[%s1001 + $0x140] sm:$0xff] %v1082
                  %v1084 = vld [vmem:[%s1000 + $0xb20] sm:$0xff]
                  %1085 = vst [vmem:[%s1001 + $0x148] sm:$0xff] %v1084
                  %v1086 = vld [vmem:[%s1000 + $0xb28] sm:$0xff]
                  %1087 = vst [vmem:[%s1001 + $0x150] sm:$0xff] %v1086
                  %v1088 = vld [vmem:[%s1000 + $0xb30] sm:$0xff]
                  %1089 = vst [vmem:[%s1001 + $0x158] sm:$0xff] %v1088
                  %v1090 = vld [vmem:[%s1000 + $0xb38] sm:$0xff]
                  %1091 = vst [vmem:[%s1001 + $0x160] sm:$0xff] %v1090
                  %v1092 = vld [vmem:[%s1000 + $0xb40] sm:$0xff]
                  %1093 = vst [vmem:[%s1001 + $0x168] sm:$0xff] %v1092
                  %v1094 = vld [vmem:[%s1000 + $0xb48] sm:$0xff]
                  %1095 = vst [vmem:[%s1001 + $0x170] sm:$0xff] %v1094
                  %v1096 = vld [vmem:[%s1000 + $0xb50] sm:$0xff]
                  %1097 = vst [vmem:[%s1001 + $0x178] sm:$0xff] %v1096
                  %v1098 = vld [vmem:[%s1000 + $0xb58] sm:$0xff]
                  %1099 = vst [vmem:[%s1001 + $0x180] sm:$0xff] %v1098
                  %v1100 = vld [vmem:[%s1000 + $0xb60] sm:$0xff]
                  %1101 = vst [vmem:[%s1001 + $0x188] sm:$0xff] %v1100
                  %v1102 = vld [vmem:[%s1000 + $0xb68] sm:$0xff]
                  %1103 = vst [vmem:[%s1001 + $0x190] sm:$0xff] %v1102
                  %v1104 = vld [vmem:[%s1000 + $0xb70] sm:$0xff]
                  %1105 = vst [vmem:[%s1001 + $0x198] sm:$0xff] %v1104
                  %v1106 = vld [vmem:[%s1000 + $0xb78] sm:$0xff]
                  %1107 = vst [vmem:[%s1001 + $0x1a0] sm:$0xff] %v1106
                  %v1108 = vld [vmem:[%s1000 + $0xb80] sm:$0xff]
                  %1109 = vst [vmem:[%s1001 + $0x1a8] sm:$0xff] %v1108
                  %v1110 = vld [vmem:[%s1000 + $0xb88] sm:$0xff]
                  %1111 = vst [vmem:[%s1001 + $0x1b0] sm:$0xff] %v1110
                  %v1112 = vld [vmem:[%s1000 + $0xb90] sm:$0xff]
                  %1113 = vst [vmem:[%s1001 + $0x1b8] sm:$0xff] %v1112
                  %v1114 = vld [vmem:[%s1000 + $0xb98] sm:$0xff]
                  %1115 = vst [vmem:[%s1001 + $0x1c0] sm:$0xff] %v1114
                  %v1116 = vld [vmem:[%s1000 + $0xba0] sm:$0xff]
                  %1117 = vst [vmem:[%s1001 + $0x1c8] sm:$0xff] %v1116
                  %v1118 = vld [vmem:[%s1000 + $0xba8] sm:$0xff]
                  %1119 = vst [vmem:[%s1001 + $0x1d0] sm:$0xff] %v1118
                  %v1120 = vld [vmem:[%s1000 + $0xbb0] sm:$0xff]
                  %1121 = vst [vmem:[%s1001 + $0x1d8] sm:$0xff] %v1120
                  %v1122 = vld [vmem:[%s1000 + $0xbb8] sm:$0xff]
                  %1123 = vst [vmem:[%s1001 + $0x1e0] sm:$0xff] %v1122
                  %v1124 = vld [vmem:[%s1000 + $0xbc0] sm:$0xff]
                  %1125 = vst [vmem:[%s1001 + $0x1e8] sm:$0xff] %v1124
                  %v1126 = vld [vmem:[%s1000 + $0xbc8] sm:$0xff]
                  %1127 = vst [vmem:[%s1001 + $0x1f0] sm:$0xff] %v1126
                  %v1128 = vld [vmem:[%s1000 + $0xbd0] sm:$0xff]
                  %1129 = vst [vmem:[%s1001 + $0x1f8] sm:$0xff] %v1128
                  %v1130 = vld [vmem:[%s1000 + $0xbd8] sm:$0xff]
                  %1131 = vst [vmem:[%s1001 + $0x200] sm:$0xff] %v1130
                  %v1132 = vld [vmem:[%s1000 + $0xbe0] sm:$0xff]
                  %1133 = vst [vmem:[%s1001 + $0x208] sm:$0xff] %v1132
                  %v1134 = vld [vmem:[%s1000 + $0xbe8] sm:$0xff]
                  %1135 = vst [vmem:[%s1001 + $0x210] sm:$0xff] %v1134
                  %v1136 = vld [vmem:[%s1000 + $0xbf0] sm:$0xff]
                  %1137 = vst [vmem:[%s1001 + $0x218] sm:$0xff] %v1136
                  %v1138 = vld [vmem:[%s1000 + $0xbf8] sm:$0xff]
                  %1139 = vst [vmem:[%s1001 + $0x220] sm:$0xff] %v1138
                  %v1140 = vld [vmem:[%s1000 + $0xc00] sm:$0xff]
                  %1141 = vst [vmem:[%s1001 + $0x228] sm:$0xff] %v1140
                  %v1142 = vld [vmem:[%s1000 + $0x15e0] sm:$0xff]
                  %1143 = vst [vmem:[%s1001 + $0x230] sm:$0xff] %v1142
                  %v1144 = vld [vmem:[%s1000 + $0x15e8] sm:$0xff]
                  %1145 = vst [vmem:[%s1001 + $0x238] sm:$0xff] %v1144
                  %v1146 = vld [vmem:[%s1000 + $0x15f0] sm:$0xff]
                  %1147 = vst [vmem:[%s1001 + $0x240] sm:$0xff] %v1146
                  %v1148 = vld [vmem:[%s1000 + $0x15f8] sm:$0xff]
                  %1149 = vst [vmem:[%s1001 + $0x248] sm:$0xff] %v1148
                  %v1150 = vld [vmem:[%s1000 + $0x1600] sm:$0xff]
                  %1151 = vst [vmem:[%s1001 + $0x250] sm:$0xff] %v1150
                  %v1152 = vld [vmem:[%s1000 + $0x1608] sm:$0xff]
                  %1153 = vst [vmem:[%s1001 + $0x258] sm:$0xff] %v1152
                  %v1154 = vld [vmem:[%s1000 + $0x1610] sm:$0xff]
                  %1155 = vst [vmem:[%s1001 + $0x260] sm:$0xff] %v1154
                  %v1156 = vld [vmem:[%s1000 + $0x1618] sm:$0xff]
                  %1157 = vst [vmem:[%s1001 + $0x268] sm:$0xff] %v1156
                  %v1158 = vld [vmem:[%s1000 + $0x1620] sm:$0xff]
                  %1159 = vst [vmem:[%s1001 + $0x270] sm:$0xff] %v1158
                  %v1160 = vld [vmem:[%s1000 + $0x1628] sm:$0xff]
                  %1161 = vst [vmem:[%s1001 + $0x278] sm:$0xff] %v1160
                  %v1162 = vld [vmem:[%s1000 + $0x1630] sm:$0xff]
                  %1163 = vst [vmem:[%s1001 + $0x280] sm:$0xff] %v1162
                  %v1164 = vld [vmem:[%s1000 + $0x1638] sm:$0xff]
                  %1165 = vst [vmem:[%s1001 + $0x288] sm:$0xff] %v1164
                  %v1166 = vld [vmem:[%s1000 + $0x1640] sm:$0xff]
                  %1167 = vst [vmem:[%s1001 + $0x290] sm:$0xff] %v1166
                  %v1168 = vld [vmem:[%s1000 + $0x1648] sm:$0xff]
                  %1169 = vst [vmem:[%s1001 + $0x298] sm:$0xff] %v1168
                  %v1170 = vld [vmem:[%s1000 + $0x1650] sm:$0xff]
                  %1171 = vst [vmem:[%s1001 + $0x2a0] sm:$0xff] %v1170
                  %v1172 = vld [vmem:[%s1000 + $0x1658] sm:$0xff]
                  %1173 = vst [vmem:[%s1001 + $0x2a8] sm:$0xff] %v1172
                  %v1174 = vld [vmem:[%s1000 + $0x1660] sm:$0xff]
                  %1175 = vst [vmem:[%s1001 + $0x2b0] sm:$0xff] %v1174
                  %v1176 = vld [vmem:[%s1000 + $0x1668] sm:$0xff]
                  %1177 = vst [vmem:[%s1001 + $0x2b8] sm:$0xff] %v1176
                  %v1178 = vld [vmem:[%s1000 + $0x1670] sm:$0xff]
                  %1179 = vst [vmem:[%s1001 + $0x2c0] sm:$0xff] %v1178
                  %v1180 = vld [vmem:[%s1000 + $0x1678] sm:$0xff]
                  %1181 = vst [vmem:[%s1001 + $0x2c8] sm:$0xff] %v1180
                  %v1182 = vld [vmem:[%s1000 + $0x1680] sm:$0xff]
                  %1183 = vst [vmem:[%s1001 + $0x2d0] sm:$0xff] %v1182
                  %v1184 = vld [vmem:[%s1000 + $0x1688] sm:$0xff]
                  %1185 = vst [vmem:[%s1001 + $0x2d8] sm:$0xff] %v1184
                  %v1186 = vld [vmem:[%s1000 + $0x1690] sm:$0xff]
                  %1187 = vst [vmem:[%s1001 + $0x2e0] sm:$0xff] %v1186
                  %v1188 = vld [vmem:[%s1000 + $0x1698] sm:$0xff]
                  %1189 = vst [vmem:[%s1001 + $0x2e8] sm:$0xff] %v1188
                  %v1190 = vld [vmem:[%s1000 + $0x16a0] sm:$0xff]
                  %1191 = vst [vmem:[%s1001 + $0x2f0] sm:$0xff] %v1190
                  %v1192 = vld [vmem:[%s1000 + $0x16a8] sm:$0xff]
                  %1193 = vst [vmem:[%s1001 + $0x2f8] sm:$0xff] %v1192
                  %v1194 = vld [vmem:[%s1000 + $0x16b0] sm:$0xff]
                  %1195 = vst [vmem:[%s1001 + $0x300] sm:$0xff] %v1194
                  %v1196 = vld [vmem:[%s1000 + $0x16b8] sm:$0xff]
                  %1197 = vst [vmem:[%s1001 + $0x308] sm:$0xff] %v1196
                  %v1198 = vld [vmem:[%s1000 + $0x16c0] sm:$0xff]
                  %1199 = vst [vmem:[%s1001 + $0x310] sm:$0xff] %v1198
                  %v1200 = vld [vmem:[%s1000 + $0x16c8] sm:$0xff]
                  %1201 = vst [vmem:[%s1001 + $0x318] sm:$0xff] %v1200
                  %v1202 = vld [vmem:[%s1000 + $0x16d0] sm:$0xff]
                  %1203 = vst [vmem:[%s1001 + $0x320] sm:$0xff] %v1202
                  %v1204 = vld [vmem:[%s1000 + $0x16d8] sm:$0xff]
                  %1205 = vst [vmem:[%s1001 + $0x328] sm:$0xff] %v1204
                  %v1206 = vld [vmem:[%s1000 + $0x16e0] sm:$0xff]
                  %1207 = vst [vmem:[%s1001 + $0x330] sm:$0xff] %v1206
                  %v1208 = vld [vmem:[%s1000 + $0x16e8] sm:$0xff]
                  %1209 = vst [vmem:[%s1001 + $0x338] sm:$0xff] %v1208
                  %v1210 = vld [vmem:[%s1000 + $0x16f0] sm:$0xff]
                  %1211 = vst [vmem:[%s1001 + $0x340] sm:$0xff] %v1210
                  %v1212 = vld [vmem:[%s1000 + $0x20d0] sm:$0xff]
                  %1213 = vst [vmem:[%s1001 + $0x348] sm:$0xff] %v1212
                  %v1214 = vld [vmem:[%s1000 + $0x20d8] sm:$0xff]
                  %1215 = vst [vmem:[%s1001 + $0x350] sm:$0xff] %v1214
                  %v1216 = vld [vmem:[%s1000 + $0x20e0] sm:$0xff]
                  %1217 = vst [vmem:[%s1001 + $0x358] sm:$0xff] %v1216
                  %v1218 = vld [vmem:[%s1000 + $0x20e8] sm:$0xff]
                  %1219 = vst [vmem:[%s1001 + $0x360] sm:$0xff] %v1218
                  %v1220 = vld [vmem:[%s1000 + $0x20f0] sm:$0xff]
                  %1221 = vst [vmem:[%s1001 + $0x368] sm:$0xff] %v1220
                  %v1222 = vld [vmem:[%s1000 + $0x20f8] sm:$0xff]
                  %1223 = vst [vmem:[%s1001 + $0x370] sm:$0xff] %v1222
                  %v1224 = vld [vmem:[%s1000 + $0x2100] sm:$0xff]
                  %1225 = vst [vmem:[%s1001 + $0x378] sm:$0xff] %v1224
                  %v1226 = vld [vmem:[%s1000 + $0x2108] sm:$0xff]
                  %1227 = vst [vmem:[%s1001 + $0x380] sm:$0xff] %v1226
                  %v1228 = vld [vmem:[%s1000 + $0x2110] sm:$0xff]
                  %1229 = vst [vmem:[%s1001 + $0x388] sm:$0xff] %v1228
                  %v1230 = vld [vmem:[%s1000 + $0x2118] sm:$0xff]
                  %1231 = vst [vmem:[%s1001 + $0x390] sm:$0xff] %v1230
                  %v1232 = vld [vmem:[%s1000 + $0x2120] sm:$0xff]
                  %1233 = vst [vmem:[%s1001 + $0x398] sm:$0xff] %v1232
                  %v1234 = vld [vmem:[%s1000 + $0x2128] sm:$0xff]
                  %1235 = vst [vmem:[%s1001 + $0x3a0] sm:$0xff] %v1234
                  %v1236 = vld [vmem:[%s1000 + $0x2130] sm:$0xff]
                  %1237 = vst [vmem:[%s1001 + $0x3a8] sm:$0xff] %v1236
                  %v1238 = vld [vmem:[%s1000 + $0x2138] sm:$0xff]
                  %1239 = vst [vmem:[%s1001 + $0x3b0] sm:$0xff] %v1238
                  %v1240 = vld [vmem:[%s1000 + $0x2140] sm:$0xff]
                  %1241 = vst [vmem:[%s1001 + $0x3b8] sm:$0xff] %v1240
                  %v1242 = vld [vmem:[%s1000 + $0x2148] sm:$0xff]
                  %1243 = vst [vmem:[%s1001 + $0x3c0] sm:$0xff] %v1242
                  %v1244 = vld [vmem:[%s1000 + $0x2150] sm:$0xff]
                  %1245 = vst [vmem:[%s1001 + $0x3c8] sm:$0xff] %v1244
                  %v1246 = vld [vmem:[%s1000 + $0x2158] sm:$0xff]
                  %1247 = vst [vmem:[%s1001 + $0x3d0] sm:$0xff] %v1246
                  %v1248 = vld [vmem:[%s1000 + $0x2160] sm:$0xff]
                  %1249 = vst [vmem:[%s1001 + $0x3d8] sm:$0xff] %v1248
                  %v1250 = vld [vmem:[%s1000 + $0x2168] sm:$0xff]
                  %1251 = vst [vmem:[%s1001 + $0x3e0] sm:$0xff] %v1250
                  %v1252 = vld [vmem:[%s1000 + $0x2170] sm:$0xff]
                  %1253 = vst [vmem:[%s1001 + $0x3e8] sm:$0xff] %v1252
                  %v1254 = vld [vmem:[%s1000 + $0x2178] sm:$0xff]
                  %1255 = vst [vmem:[%s1001 + $0x3f0] sm:$0xff] %v1254
                  %v1256 = vld [vmem:[%s1000 + $0x2180] sm:$0xff]
                  %1257 = vst [vmem:[%s1001 + $0x3f8] sm:$0xff] %v1256
                  %v1258 = vld [vmem:[%s1000 + $0x2188] sm:$0xff]
                  %1259 = vst [vmem:[%s1001 + $0x400] sm:$0xff] %v1258
                  %v1260 = vld [vmem:[%s1000 + $0x2190] sm:$0xff]
                  %1261 = vst [vmem:[%s1001 + $0x408] sm:$0xff] %v1260
                  %v1262 = vld [vmem:[%s1000 + $0x2198] sm:$0xff]
                  %1263 = vst [vmem:[%s1001 + $0x410] sm:$0xff] %v1262
                  %v1264 = vld [vmem:[%s1000 + $0x21a0] sm:$0xff]
                  %1265 = vst [vmem:[%s1001 + $0x418] sm:$0xff] %v1264
                  %v1266 = vld [vmem:[%s1000 + $0x21a8] sm:$0xff]
                  %1267 = vst [vmem:[%s1001 + $0x420] sm:$0xff] %v1266
                  %v1268 = vld [vmem:[%s1000 + $0x21b0] sm:$0xff]
                  %1269 = vst [vmem:[%s1001 + $0x428] sm:$0xff] %v1268
                  %v1270 = vld [vmem:[%s1000 + $0x21b8] sm:$0xff]
                  %1271 = vst [vmem:[%s1001 + $0x430] sm:$0xff] %v1270
                  %v1272 = vld [vmem:[%s1000 + $0x21c0] sm:$0xff]
                  %1273 = vst [vmem:[%s1001 + $0x438] sm:$0xff] %v1272
                  %v1274 = vld [vmem:[%s1000 + $0x21c8] sm:$0xff]
                  %1275 = vst [vmem:[%s1001 + $0x440] sm:$0xff] %v1274
                  %v1276 = vld [vmem:[%s1000 + $0x21d0] sm:$0xff]
                  %1277 = vst [vmem:[%s1001 + $0x448] sm:$0xff] %v1276
                  %v1278 = vld [vmem:[%s1000 + $0x21d8] sm:$0xff]
                  %1279 = vst [vmem:[%s1001 + $0x450] sm:$0xff] %v1278
                  %v1280 = vld [vmem:[%s1000 + $0x21e0] sm:$0xff]
                  %1281 = vst [vmem:[%s1001 + $0x458] sm:$0xff] %v1280
                  %v1282 = vld [vmem:[%s1000 + $0x2bc0] sm:$0xff]
                  %1283 = vst [vmem:[%s1001 + $0x460] sm:$0xff] %v1282
                  %v1284 = vld [vmem:[%s1000 + $0x2bc8] sm:$0xff]
                  %1285 = vst [vmem:[%s1001 + $0x468] sm:$0xff] %v1284
                  %v1286 = vld [vmem:[%s1000 + $0x2bd0] sm:$0xff]
                  %1287 = vst [vmem:[%s1001 + $0x470] sm:$0xff] %v1286
                  %v1288 = vld [vmem:[%s1000 + $0x2bd8] sm:$0xff]
                  %1289 = vst [vmem:[%s1001 + $0x478] sm:$0xff] %v1288
                  %v1290 = vld [vmem:[%s1000 + $0x2be0] sm:$0xff]
                  %1291 = vst [vmem:[%s1001 + $0x480] sm:$0xff] %v1290
                  %v1292 = vld [vmem:[%s1000 + $0x2be8] sm:$0xff]
                  %1293 = vst [vmem:[%s1001 + $0x488] sm:$0xff] %v1292
                  %v1294 = vld [vmem:[%s1000 + $0x2bf0] sm:$0xff]
                  %1295 = vst [vmem:[%s1001 + $0x490] sm:$0xff] %v1294
                  %v1296 = vld [vmem:[%s1000 + $0x2bf8] sm:$0xff]
                  %1297 = vst [vmem:[%s1001 + $0x498] sm:$0xff] %v1296
                  %v1298 = vld [vmem:[%s1000 + $0x2c00] sm:$0xff]
                  %1299 = vst [vmem:[%s1001 + $0x4a0] sm:$0xff] %v1298
                  %v1300 = vld [vmem:[%s1000 + $0x2c08] sm:$0xff]
                  %1301 = vst [vmem:[%s1001 + $0x4a8] sm:$0xff] %v1300
                  %v1302 = vld [vmem:[%s1000 + $0x2c10] sm:$0xff]
                  %1303 = vst [vmem:[%s1001 + $0x4b0] sm:$0xff] %v1302
                  %v1304 = vld [vmem:[%s1000 + $0x2c18] sm:$0xff]
                  %1305 = vst [vmem:[%s1001 + $0x4b8] sm:$0xff] %v1304
                  %v1306 = vld [vmem:[%s1000 + $0x2c20] sm:$0xff]
                  %1307 = vst [vmem:[%s1001 + $0x4c0] sm:$0xff] %v1306
                  %v1308 = vld [vmem:[%s1000 + $0x2c28] sm:$0xff]
                  %1309 = vst [vmem:[%s1001 + $0x4c8] sm:$0xff] %v1308
                  %v1310 = vld [vmem:[%s1000 + $0x2c30] sm:$0xff]
                  %1311 = vst [vmem:[%s1001 + $0x4d0] sm:$0xff] %v1310
                  %v1312 = vld [vmem:[%s1000 + $0x2c38] sm:$0xff]
                  %1313 = vst [vmem:[%s1001 + $0x4d8] sm:$0xff] %v1312
                  %v1314 = vld [vmem:[%s1000 + $0x2c40] sm:$0xff]
                  %1315 = vst [vmem:[%s1001 + $0x4e0] sm:$0xff] %v1314
                  %v1316 = vld [vmem:[%s1000 + $0x2c48] sm:$0xff]
                  %1317 = vst [vmem:[%s1001 + $0x4e8] sm:$0xff] %v1316
                  %v1318 = vld [vmem:[%s1000 + $0x2c50] sm:$0xff]
                  %1319 = vst [vmem:[%s1001 + $0x4f0] sm:$0xff] %v1318
                  %v1320 = vld [vmem:[%s1000 + $0x2c58] sm:$0xff]
                  %1321 = vst [vmem:[%s1001 + $0x4f8] sm:$0xff] %v1320
                  %v1322 = vld [vmem:[%s1000 + $0x2c60] sm:$0xff]
                  %1323 = vst [vmem:[%s1001 + $0x500] sm:$0xff] %v1322
                  %v1324 = vld [vmem:[%s1000 + $0x2c68] sm:$0xff]
                  %1325 = vst [vmem:[%s1001 + $0x508] sm:$0xff] %v1324
                  %v1326 = vld [vmem:[%s1000 + $0x2c70] sm:$0xff]
                  %1327 = vst [vmem:[%s1001 + $0x510] sm:$0xff] %v1326
                  %v1328 = vld [vmem:[%s1000 + $0x2c78] sm:$0xff]
                  %1329 = vst [vmem:[%s1001 + $0x518] sm:$0xff] %v1328
                  %v1330 = vld [vmem:[%s1000 + $0x2c80] sm:$0xff]
                  %1331 = vst [vmem:[%s1001 + $0x520] sm:$0xff] %v1330
                  %v1332 = vld [vmem:[%s1000 + $0x2c88] sm:$0xff]
                  %1333 = vst [vmem:[%s1001 + $0x528] sm:$0xff] %v1332
                  %v1334 = vld [vmem:[%s1000 + $0x2c90] sm:$0xff]
                  %1335 = vst [vmem:[%s1001 + $0x530] sm:$0xff] %v1334
                  %v1336 = vld [vmem:[%s1000 + $0x2c98] sm:$0xff]
                  %1337 = vst [vmem:[%s1001 + $0x538] sm:$0xff] %v1336
                  %v1338 = vld [vmem:[%s1000 + $0x2ca0] sm:$0xff]
                  %1339 = vst [vmem:[%s1001 + $0x540] sm:$0xff] %v1338
                  %v1340 = vld [vmem:[%s1000 + $0x2ca8] sm:$0xff]
                  %1341 = vst [vmem:[%s1001 + $0x548] sm:$0xff] %v1340
                  %v1342 = vld [vmem:[%s1000 + $0x2cb0] sm:$0xff]
                  %1343 = vst [vmem:[%s1001 + $0x550] sm:$0xff] %v1342
                  %v1344 = vld [vmem:[%s1000 + $0x2cb8] sm:$0xff]
                  %1345 = vst [vmem:[%s1001 + $0x558] sm:$0xff] %v1344
                  %v1346 = vld [vmem:[%s1000 + $0x2cc0] sm:$0xff]
                  %1347 = vst [vmem:[%s1001 + $0x560] sm:$0xff] %v1346
                  %v1348 = vld [vmem:[%s1000 + $0x2cc8] sm:$0xff]
                  %1349 = vst [vmem:[%s1001 + $0x568] sm:$0xff] %v1348
                  %v1350 = vld [vmem:[%s1000 + $0x2cd0] sm:$0xff]
                  %1351 = vst [vmem:[%s1001 + $0x570] sm:$0xff] %v1350
                  %v1352 = vld [vmem:[%s1000 + $0x36b0] sm:$0xff]
                  %1353 = vst [vmem:[%s1001 + $0x578] sm:$0xff] %v1352
                  %v1354 = vld [vmem:[%s1000 + $0x36b8] sm:$0xff]
                  %1355 = vst [vmem:[%s1001 + $0x580] sm:$0xff] %v1354
                  %v1356 = vld [vmem:[%s1000 + $0x36c0] sm:$0xff]
                  %1357 = vst [vmem:[%s1001 + $0x588] sm:$0xff] %v1356
                  %v1358 = vld [vmem:[%s1000 + $0x36c8] sm:$0xff]
                  %1359 = vst [vmem:[%s1001 + $0x590] sm:$0xff] %v1358
                  %v1360 = vld [vmem:[%s1000 + $0x36d0] sm:$0xff]
                  %1361 = vst [vmem:[%s1001 + $0x598] sm:$0xff] %v1360
                  %v1362 = vld [vmem:[%s1000 + $0x36d8] sm:$0xff]
                  %1363 = vst [vmem:[%s1001 + $0x5a0] sm:$0xff] %v1362
                  %v1364 = vld [vmem:[%s1000 + $0x36e0] sm:$0xff]
                  %1365 = vst [vmem:[%s1001 + $0x5a8] sm:$0xff] %v1364
                  %v1366 = vld [vmem:[%s1000 + $0x36e8] sm:$0xff]
                  %1367 = vst [vmem:[%s1001 + $0x5b0] sm:$0xff] %v1366
                  %v1368 = vld [vmem:[%s1000 + $0x36f0] sm:$0xff]
                  %1369 = vst [vmem:[%s1001 + $0x5b8] sm:$0xff] %v1368
                  %v1370 = vld [vmem:[%s1000 + $0x36f8] sm:$0xff]
                  %1371 = vst [vmem:[%s1001 + $0x5c0] sm:$0xff] %v1370
                  %v1372 = vld [vmem:[%s1000 + $0x3700] sm:$0xff]
                  %1373 = vst [vmem:[%s1001 + $0x5c8] sm:$0xff] %v1372
                  %v1374 = vld [vmem:[%s1000 + $0x3708] sm:$0xff]
                  %1375 = vst [vmem:[%s1001 + $0x5d0] sm:$0xff] %v1374
                  %v1376 = vld [vmem:[%s1000 + $0x3710] sm:$0xff]
                  %1377 = vst [vmem:[%s1001 + $0x5d8] sm:$0xff] %v1376
                  %v1378 = vld [vmem:[%s1000 + $0x3718] sm:$0xff]
                  %1379 = vst [vmem:[%s1001 + $0x5e0] sm:$0xff] %v1378
                  %v1380 = vld [vmem:[%s1000 + $0x3720] sm:$0xff]
                  %1381 = vst [vmem:[%s1001 + $0x5e8] sm:$0xff] %v1380
                  %v1382 = vld [vmem:[%s1000 + $0x3728] sm:$0xff]
                  %1383 = vst [vmem:[%s1001 + $0x5f0] sm:$0xff] %v1382
                  %v1384 = vld [vmem:[%s1000 + $0x3730] sm:$0xff]
                  %1385 = vst [vmem:[%s1001 + $0x5f8] sm:$0xff] %v1384
                  %v1386 = vld [vmem:[%s1000 + $0x3738] sm:$0xff]
                  %1387 = vst [vmem:[%s1001 + $0x600] sm:$0xff] %v1386
                  %v1388 = vld [vmem:[%s1000 + $0x3740] sm:$0xff]
                  %1389 = vst [vmem:[%s1001 + $0x608] sm:$0xff] %v1388
                  %v1390 = vld [vmem:[%s1000 + $0x3748] sm:$0xff]
                  %1391 = vst [vmem:[%s1001 + $0x610] sm:$0xff] %v1390
                  %v1392 = vld [vmem:[%s1000 + $0x3750] sm:$0xff]
                  %1393 = vst [vmem:[%s1001 + $0x618] sm:$0xff] %v1392
                  %v1394 = vld [vmem:[%s1000 + $0x3758] sm:$0xff]
                  %1395 = vst [vmem:[%s1001 + $0x620] sm:$0xff] %v1394
                  %v1396 = vld [vmem:[%s1000 + $0x3760] sm:$0xff]
                  %1397 = vst [vmem:[%s1001 + $0x628] sm:$0xff] %v1396
                  %v1398 = vld [vmem:[%s1000 + $0x3768] sm:$0xff]
                  %1399 = vst [vmem:[%s1001 + $0x630] sm:$0xff] %v1398
                  %v1400 = vld [vmem:[%s1000 + $0x3770] sm:$0xff]
                  %1401 = vst [vmem:[%s1001 + $0x638] sm:$0xff] %v1400
                  %v1402 = vld [vmem:[%s1000 + $0x3778] sm:$0xff]
                  %1403 = vst [vmem:[%s1001 + $0x640] sm:$0xff] %v1402
                  %v1404 = vld [vmem:[%s1000 + $0x3780] sm:$0xff]
                  %1405 = vst [vmem:[%s1001 + $0x648] sm:$0xff] %v1404
                  %v1406 = vld [vmem:[%s1000 + $0x3788] sm:$0xff]
                  %1407 = vst [vmem:[%s1001 + $0x650] sm:$0xff] %v1406
                  %v1408 = vld [vmem:[%s1000 + $0x3790] sm:$0xff]
                  %1409 = vst [vmem:[%s1001 + $0x658] sm:$0xff] %v1408
                  %v1410 = vld [vmem:[%s1000 + $0x3798] sm:$0xff]
                  %1411 = vst [vmem:[%s1001 + $0x660] sm:$0xff] %v1410
                  %v1412 = vld [vmem:[%s1000 + $0x37a0] sm:$0xff]
                  %1413 = vst [vmem:[%s1001 + $0x668] sm:$0xff] %v1412
                  %v1414 = vld [vmem:[%s1000 + $0x37a8] sm:$0xff]
                  %1415 = vst [vmem:[%s1001 + $0x670] sm:$0xff] %v1414
                  %v1416 = vld [vmem:[%s1000 + $0x37b0] sm:$0xff]
                  %1417 = vst [vmem:[%s1001 + $0x678] sm:$0xff] %v1416
                  %v1418 = vld [vmem:[%s1000 + $0x37b8] sm:$0xff]
                  %1419 = vst [vmem:[%s1001 + $0x680] sm:$0xff] %v1418
                  %v1420 = vld [vmem:[%s1000 + $0x37c0] sm:$0xff]
                  %1421 = vst [vmem:[%s1001 + $0x688] sm:$0xff] %v1420
                  %v1422 = vld [vmem:[%s1000 + $0x41a0] sm:$0xff]
                  %1423 = vst [vmem:[%s1001 + $0x690] sm:$0xff] %v1422
                  %v1424 = vld [vmem:[%s1000 + $0x41a8] sm:$0xff]
                  %1425 = vst [vmem:[%s1001 + $0x698] sm:$0xff] %v1424
                  %v1426 = vld [vmem:[%s1000 + $0x41b0] sm:$0xff]
                  %1427 = vst [vmem:[%s1001 + $0x6a0] sm:$0xff] %v1426
                  %v1428 = vld [vmem:[%s1000 + $0x41b8] sm:$0xff]
                  %1429 = vst [vmem:[%s1001 + $0x6a8] sm:$0xff] %v1428
                  %v1430 = vld [vmem:[%s1000 + $0x41c0] sm:$0xff]
                  %1431 = vst [vmem:[%s1001 + $0x6b0] sm:$0xff] %v1430
                  %v1432 = vld [vmem:[%s1000 + $0x41c8] sm:$0xff]
                  %1433 = vst [vmem:[%s1001 + $0x6b8] sm:$0xff] %v1432
                  %v1434 = vld [vmem:[%s1000 + $0x41d0] sm:$0xff]
                  %1435 = vst [vmem:[%s1001 + $0x6c0] sm:$0xff] %v1434
                  %v1436 = vld [vmem:[%s1000 + $0x41d8] sm:$0xff]
                  %1437 = vst [vmem:[%s1001 + $0x6c8] sm:$0xff] %v1436
                  %v1438 = vld [vmem:[%s1000 + $0x41e0] sm:$0xff]
                  %1439 = vst [vmem:[%s1001 + $0x6d0] sm:$0xff] %v1438
                  %v1440 = vld [vmem:[%s1000 + $0x41e8] sm:$0xff]
                  %1441 = vst [vmem:[%s1001 + $0x6d8] sm:$0xff] %v1440
                  %v1442 = vld [vmem:[%s1000 + $0x41f0] sm:$0xff]
                  %1443 = vst [vmem:[%s1001 + $0x6e0] sm:$0xff] %v1442
                  %v1444 = vld [vmem:[%s1000 + $0x41f8] sm:$0xff]
                  %1445 = vst [vmem:[%s1001 + $0x6e8] sm:$0xff] %v1444
                  %v1446 = vld [vmem:[%s1000 + $0x4200] sm:$0xff]
                  %1447 = vst [vmem:[%s1001 + $0x6f0] sm:$0xff] %v1446
                  %v1448 = vld [vmem:[%s1000 + $0x4208] sm:$0xff]
                  %1449 = vst [vmem:[%s1001 + $0x6f8] sm:$0xff] %v1448
                  %v1450 = vld [vmem:[%s1000 + $0x4210] sm:$0xff]
                  %1451 = vst [vmem:[%s1001 + $0x700] sm:$0xff] %v1450
                  %v1452 = vld [vmem:[%s1000 + $0x4218] sm:$0xff]
                  %1453 = vst [vmem:[%s1001 + $0x708] sm:$0xff] %v1452
                  %v1454 = vld [vmem:[%s1000 + $0x4220] sm:$0xff]
                  %1455 = vst [vmem:[%s1001 + $0x710] sm:$0xff] %v1454
                  %v1456 = vld [vmem:[%s1000 + $0x4228] sm:$0xff]
                  %1457 = vst [vmem:[%s1001 + $0x718] sm:$0xff] %v1456
                  %v1458 = vld [vmem:[%s1000 + $0x4230] sm:$0xff]
                  %1459 = vst [vmem:[%s1001 + $0x720] sm:$0xff] %v1458
                  %v1460 = vld [vmem:[%s1000 + $0x4238] sm:$0xff]
                  %1461 = vst [vmem:[%s1001 + $0x728] sm:$0xff] %v1460
                  %v1462 = vld [vmem:[%s1000 + $0x4240] sm:$0xff]
                  %1463 = vst [vmem:[%s1001 + $0x730] sm:$0xff] %v1462
                  %v1464 = vld [vmem:[%s1000 + $0x4248] sm:$0xff]
                  %1465 = vst [vmem:[%s1001 + $0x738] sm:$0xff] %v1464
                  %v1466 = vld [vmem:[%s1000 + $0x4250] sm:$0xff]
                  %1467 = vst [vmem:[%s1001 + $0x740] sm:$0xff] %v1466
                  %v1468 = vld [vmem:[%s1000 + $0x4258] sm:$0xff]
                  %1469 = vst [vmem:[%s1001 + $0x748] sm:$0xff] %v1468
                  %v1470 = vld [vmem:[%s1000 + $0x4260] sm:$0xff]
                  %1471 = vst [vmem:[%s1001 + $0x750] sm:$0xff] %v1470
                  %v1472 = vld [vmem:[%s1000 + $0x4268] sm:$0xff]
                  %1473 = vst [vmem:[%s1001 + $0x758] sm:$0xff] %v1472
                  %v1474 = vld [vmem:[%s1000 + $0x4270] sm:$0xff]
                  %1475 = vst [vmem:[%s1001 + $0x760] sm:$0xff] %v1474
                  %v1476 = vld [vmem:[%s1000 + $0x4278] sm:$0xff]
                  %1477 = vst [vmem:[%s1001 + $0x768] sm:$0xff] %v1476
                  %v1478 = vld [vmem:[%s1000 + $0x4280] sm:$0xff]
                  %1479 = vst [vmem:[%s1001 + $0x770] sm:$0xff] %v1478
                  %v1480 = vld [vmem:[%s1000 + $0x4288] sm:$0xff]
                  %1481 = vst [vmem:[%s1001 + $0x778] sm:$0xff] %v1480
                  %v1482 = vld [vmem:[%s1000 + $0x4290] sm:$0xff]
                  %1483 = vst [vmem:[%s1001 + $0x780] sm:$0xff] %v1482
                  %v1484 = vld [vmem:[%s1000 + $0x4298] sm:$0xff]
                  %1485 = vst [vmem:[%s1001 + $0x788] sm:$0xff] %v1484
                  %v1486 = vld [vmem:[%s1000 + $0x42a0] sm:$0xff]
                  %1487 = vst [vmem:[%s1001 + $0x790] sm:$0xff] %v1486
                  %v1488 = vld [vmem:[%s1000 + $0x42a8] sm:$0xff]
                  %1489 = vst [vmem:[%s1001 + $0x798] sm:$0xff] %v1488
                  %v1490 = vld [vmem:[%s1000 + $0x42b0] sm:$0xff]
                  %1491 = vst [vmem:[%s1001 + $0x7a0] sm:$0xff] %v1490
                  %v1492 = vld [vmem:[%s1000 + $0x4c90] sm:$0xff]
                  %1493 = vst [vmem:[%s1001 + $0x7a8] sm:$0xff] %v1492
                  %v1494 = vld [vmem:[%s1000 + $0x4c98] sm:$0xff]
                  %1495 = vst [vmem:[%s1001 + $0x7b0] sm:$0xff] %v1494
                  %v1496 = vld [vmem:[%s1000 + $0x4ca0] sm:$0xff]
                  %1497 = vst [vmem:[%s1001 + $0x7b8] sm:$0xff] %v1496
                  %v1498 = vld [vmem:[%s1000 + $0x4ca8] sm:$0xff]
                  %1499 = vst [vmem:[%s1001 + $0x7c0] sm:$0xff] %v1498
                  %v1500 = vld [vmem:[%s1000 + $0x4cb0] sm:$0xff]
                  %1501 = vst [vmem:[%s1001 + $0x7c8] sm:$0xff] %v1500
                  %v1502 = vld [vmem:[%s1000 + $0x4cb8] sm:$0xff]
                  %1503 = vst [vmem:[%s1001 + $0x7d0] sm:$0xff] %v1502
                  %v1504 = vld [vmem:[%s1000 + $0x4cc0] sm:$0xff]
                  %1505 = vst [vmem:[%s1001 + $0x7d8] sm:$0xff] %v1504
                  %v1506 = vld [vmem:[%s1000 + $0x4cc8] sm:$0xff]
                  %1507 = vst [vmem:[%s1001 + $0x7e0] sm:$0xff] %v1506
                  %v1508 = vld [vmem:[%s1000 + $0x4cd0] sm:$0xff]
                  %1509 = vst [vmem:[%s1001 + $0x7e8] sm:$0xff] %v1508
                  %v1510 = vld [vmem:[%s1000 + $0x4cd8] sm:$0xff]
                  %1511 = vst [vmem:[%s1001 + $0x7f0] sm:$0xff] %v1510
                  %v1512 = vld [vmem:[%s1000 + $0x4ce0] sm:$0xff]
                  %1513 = vst [vmem:[%s1001 + $0x7f8] sm:$0xff] %v1512
                  %v1514 = vld [vmem:[%s1000 + $0x4ce8] sm:$0xff]
                  %1515 = vst [vmem:[%s1001 + $0x800] sm:$0xff] %v1514
                  %v1516 = vld [vmem:[%s1000 + $0x4cf0] sm:$0xff]
                  %1517 = vst [vmem:[%s1001 + $0x808] sm:$0xff] %v1516
                  %v1518 = vld [vmem:[%s1000 + $0x4cf8] sm:$0xff]
                  %1519 = vst [vmem:[%s1001 + $0x810] sm:$0xff] %v1518
                  %v1520 = vld [vmem:[%s1000 + $0x4d00] sm:$0xff]
                  %1521 = vst [vmem:[%s1001 + $0x818] sm:$0xff] %v1520
                  %v1522 = vld [vmem:[%s1000 + $0x4d08] sm:$0xff]
                  %1523 = vst [vmem:[%s1001 + $0x820] sm:$0xff] %v1522
                  %v1524 = vld [vmem:[%s1000 + $0x4d10] sm:$0xff]
                  %1525 = vst [vmem:[%s1001 + $0x828] sm:$0xff] %v1524
                  %v1526 = vld [vmem:[%s1000 + $0x4d18] sm:$0xff]
                  %1527 = vst [vmem:[%s1001 + $0x830] sm:$0xff] %v1526
                  %v1528 = vld [vmem:[%s1000 + $0x4d20] sm:$0xff]
                  %1529 = vst [vmem:[%s1001 + $0x838] sm:$0xff] %v1528
                  %v1530 = vld [vmem:[%s1000 + $0x4d28] sm:$0xff]
                  %1531 = vst [vmem:[%s1001 + $0x840] sm:$0xff] %v1530
                  %v1532 = vld [vmem:[%s1000 + $0x4d30] sm:$0xff]
                  %1533 = vst [vmem:[%s1001 + $0x848] sm:$0xff] %v1532
                  %v1534 = vld [vmem:[%s1000 + $0x4d38] sm:$0xff]
                  %1535 = vst [vmem:[%s1001 + $0x850] sm:$0xff] %v1534
                  %v1536 = vld [vmem:[%s1000 + $0x4d40] sm:$0xff]
                  %1537 = vst [vmem:[%s1001 + $0x858] sm:$0xff] %v1536
                  %v1538 = vld [vmem:[%s1000 + $0x4d48] sm:$0xff]
                  %1539 = vst [vmem:[%s1001 + $0x860] sm:$0xff] %v1538
                  %v1540 = vld [vmem:[%s1000 + $0x4d50] sm:$0xff]
                  %1541 = vst [vmem:[%s1001 + $0x868] sm:$0xff] %v1540
                  %v1542 = vld [vmem:[%s1000 + $0x4d58] sm:$0xff]
                  %1543 = vst [vmem:[%s1001 + $0x870] sm:$0xff] %v1542
                  %v1544 = vld [vmem:[%s1000 + $0x4d60] sm:$0xff]
                  %1545 = vst [vmem:[%s1001 + $0x878] sm:$0xff] %v1544
                  %v1546 = vld [vmem:[%s1000 + $0x4d68] sm:$0xff]
                  %1547 = vst [vmem:[%s1001 + $0x880] sm:$0xff] %v1546
                  %v1548 = vld [vmem:[%s1000 + $0x4d70] sm:$0xff]
                  %1549 = vst [vmem:[%s1001 + $0x888] sm:$0xff] %v1548
                  %v1550 = vld [vmem:[%s1000 + $0x4d78] sm:$0xff]
                  %1551 = vst [vmem:[%s1001 + $0x890] sm:$0xff] %v1550
                  %v1552 = vld [vmem:[%s1000 + $0x4d80] sm:$0xff]
                  %1553 = vst [vmem:[%s1001 + $0x898] sm:$0xff] %v1552
                  %v1554 = vld [vmem:[%s1000 + $0x4d88] sm:$0xff]
                  %1555 = vst [vmem:[%s1001 + $0x8a0] sm:$0xff] %v1554
                  %v1556 = vld [vmem:[%s1000 + $0x4d90] sm:$0xff]
                  %1557 = vst [vmem:[%s1001 + $0x8a8] sm:$0xff] %v1556
                  %v1558 = vld [vmem:[%s1000 + $0x4d98] sm:$0xff]
                  %1559 = vst [vmem:[%s1001 + $0x8b0] sm:$0xff] %v1558
                  %v1560 = vld [vmem:[%s1000 + $0x4da0] sm:$0xff]
                  %1561 = vst [vmem:[%s1001 + $0x8b8] sm:$0xff] %v1560
                  %v1562 = vld [vmem:[%s1000 + $0x5780] sm:$0xff]
                  %1563 = vst [vmem:[%s1001 + $0x8c0] sm:$0xff] %v1562
                  %v1564 = vld [vmem:[%s1000 + $0x5788] sm:$0xff]
                  %1565 = vst [vmem:[%s1001 + $0x8c8] sm:$0xff] %v1564
                  %v1566 = vld [vmem:[%s1000 + $0x5790] sm:$0xff]
                  %1567 = vst [vmem:[%s1001 + $0x8d0] sm:$0xff] %v1566
                  %v1568 = vld [vmem:[%s1000 + $0x5798] sm:$0xff]
                  %1569 = vst [vmem:[%s1001 + $0x8d8] sm:$0xff] %v1568
                  %v1570 = vld [vmem:[%s1000 + $0x57a0] sm:$0xff]
                  %1571 = vst [vmem:[%s1001 + $0x8e0] sm:$0xff] %v1570
                  %v1572 = vld [vmem:[%s1000 + $0x57a8] sm:$0xff]
                  %1573 = vst [vmem:[%s1001 + $0x8e8] sm:$0xff] %v1572
                  %v1574 = vld [vmem:[%s1000 + $0x57b0] sm:$0xff]
                  %1575 = vst [vmem:[%s1001 + $0x8f0] sm:$0xff] %v1574
                  %v1576 = vld [vmem:[%s1000 + $0x57b8] sm:$0xff]
                  %1577 = vst [vmem:[%s1001 + $0x8f8] sm:$0xff] %v1576
                  %v1578 = vld [vmem:[%s1000 + $0x57c0] sm:$0xff]
                  %1579 = vst [vmem:[%s1001 + $0x900] sm:$0xff] %v1578
                  %v1580 = vld [vmem:[%s1000 + $0x57c8] sm:$0xff]
                  %1581 = vst [vmem:[%s1001 + $0x908] sm:$0xff] %v1580
                  %v1582 = vld [vmem:[%s1000 + $0x57d0] sm:$0xff]
                  %1583 = vst [vmem:[%s1001 + $0x910] sm:$0xff] %v1582
                  %v1584 = vld [vmem:[%s1000 + $0x57d8] sm:$0xff]
                  %1585 = vst [vmem:[%s1001 + $0x918] sm:$0xff] %v1584
                  %v1586 = vld [vmem:[%s1000 + $0x57e0] sm:$0xff]
                  %1587 = vst [vmem:[%s1001 + $0x920] sm:$0xff] %v1586
                  %v1588 = vld [vmem:[%s1000 + $0x57e8] sm:$0xff]
                  %1589 = vst [vmem:[%s1001 + $0x928] sm:$0xff] %v1588
                  %v1590 = vld [vmem:[%s1000 + $0x57f0] sm:$0xff]
                  %1591 = vst [vmem:[%s1001 + $0x930] sm:$0xff] %v1590
                  %v1592 = vld [vmem:[%s1000 + $0x57f8] sm:$0xff]
                  %1593 = vst [vmem:[%s1001 + $0x938] sm:$0xff] %v1592
                  %v1594 = vld [vmem:[%s1000 + $0x5800] sm:$0xff]
                  %1595 = vst [vmem:[%s1001 + $0x940] sm:$0xff] %v1594
                  %v1596 = vld [vmem:[%s1000 + $0x5808] sm:$0xff]
                  %1597 = vst [vmem:[%s1001 + $0x948] sm:$0xff] %v1596
                  %v1598 = vld [vmem:[%s1000 + $0x5810] sm:$0xff]
                  %1599 = vst [vmem:[%s1001 + $0x950] sm:$0xff] %v1598
                  %v1600 = vld [vmem:[%s1000 + $0x5818] sm:$0xff]
                  %1601 = vst [vmem:[%s1001 + $0x958] sm:$0xff] %v1600
                  %v1602 = vld [vmem:[%s1000 + $0x5820] sm:$0xff]
                  %1603 = vst [vmem:[%s1001 + $0x960] sm:$0xff] %v1602
                  %v1604 = vld [vmem:[%s1000 + $0x5828] sm:$0xff]
                  %1605 = vst [vmem:[%s1001 + $0x968] sm:$0xff] %v1604
                  %v1606 = vld [vmem:[%s1000 + $0x5830] sm:$0xff]
                  %1607 = vst [vmem:[%s1001 + $0x970] sm:$0xff] %v1606
                  %v1608 = vld [vmem:[%s1000 + $0x5838] sm:$0xff]
                  %1609 = vst [vmem:[%s1001 + $0x978] sm:$0xff] %v1608
                  %v1610 = vld [vmem:[%s1000 + $0x5840] sm:$0xff]
                  %1611 = vst [vmem:[%s1001 + $0x980] sm:$0xff] %v1610
                  %v1612 = vld [vmem:[%s1000 + $0x5848] sm:$0xff]
                  %1613 = vst [vmem:[%s1001 + $0x988] sm:$0xff] %v1612
                  %v1614 = vld [vmem:[%s1000 + $0x5850] sm:$0xff]
                  %1615 = vst [vmem:[%s1001 + $0x990] sm:$0xff] %v1614
                  %v1616 = vld [vmem:[%s1000 + $0x5858] sm:$0xff]
                  %1617 = vst [vmem:[%s1001 + $0x998] sm:$0xff] %v1616
                  %v1618 = vld [vmem:[%s1000 + $0x5860] sm:$0xff]
                  %1619 = vst [vmem:[%s1001 + $0x9a0] sm:$0xff] %v1618
                  %v1620 = vld [vmem:[%s1000 + $0x5868] sm:$0xff]
                  %1621 = vst [vmem:[%s1001 + $0x9a8] sm:$0xff] %v1620
                  %v1622 = vld [vmem:[%s1000 + $0x5870] sm:$0xff]
                  %1623 = vst [vmem:[%s1001 + $0x9b0] sm:$0xff] %v1622
                  %v1624 = vld [vmem:[%s1000 + $0x5878] sm:$0xff]
                  %1625 = vst [vmem:[%s1001 + $0x9b8] sm:$0xff] %v1624
                  %v1626 = vld [vmem:[%s1000 + $0x5880] sm:$0xff]
                  %1627 = vst [vmem:[%s1001 + $0x9c0] sm:$0xff] %v1626
                  %v1628 = vld [vmem:[%s1000 + $0x5888] sm:$0xff]
                  %1629 = vst [vmem:[%s1001 + $0x9c8] sm:$0xff] %v1628
                  %v1630 = vld [vmem:[%s1000 + $0x5890] sm:$0xff]
                  %1631 = vst [vmem:[%s1001 + $0x9d0] sm:$0xff] %v1630
                  %v1632 = vld [vmem:[%s1000 + $0x6270] sm:$0xff]
                  %1633 = vst [vmem:[%s1001 + $0x9d8] sm:$0xff] %v1632
                  %v1634 = vld [vmem:[%s1000 + $0x6278] sm:$0xff]
                  %1635 = vst [vmem:[%s1001 + $0x9e0] sm:$0xff] %v1634
                  %v1636 = vld [vmem:[%s1000 + $0x6280] sm:$0xff]
                  %1637 = vst [vmem:[%s1001 + $0x9e8] sm:$0xff] %v1636
                  %v1638 = vld [vmem:[%s1000 + $0x6288] sm:$0xff]
                  %1639 = vst [vmem:[%s1001 + $0x9f0] sm:$0xff] %v1638
                  %v1640 = vld [vmem:[%s1000 + $0x6290] sm:$0xff]
                  %1641 = vst [vmem:[%s1001 + $0x9f8] sm:$0xff] %v1640
                  %v1642 = vld [vmem:[%s1000 + $0x6298] sm:$0xff]
                  %1643 = vst [vmem:[%s1001 + $0xa00] sm:$0xff] %v1642
                  %v1644 = vld [vmem:[%s1000 + $0x62a0] sm:$0xff]
                  %1645 = vst [vmem:[%s1001 + $0xa08] sm:$0xff] %v1644
                  %v1646 = vld [vmem:[%s1000 + $0x62a8] sm:$0xff]
                  %1647 = vst [vmem:[%s1001 + $0xa10] sm:$0xff] %v1646
                  %v1648 = vld [vmem:[%s1000 + $0x62b0] sm:$0xff]
                  %1649 = vst [vmem:[%s1001 + $0xa18] sm:$0xff] %v1648
                  %v1650 = vld [vmem:[%s1000 + $0x62b8] sm:$0xff]
                  %1651 = vst [vmem:[%s1001 + $0xa20] sm:$0xff] %v1650
                  %v1652 = vld [vmem:[%s1000 + $0x62c0] sm:$0xff]
                  %1653 = vst [vmem:[%s1001 + $0xa28] sm:$0xff] %v1652
                  %v1654 = vld [vmem:[%s1000 + $0x62c8] sm:$0xff]
                  %1655 = vst [vmem:[%s1001 + $0xa30] sm:$0xff] %v1654
                  %v1656 = vld [vmem:[%s1000 + $0x62d0] sm:$0xff]
                  %1657 = vst [vmem:[%s1001 + $0xa38] sm:$0xff] %v1656
                  %v1658 = vld [vmem:[%s1000 + $0x62d8] sm:$0xff]
                  %1659 = vst [vmem:[%s1001 + $0xa40] sm:$0xff] %v1658
                  %v1660 = vld [vmem:[%s1000 + $0x62e0] sm:$0xff]
                  %1661 = vst [vmem:[%s1001 + $0xa48] sm:$0xff] %v1660
                  %v1662 = vld [vmem:[%s1000 + $0x62e8] sm:$0xff]
                  %1663 = vst [vmem:[%s1001 + $0xa50] sm:$0xff] %v1662
                  %v1664 = vld [vmem:[%s1000 + $0x62f0] sm:$0xff]
                  %1665 = vst [vmem:[%s1001 + $0xa58] sm:$0xff] %v1664
                  %v1666 = vld [vmem:[%s1000 + $0x62f8] sm:$0xff]
                  %1667 = vst [vmem:[%s1001 + $0xa60] sm:$0xff] %v1666
                  %v1668 = vld [vmem:[%s1000 + $0x6300] sm:$0xff]
                  %1669 = vst [vmem:[%s1001 + $0xa68] sm:$0xff] %v1668
                  %v1670 = vld [vmem:[%s1000 + $0x6308] sm:$0xff]
                  %1671 = vst [vmem:[%s1001 + $0xa70] sm:$0xff] %v1670
                  %v1672 = vld [vmem:[%s1000 + $0x6310] sm:$0xff]
                  %1673 = vst [vmem:[%s1001 + $0xa78] sm:$0xff] %v1672
                  %v1674 = vld [vmem:[%s1000 + $0x6318] sm:$0xff]
                  %1675 = vst [vmem:[%s1001 + $0xa80] sm:$0xff] %v1674
                  %v1676 = vld [vmem:[%s1000 + $0x6320] sm:$0xff]
                  %1677 = vst [vmem:[%s1001 + $0xa88] sm:$0xff] %v1676
                  %v1678 = vld [vmem:[%s1000 + $0x6328] sm:$0xff]
                  %1679 = vst [vmem:[%s1001 + $0xa90] sm:$0xff] %v1678
                  %v1680 = vld [vmem:[%s1000 + $0x6330] sm:$0xff]
                  %1681 = vst [vmem:[%s1001 + $0xa98] sm:$0xff] %v1680
                  %v1682 = vld [vmem:[%s1000 + $0x6338] sm:$0xff]
                  %1683 = vst [vmem:[%s1001 + $0xaa0] sm:$0xff] %v1682
                  %v1684 = vld [vmem:[%s1000 + $0x6340] sm:$0xff]
                  %1685 = vst [vmem:[%s1001 + $0xaa8] sm:$0xff] %v1684
                  %v1686 = vld [vmem:[%s1000 + $0x6348] sm:$0xff]
                  %1687 = vst [vmem:[%s1001 + $0xab0] sm:$0xff] %v1686
                  %v1688 = vld [vmem:[%s1000 + $0x6350] sm:$0xff]
                  %1689 = vst [vmem:[%s1001 + $0xab8] sm:$0xff] %v1688
                  %v1690 = vld [vmem:[%s1000 + $0x6358] sm:$0xff]
                  %1691 = vst [vmem:[%s1001 + $0xac0] sm:$0xff] %v1690
                  %v1692 = vld [vmem:[%s1000 + $0x6360] sm:$0xff]
                  %1693 = vst [vmem:[%s1001 + $0xac8] sm:$0xff] %v1692
                  %v1694 = vld [vmem:[%s1000 + $0x6368] sm:$0xff]
                  %1695 = vst [vmem:[%s1001 + $0xad0] sm:$0xff] %v1694
                  %v1696 = vld [vmem:[%s1000 + $0x6370] sm:$0xff]
                  %1697 = vst [vmem:[%s1001 + $0xad8] sm:$0xff] %v1696
                  %v1698 = vld [vmem:[%s1000 + $0x6378] sm:$0xff]
                  %1699 = vst [vmem:[%s1001 + $0xae0] sm:$0xff] %v1698
                  %v1700 = vld [vmem:[%s1000 + $0x6380] sm:$0xff]
                  %1701 = vst [vmem:[%s1001 + $0xae8] sm:$0xff] %v1700
                  %v1702 = vld [vmem:[%s1000 + $0x6d60] sm:$0xff]
                  %1703 = vst [vmem:[%s1001 + $0xaf0] sm:$0xff] %v1702
                  %v1704 = vld [vmem:[%s1000 + $0x6d68] sm:$0xff]
                  %1705 = vst [vmem:[%s1001 + $0xaf8] sm:$0xff] %v1704
                  %v1706 = vld [vmem:[%s1000 + $0x6d70] sm:$0xff]
                  %1707 = vst [vmem:[%s1001 + $0xb00] sm:$0xff] %v1706
                  %v1708 = vld [vmem:[%s1000 + $0x6d78] sm:$0xff]
                  %1709 = vst [vmem:[%s1001 + $0xb08] sm:$0xff] %v1708
                  %v1710 = vld [vmem:[%s1000 + $0x6d80] sm:$0xff]
                  %1711 = vst [vmem:[%s1001 + $0xb10] sm:$0xff] %v1710
                  %v1712 = vld [vmem:[%s1000 + $0x6d88] sm:$0xff]
                  %1713 = vst [vmem:[%s1001 + $0xb18] sm:$0xff] %v1712
                  %v1714 = vld [vmem:[%s1000 + $0x6d90] sm:$0xff]
                  %1715 = vst [vmem:[%s1001 + $0xb20] sm:$0xff] %v1714
                  %v1716 = vld [vmem:[%s1000 + $0x6d98] sm:$0xff]
                  %1717 = vst [vmem:[%s1001 + $0xb28] sm:$0xff] %v1716
                  %v1718 = vld [vmem:[%s1000 + $0x6da0] sm:$0xff]
                  %1719 = vst [vmem:[%s1001 + $0xb30] sm:$0xff] %v1718
                  %v1720 = vld [vmem:[%s1000 + $0x6da8] sm:$0xff]
                  %1721 = vst [vmem:[%s1001 + $0xb38] sm:$0xff] %v1720
                  %v1722 = vld [vmem:[%s1000 + $0x6db0] sm:$0xff]
                  %1723 = vst [vmem:[%s1001 + $0xb40] sm:$0xff] %v1722
                  %v1724 = vld [vmem:[%s1000 + $0x6db8] sm:$0xff]
                  %1725 = vst [vmem:[%s1001 + $0xb48] sm:$0xff] %v1724
                  %v1726 = vld [vmem:[%s1000 + $0x6dc0] sm:$0xff]
                  %1727 = vst [vmem:[%s1001 + $0xb50] sm:$0xff] %v1726
                  %v1728 = vld [vmem:[%s1000 + $0x6dc8] sm:$0xff]
                  %1729 = vst [vmem:[%s1001 + $0xb58] sm:$0xff] %v1728
                  %v1730 = vld [vmem:[%s1000 + $0x6dd0] sm:$0xff]
                  %1731 = vst [vmem:[%s1001 + $0xb60] sm:$0xff] %v1730
                  %v1732 = vld [vmem:[%s1000 + $0x6dd8] sm:$0xff]
                  %1733 = vst [vmem:[%s1001 + $0xb68] sm:$0xff] %v1732
                  %v1734 = vld [vmem:[%s1000 + $0x6de0] sm:$0xff]
                  %1735 = vst [vmem:[%s1001 + $0xb70] sm:$0xff] %v1734
                  %v1736 = vld [vmem:[%s1000 + $0x6de8] sm:$0xff]
                  %1737 = vst [vmem:[%s1001 + $0xb78] sm:$0xff] %v1736
                  %v1738 = vld [vmem:[%s1000 + $0x6df0] sm:$0xff]
                  %1739 = vst [vmem:[%s1001 + $0xb80] sm:$0xff] %v1738
                  %v1740 = vld [vmem:[%s1000 + $0x6df8] sm:$0xff]
                  %1741 = vst [vmem:[%s1001 + $0xb88] sm:$0xff] %v1740
                  %v1742 = vld [vmem:[%s1000 + $0x6e00] sm:$0xff]
                  %1743 = vst [vmem:[%s1001 + $0xb90] sm:$0xff] %v1742
                  %v1744 = vld [vmem:[%s1000 + $0x6e08] sm:$0xff]
                  %1745 = vst [vmem:[%s1001 + $0xb98] sm:$0xff] %v1744
                  %v1746 = vld [vmem:[%s1000 + $0x6e10] sm:$0xff]
                  %1747 = vst [vmem:[%s1001 + $0xba0] sm:$0xff] %v1746
                  %v1748 = vld [vmem:[%s1000 + $0x6e18] sm:$0xff]
                  %1749 = vst [vmem:[%s1001 + $0xba8] sm:$0xff] %v1748
                  %v1750 = vld [vmem:[%s1000 + $0x6e20] sm:$0xff]
                  %1751 = vst [vmem:[%s1001 + $0xbb0] sm:$0xff] %v1750
                  %v1752 = vld [vmem:[%s1000 + $0x6e28] sm:$0xff]
                  %1753 = vst [vmem:[%s1001 + $0xbb8] sm:$0xff] %v1752
                  %v1754 = vld [vmem:[%s1000 + $0x6e30] sm:$0xff]
                  %1755 = vst [vmem:[%s1001 + $0xbc0] sm:$0xff] %v1754
                  %v1756 = vld [vmem:[%s1000 + $0x6e38] sm:$0xff]
                  %1757 = vst [vmem:[%s1001 + $0xbc8] sm:$0xff] %v1756
                  %v1758 = vld [vmem:[%s1000 + $0x6e40] sm:$0xff]
                  %1759 = vst [vmem:[%s1001 + $0xbd0] sm:$0xff] %v1758
                  %v1760 = vld [vmem:[%s1000 + $0x6e48] sm:$0xff]
                  %1761 = vst [vmem:[%s1001 + $0xbd8] sm:$0xff] %v1760
                  %v1762 = vld [vmem:[%s1000 + $0x6e50] sm:$0xff]
                  %1763 = vst [vmem:[%s1001 + $0xbe0] sm:$0xff] %v1762
                  %v1764 = vld [vmem:[%s1000 + $0x6e58] sm:$0xff]
                  %1765 = vst [vmem:[%s1001 + $0xbe8] sm:$0xff] %v1764
                  %v1766 = vld [vmem:[%s1000 + $0x6e60] sm:$0xff]
                  %1767 = vst [vmem:[%s1001 + $0xbf0] sm:$0xff] %v1766
                  %v1768 = vld [vmem:[%s1000 + $0x6e68] sm:$0xff]
                  %1769 = vst [vmem:[%s1001 + $0xbf8] sm:$0xff] %v1768
                  %v1770 = vld [vmem:[%s1000 + $0x6e70] sm:$0xff]
                  %1771 = vst [vmem:[%s1001 + $0xc00] sm:$0xff] %v1770
                  %v1772 = vld [vmem:[%s1000 + $0x7850] sm:$0xff]
                  %1773 = vst [vmem:[%s1001 + $0xc08] sm:$0xff] %v1772
                  %v1774 = vld [vmem:[%s1000 + $0x7858] sm:$0xff]
                  %1775 = vst [vmem:[%s1001 + $0xc10] sm:$0xff] %v1774
                  %v1776 = vld [vmem:[%s1000 + $0x7860] sm:$0xff]
                  %1777 = vst [vmem:[%s1001 + $0xc18] sm:$0xff] %v1776
                  %v1778 = vld [vmem:[%s1000 + $0x7868] sm:$0xff]
                  %1779 = vst [vmem:[%s1001 + $0xc20] sm:$0xff] %v1778
                  %v1780 = vld [vmem:[%s1000 + $0x7870] sm:$0xff]
                  %1781 = vst [vmem:[%s1001 + $0xc28] sm:$0xff] %v1780
                  %v1782 = vld [vmem:[%s1000 + $0x7878] sm:$0xff]
                  %1783 = vst [vmem:[%s1001 + $0xc30] sm:$0xff] %v1782
                  %v1784 = vld [vmem:[%s1000 + $0x7880] sm:$0xff]
                  %1785 = vst [vmem:[%s1001 + $0xc38] sm:$0xff] %v1784
                  %v1786 = vld [vmem:[%s1000 + $0x7888] sm:$0xff]
                  %1787 = vst [vmem:[%s1001 + $0xc40] sm:$0xff] %v1786
                  %v1788 = vld [vmem:[%s1000 + $0x7890] sm:$0xff]
                  %1789 = vst [vmem:[%s1001 + $0xc48] sm:$0xff] %v1788
                  %v1790 = vld [vmem:[%s1000 + $0x7898] sm:$0xff]
                  %1791 = vst [vmem:[%s1001 + $0xc50] sm:$0xff] %v1790
                  %v1792 = vld [vmem:[%s1000 + $0x78a0] sm:$0xff]
                  %1793 = vst [vmem:[%s1001 + $0xc58] sm:$0xff] %v1792
                  %v1794 = vld [vmem:[%s1000 + $0x78a8] sm:$0xff]
                  %1795 = vst [vmem:[%s1001 + $0xc60] sm:$0xff] %v1794
                  %v1796 = vld [vmem:[%s1000 + $0x78b0] sm:$0xff]
                  %1797 = vst [vmem:[%s1001 + $0xc68] sm:$0xff] %v1796
                  %v1798 = vld [vmem:[%s1000 + $0x78b8] sm:$0xff]
                  %1799 = vst [vmem:[%s1001 + $0xc70] sm:$0xff] %v1798
                  %v1800 = vld [vmem:[%s1000 + $0x78c0] sm:$0xff]
                  %1801 = vst [vmem:[%s1001 + $0xc78] sm:$0xff] %v1800
                  %v1802 = vld [vmem:[%s1000 + $0x78c8] sm:$0xff]
                  %1803 = vst [vmem:[%s1001 + $0xc80] sm:$0xff] %v1802
                  %v1804 = vld [vmem:[%s1000 + $0x78d0] sm:$0xff]
                  %1805 = vst [vmem:[%s1001 + $0xc88] sm:$0xff] %v1804
                  %v1806 = vld [vmem:[%s1000 + $0x78d8] sm:$0xff]
                  %1807 = vst [vmem:[%s1001 + $0xc90] sm:$0xff] %v1806
                  %v1808 = vld [vmem:[%s1000 + $0x78e0] sm:$0xff]
                  %1809 = vst [vmem:[%s1001 + $0xc98] sm:$0xff] %v1808
                  %v1810 = vld [vmem:[%s1000 + $0x78e8] sm:$0xff]
                  %1811 = vst [vmem:[%s1001 + $0xca0] sm:$0xff] %v1810
                  %v1812 = vld [vmem:[%s1000 + $0x78f0] sm:$0xff]
                  %1813 = vst [vmem:[%s1001 + $0xca8] sm:$0xff] %v1812
                  %v1814 = vld [vmem:[%s1000 + $0x78f8] sm:$0xff]
                  %1815 = vst [vmem:[%s1001 + $0xcb0] sm:$0xff] %v1814
                  %v1816 = vld [vmem:[%s1000 + $0x7900] sm:$0xff]
                  %1817 = vst [vmem:[%s1001 + $0xcb8] sm:$0xff] %v1816
                  %v1818 = vld [vmem:[%s1000 + $0x7908] sm:$0xff]
                  %1819 = vst [vmem:[%s1001 + $0xcc0] sm:$0xff] %v1818
                  %v1820 = vld [vmem:[%s1000 + $0x7910] sm:$0xff]
                  %1821 = vst [vmem:[%s1001 + $0xcc8] sm:$0xff] %v1820
                  %v1822 = vld [vmem:[%s1000 + $0x7918] sm:$0xff]
                  %1823 = vst [vmem:[%s1001 + $0xcd0] sm:$0xff] %v1822
                  %v1824 = vld [vmem:[%s1000 + $0x7920] sm:$0xff]
                  %1825 = vst [vmem:[%s1001 + $0xcd8] sm:$0xff] %v1824
                  %v1826 = vld [vmem:[%s1000 + $0x7928] sm:$0xff]
                  %1827 = vst [vmem:[%s1001 + $0xce0] sm:$0xff] %v1826
                  %v1828 = vld [vmem:[%s1000 + $0x7930] sm:$0xff]
                  %1829 = vst [vmem:[%s1001 + $0xce8] sm:$0xff] %v1828
                  %v1830 = vld [vmem:[%s1000 + $0x7938] sm:$0xff]
                  %1831 = vst [vmem:[%s1001 + $0xcf0] sm:$0xff] %v1830
                  %v1832 = vld [vmem:[%s1000 + $0x7940] sm:$0xff]
                  %1833 = vst [vmem:[%s1001 + $0xcf8] sm:$0xff] %v1832
                  %v1834 = vld [vmem:[%s1000 + $0x7948] sm:$0xff]
                  %1835 = vst [vmem:[%s1001 + $0xd00] sm:$0xff] %v1834
                  %v1836 = vld [vmem:[%s1000 + $0x7950] sm:$0xff]
                  %1837 = vst [vmem:[%s1001 + $0xd08] sm:$0xff] %v1836
                  %v1838 = vld [vmem:[%s1000 + $0x7958] sm:$0xff]
                  %1839 = vst [vmem:[%s1001 + $0xd10] sm:$0xff] %v1838
                  %v1840 = vld [vmem:[%s1000 + $0x7960] sm:$0xff]
                  %1841 = vst [vmem:[%s1001 + $0xd18] sm:$0xff] %v1840
                $region48: #{conv_transpose3d_tanh.3} parent=42 // loop_footer
                  %s999 = sadd.s32 1, %s995
                $region49: #{conv_transpose3d_tanh.3} parent=42 // loop_footer_branch
                  %994 = sbr.rel target = $region45
                $region50: #{conv_transpose3d_tanh.3} parent=42 // loop_exit
                  _
              $region43: #{conv_transpose3d_tanh.3} parent=27 // pred_fallthru
                _
              // Predicated region
              $region51: #{conv_transpose3d_tanh.3} parent=27 // pred_check
                _
              $region52: #{conv_transpose3d_tanh.3} parent=27 // pred_check_branch
                %1843 = sbr.rel target = $region54
              $region53: #{conv_transpose3d_tanh.3} parent=27 // pred_region
                _
              $region54: #{conv_transpose3d_tanh.3} parent=27 // pred_fallthru
                _
            $region28: #{conv_transpose3d_tanh.3} parent=23 // pred_fallthru
              _
            // Predicated region
            $region29: #{conv_transpose3d_tanh.3} parent=23 // pred_check
              _
            $region30: #{conv_transpose3d_tanh.3} parent=23 // pred_check_branch
              %142 = sbr.rel target = $region32
            $region31: #{conv_transpose3d_tanh.3} parent=23 // pred_region
              loop: start=0, step=1, limit=1
              $region33: #{conv_transpose3d_tanh.3} parent=31 // loop_pre_header
                _
              $region34: #{conv_transpose3d_tanh.3} parent=31 // loop_header
                %s145 = sphi 0, %s149
                %p146 = scmp.ge.s32.totalorder %s145, 1
                %s150 = sphi %s136, %s136
                %s151 = sphi %s130, %s130
              $region35: #{conv_transpose3d_tanh.3} parent=31 // loop_header_branch
                %148 = sbr.rel (%p146) target = $region39
              $region36: #{conv_transpose3d_tanh.3} parent=31 // loop_body
                %v152 = vld [vmem:[%s150] sm:$0xff]
                %153 = vst [vmem:[%s151] sm:$0xff] %v152
                %v154 = vld [vmem:[%s150 + $0x8] sm:$0xff]
                %155 = vst [vmem:[%s151 + $0x8] sm:$0xff] %v154
                %v156 = vld [vmem:[%s150 + $0x10] sm:$0xff]
                %157 = vst [vmem:[%s151 + $0x10] sm:$0xff] %v156
                %v158 = vld [vmem:[%s150 + $0x18] sm:$0xff]
                %159 = vst [vmem:[%s151 + $0x18] sm:$0xff] %v158
                %v160 = vld [vmem:[%s150 + $0x20] sm:$0xff]
                %161 = vst [vmem:[%s151 + $0x20] sm:$0xff] %v160
                %v162 = vld [vmem:[%s150 + $0x28] sm:$0xff]
                %163 = vst [vmem:[%s151 + $0x28] sm:$0xff] %v162
                %v164 = vld [vmem:[%s150 + $0x30] sm:$0xff]
                %165 = vst [vmem:[%s151 + $0x30] sm:$0xff] %v164
                %v166 = vld [vmem:[%s150 + $0x38] sm:$0xff]
                %167 = vst [vmem:[%s151 + $0x38] sm:$0xff] %v166
                %v168 = vld [vmem:[%s150 + $0x40] sm:$0xff]
                %169 = vst [vmem:[%s151 + $0x40] sm:$0xff] %v168
                %v170 = vld [vmem:[%s150 + $0x48] sm:$0xff]
                %171 = vst [vmem:[%s151 + $0x48] sm:$0xff] %v170
                %v172 = vld [vmem:[%s150 + $0x50] sm:$0xff]
                %173 = vst [vmem:[%s151 + $0x50] sm:$0xff] %v172
                %v174 = vld [vmem:[%s150 + $0x58] sm:$0xff]
                %175 = vst [vmem:[%s151 + $0x58] sm:$0xff] %v174
                %v176 = vld [vmem:[%s150 + $0x60] sm:$0xff]
                %177 = vst [vmem:[%s151 + $0x60] sm:$0xff] %v176
                %v178 = vld [vmem:[%s150 + $0x68] sm:$0xff]
                %179 = vst [vmem:[%s151 + $0x68] sm:$0xff] %v178
                %v180 = vld [vmem:[%s150 + $0x70] sm:$0xff]
                %181 = vst [vmem:[%s151 + $0x70] sm:$0xff] %v180
                %v182 = vld [vmem:[%s150 + $0x78] sm:$0xff]
                %183 = vst [vmem:[%s151 + $0x78] sm:$0xff] %v182
                %v184 = vld [vmem:[%s150 + $0x80] sm:$0xff]
                %185 = vst [vmem:[%s151 + $0x80] sm:$0xff] %v184
                %v186 = vld [vmem:[%s150 + $0x88] sm:$0xff]
                %187 = vst [vmem:[%s151 + $0x88] sm:$0xff] %v186
                %v188 = vld [vmem:[%s150 + $0x90] sm:$0xff]
                %189 = vst [vmem:[%s151 + $0x90] sm:$0xff] %v188
                %v190 = vld [vmem:[%s150 + $0x98] sm:$0xff]
                %191 = vst [vmem:[%s151 + $0x98] sm:$0xff] %v190
                %v192 = vld [vmem:[%s150 + $0xa0] sm:$0xff]
                %193 = vst [vmem:[%s151 + $0xa0] sm:$0xff] %v192
                %v194 = vld [vmem:[%s150 + $0xa8] sm:$0xff]
                %195 = vst [vmem:[%s151 + $0xa8] sm:$0xff] %v194
                %v196 = vld [vmem:[%s150 + $0xb0] sm:$0xff]
                %197 = vst [vmem:[%s151 + $0xb0] sm:$0xff] %v196
                %v198 = vld [vmem:[%s150 + $0xb8] sm:$0xff]
                %199 = vst [vmem:[%s151 + $0xb8] sm:$0xff] %v198
                %v200 = vld [vmem:[%s150 + $0xc0] sm:$0xff]
                %201 = vst [vmem:[%s151 + $0xc0] sm:$0xff] %v200
                %v202 = vld [vmem:[%s150 + $0xc8] sm:$0xff]
                %203 = vst [vmem:[%s151 + $0xc8] sm:$0xff] %v202
                %v204 = vld [vmem:[%s150 + $0xd0] sm:$0xff]
                %205 = vst [vmem:[%s151 + $0xd0] sm:$0xff] %v204
                %v206 = vld [vmem:[%s150 + $0xd8] sm:$0xff]
                %207 = vst [vmem:[%s151 + $0xd8] sm:$0xff] %v206
                %v208 = vld [vmem:[%s150 + $0xe0] sm:$0xff]
                %209 = vst [vmem:[%s151 + $0xe0] sm:$0xff] %v208
                %v210 = vld [vmem:[%s150 + $0xe8] sm:$0xff]
                %211 = vst [vmem:[%s151 + $0xe8] sm:$0xff] %v210
                %v212 = vld [vmem:[%s150 + $0xf0] sm:$0xff]
                %213 = vst [vmem:[%s151 + $0xf0] sm:$0xff] %v212
                %v214 = vld [vmem:[%s150 + $0xf8] sm:$0xff]
                %215 = vst [vmem:[%s151 + $0xf8] sm:$0xff] %v214
                %v216 = vld [vmem:[%s150 + $0x100] sm:$0xff]
                %217 = vst [vmem:[%s151 + $0x100] sm:$0xff] %v216
                %v218 = vld [vmem:[%s150 + $0x108] sm:$0xff]
                %219 = vst [vmem:[%s151 + $0x108] sm:$0xff] %v218
                %v220 = vld [vmem:[%s150 + $0x110] sm:$0xff]
                %221 = vst [vmem:[%s151 + $0x110] sm:$0xff] %v220
                %v222 = vld [vmem:[%s150 + $0xaf0] sm:$0xff]
                %223 = vst [vmem:[%s151 + $0x118] sm:$0xff] %v222
                %v224 = vld [vmem:[%s150 + $0xaf8] sm:$0xff]
                %225 = vst [vmem:[%s151 + $0x120] sm:$0xff] %v224
                %v226 = vld [vmem:[%s150 + $0xb00] sm:$0xff]
                %227 = vst [vmem:[%s151 + $0x128] sm:$0xff] %v226
                %v228 = vld [vmem:[%s150 + $0xb08] sm:$0xff]
                %229 = vst [vmem:[%s151 + $0x130] sm:$0xff] %v228
                %v230 = vld [vmem:[%s150 + $0xb10] sm:$0xff]
                %231 = vst [vmem:[%s151 + $0x138] sm:$0xff] %v230
                %v232 = vld [vmem:[%s150 + $0xb18] sm:$0xff]
                %233 = vst [vmem:[%s151 + $0x140] sm:$0xff] %v232
                %v234 = vld [vmem:[%s150 + $0xb20] sm:$0xff]
                %235 = vst [vmem:[%s151 + $0x148] sm:$0xff] %v234
                %v236 = vld [vmem:[%s150 + $0xb28] sm:$0xff]
                %237 = vst [vmem:[%s151 + $0x150] sm:$0xff] %v236
                %v238 = vld [vmem:[%s150 + $0xb30] sm:$0xff]
                %239 = vst [vmem:[%s151 + $0x158] sm:$0xff] %v238
                %v240 = vld [vmem:[%s150 + $0xb38] sm:$0xff]
                %241 = vst [vmem:[%s151 + $0x160] sm:$0xff] %v240
                %v242 = vld [vmem:[%s150 + $0xb40] sm:$0xff]
                %243 = vst [vmem:[%s151 + $0x168] sm:$0xff] %v242
                %v244 = vld [vmem:[%s150 + $0xb48] sm:$0xff]
                %245 = vst [vmem:[%s151 + $0x170] sm:$0xff] %v244
                %v246 = vld [vmem:[%s150 + $0xb50] sm:$0xff]
                %247 = vst [vmem:[%s151 + $0x178] sm:$0xff] %v246
                %v248 = vld [vmem:[%s150 + $0xb58] sm:$0xff]
                %249 = vst [vmem:[%s151 + $0x180] sm:$0xff] %v248
                %v250 = vld [vmem:[%s150 + $0xb60] sm:$0xff]
                %251 = vst [vmem:[%s151 + $0x188] sm:$0xff] %v250
                %v252 = vld [vmem:[%s150 + $0xb68] sm:$0xff]
                %253 = vst [vmem:[%s151 + $0x190] sm:$0xff] %v252
                %v254 = vld [vmem:[%s150 + $0xb70] sm:$0xff]
                %255 = vst [vmem:[%s151 + $0x198] sm:$0xff] %v254
                %v256 = vld [vmem:[%s150 + $0xb78] sm:$0xff]
                %257 = vst [vmem:[%s151 + $0x1a0] sm:$0xff] %v256
                %v258 = vld [vmem:[%s150 + $0xb80] sm:$0xff]
                %259 = vst [vmem:[%s151 + $0x1a8] sm:$0xff] %v258
                %v260 = vld [vmem:[%s150 + $0xb88] sm:$0xff]
                %261 = vst [vmem:[%s151 + $0x1b0] sm:$0xff] %v260
                %v262 = vld [vmem:[%s150 + $0xb90] sm:$0xff]
                %263 = vst [vmem:[%s151 + $0x1b8] sm:$0xff] %v262
                %v264 = vld [vmem:[%s150 + $0xb98] sm:$0xff]
                %265 = vst [vmem:[%s151 + $0x1c0] sm:$0xff] %v264
                %v266 = vld [vmem:[%s150 + $0xba0] sm:$0xff]
                %267 = vst [vmem:[%s151 + $0x1c8] sm:$0xff] %v266
                %v268 = vld [vmem:[%s150 + $0xba8] sm:$0xff]
                %269 = vst [vmem:[%s151 + $0x1d0] sm:$0xff] %v268
                %v270 = vld [vmem:[%s150 + $0xbb0] sm:$0xff]
                %271 = vst [vmem:[%s151 + $0x1d8] sm:$0xff] %v270
                %v272 = vld [vmem:[%s150 + $0xbb8] sm:$0xff]
                %273 = vst [vmem:[%s151 + $0x1e0] sm:$0xff] %v272
                %v274 = vld [vmem:[%s150 + $0xbc0] sm:$0xff]
                %275 = vst [vmem:[%s151 + $0x1e8] sm:$0xff] %v274
                %v276 = vld [vmem:[%s150 + $0xbc8] sm:$0xff]
                %277 = vst [vmem:[%s151 + $0x1f0] sm:$0xff] %v276
                %v278 = vld [vmem:[%s150 + $0xbd0] sm:$0xff]
                %279 = vst [vmem:[%s151 + $0x1f8] sm:$0xff] %v278
                %v280 = vld [vmem:[%s150 + $0xbd8] sm:$0xff]
                %281 = vst [vmem:[%s151 + $0x200] sm:$0xff] %v280
                %v282 = vld [vmem:[%s150 + $0xbe0] sm:$0xff]
                %283 = vst [vmem:[%s151 + $0x208] sm:$0xff] %v282
                %v284 = vld [vmem:[%s150 + $0xbe8] sm:$0xff]
                %285 = vst [vmem:[%s151 + $0x210] sm:$0xff] %v284
                %v286 = vld [vmem:[%s150 + $0xbf0] sm:$0xff]
                %287 = vst [vmem:[%s151 + $0x218] sm:$0xff] %v286
                %v288 = vld [vmem:[%s150 + $0xbf8] sm:$0xff]
                %289 = vst [vmem:[%s151 + $0x220] sm:$0xff] %v288
                %v290 = vld [vmem:[%s150 + $0xc00] sm:$0xff]
                %291 = vst [vmem:[%s151 + $0x228] sm:$0xff] %v290
                %v292 = vld [vmem:[%s150 + $0x15e0] sm:$0xff]
                %293 = vst [vmem:[%s151 + $0x230] sm:$0xff] %v292
                %v294 = vld [vmem:[%s150 + $0x15e8] sm:$0xff]
                %295 = vst [vmem:[%s151 + $0x238] sm:$0xff] %v294
                %v296 = vld [vmem:[%s150 + $0x15f0] sm:$0xff]
                %297 = vst [vmem:[%s151 + $0x240] sm:$0xff] %v296
                %v298 = vld [vmem:[%s150 + $0x15f8] sm:$0xff]
                %299 = vst [vmem:[%s151 + $0x248] sm:$0xff] %v298
                %v300 = vld [vmem:[%s150 + $0x1600] sm:$0xff]
                %301 = vst [vmem:[%s151 + $0x250] sm:$0xff] %v300
                %v302 = vld [vmem:[%s150 + $0x1608] sm:$0xff]
                %303 = vst [vmem:[%s151 + $0x258] sm:$0xff] %v302
                %v304 = vld [vmem:[%s150 + $0x1610] sm:$0xff]
                %305 = vst [vmem:[%s151 + $0x260] sm:$0xff] %v304
                %v306 = vld [vmem:[%s150 + $0x1618] sm:$0xff]
                %307 = vst [vmem:[%s151 + $0x268] sm:$0xff] %v306
                %v308 = vld [vmem:[%s150 + $0x1620] sm:$0xff]
                %309 = vst [vmem:[%s151 + $0x270] sm:$0xff] %v308
                %v310 = vld [vmem:[%s150 + $0x1628] sm:$0xff]
                %311 = vst [vmem:[%s151 + $0x278] sm:$0xff] %v310
                %v312 = vld [vmem:[%s150 + $0x1630] sm:$0xff]
                %313 = vst [vmem:[%s151 + $0x280] sm:$0xff] %v312
                %v314 = vld [vmem:[%s150 + $0x1638] sm:$0xff]
                %315 = vst [vmem:[%s151 + $0x288] sm:$0xff] %v314
                %v316 = vld [vmem:[%s150 + $0x1640] sm:$0xff]
                %317 = vst [vmem:[%s151 + $0x290] sm:$0xff] %v316
                %v318 = vld [vmem:[%s150 + $0x1648] sm:$0xff]
                %319 = vst [vmem:[%s151 + $0x298] sm:$0xff] %v318
                %v320 = vld [vmem:[%s150 + $0x1650] sm:$0xff]
                %321 = vst [vmem:[%s151 + $0x2a0] sm:$0xff] %v320
                %v322 = vld [vmem:[%s150 + $0x1658] sm:$0xff]
                %323 = vst [vmem:[%s151 + $0x2a8] sm:$0xff] %v322
                %v324 = vld [vmem:[%s150 + $0x1660] sm:$0xff]
                %325 = vst [vmem:[%s151 + $0x2b0] sm:$0xff] %v324
                %v326 = vld [vmem:[%s150 + $0x1668] sm:$0xff]
                %327 = vst [vmem:[%s151 + $0x2b8] sm:$0xff] %v326
                %v328 = vld [vmem:[%s150 + $0x1670] sm:$0xff]
                %329 = vst [vmem:[%s151 + $0x2c0] sm:$0xff] %v328
                %v330 = vld [vmem:[%s150 + $0x1678] sm:$0xff]
                %331 = vst [vmem:[%s151 + $0x2c8] sm:$0xff] %v330
                %v332 = vld [vmem:[%s150 + $0x1680] sm:$0xff]
                %333 = vst [vmem:[%s151 + $0x2d0] sm:$0xff] %v332
                %v334 = vld [vmem:[%s150 + $0x1688] sm:$0xff]
                %335 = vst [vmem:[%s151 + $0x2d8] sm:$0xff] %v334
                %v336 = vld [vmem:[%s150 + $0x1690] sm:$0xff]
                %337 = vst [vmem:[%s151 + $0x2e0] sm:$0xff] %v336
                %v338 = vld [vmem:[%s150 + $0x1698] sm:$0xff]
                %339 = vst [vmem:[%s151 + $0x2e8] sm:$0xff] %v338
                %v340 = vld [vmem:[%s150 + $0x16a0] sm:$0xff]
                %341 = vst [vmem:[%s151 + $0x2f0] sm:$0xff] %v340
                %v342 = vld [vmem:[%s150 + $0x16a8] sm:$0xff]
                %343 = vst [vmem:[%s151 + $0x2f8] sm:$0xff] %v342
                %v344 = vld [vmem:[%s150 + $0x16b0] sm:$0xff]
                %345 = vst [vmem:[%s151 + $0x300] sm:$0xff] %v344
                %v346 = vld [vmem:[%s150 + $0x16b8] sm:$0xff]
                %347 = vst [vmem:[%s151 + $0x308] sm:$0xff] %v346
                %v348 = vld [vmem:[%s150 + $0x16c0] sm:$0xff]
                %349 = vst [vmem:[%s151 + $0x310] sm:$0xff] %v348
                %v350 = vld [vmem:[%s150 + $0x16c8] sm:$0xff]
                %351 = vst [vmem:[%s151 + $0x318] sm:$0xff] %v350
                %v352 = vld [vmem:[%s150 + $0x16d0] sm:$0xff]
                %353 = vst [vmem:[%s151 + $0x320] sm:$0xff] %v352
                %v354 = vld [vmem:[%s150 + $0x16d8] sm:$0xff]
                %355 = vst [vmem:[%s151 + $0x328] sm:$0xff] %v354
                %v356 = vld [vmem:[%s150 + $0x16e0] sm:$0xff]
                %357 = vst [vmem:[%s151 + $0x330] sm:$0xff] %v356
                %v358 = vld [vmem:[%s150 + $0x16e8] sm:$0xff]
                %359 = vst [vmem:[%s151 + $0x338] sm:$0xff] %v358
                %v360 = vld [vmem:[%s150 + $0x16f0] sm:$0xff]
                %361 = vst [vmem:[%s151 + $0x340] sm:$0xff] %v360
                %v362 = vld [vmem:[%s150 + $0x20d0] sm:$0xff]
                %363 = vst [vmem:[%s151 + $0x348] sm:$0xff] %v362
                %v364 = vld [vmem:[%s150 + $0x20d8] sm:$0xff]
                %365 = vst [vmem:[%s151 + $0x350] sm:$0xff] %v364
                %v366 = vld [vmem:[%s150 + $0x20e0] sm:$0xff]
                %367 = vst [vmem:[%s151 + $0x358] sm:$0xff] %v366
                %v368 = vld [vmem:[%s150 + $0x20e8] sm:$0xff]
                %369 = vst [vmem:[%s151 + $0x360] sm:$0xff] %v368
                %v370 = vld [vmem:[%s150 + $0x20f0] sm:$0xff]
                %371 = vst [vmem:[%s151 + $0x368] sm:$0xff] %v370
                %v372 = vld [vmem:[%s150 + $0x20f8] sm:$0xff]
                %373 = vst [vmem:[%s151 + $0x370] sm:$0xff] %v372
                %v374 = vld [vmem:[%s150 + $0x2100] sm:$0xff]
                %375 = vst [vmem:[%s151 + $0x378] sm:$0xff] %v374
                %v376 = vld [vmem:[%s150 + $0x2108] sm:$0xff]
                %377 = vst [vmem:[%s151 + $0x380] sm:$0xff] %v376
                %v378 = vld [vmem:[%s150 + $0x2110] sm:$0xff]
                %379 = vst [vmem:[%s151 + $0x388] sm:$0xff] %v378
                %v380 = vld [vmem:[%s150 + $0x2118] sm:$0xff]
                %381 = vst [vmem:[%s151 + $0x390] sm:$0xff] %v380
                %v382 = vld [vmem:[%s150 + $0x2120] sm:$0xff]
                %383 = vst [vmem:[%s151 + $0x398] sm:$0xff] %v382
                %v384 = vld [vmem:[%s150 + $0x2128] sm:$0xff]
                %385 = vst [vmem:[%s151 + $0x3a0] sm:$0xff] %v384
                %v386 = vld [vmem:[%s150 + $0x2130] sm:$0xff]
                %387 = vst [vmem:[%s151 + $0x3a8] sm:$0xff] %v386
                %v388 = vld [vmem:[%s150 + $0x2138] sm:$0xff]
                %389 = vst [vmem:[%s151 + $0x3b0] sm:$0xff] %v388
                %v390 = vld [vmem:[%s150 + $0x2140] sm:$0xff]
                %391 = vst [vmem:[%s151 + $0x3b8] sm:$0xff] %v390
                %v392 = vld [vmem:[%s150 + $0x2148] sm:$0xff]
                %393 = vst [vmem:[%s151 + $0x3c0] sm:$0xff] %v392
                %v394 = vld [vmem:[%s150 + $0x2150] sm:$0xff]
                %395 = vst [vmem:[%s151 + $0x3c8] sm:$0xff] %v394
                %v396 = vld [vmem:[%s150 + $0x2158] sm:$0xff]
                %397 = vst [vmem:[%s151 + $0x3d0] sm:$0xff] %v396
                %v398 = vld [vmem:[%s150 + $0x2160] sm:$0xff]
                %399 = vst [vmem:[%s151 + $0x3d8] sm:$0xff] %v398
                %v400 = vld [vmem:[%s150 + $0x2168] sm:$0xff]
                %401 = vst [vmem:[%s151 + $0x3e0] sm:$0xff] %v400
                %v402 = vld [vmem:[%s150 + $0x2170] sm:$0xff]
                %403 = vst [vmem:[%s151 + $0x3e8] sm:$0xff] %v402
                %v404 = vld [vmem:[%s150 + $0x2178] sm:$0xff]
                %405 = vst [vmem:[%s151 + $0x3f0] sm:$0xff] %v404
                %v406 = vld [vmem:[%s150 + $0x2180] sm:$0xff]
                %407 = vst [vmem:[%s151 + $0x3f8] sm:$0xff] %v406
                %v408 = vld [vmem:[%s150 + $0x2188] sm:$0xff]
                %409 = vst [vmem:[%s151 + $0x400] sm:$0xff] %v408
                %v410 = vld [vmem:[%s150 + $0x2190] sm:$0xff]
                %411 = vst [vmem:[%s151 + $0x408] sm:$0xff] %v410
                %v412 = vld [vmem:[%s150 + $0x2198] sm:$0xff]
                %413 = vst [vmem:[%s151 + $0x410] sm:$0xff] %v412
                %v414 = vld [vmem:[%s150 + $0x21a0] sm:$0xff]
                %415 = vst [vmem:[%s151 + $0x418] sm:$0xff] %v414
                %v416 = vld [vmem:[%s150 + $0x21a8] sm:$0xff]
                %417 = vst [vmem:[%s151 + $0x420] sm:$0xff] %v416
                %v418 = vld [vmem:[%s150 + $0x21b0] sm:$0xff]
                %419 = vst [vmem:[%s151 + $0x428] sm:$0xff] %v418
                %v420 = vld [vmem:[%s150 + $0x21b8] sm:$0xff]
                %421 = vst [vmem:[%s151 + $0x430] sm:$0xff] %v420
                %v422 = vld [vmem:[%s150 + $0x21c0] sm:$0xff]
                %423 = vst [vmem:[%s151 + $0x438] sm:$0xff] %v422
                %v424 = vld [vmem:[%s150 + $0x21c8] sm:$0xff]
                %425 = vst [vmem:[%s151 + $0x440] sm:$0xff] %v424
                %v426 = vld [vmem:[%s150 + $0x21d0] sm:$0xff]
                %427 = vst [vmem:[%s151 + $0x448] sm:$0xff] %v426
                %v428 = vld [vmem:[%s150 + $0x21d8] sm:$0xff]
                %429 = vst [vmem:[%s151 + $0x450] sm:$0xff] %v428
                %v430 = vld [vmem:[%s150 + $0x21e0] sm:$0xff]
                %431 = vst [vmem:[%s151 + $0x458] sm:$0xff] %v430
                %v432 = vld [vmem:[%s150 + $0x2bc0] sm:$0xff]
                %433 = vst [vmem:[%s151 + $0x460] sm:$0xff] %v432
                %v434 = vld [vmem:[%s150 + $0x2bc8] sm:$0xff]
                %435 = vst [vmem:[%s151 + $0x468] sm:$0xff] %v434
                %v436 = vld [vmem:[%s150 + $0x2bd0] sm:$0xff]
                %437 = vst [vmem:[%s151 + $0x470] sm:$0xff] %v436
                %v438 = vld [vmem:[%s150 + $0x2bd8] sm:$0xff]
                %439 = vst [vmem:[%s151 + $0x478] sm:$0xff] %v438
                %v440 = vld [vmem:[%s150 + $0x2be0] sm:$0xff]
                %441 = vst [vmem:[%s151 + $0x480] sm:$0xff] %v440
                %v442 = vld [vmem:[%s150 + $0x2be8] sm:$0xff]
                %443 = vst [vmem:[%s151 + $0x488] sm:$0xff] %v442
                %v444 = vld [vmem:[%s150 + $0x2bf0] sm:$0xff]
                %445 = vst [vmem:[%s151 + $0x490] sm:$0xff] %v444
                %v446 = vld [vmem:[%s150 + $0x2bf8] sm:$0xff]
                %447 = vst [vmem:[%s151 + $0x498] sm:$0xff] %v446
                %v448 = vld [vmem:[%s150 + $0x2c00] sm:$0xff]
                %449 = vst [vmem:[%s151 + $0x4a0] sm:$0xff] %v448
                %v450 = vld [vmem:[%s150 + $0x2c08] sm:$0xff]
                %451 = vst [vmem:[%s151 + $0x4a8] sm:$0xff] %v450
                %v452 = vld [vmem:[%s150 + $0x2c10] sm:$0xff]
                %453 = vst [vmem:[%s151 + $0x4b0] sm:$0xff] %v452
                %v454 = vld [vmem:[%s150 + $0x2c18] sm:$0xff]
                %455 = vst [vmem:[%s151 + $0x4b8] sm:$0xff] %v454
                %v456 = vld [vmem:[%s150 + $0x2c20] sm:$0xff]
                %457 = vst [vmem:[%s151 + $0x4c0] sm:$0xff] %v456
                %v458 = vld [vmem:[%s150 + $0x2c28] sm:$0xff]
                %459 = vst [vmem:[%s151 + $0x4c8] sm:$0xff] %v458
                %v460 = vld [vmem:[%s150 + $0x2c30] sm:$0xff]
                %461 = vst [vmem:[%s151 + $0x4d0] sm:$0xff] %v460
                %v462 = vld [vmem:[%s150 + $0x2c38] sm:$0xff]
                %463 = vst [vmem:[%s151 + $0x4d8] sm:$0xff] %v462
                %v464 = vld [vmem:[%s150 + $0x2c40] sm:$0xff]
                %465 = vst [vmem:[%s151 + $0x4e0] sm:$0xff] %v464
                %v466 = vld [vmem:[%s150 + $0x2c48] sm:$0xff]
                %467 = vst [vmem:[%s151 + $0x4e8] sm:$0xff] %v466
                %v468 = vld [vmem:[%s150 + $0x2c50] sm:$0xff]
                %469 = vst [vmem:[%s151 + $0x4f0] sm:$0xff] %v468
                %v470 = vld [vmem:[%s150 + $0x2c58] sm:$0xff]
                %471 = vst [vmem:[%s151 + $0x4f8] sm:$0xff] %v470
                %v472 = vld [vmem:[%s150 + $0x2c60] sm:$0xff]
                %473 = vst [vmem:[%s151 + $0x500] sm:$0xff] %v472
                %v474 = vld [vmem:[%s150 + $0x2c68] sm:$0xff]
                %475 = vst [vmem:[%s151 + $0x508] sm:$0xff] %v474
                %v476 = vld [vmem:[%s150 + $0x2c70] sm:$0xff]
                %477 = vst [vmem:[%s151 + $0x510] sm:$0xff] %v476
                %v478 = vld [vmem:[%s150 + $0x2c78] sm:$0xff]
                %479 = vst [vmem:[%s151 + $0x518] sm:$0xff] %v478
                %v480 = vld [vmem:[%s150 + $0x2c80] sm:$0xff]
                %481 = vst [vmem:[%s151 + $0x520] sm:$0xff] %v480
                %v482 = vld [vmem:[%s150 + $0x2c88] sm:$0xff]
                %483 = vst [vmem:[%s151 + $0x528] sm:$0xff] %v482
                %v484 = vld [vmem:[%s150 + $0x2c90] sm:$0xff]
                %485 = vst [vmem:[%s151 + $0x530] sm:$0xff] %v484
                %v486 = vld [vmem:[%s150 + $0x2c98] sm:$0xff]
                %487 = vst [vmem:[%s151 + $0x538] sm:$0xff] %v486
                %v488 = vld [vmem:[%s150 + $0x2ca0] sm:$0xff]
                %489 = vst [vmem:[%s151 + $0x540] sm:$0xff] %v488
                %v490 = vld [vmem:[%s150 + $0x2ca8] sm:$0xff]
                %491 = vst [vmem:[%s151 + $0x548] sm:$0xff] %v490
                %v492 = vld [vmem:[%s150 + $0x2cb0] sm:$0xff]
                %493 = vst [vmem:[%s151 + $0x550] sm:$0xff] %v492
                %v494 = vld [vmem:[%s150 + $0x2cb8] sm:$0xff]
                %495 = vst [vmem:[%s151 + $0x558] sm:$0xff] %v494
                %v496 = vld [vmem:[%s150 + $0x2cc0] sm:$0xff]
                %497 = vst [vmem:[%s151 + $0x560] sm:$0xff] %v496
                %v498 = vld [vmem:[%s150 + $0x2cc8] sm:$0xff]
                %499 = vst [vmem:[%s151 + $0x568] sm:$0xff] %v498
                %v500 = vld [vmem:[%s150 + $0x2cd0] sm:$0xff]
                %501 = vst [vmem:[%s151 + $0x570] sm:$0xff] %v500
                %v502 = vld [vmem:[%s150 + $0x36b0] sm:$0xff]
                %503 = vst [vmem:[%s151 + $0x578] sm:$0xff] %v502
                %v504 = vld [vmem:[%s150 + $0x36b8] sm:$0xff]
                %505 = vst [vmem:[%s151 + $0x580] sm:$0xff] %v504
                %v506 = vld [vmem:[%s150 + $0x36c0] sm:$0xff]
                %507 = vst [vmem:[%s151 + $0x588] sm:$0xff] %v506
                %v508 = vld [vmem:[%s150 + $0x36c8] sm:$0xff]
                %509 = vst [vmem:[%s151 + $0x590] sm:$0xff] %v508
                %v510 = vld [vmem:[%s150 + $0x36d0] sm:$0xff]
                %511 = vst [vmem:[%s151 + $0x598] sm:$0xff] %v510
                %v512 = vld [vmem:[%s150 + $0x36d8] sm:$0xff]
                %513 = vst [vmem:[%s151 + $0x5a0] sm:$0xff] %v512
                %v514 = vld [vmem:[%s150 + $0x36e0] sm:$0xff]
                %515 = vst [vmem:[%s151 + $0x5a8] sm:$0xff] %v514
                %v516 = vld [vmem:[%s150 + $0x36e8] sm:$0xff]
                %517 = vst [vmem:[%s151 + $0x5b0] sm:$0xff] %v516
                %v518 = vld [vmem:[%s150 + $0x36f0] sm:$0xff]
                %519 = vst [vmem:[%s151 + $0x5b8] sm:$0xff] %v518
                %v520 = vld [vmem:[%s150 + $0x36f8] sm:$0xff]
                %521 = vst [vmem:[%s151 + $0x5c0] sm:$0xff] %v520
                %v522 = vld [vmem:[%s150 + $0x3700] sm:$0xff]
                %523 = vst [vmem:[%s151 + $0x5c8] sm:$0xff] %v522
                %v524 = vld [vmem:[%s150 + $0x3708] sm:$0xff]
                %525 = vst [vmem:[%s151 + $0x5d0] sm:$0xff] %v524
                %v526 = vld [vmem:[%s150 + $0x3710] sm:$0xff]
                %527 = vst [vmem:[%s151 + $0x5d8] sm:$0xff] %v526
                %v528 = vld [vmem:[%s150 + $0x3718] sm:$0xff]
                %529 = vst [vmem:[%s151 + $0x5e0] sm:$0xff] %v528
                %v530 = vld [vmem:[%s150 + $0x3720] sm:$0xff]
                %531 = vst [vmem:[%s151 + $0x5e8] sm:$0xff] %v530
                %v532 = vld [vmem:[%s150 + $0x3728] sm:$0xff]
                %533 = vst [vmem:[%s151 + $0x5f0] sm:$0xff] %v532
                %v534 = vld [vmem:[%s150 + $0x3730] sm:$0xff]
                %535 = vst [vmem:[%s151 + $0x5f8] sm:$0xff] %v534
                %v536 = vld [vmem:[%s150 + $0x3738] sm:$0xff]
                %537 = vst [vmem:[%s151 + $0x600] sm:$0xff] %v536
                %v538 = vld [vmem:[%s150 + $0x3740] sm:$0xff]
                %539 = vst [vmem:[%s151 + $0x608] sm:$0xff] %v538
                %v540 = vld [vmem:[%s150 + $0x3748] sm:$0xff]
                %541 = vst [vmem:[%s151 + $0x610] sm:$0xff] %v540
                %v542 = vld [vmem:[%s150 + $0x3750] sm:$0xff]
                %543 = vst [vmem:[%s151 + $0x618] sm:$0xff] %v542
                %v544 = vld [vmem:[%s150 + $0x3758] sm:$0xff]
                %545 = vst [vmem:[%s151 + $0x620] sm:$0xff] %v544
                %v546 = vld [vmem:[%s150 + $0x3760] sm:$0xff]
                %547 = vst [vmem:[%s151 + $0x628] sm:$0xff] %v546
                %v548 = vld [vmem:[%s150 + $0x3768] sm:$0xff]
                %549 = vst [vmem:[%s151 + $0x630] sm:$0xff] %v548
                %v550 = vld [vmem:[%s150 + $0x3770] sm:$0xff]
                %551 = vst [vmem:[%s151 + $0x638] sm:$0xff] %v550
                %v552 = vld [vmem:[%s150 + $0x3778] sm:$0xff]
                %553 = vst [vmem:[%s151 + $0x640] sm:$0xff] %v552
                %v554 = vld [vmem:[%s150 + $0x3780] sm:$0xff]
                %555 = vst [vmem:[%s151 + $0x648] sm:$0xff] %v554
                %v556 = vld [vmem:[%s150 + $0x3788] sm:$0xff]
                %557 = vst [vmem:[%s151 + $0x650] sm:$0xff] %v556
                %v558 = vld [vmem:[%s150 + $0x3790] sm:$0xff]
                %559 = vst [vmem:[%s151 + $0x658] sm:$0xff] %v558
                %v560 = vld [vmem:[%s150 + $0x3798] sm:$0xff]
                %561 = vst [vmem:[%s151 + $0x660] sm:$0xff] %v560
                %v562 = vld [vmem:[%s150 + $0x37a0] sm:$0xff]
                %563 = vst [vmem:[%s151 + $0x668] sm:$0xff] %v562
                %v564 = vld [vmem:[%s150 + $0x37a8] sm:$0xff]
                %565 = vst [vmem:[%s151 + $0x670] sm:$0xff] %v564
                %v566 = vld [vmem:[%s150 + $0x37b0] sm:$0xff]
                %567 = vst [vmem:[%s151 + $0x678] sm:$0xff] %v566
                %v568 = vld [vmem:[%s150 + $0x37b8] sm:$0xff]
                %569 = vst [vmem:[%s151 + $0x680] sm:$0xff] %v568
                %v570 = vld [vmem:[%s150 + $0x37c0] sm:$0xff]
                %571 = vst [vmem:[%s151 + $0x688] sm:$0xff] %v570
                %v572 = vld [vmem:[%s150 + $0x41a0] sm:$0xff]
                %573 = vst [vmem:[%s151 + $0x690] sm:$0xff] %v572
                %v574 = vld [vmem:[%s150 + $0x41a8] sm:$0xff]
                %575 = vst [vmem:[%s151 + $0x698] sm:$0xff] %v574
                %v576 = vld [vmem:[%s150 + $0x41b0] sm:$0xff]
                %577 = vst [vmem:[%s151 + $0x6a0] sm:$0xff] %v576
                %v578 = vld [vmem:[%s150 + $0x41b8] sm:$0xff]
                %579 = vst [vmem:[%s151 + $0x6a8] sm:$0xff] %v578
                %v580 = vld [vmem:[%s150 + $0x41c0] sm:$0xff]
                %581 = vst [vmem:[%s151 + $0x6b0] sm:$0xff] %v580
                %v582 = vld [vmem:[%s150 + $0x41c8] sm:$0xff]
                %583 = vst [vmem:[%s151 + $0x6b8] sm:$0xff] %v582
                %v584 = vld [vmem:[%s150 + $0x41d0] sm:$0xff]
                %585 = vst [vmem:[%s151 + $0x6c0] sm:$0xff] %v584
                %v586 = vld [vmem:[%s150 + $0x41d8] sm:$0xff]
                %587 = vst [vmem:[%s151 + $0x6c8] sm:$0xff] %v586
                %v588 = vld [vmem:[%s150 + $0x41e0] sm:$0xff]
                %589 = vst [vmem:[%s151 + $0x6d0] sm:$0xff] %v588
                %v590 = vld [vmem:[%s150 + $0x41e8] sm:$0xff]
                %591 = vst [vmem:[%s151 + $0x6d8] sm:$0xff] %v590
                %v592 = vld [vmem:[%s150 + $0x41f0] sm:$0xff]
                %593 = vst [vmem:[%s151 + $0x6e0] sm:$0xff] %v592
                %v594 = vld [vmem:[%s150 + $0x41f8] sm:$0xff]
                %595 = vst [vmem:[%s151 + $0x6e8] sm:$0xff] %v594
                %v596 = vld [vmem:[%s150 + $0x4200] sm:$0xff]
                %597 = vst [vmem:[%s151 + $0x6f0] sm:$0xff] %v596
                %v598 = vld [vmem:[%s150 + $0x4208] sm:$0xff]
                %599 = vst [vmem:[%s151 + $0x6f8] sm:$0xff] %v598
                %v600 = vld [vmem:[%s150 + $0x4210] sm:$0xff]
                %601 = vst [vmem:[%s151 + $0x700] sm:$0xff] %v600
                %v602 = vld [vmem:[%s150 + $0x4218] sm:$0xff]
                %603 = vst [vmem:[%s151 + $0x708] sm:$0xff] %v602
                %v604 = vld [vmem:[%s150 + $0x4220] sm:$0xff]
                %605 = vst [vmem:[%s151 + $0x710] sm:$0xff] %v604
                %v606 = vld [vmem:[%s150 + $0x4228] sm:$0xff]
                %607 = vst [vmem:[%s151 + $0x718] sm:$0xff] %v606
                %v608 = vld [vmem:[%s150 + $0x4230] sm:$0xff]
                %609 = vst [vmem:[%s151 + $0x720] sm:$0xff] %v608
                %v610 = vld [vmem:[%s150 + $0x4238] sm:$0xff]
                %611 = vst [vmem:[%s151 + $0x728] sm:$0xff] %v610
                %v612 = vld [vmem:[%s150 + $0x4240] sm:$0xff]
                %613 = vst [vmem:[%s151 + $0x730] sm:$0xff] %v612
                %v614 = vld [vmem:[%s150 + $0x4248] sm:$0xff]
                %615 = vst [vmem:[%s151 + $0x738] sm:$0xff] %v614
                %v616 = vld [vmem:[%s150 + $0x4250] sm:$0xff]
                %617 = vst [vmem:[%s151 + $0x740] sm:$0xff] %v616
                %v618 = vld [vmem:[%s150 + $0x4258] sm:$0xff]
                %619 = vst [vmem:[%s151 + $0x748] sm:$0xff] %v618
                %v620 = vld [vmem:[%s150 + $0x4260] sm:$0xff]
                %621 = vst [vmem:[%s151 + $0x750] sm:$0xff] %v620
                %v622 = vld [vmem:[%s150 + $0x4268] sm:$0xff]
                %623 = vst [vmem:[%s151 + $0x758] sm:$0xff] %v622
                %v624 = vld [vmem:[%s150 + $0x4270] sm:$0xff]
                %625 = vst [vmem:[%s151 + $0x760] sm:$0xff] %v624
                %v626 = vld [vmem:[%s150 + $0x4278] sm:$0xff]
                %627 = vst [vmem:[%s151 + $0x768] sm:$0xff] %v626
                %v628 = vld [vmem:[%s150 + $0x4280] sm:$0xff]
                %629 = vst [vmem:[%s151 + $0x770] sm:$0xff] %v628
                %v630 = vld [vmem:[%s150 + $0x4288] sm:$0xff]
                %631 = vst [vmem:[%s151 + $0x778] sm:$0xff] %v630
                %v632 = vld [vmem:[%s150 + $0x4290] sm:$0xff]
                %633 = vst [vmem:[%s151 + $0x780] sm:$0xff] %v632
                %v634 = vld [vmem:[%s150 + $0x4298] sm:$0xff]
                %635 = vst [vmem:[%s151 + $0x788] sm:$0xff] %v634
                %v636 = vld [vmem:[%s150 + $0x42a0] sm:$0xff]
                %637 = vst [vmem:[%s151 + $0x790] sm:$0xff] %v636
                %v638 = vld [vmem:[%s150 + $0x42a8] sm:$0xff]
                %639 = vst [vmem:[%s151 + $0x798] sm:$0xff] %v638
                %v640 = vld [vmem:[%s150 + $0x42b0] sm:$0xff]
                %641 = vst [vmem:[%s151 + $0x7a0] sm:$0xff] %v640
                %v642 = vld [vmem:[%s150 + $0x4c90] sm:$0xff]
                %643 = vst [vmem:[%s151 + $0x7a8] sm:$0xff] %v642
                %v644 = vld [vmem:[%s150 + $0x4c98] sm:$0xff]
                %645 = vst [vmem:[%s151 + $0x7b0] sm:$0xff] %v644
                %v646 = vld [vmem:[%s150 + $0x4ca0] sm:$0xff]
                %647 = vst [vmem:[%s151 + $0x7b8] sm:$0xff] %v646
                %v648 = vld [vmem:[%s150 + $0x4ca8] sm:$0xff]
                %649 = vst [vmem:[%s151 + $0x7c0] sm:$0xff] %v648
                %v650 = vld [vmem:[%s150 + $0x4cb0] sm:$0xff]
                %651 = vst [vmem:[%s151 + $0x7c8] sm:$0xff] %v650
                %v652 = vld [vmem:[%s150 + $0x4cb8] sm:$0xff]
                %653 = vst [vmem:[%s151 + $0x7d0] sm:$0xff] %v652
                %v654 = vld [vmem:[%s150 + $0x4cc0] sm:$0xff]
                %655 = vst [vmem:[%s151 + $0x7d8] sm:$0xff] %v654
                %v656 = vld [vmem:[%s150 + $0x4cc8] sm:$0xff]
                %657 = vst [vmem:[%s151 + $0x7e0] sm:$0xff] %v656
                %v658 = vld [vmem:[%s150 + $0x4cd0] sm:$0xff]
                %659 = vst [vmem:[%s151 + $0x7e8] sm:$0xff] %v658
                %v660 = vld [vmem:[%s150 + $0x4cd8] sm:$0xff]
                %661 = vst [vmem:[%s151 + $0x7f0] sm:$0xff] %v660
                %v662 = vld [vmem:[%s150 + $0x4ce0] sm:$0xff]
                %663 = vst [vmem:[%s151 + $0x7f8] sm:$0xff] %v662
                %v664 = vld [vmem:[%s150 + $0x4ce8] sm:$0xff]
                %665 = vst [vmem:[%s151 + $0x800] sm:$0xff] %v664
                %v666 = vld [vmem:[%s150 + $0x4cf0] sm:$0xff]
                %667 = vst [vmem:[%s151 + $0x808] sm:$0xff] %v666
                %v668 = vld [vmem:[%s150 + $0x4cf8] sm:$0xff]
                %669 = vst [vmem:[%s151 + $0x810] sm:$0xff] %v668
                %v670 = vld [vmem:[%s150 + $0x4d00] sm:$0xff]
                %671 = vst [vmem:[%s151 + $0x818] sm:$0xff] %v670
                %v672 = vld [vmem:[%s150 + $0x4d08] sm:$0xff]
                %673 = vst [vmem:[%s151 + $0x820] sm:$0xff] %v672
                %v674 = vld [vmem:[%s150 + $0x4d10] sm:$0xff]
                %675 = vst [vmem:[%s151 + $0x828] sm:$0xff] %v674
                %v676 = vld [vmem:[%s150 + $0x4d18] sm:$0xff]
                %677 = vst [vmem:[%s151 + $0x830] sm:$0xff] %v676
                %v678 = vld [vmem:[%s150 + $0x4d20] sm:$0xff]
                %679 = vst [vmem:[%s151 + $0x838] sm:$0xff] %v678
                %v680 = vld [vmem:[%s150 + $0x4d28] sm:$0xff]
                %681 = vst [vmem:[%s151 + $0x840] sm:$0xff] %v680
                %v682 = vld [vmem:[%s150 + $0x4d30] sm:$0xff]
                %683 = vst [vmem:[%s151 + $0x848] sm:$0xff] %v682
                %v684 = vld [vmem:[%s150 + $0x4d38] sm:$0xff]
                %685 = vst [vmem:[%s151 + $0x850] sm:$0xff] %v684
                %v686 = vld [vmem:[%s150 + $0x4d40] sm:$0xff]
                %687 = vst [vmem:[%s151 + $0x858] sm:$0xff] %v686
                %v688 = vld [vmem:[%s150 + $0x4d48] sm:$0xff]
                %689 = vst [vmem:[%s151 + $0x860] sm:$0xff] %v688
                %v690 = vld [vmem:[%s150 + $0x4d50] sm:$0xff]
                %691 = vst [vmem:[%s151 + $0x868] sm:$0xff] %v690
                %v692 = vld [vmem:[%s150 + $0x4d58] sm:$0xff]
                %693 = vst [vmem:[%s151 + $0x870] sm:$0xff] %v692
                %v694 = vld [vmem:[%s150 + $0x4d60] sm:$0xff]
                %695 = vst [vmem:[%s151 + $0x878] sm:$0xff] %v694
                %v696 = vld [vmem:[%s150 + $0x4d68] sm:$0xff]
                %697 = vst [vmem:[%s151 + $0x880] sm:$0xff] %v696
                %v698 = vld [vmem:[%s150 + $0x4d70] sm:$0xff]
                %699 = vst [vmem:[%s151 + $0x888] sm:$0xff] %v698
                %v700 = vld [vmem:[%s150 + $0x4d78] sm:$0xff]
                %701 = vst [vmem:[%s151 + $0x890] sm:$0xff] %v700
                %v702 = vld [vmem:[%s150 + $0x4d80] sm:$0xff]
                %703 = vst [vmem:[%s151 + $0x898] sm:$0xff] %v702
                %v704 = vld [vmem:[%s150 + $0x4d88] sm:$0xff]
                %705 = vst [vmem:[%s151 + $0x8a0] sm:$0xff] %v704
                %v706 = vld [vmem:[%s150 + $0x4d90] sm:$0xff]
                %707 = vst [vmem:[%s151 + $0x8a8] sm:$0xff] %v706
                %v708 = vld [vmem:[%s150 + $0x4d98] sm:$0xff]
                %709 = vst [vmem:[%s151 + $0x8b0] sm:$0xff] %v708
                %v710 = vld [vmem:[%s150 + $0x4da0] sm:$0xff]
                %711 = vst [vmem:[%s151 + $0x8b8] sm:$0xff] %v710
                %v712 = vld [vmem:[%s150 + $0x5780] sm:$0xff]
                %713 = vst [vmem:[%s151 + $0x8c0] sm:$0xff] %v712
                %v714 = vld [vmem:[%s150 + $0x5788] sm:$0xff]
                %715 = vst [vmem:[%s151 + $0x8c8] sm:$0xff] %v714
                %v716 = vld [vmem:[%s150 + $0x5790] sm:$0xff]
                %717 = vst [vmem:[%s151 + $0x8d0] sm:$0xff] %v716
                %v718 = vld [vmem:[%s150 + $0x5798] sm:$0xff]
                %719 = vst [vmem:[%s151 + $0x8d8] sm:$0xff] %v718
                %v720 = vld [vmem:[%s150 + $0x57a0] sm:$0xff]
                %721 = vst [vmem:[%s151 + $0x8e0] sm:$0xff] %v720
                %v722 = vld [vmem:[%s150 + $0x57a8] sm:$0xff]
                %723 = vst [vmem:[%s151 + $0x8e8] sm:$0xff] %v722
                %v724 = vld [vmem:[%s150 + $0x57b0] sm:$0xff]
                %725 = vst [vmem:[%s151 + $0x8f0] sm:$0xff] %v724
                %v726 = vld [vmem:[%s150 + $0x57b8] sm:$0xff]
                %727 = vst [vmem:[%s151 + $0x8f8] sm:$0xff] %v726
                %v728 = vld [vmem:[%s150 + $0x57c0] sm:$0xff]
                %729 = vst [vmem:[%s151 + $0x900] sm:$0xff] %v728
                %v730 = vld [vmem:[%s150 + $0x57c8] sm:$0xff]
                %731 = vst [vmem:[%s151 + $0x908] sm:$0xff] %v730
                %v732 = vld [vmem:[%s150 + $0x57d0] sm:$0xff]
                %733 = vst [vmem:[%s151 + $0x910] sm:$0xff] %v732
                %v734 = vld [vmem:[%s150 + $0x57d8] sm:$0xff]
                %735 = vst [vmem:[%s151 + $0x918] sm:$0xff] %v734
                %v736 = vld [vmem:[%s150 + $0x57e0] sm:$0xff]
                %737 = vst [vmem:[%s151 + $0x920] sm:$0xff] %v736
                %v738 = vld [vmem:[%s150 + $0x57e8] sm:$0xff]
                %739 = vst [vmem:[%s151 + $0x928] sm:$0xff] %v738
                %v740 = vld [vmem:[%s150 + $0x57f0] sm:$0xff]
                %741 = vst [vmem:[%s151 + $0x930] sm:$0xff] %v740
                %v742 = vld [vmem:[%s150 + $0x57f8] sm:$0xff]
                %743 = vst [vmem:[%s151 + $0x938] sm:$0xff] %v742
                %v744 = vld [vmem:[%s150 + $0x5800] sm:$0xff]
                %745 = vst [vmem:[%s151 + $0x940] sm:$0xff] %v744
                %v746 = vld [vmem:[%s150 + $0x5808] sm:$0xff]
                %747 = vst [vmem:[%s151 + $0x948] sm:$0xff] %v746
                %v748 = vld [vmem:[%s150 + $0x5810] sm:$0xff]
                %749 = vst [vmem:[%s151 + $0x950] sm:$0xff] %v748
                %v750 = vld [vmem:[%s150 + $0x5818] sm:$0xff]
                %751 = vst [vmem:[%s151 + $0x958] sm:$0xff] %v750
                %v752 = vld [vmem:[%s150 + $0x5820] sm:$0xff]
                %753 = vst [vmem:[%s151 + $0x960] sm:$0xff] %v752
                %v754 = vld [vmem:[%s150 + $0x5828] sm:$0xff]
                %755 = vst [vmem:[%s151 + $0x968] sm:$0xff] %v754
                %v756 = vld [vmem:[%s150 + $0x5830] sm:$0xff]
                %757 = vst [vmem:[%s151 + $0x970] sm:$0xff] %v756
                %v758 = vld [vmem:[%s150 + $0x5838] sm:$0xff]
                %759 = vst [vmem:[%s151 + $0x978] sm:$0xff] %v758
                %v760 = vld [vmem:[%s150 + $0x5840] sm:$0xff]
                %761 = vst [vmem:[%s151 + $0x980] sm:$0xff] %v760
                %v762 = vld [vmem:[%s150 + $0x5848] sm:$0xff]
                %763 = vst [vmem:[%s151 + $0x988] sm:$0xff] %v762
                %v764 = vld [vmem:[%s150 + $0x5850] sm:$0xff]
                %765 = vst [vmem:[%s151 + $0x990] sm:$0xff] %v764
                %v766 = vld [vmem:[%s150 + $0x5858] sm:$0xff]
                %767 = vst [vmem:[%s151 + $0x998] sm:$0xff] %v766
                %v768 = vld [vmem:[%s150 + $0x5860] sm:$0xff]
                %769 = vst [vmem:[%s151 + $0x9a0] sm:$0xff] %v768
                %v770 = vld [vmem:[%s150 + $0x5868] sm:$0xff]
                %771 = vst [vmem:[%s151 + $0x9a8] sm:$0xff] %v770
                %v772 = vld [vmem:[%s150 + $0x5870] sm:$0xff]
                %773 = vst [vmem:[%s151 + $0x9b0] sm:$0xff] %v772
                %v774 = vld [vmem:[%s150 + $0x5878] sm:$0xff]
                %775 = vst [vmem:[%s151 + $0x9b8] sm:$0xff] %v774
                %v776 = vld [vmem:[%s150 + $0x5880] sm:$0xff]
                %777 = vst [vmem:[%s151 + $0x9c0] sm:$0xff] %v776
                %v778 = vld [vmem:[%s150 + $0x5888] sm:$0xff]
                %779 = vst [vmem:[%s151 + $0x9c8] sm:$0xff] %v778
                %v780 = vld [vmem:[%s150 + $0x5890] sm:$0xff]
                %781 = vst [vmem:[%s151 + $0x9d0] sm:$0xff] %v780
                %v782 = vld [vmem:[%s150 + $0x6270] sm:$0xff]
                %783 = vst [vmem:[%s151 + $0x9d8] sm:$0xff] %v782
                %v784 = vld [vmem:[%s150 + $0x6278] sm:$0xff]
                %785 = vst [vmem:[%s151 + $0x9e0] sm:$0xff] %v784
                %v786 = vld [vmem:[%s150 + $0x6280] sm:$0xff]
                %787 = vst [vmem:[%s151 + $0x9e8] sm:$0xff] %v786
                %v788 = vld [vmem:[%s150 + $0x6288] sm:$0xff]
                %789 = vst [vmem:[%s151 + $0x9f0] sm:$0xff] %v788
                %v790 = vld [vmem:[%s150 + $0x6290] sm:$0xff]
                %791 = vst [vmem:[%s151 + $0x9f8] sm:$0xff] %v790
                %v792 = vld [vmem:[%s150 + $0x6298] sm:$0xff]
                %793 = vst [vmem:[%s151 + $0xa00] sm:$0xff] %v792
                %v794 = vld [vmem:[%s150 + $0x62a0] sm:$0xff]
                %795 = vst [vmem:[%s151 + $0xa08] sm:$0xff] %v794
                %v796 = vld [vmem:[%s150 + $0x62a8] sm:$0xff]
                %797 = vst [vmem:[%s151 + $0xa10] sm:$0xff] %v796
                %v798 = vld [vmem:[%s150 + $0x62b0] sm:$0xff]
                %799 = vst [vmem:[%s151 + $0xa18] sm:$0xff] %v798
                %v800 = vld [vmem:[%s150 + $0x62b8] sm:$0xff]
                %801 = vst [vmem:[%s151 + $0xa20] sm:$0xff] %v800
                %v802 = vld [vmem:[%s150 + $0x62c0] sm:$0xff]
                %803 = vst [vmem:[%s151 + $0xa28] sm:$0xff] %v802
                %v804 = vld [vmem:[%s150 + $0x62c8] sm:$0xff]
                %805 = vst [vmem:[%s151 + $0xa30] sm:$0xff] %v804
                %v806 = vld [vmem:[%s150 + $0x62d0] sm:$0xff]
                %807 = vst [vmem:[%s151 + $0xa38] sm:$0xff] %v806
                %v808 = vld [vmem:[%s150 + $0x62d8] sm:$0xff]
                %809 = vst [vmem:[%s151 + $0xa40] sm:$0xff] %v808
                %v810 = vld [vmem:[%s150 + $0x62e0] sm:$0xff]
                %811 = vst [vmem:[%s151 + $0xa48] sm:$0xff] %v810
                %v812 = vld [vmem:[%s150 + $0x62e8] sm:$0xff]
                %813 = vst [vmem:[%s151 + $0xa50] sm:$0xff] %v812
                %v814 = vld [vmem:[%s150 + $0x62f0] sm:$0xff]
                %815 = vst [vmem:[%s151 + $0xa58] sm:$0xff] %v814
                %v816 = vld [vmem:[%s150 + $0x62f8] sm:$0xff]
                %817 = vst [vmem:[%s151 + $0xa60] sm:$0xff] %v816
                %v818 = vld [vmem:[%s150 + $0x6300] sm:$0xff]
                %819 = vst [vmem:[%s151 + $0xa68] sm:$0xff] %v818
                %v820 = vld [vmem:[%s150 + $0x6308] sm:$0xff]
                %821 = vst [vmem:[%s151 + $0xa70] sm:$0xff] %v820
                %v822 = vld [vmem:[%s150 + $0x6310] sm:$0xff]
                %823 = vst [vmem:[%s151 + $0xa78] sm:$0xff] %v822
                %v824 = vld [vmem:[%s150 + $0x6318] sm:$0xff]
                %825 = vst [vmem:[%s151 + $0xa80] sm:$0xff] %v824
                %v826 = vld [vmem:[%s150 + $0x6320] sm:$0xff]
                %827 = vst [vmem:[%s151 + $0xa88] sm:$0xff] %v826
                %v828 = vld [vmem:[%s150 + $0x6328] sm:$0xff]
                %829 = vst [vmem:[%s151 + $0xa90] sm:$0xff] %v828
                %v830 = vld [vmem:[%s150 + $0x6330] sm:$0xff]
                %831 = vst [vmem:[%s151 + $0xa98] sm:$0xff] %v830
                %v832 = vld [vmem:[%s150 + $0x6338] sm:$0xff]
                %833 = vst [vmem:[%s151 + $0xaa0] sm:$0xff] %v832
                %v834 = vld [vmem:[%s150 + $0x6340] sm:$0xff]
                %835 = vst [vmem:[%s151 + $0xaa8] sm:$0xff] %v834
                %v836 = vld [vmem:[%s150 + $0x6348] sm:$0xff]
                %837 = vst [vmem:[%s151 + $0xab0] sm:$0xff] %v836
                %v838 = vld [vmem:[%s150 + $0x6350] sm:$0xff]
                %839 = vst [vmem:[%s151 + $0xab8] sm:$0xff] %v838
                %v840 = vld [vmem:[%s150 + $0x6358] sm:$0xff]
                %841 = vst [vmem:[%s151 + $0xac0] sm:$0xff] %v840
                %v842 = vld [vmem:[%s150 + $0x6360] sm:$0xff]
                %843 = vst [vmem:[%s151 + $0xac8] sm:$0xff] %v842
                %v844 = vld [vmem:[%s150 + $0x6368] sm:$0xff]
                %845 = vst [vmem:[%s151 + $0xad0] sm:$0xff] %v844
                %v846 = vld [vmem:[%s150 + $0x6370] sm:$0xff]
                %847 = vst [vmem:[%s151 + $0xad8] sm:$0xff] %v846
                %v848 = vld [vmem:[%s150 + $0x6378] sm:$0xff]
                %849 = vst [vmem:[%s151 + $0xae0] sm:$0xff] %v848
                %v850 = vld [vmem:[%s150 + $0x6380] sm:$0xff]
                %851 = vst [vmem:[%s151 + $0xae8] sm:$0xff] %v850
                %v852 = vld [vmem:[%s150 + $0x6d60] sm:$0xff]
                %853 = vst [vmem:[%s151 + $0xaf0] sm:$0xff] %v852
                %v854 = vld [vmem:[%s150 + $0x6d68] sm:$0xff]
                %855 = vst [vmem:[%s151 + $0xaf8] sm:$0xff] %v854
                %v856 = vld [vmem:[%s150 + $0x6d70] sm:$0xff]
                %857 = vst [vmem:[%s151 + $0xb00] sm:$0xff] %v856
                %v858 = vld [vmem:[%s150 + $0x6d78] sm:$0xff]
                %859 = vst [vmem:[%s151 + $0xb08] sm:$0xff] %v858
                %v860 = vld [vmem:[%s150 + $0x6d80] sm:$0xff]
                %861 = vst [vmem:[%s151 + $0xb10] sm:$0xff] %v860
                %v862 = vld [vmem:[%s150 + $0x6d88] sm:$0xff]
                %863 = vst [vmem:[%s151 + $0xb18] sm:$0xff] %v862
                %v864 = vld [vmem:[%s150 + $0x6d90] sm:$0xff]
                %865 = vst [vmem:[%s151 + $0xb20] sm:$0xff] %v864
                %v866 = vld [vmem:[%s150 + $0x6d98] sm:$0xff]
                %867 = vst [vmem:[%s151 + $0xb28] sm:$0xff] %v866
                %v868 = vld [vmem:[%s150 + $0x6da0] sm:$0xff]
                %869 = vst [vmem:[%s151 + $0xb30] sm:$0xff] %v868
                %v870 = vld [vmem:[%s150 + $0x6da8] sm:$0xff]
                %871 = vst [vmem:[%s151 + $0xb38] sm:$0xff] %v870
                %v872 = vld [vmem:[%s150 + $0x6db0] sm:$0xff]
                %873 = vst [vmem:[%s151 + $0xb40] sm:$0xff] %v872
                %v874 = vld [vmem:[%s150 + $0x6db8] sm:$0xff]
                %875 = vst [vmem:[%s151 + $0xb48] sm:$0xff] %v874
                %v876 = vld [vmem:[%s150 + $0x6dc0] sm:$0xff]
                %877 = vst [vmem:[%s151 + $0xb50] sm:$0xff] %v876
                %v878 = vld [vmem:[%s150 + $0x6dc8] sm:$0xff]
                %879 = vst [vmem:[%s151 + $0xb58] sm:$0xff] %v878
                %v880 = vld [vmem:[%s150 + $0x6dd0] sm:$0xff]
                %881 = vst [vmem:[%s151 + $0xb60] sm:$0xff] %v880
                %v882 = vld [vmem:[%s150 + $0x6dd8] sm:$0xff]
                %883 = vst [vmem:[%s151 + $0xb68] sm:$0xff] %v882
                %v884 = vld [vmem:[%s150 + $0x6de0] sm:$0xff]
                %885 = vst [vmem:[%s151 + $0xb70] sm:$0xff] %v884
                %v886 = vld [vmem:[%s150 + $0x6de8] sm:$0xff]
                %887 = vst [vmem:[%s151 + $0xb78] sm:$0xff] %v886
                %v888 = vld [vmem:[%s150 + $0x6df0] sm:$0xff]
                %889 = vst [vmem:[%s151 + $0xb80] sm:$0xff] %v888
                %v890 = vld [vmem:[%s150 + $0x6df8] sm:$0xff]
                %891 = vst [vmem:[%s151 + $0xb88] sm:$0xff] %v890
                %v892 = vld [vmem:[%s150 + $0x6e00] sm:$0xff]
                %893 = vst [vmem:[%s151 + $0xb90] sm:$0xff] %v892
                %v894 = vld [vmem:[%s150 + $0x6e08] sm:$0xff]
                %895 = vst [vmem:[%s151 + $0xb98] sm:$0xff] %v894
                %v896 = vld [vmem:[%s150 + $0x6e10] sm:$0xff]
                %897 = vst [vmem:[%s151 + $0xba0] sm:$0xff] %v896
                %v898 = vld [vmem:[%s150 + $0x6e18] sm:$0xff]
                %899 = vst [vmem:[%s151 + $0xba8] sm:$0xff] %v898
                %v900 = vld [vmem:[%s150 + $0x6e20] sm:$0xff]
                %901 = vst [vmem:[%s151 + $0xbb0] sm:$0xff] %v900
                %v902 = vld [vmem:[%s150 + $0x6e28] sm:$0xff]
                %903 = vst [vmem:[%s151 + $0xbb8] sm:$0xff] %v902
                %v904 = vld [vmem:[%s150 + $0x6e30] sm:$0xff]
                %905 = vst [vmem:[%s151 + $0xbc0] sm:$0xff] %v904
                %v906 = vld [vmem:[%s150 + $0x6e38] sm:$0xff]
                %907 = vst [vmem:[%s151 + $0xbc8] sm:$0xff] %v906
                %v908 = vld [vmem:[%s150 + $0x6e40] sm:$0xff]
                %909 = vst [vmem:[%s151 + $0xbd0] sm:$0xff] %v908
                %v910 = vld [vmem:[%s150 + $0x6e48] sm:$0xff]
                %911 = vst [vmem:[%s151 + $0xbd8] sm:$0xff] %v910
                %v912 = vld [vmem:[%s150 + $0x6e50] sm:$0xff]
                %913 = vst [vmem:[%s151 + $0xbe0] sm:$0xff] %v912
                %v914 = vld [vmem:[%s150 + $0x6e58] sm:$0xff]
                %915 = vst [vmem:[%s151 + $0xbe8] sm:$0xff] %v914
                %v916 = vld [vmem:[%s150 + $0x6e60] sm:$0xff]
                %917 = vst [vmem:[%s151 + $0xbf0] sm:$0xff] %v916
                %v918 = vld [vmem:[%s150 + $0x6e68] sm:$0xff]
                %919 = vst [vmem:[%s151 + $0xbf8] sm:$0xff] %v918
                %v920 = vld [vmem:[%s150 + $0x6e70] sm:$0xff]
                %921 = vst [vmem:[%s151 + $0xc00] sm:$0xff] %v920
                %v922 = vld [vmem:[%s150 + $0x7850] sm:$0xff]
                %923 = vst [vmem:[%s151 + $0xc08] sm:$0xff] %v922
                %v924 = vld [vmem:[%s150 + $0x7858] sm:$0xff]
                %925 = vst [vmem:[%s151 + $0xc10] sm:$0xff] %v924
                %v926 = vld [vmem:[%s150 + $0x7860] sm:$0xff]
                %927 = vst [vmem:[%s151 + $0xc18] sm:$0xff] %v926
                %v928 = vld [vmem:[%s150 + $0x7868] sm:$0xff]
                %929 = vst [vmem:[%s151 + $0xc20] sm:$0xff] %v928
                %v930 = vld [vmem:[%s150 + $0x7870] sm:$0xff]
                %931 = vst [vmem:[%s151 + $0xc28] sm:$0xff] %v930
                %v932 = vld [vmem:[%s150 + $0x7878] sm:$0xff]
                %933 = vst [vmem:[%s151 + $0xc30] sm:$0xff] %v932
                %v934 = vld [vmem:[%s150 + $0x7880] sm:$0xff]
                %935 = vst [vmem:[%s151 + $0xc38] sm:$0xff] %v934
                %v936 = vld [vmem:[%s150 + $0x7888] sm:$0xff]
                %937 = vst [vmem:[%s151 + $0xc40] sm:$0xff] %v936
                %v938 = vld [vmem:[%s150 + $0x7890] sm:$0xff]
                %939 = vst [vmem:[%s151 + $0xc48] sm:$0xff] %v938
                %v940 = vld [vmem:[%s150 + $0x7898] sm:$0xff]
                %941 = vst [vmem:[%s151 + $0xc50] sm:$0xff] %v940
                %v942 = vld [vmem:[%s150 + $0x78a0] sm:$0xff]
                %943 = vst [vmem:[%s151 + $0xc58] sm:$0xff] %v942
                %v944 = vld [vmem:[%s150 + $0x78a8] sm:$0xff]
                %945 = vst [vmem:[%s151 + $0xc60] sm:$0xff] %v944
                %v946 = vld [vmem:[%s150 + $0x78b0] sm:$0xff]
                %947 = vst [vmem:[%s151 + $0xc68] sm:$0xff] %v946
                %v948 = vld [vmem:[%s150 + $0x78b8] sm:$0xff]
                %949 = vst [vmem:[%s151 + $0xc70] sm:$0xff] %v948
                %v950 = vld [vmem:[%s150 + $0x78c0] sm:$0xff]
                %951 = vst [vmem:[%s151 + $0xc78] sm:$0xff] %v950
                %v952 = vld [vmem:[%s150 + $0x78c8] sm:$0xff]
                %953 = vst [vmem:[%s151 + $0xc80] sm:$0xff] %v952
                %v954 = vld [vmem:[%s150 + $0x78d0] sm:$0xff]
                %955 = vst [vmem:[%s151 + $0xc88] sm:$0xff] %v954
                %v956 = vld [vmem:[%s150 + $0x78d8] sm:$0xff]
                %957 = vst [vmem:[%s151 + $0xc90] sm:$0xff] %v956
                %v958 = vld [vmem:[%s150 + $0x78e0] sm:$0xff]
                %959 = vst [vmem:[%s151 + $0xc98] sm:$0xff] %v958
                %v960 = vld [vmem:[%s150 + $0x78e8] sm:$0xff]
                %961 = vst [vmem:[%s151 + $0xca0] sm:$0xff] %v960
                %v962 = vld [vmem:[%s150 + $0x78f0] sm:$0xff]
                %963 = vst [vmem:[%s151 + $0xca8] sm:$0xff] %v962
                %v964 = vld [vmem:[%s150 + $0x78f8] sm:$0xff]
                %965 = vst [vmem:[%s151 + $0xcb0] sm:$0xff] %v964
                %v966 = vld [vmem:[%s150 + $0x7900] sm:$0xff]
                %967 = vst [vmem:[%s151 + $0xcb8] sm:$0xff] %v966
                %v968 = vld [vmem:[%s150 + $0x7908] sm:$0xff]
                %969 = vst [vmem:[%s151 + $0xcc0] sm:$0xff] %v968
                %v970 = vld [vmem:[%s150 + $0x7910] sm:$0xff]
                %971 = vst [vmem:[%s151 + $0xcc8] sm:$0xff] %v970
                %v972 = vld [vmem:[%s150 + $0x7918] sm:$0xff]
                %973 = vst [vmem:[%s151 + $0xcd0] sm:$0xff] %v972
                %v974 = vld [vmem:[%s150 + $0x7920] sm:$0xff]
                %975 = vst [vmem:[%s151 + $0xcd8] sm:$0xff] %v974
                %v976 = vld [vmem:[%s150 + $0x7928] sm:$0xff]
                %977 = vst [vmem:[%s151 + $0xce0] sm:$0xff] %v976
                %v978 = vld [vmem:[%s150 + $0x7930] sm:$0xff]
                %979 = vst [vmem:[%s151 + $0xce8] sm:$0xff] %v978
                %v980 = vld [vmem:[%s150 + $0x7938] sm:$0xff]
                %981 = vst [vmem:[%s151 + $0xcf0] sm:$0xff] %v980
                %v982 = vld [vmem:[%s150 + $0x7940] sm:$0xff]
                %983 = vst [vmem:[%s151 + $0xcf8] sm:$0xff] %v982
                %v984 = vld [vmem:[%s150 + $0x7948] sm:$0xff]
                %985 = vst [vmem:[%s151 + $0xd00] sm:$0xff] %v984
                %v986 = vld [vmem:[%s150 + $0x7950] sm:$0xff]
                %987 = vst [vmem:[%s151 + $0xd08] sm:$0xff] %v986
                %v988 = vld [vmem:[%s150 + $0x7958] sm:$0xff]
                %989 = vst [vmem:[%s151 + $0xd10] sm:$0xff] %v988
                %v990 = vld [vmem:[%s150 + $0x7960] sm:$0xff]
                %991 = vst [vmem:[%s151 + $0xd18] sm:$0xff] %v990
              $region37: #{conv_transpose3d_tanh.3} parent=31 // loop_footer
                %s149 = sadd.s32 1, %s145
              $region38: #{conv_transpose3d_tanh.3} parent=31 // loop_footer_branch
                %144 = sbr.rel target = $region34
              $region39: #{conv_transpose3d_tanh.3} parent=31 // loop_exit
                _
            $region32: #{conv_transpose3d_tanh.3} parent=23 // pred_fallthru
              _
          $region24: #{conv_transpose3d_tanh.3} parent=19 // pred_fallthru
            _
          %1844 = vnop
        $region20: #{conv_transpose3d_tanh.3} parent=15 // pred_fallthru
          _
        // Predicated region
        $region55: #{conv_transpose3d_tanh.3} parent=15 // pred_check
          %p1845 = pneg %p71
        $region56: #{conv_transpose3d_tanh.3} parent=15 // pred_check_branch
          %1847 = sbr.rel (%p1845) target = $region58
        $region57: #{conv_transpose3d_tanh.3} parent=15 // pred_region
          %s1848 = smul.u32 5, %s19
          %p1849 = scmp.lt.s32.totalorder %s1848, 49
          %s1850 = scalar_select %p1849, %s1848, 49
          %s1851 = scalar_lea.vmem %s1, %s1850
          %s1852 = smul.u32 5, %s19
        $region58: #{conv_transpose3d_tanh.3} parent=15 // pred_fallthru
          _
      $region16: #{conv_transpose3d_tanh.3} parent=5 // pred_fallthru
        _
      %p1853 = scmp.le.s32.totalorder 1, %s11
      %p1854 = scmp.lt.s32.totalorder %s11, 11
      %p1855 = pnand %p1853, %p1854
      %p1856 = pneg %p1855
      // Predicated region
      $region59: #{conv_transpose3d_tanh.3} parent=5 // pred_check
        _
      $region60: #{conv_transpose3d_tanh.3} parent=5 // pred_check_branch
        %1858 = sbr.rel (%p1855) target = $region62
      $region61: #{conv_transpose3d_tanh.3} parent=5 // pred_region
        %s1859 = ssub.s32 %s11, 1
        %s1860 = sand.u32 %s38, 1
        %s1861 = sand.u32 %s38, 1
        %s1862 = smul.addr %s1861, 3360
        %s1863 = scalar_lea.vmem [#allocation2], %s1862
        // Predicated region
        $region63: #{conv_transpose3d_tanh.3} parent=61 // pred_check
          %p1864 = pneg %p51
        $region64: #{conv_transpose3d_tanh.3} parent=61 // pred_check_branch
          %1866 = sbr.rel (%p1864) target = $region66
        $region65: #{conv_transpose3d_tanh.3} parent=61 // pred_region
          _
        $region66: #{conv_transpose3d_tanh.3} parent=61 // pred_fallthru
          _
        %s1867 = sand.u32 %s38, 1
        %s1868 = sand.u32 %s38, 1
        %s1869 = smul.addr %s1868, 3360
        %s1870 = scalar_lea.vmem [#allocation2], %s1869
        %p1871 = pneg %p51
        %p1872 = pneg %p48
        %s1873 = smul.u32 5, %s21
        %p1874 = scmp.lt.s32.totalorder %s1873, 49
        %s1875 = scalar_select %p1874, %s1873, 49
        %s1876 = scalar_lea.vmem %s1, %s1875
        %p1877 = pneg %p77
        %p1878 = pneg %p74
        %p1879 = pneg %p105
        %p1880 = pneg %p102
        %s1881 = sand.u32 %s92, 1
        %s1882 = scalar_lea.sflag [#allocation4], %s1881
        %s1883 = sand.u32 %s92, 1
        %s1884 = smul.addr %s1883, 14000
        %s1885 = scalar_lea.vmem [#allocation3], %s1884
        %s1886 = smul.u32 5, %s21
        %s1887 = smul.u32 5, %s21
        %p1888 = scmp.lt.s32.totalorder %s1887, 49
        %s1889 = scalar_select %p1888, %s1887, 49
        %s1890 = scalar_lea.vmem %s1, %s1889
        %s1891 = smul.u32 5, %s21
        %s1892 = smul.u32 5, %s21
        %v1893 = vld [vmem:[%s1890] sm:$0x1]
        %v1894 = vld [vmem:[%s1890 + $0x1] sm:$0x1]
        %v1895 = vld [vmem:[%s1890 + $0x2] sm:$0x1]
        %v1896 = vld [vmem:[%s1890 + $0x3] sm:$0x1]
        %v1897 = vld [vmem:[%s1890 + $0x4] sm:$0x1]
        %v1903 = vlaneseq
        %v1904 = vshrl.u32 %v1903, 7
        %v1905 = vsub.s32 0, %v1904
        %v1906 = vrot.slane %v1893, %v1905
        %v1907 = vlaneseq
        %v1908 = vshrl.u32 %v1907, 7
        %v1909 = vsub.s32 0, %v1908
        %v1910 = vrot.slane %v1894, %v1909
        %v1911 = vlaneseq
        %v1912 = vshrl.u32 %v1911, 7
        %v1913 = vsub.s32 0, %v1912
        %v1914 = vrot.slane %v1895, %v1913
        %v1915 = vlaneseq
        %v1916 = vshrl.u32 %v1915, 7
        %v1917 = vsub.s32 0, %v1916
        %v1918 = vrot.slane %v1896, %v1917
        %v1919 = vlaneseq
        %v1920 = vshrl.u32 %v1919, 7
        %v1921 = vsub.s32 0, %v1920
        %v1922 = vrot.slane %v1897, %v1921
        %1923 = vset.pattern.permute.xlu0 0
        %1924 = vperm.xlu0 %1923, %v1906
        %v1925 = vpop.permute.xlu0 %1924
        %1927 = vset.pattern.permute.xlu0 0
        %1928 = vperm.xlu0 %1927, %v1910
        %v1929 = vpop.permute.xlu0 %1928
        %1931 = vset.pattern.permute.xlu0 0
        %1932 = vperm.xlu0 %1931, %v1914
        %v1933 = vpop.permute.xlu0 %1932
        %1935 = vset.pattern.permute.xlu0 0
        %1936 = vperm.xlu0 %1935, %v1918
        %v1937 = vpop.permute.xlu0 %1936
        %1939 = vset.pattern.permute.xlu0 0
        %1940 = vperm.xlu0 %1939, %v1922
        %v1941 = vpop.permute.xlu0 %1940
        %v1943 = vld [vmem:[%s1863] sm:$0xff]
        %v1944 = vld [vmem:[%s1863 + $0x8] sm:$0xff]
        %v1945 = vld [vmem:[%s1863 + $0x10] sm:$0xff]
        %v1946 = vld [vmem:[%s1863 + $0x18] sm:$0xff]
        %v1947 = vld [vmem:[%s1863 + $0x20] sm:$0xff]
        %v1948 = vld [vmem:[%s1863 + $0x28] sm:$0xff]
        %v1949 = vld [vmem:[%s1863 + $0x30] sm:$0x3]
        %v1950 = vld [vmem:[%s1863 + $0x38] sm:$0xff]
        %v1951 = vld [vmem:[%s1863 + $0x40] sm:$0xff]
        %v1952 = vld [vmem:[%s1863 + $0x48] sm:$0xff]
        %v1953 = vld [vmem:[%s1863 + $0x50] sm:$0xff]
        %v1954 = vld [vmem:[%s1863 + $0x58] sm:$0xff]
        %v1955 = vld [vmem:[%s1863 + $0x60] sm:$0xff]
        %v1956 = vld [vmem:[%s1863 + $0x68] sm:$0x3]
        %v1957 = vld [vmem:[%s1863 + $0x70] sm:$0xff]
        %v1958 = vld [vmem:[%s1863 + $0x78] sm:$0xff]
        %v1959 = vld [vmem:[%s1863 + $0x80] sm:$0xff]
        %v1960 = vld [vmem:[%s1863 + $0x88] sm:$0xff]
        %v1961 = vld [vmem:[%s1863 + $0x90] sm:$0xff]
        %v1962 = vld [vmem:[%s1863 + $0x98] sm:$0xff]
        %v1963 = vld [vmem:[%s1863 + $0xa0] sm:$0x3]
        %v1964 = vld [vmem:[%s1863 + $0xa8] sm:$0xff]
        %v1965 = vld [vmem:[%s1863 + $0xb0] sm:$0xff]
        %v1966 = vld [vmem:[%s1863 + $0xb8] sm:$0xff]
        %v1967 = vld [vmem:[%s1863 + $0xc0] sm:$0xff]
        %v1968 = vld [vmem:[%s1863 + $0xc8] sm:$0xff]
        %v1969 = vld [vmem:[%s1863 + $0xd0] sm:$0xff]
        %v1970 = vld [vmem:[%s1863 + $0xd8] sm:$0x3]
        %v1971 = vld [vmem:[%s1863 + $0xe0] sm:$0xff]
        %v1972 = vld [vmem:[%s1863 + $0xe8] sm:$0xff]
        %v1973 = vld [vmem:[%s1863 + $0xf0] sm:$0xff]
        %v1974 = vld [vmem:[%s1863 + $0xf8] sm:$0xff]
        %v1975 = vld [vmem:[%s1863 + $0x100] sm:$0xff]
        %v1976 = vld [vmem:[%s1863 + $0x108] sm:$0xff]
        %v1977 = vld [vmem:[%s1863 + $0x110] sm:$0x3]
        %vm1978 = vcmask 408576
        %1979 = vst.msk [vmem:[%s1885] sm:$0xff] %vm1978, %v1943
        %1980 = vst.msk [vmem:[%s1885 + $0x8] sm:$0xff] %vm1978, %v1944
        %1981 = vst.msk [vmem:[%s1885 + $0x10] sm:$0xff] %vm1978, %v1945
        %1982 = vst.msk [vmem:[%s1885 + $0x18] sm:$0xff] %vm1978, %v1946
        %1983 = vst.msk [vmem:[%s1885 + $0x20] sm:$0xff] %vm1978, %v1947
        %1984 = vst.msk [vmem:[%s1885 + $0x28] sm:$0xff] %vm1978, %v1948
        %vm1985 = vcmask 402432
        %1986 = vst.msk [vmem:[%s1885 + $0x30] sm:$0x3] %vm1985, %v1949
        %1987 = vst.msk [vmem:[%s1885 + $0xaf0] sm:$0xff] %vm1978, %v1950
        %1988 = vst.msk [vmem:[%s1885 + $0xaf8] sm:$0xff] %vm1978, %v1951
        %1989 = vst.msk [vmem:[%s1885 + $0xb00] sm:$0xff] %vm1978, %v1952
        %1990 = vst.msk [vmem:[%s1885 + $0xb08] sm:$0xff] %vm1978, %v1953
        %1991 = vst.msk [vmem:[%s1885 + $0xb10] sm:$0xff] %vm1978, %v1954
        %1992 = vst.msk [vmem:[%s1885 + $0xb18] sm:$0xff] %vm1978, %v1955
        %1993 = vst.msk [vmem:[%s1885 + $0xb20] sm:$0x3] %vm1985, %v1956
        %1994 = vst.msk [vmem:[%s1885 + $0x15e0] sm:$0xff] %vm1978, %v1957
        %1995 = vst.msk [vmem:[%s1885 + $0x15e8] sm:$0xff] %vm1978, %v1958
        %1996 = vst.msk [vmem:[%s1885 + $0x15f0] sm:$0xff] %vm1978, %v1959
        %1997 = vst.msk [vmem:[%s1885 + $0x15f8] sm:$0xff] %vm1978, %v1960
        %1998 = vst.msk [vmem:[%s1885 + $0x1600] sm:$0xff] %vm1978, %v1961
        %1999 = vst.msk [vmem:[%s1885 + $0x1608] sm:$0xff] %vm1978, %v1962
        %2000 = vst.msk [vmem:[%s1885 + $0x1610] sm:$0x3] %vm1985, %v1963
        %2001 = vst.msk [vmem:[%s1885 + $0x20d0] sm:$0xff] %vm1978, %v1964
        %2002 = vst.msk [vmem:[%s1885 + $0x20d8] sm:$0xff] %vm1978, %v1965
        %2003 = vst.msk [vmem:[%s1885 + $0x20e0] sm:$0xff] %vm1978, %v1966
        %2004 = vst.msk [vmem:[%s1885 + $0x20e8] sm:$0xff] %vm1978, %v1967
        %2005 = vst.msk [vmem:[%s1885 + $0x20f0] sm:$0xff] %vm1978, %v1968
        %2006 = vst.msk [vmem:[%s1885 + $0x20f8] sm:$0xff] %vm1978, %v1969
        %2007 = vst.msk [vmem:[%s1885 + $0x2100] sm:$0x3] %vm1985, %v1970
        %2008 = vst.msk [vmem:[%s1885 + $0x2bc0] sm:$0xff] %vm1978, %v1971
        %2009 = vst.msk [vmem:[%s1885 + $0x2bc8] sm:$0xff] %vm1978, %v1972
        %2010 = vst.msk [vmem:[%s1885 + $0x2bd0] sm:$0xff] %vm1978, %v1973
        %2011 = vst.msk [vmem:[%s1885 + $0x2bd8] sm:$0xff] %vm1978, %v1974
        %2012 = vst.msk [vmem:[%s1885 + $0x2be0] sm:$0xff] %vm1978, %v1975
        %2013 = vst.msk [vmem:[%s1885 + $0x2be8] sm:$0xff] %vm1978, %v1976
        %2014 = vst.msk [vmem:[%s1885 + $0x2bf0] sm:$0x3] %vm1985, %v1977
        %s2015 = scalar_lea.vmem %s1885, 56 [#allocation3]
        %2016 = vst.msk [vmem:[%s2015] sm:$0xff] %vm1978, %v1925
        %2017 = vst.msk [vmem:[%s2015 + $0x8] sm:$0xff] %vm1978, %v1925
        %2018 = vst.msk [vmem:[%s2015 + $0x10] sm:$0xff] %vm1978, %v1925
        %2019 = vst.msk [vmem:[%s2015 + $0x18] sm:$0xff] %vm1978, %v1925
        %2020 = vst.msk [vmem:[%s2015 + $0x20] sm:$0xff] %vm1978, %v1925
        %2021 = vst.msk [vmem:[%s2015 + $0x28] sm:$0xff] %vm1978, %v1925
        %2022 = vst.msk [vmem:[%s2015 + $0x30] sm:$0x3] %vm1985, %v1925
        %2023 = vst.msk [vmem:[%s2015 + $0xaf0] sm:$0xff] %vm1978, %v1929
        %2024 = vst.msk [vmem:[%s2015 + $0xaf8] sm:$0xff] %vm1978, %v1929
        %2025 = vst.msk [vmem:[%s2015 + $0xb00] sm:$0xff] %vm1978, %v1929
        %2026 = vst.msk [vmem:[%s2015 + $0xb08] sm:$0xff] %vm1978, %v1929
        %2027 = vst.msk [vmem:[%s2015 + $0xb10] sm:$0xff] %vm1978, %v1929
        %2028 = vst.msk [vmem:[%s2015 + $0xb18] sm:$0xff] %vm1978, %v1929
        %2029 = vst.msk [vmem:[%s2015 + $0xb20] sm:$0x3] %vm1985, %v1929
        %2030 = vst.msk [vmem:[%s2015 + $0x15e0] sm:$0xff] %vm1978, %v1933
        %2031 = vst.msk [vmem:[%s2015 + $0x15e8] sm:$0xff] %vm1978, %v1933
        %2032 = vst.msk [vmem:[%s2015 + $0x15f0] sm:$0xff] %vm1978, %v1933
        %2033 = vst.msk [vmem:[%s2015 + $0x15f8] sm:$0xff] %vm1978, %v1933
        %2034 = vst.msk [vmem:[%s2015 + $0x1600] sm:$0xff] %vm1978, %v1933
        %2035 = vst.msk [vmem:[%s2015 + $0x1608] sm:$0xff] %vm1978, %v1933
        %2036 = vst.msk [vmem:[%s2015 + $0x1610] sm:$0x3] %vm1985, %v1933
        %2037 = vst.msk [vmem:[%s2015 + $0x20d0] sm:$0xff] %vm1978, %v1937
        %2038 = vst.msk [vmem:[%s2015 + $0x20d8] sm:$0xff] %vm1978, %v1937
        %2039 = vst.msk [vmem:[%s2015 + $0x20e0] sm:$0xff] %vm1978, %v1937
        %2040 = vst.msk [vmem:[%s2015 + $0x20e8] sm:$0xff] %vm1978, %v1937
        %2041 = vst.msk [vmem:[%s2015 + $0x20f0] sm:$0xff] %vm1978, %v1937
        %2042 = vst.msk [vmem:[%s2015 + $0x20f8] sm:$0xff] %vm1978, %v1937
        %2043 = vst.msk [vmem:[%s2015 + $0x2100] sm:$0x3] %vm1985, %v1937
        %2044 = vst.msk [vmem:[%s2015 + $0x2bc0] sm:$0xff] %vm1978, %v1941
        %2045 = vst.msk [vmem:[%s2015 + $0x2bc8] sm:$0xff] %vm1978, %v1941
        %2046 = vst.msk [vmem:[%s2015 + $0x2bd0] sm:$0xff] %vm1978, %v1941
        %2047 = vst.msk [vmem:[%s2015 + $0x2bd8] sm:$0xff] %vm1978, %v1941
        %2048 = vst.msk [vmem:[%s2015 + $0x2be0] sm:$0xff] %vm1978, %v1941
        %2049 = vst.msk [vmem:[%s2015 + $0x2be8] sm:$0xff] %vm1978, %v1941
        %2050 = vst.msk [vmem:[%s2015 + $0x2bf0] sm:$0x3] %vm1985, %v1941
        %s2051 = scalar_lea.vmem %s1863, 280 [#allocation2]
        %v2052 = vld [vmem:[%s2051] sm:$0xff]
        %v2053 = vld [vmem:[%s2051 + $0x8] sm:$0xff]
        %v2054 = vld [vmem:[%s2051 + $0x10] sm:$0xff]
        %v2055 = vld [vmem:[%s2051 + $0x18] sm:$0xff]
        %v2056 = vld [vmem:[%s2051 + $0x20] sm:$0xff]
        %v2057 = vld [vmem:[%s2051 + $0x28] sm:$0xff]
        %v2058 = vld [vmem:[%s2051 + $0x30] sm:$0x3]
        %v2059 = vld [vmem:[%s2051 + $0x38] sm:$0xff]
        %v2060 = vld [vmem:[%s2051 + $0x40] sm:$0xff]
        %v2061 = vld [vmem:[%s2051 + $0x48] sm:$0xff]
        %v2062 = vld [vmem:[%s2051 + $0x50] sm:$0xff]
        %v2063 = vld [vmem:[%s2051 + $0x58] sm:$0xff]
        %v2064 = vld [vmem:[%s2051 + $0x60] sm:$0xff]
        %v2065 = vld [vmem:[%s2051 + $0x68] sm:$0x3]
        %v2066 = vld [vmem:[%s2051 + $0x70] sm:$0xff]
        %v2067 = vld [vmem:[%s2051 + $0x78] sm:$0xff]
        %v2068 = vld [vmem:[%s2051 + $0x80] sm:$0xff]
        %v2069 = vld [vmem:[%s2051 + $0x88] sm:$0xff]
        %v2070 = vld [vmem:[%s2051 + $0x90] sm:$0xff]
        %v2071 = vld [vmem:[%s2051 + $0x98] sm:$0xff]
        %v2072 = vld [vmem:[%s2051 + $0xa0] sm:$0x3]
        %v2073 = vld [vmem:[%s2051 + $0xa8] sm:$0xff]
        %v2074 = vld [vmem:[%s2051 + $0xb0] sm:$0xff]
        %v2075 = vld [vmem:[%s2051 + $0xb8] sm:$0xff]
        %v2076 = vld [vmem:[%s2051 + $0xc0] sm:$0xff]
        %v2077 = vld [vmem:[%s2051 + $0xc8] sm:$0xff]
        %v2078 = vld [vmem:[%s2051 + $0xd0] sm:$0xff]
        %v2079 = vld [vmem:[%s2051 + $0xd8] sm:$0x3]
        %v2080 = vld [vmem:[%s2051 + $0xe0] sm:$0xff]
        %v2081 = vld [vmem:[%s2051 + $0xe8] sm:$0xff]
        %v2082 = vld [vmem:[%s2051 + $0xf0] sm:$0xff]
        %v2083 = vld [vmem:[%s2051 + $0xf8] sm:$0xff]
        %v2084 = vld [vmem:[%s2051 + $0x100] sm:$0xff]
        %v2085 = vld [vmem:[%s2051 + $0x108] sm:$0xff]
        %v2086 = vld [vmem:[%s2051 + $0x110] sm:$0x3]
        %s2087 = scalar_lea.vmem %s1885, 112 [#allocation3]
        %2088 = vst.msk [vmem:[%s2087] sm:$0xff] %vm1978, %v2052
        %2089 = vst.msk [vmem:[%s2087 + $0x8] sm:$0xff] %vm1978, %v2053
        %2090 = vst.msk [vmem:[%s2087 + $0x10] sm:$0xff] %vm1978, %v2054
        %2091 = vst.msk [vmem:[%s2087 + $0x18] sm:$0xff] %vm1978, %v2055
        %2092 = vst.msk [vmem:[%s2087 + $0x20] sm:$0xff] %vm1978, %v2056
        %2093 = vst.msk [vmem:[%s2087 + $0x28] sm:$0xff] %vm1978, %v2057
        %2094 = vst.msk [vmem:[%s2087 + $0x30] sm:$0x3] %vm1985, %v2058
        %2095 = vst.msk [vmem:[%s2087 + $0xaf0] sm:$0xff] %vm1978, %v2059
        %2096 = vst.msk [vmem:[%s2087 + $0xaf8] sm:$0xff] %vm1978, %v2060
        %2097 = vst.msk [vmem:[%s2087 + $0xb00] sm:$0xff] %vm1978, %v2061
        %2098 = vst.msk [vmem:[%s2087 + $0xb08] sm:$0xff] %vm1978, %v2062
        %2099 = vst.msk [vmem:[%s2087 + $0xb10] sm:$0xff] %vm1978, %v2063
        %2100 = vst.msk [vmem:[%s2087 + $0xb18] sm:$0xff] %vm1978, %v2064
        %2101 = vst.msk [vmem:[%s2087 + $0xb20] sm:$0x3] %vm1985, %v2065
        %2102 = vst.msk [vmem:[%s2087 + $0x15e0] sm:$0xff] %vm1978, %v2066
        %2103 = vst.msk [vmem:[%s2087 + $0x15e8] sm:$0xff] %vm1978, %v2067
        %2104 = vst.msk [vmem:[%s2087 + $0x15f0] sm:$0xff] %vm1978, %v2068
        %2105 = vst.msk [vmem:[%s2087 + $0x15f8] sm:$0xff] %vm1978, %v2069
        %2106 = vst.msk [vmem:[%s2087 + $0x1600] sm:$0xff] %vm1978, %v2070
        %2107 = vst.msk [vmem:[%s2087 + $0x1608] sm:$0xff] %vm1978, %v2071
        %2108 = vst.msk [vmem:[%s2087 + $0x1610] sm:$0x3] %vm1985, %v2072
        %2109 = vst.msk [vmem:[%s2087 + $0x20d0] sm:$0xff] %vm1978, %v2073
        %2110 = vst.msk [vmem:[%s2087 + $0x20d8] sm:$0xff] %vm1978, %v2074
        %2111 = vst.msk [vmem:[%s2087 + $0x20e0] sm:$0xff] %vm1978, %v2075
        %2112 = vst.msk [vmem:[%s2087 + $0x20e8] sm:$0xff] %vm1978, %v2076
        %2113 = vst.msk [vmem:[%s2087 + $0x20f0] sm:$0xff] %vm1978, %v2077
        %2114 = vst.msk [vmem:[%s2087 + $0x20f8] sm:$0xff] %vm1978, %v2078
        %2115 = vst.msk [vmem:[%s2087 + $0x2100] sm:$0x3] %vm1985, %v2079
        %2116 = vst.msk [vmem:[%s2087 + $0x2bc0] sm:$0xff] %vm1978, %v2080
        %2117 = vst.msk [vmem:[%s2087 + $0x2bc8] sm:$0xff] %vm1978, %v2081
        %2118 = vst.msk [vmem:[%s2087 + $0x2bd0] sm:$0xff] %vm1978, %v2082
        %2119 = vst.msk [vmem:[%s2087 + $0x2bd8] sm:$0xff] %vm1978, %v2083
        %2120 = vst.msk [vmem:[%s2087 + $0x2be0] sm:$0xff] %vm1978, %v2084
        %2121 = vst.msk [vmem:[%s2087 + $0x2be8] sm:$0xff] %vm1978, %v2085
        %2122 = vst.msk [vmem:[%s2087 + $0x2bf0] sm:$0x3] %vm1985, %v2086
        %s2123 = scalar_lea.vmem %s1885, 168 [#allocation3]
        %2124 = vst.msk [vmem:[%s2123] sm:$0xff] %vm1978, %v1925
        %2125 = vst.msk [vmem:[%s2123 + $0x8] sm:$0xff] %vm1978, %v1925
        %2126 = vst.msk [vmem:[%s2123 + $0x10] sm:$0xff] %vm1978, %v1925
        %2127 = vst.msk [vmem:[%s2123 + $0x18] sm:$0xff] %vm1978, %v1925
        %2128 = vst.msk [vmem:[%s2123 + $0x20] sm:$0xff] %vm1978, %v1925
        %2129 = vst.msk [vmem:[%s2123 + $0x28] sm:$0xff] %vm1978, %v1925
        %2130 = vst.msk [vmem:[%s2123 + $0x30] sm:$0x3] %vm1985, %v1925
        %2131 = vst.msk [vmem:[%s2123 + $0xaf0] sm:$0xff] %vm1978, %v1929
        %2132 = vst.msk [vmem:[%s2123 + $0xaf8] sm:$0xff] %vm1978, %v1929
        %2133 = vst.msk [vmem:[%s2123 + $0xb00] sm:$0xff] %vm1978, %v1929
        %2134 = vst.msk [vmem:[%s2123 + $0xb08] sm:$0xff] %vm1978, %v1929
        %2135 = vst.msk [vmem:[%s2123 + $0xb10] sm:$0xff] %vm1978, %v1929
        %2136 = vst.msk [vmem:[%s2123 + $0xb18] sm:$0xff] %vm1978, %v1929
        %2137 = vst.msk [vmem:[%s2123 + $0xb20] sm:$0x3] %vm1985, %v1929
        %2138 = vst.msk [vmem:[%s2123 + $0x15e0] sm:$0xff] %vm1978, %v1933
        %2139 = vst.msk [vmem:[%s2123 + $0x15e8] sm:$0xff] %vm1978, %v1933
        %2140 = vst.msk [vmem:[%s2123 + $0x15f0] sm:$0xff] %vm1978, %v1933
        %2141 = vst.msk [vmem:[%s2123 + $0x15f8] sm:$0xff] %vm1978, %v1933
        %2142 = vst.msk [vmem:[%s2123 + $0x1600] sm:$0xff] %vm1978, %v1933
        %2143 = vst.msk [vmem:[%s2123 + $0x1608] sm:$0xff] %vm1978, %v1933
        %2144 = vst.msk [vmem:[%s2123 + $0x1610] sm:$0x3] %vm1985, %v1933
        %2145 = vst.msk [vmem:[%s2123 + $0x20d0] sm:$0xff] %vm1978, %v1937
        %2146 = vst.msk [vmem:[%s2123 + $0x20d8] sm:$0xff] %vm1978, %v1937
        %2147 = vst.msk [vmem:[%s2123 + $0x20e0] sm:$0xff] %vm1978, %v1937
        %2148 = vst.msk [vmem:[%s2123 + $0x20e8] sm:$0xff] %vm1978, %v1937
        %2149 = vst.msk [vmem:[%s2123 + $0x20f0] sm:$0xff] %vm1978, %v1937
        %2150 = vst.msk [vmem:[%s2123 + $0x20f8] sm:$0xff] %vm1978, %v1937
        %2151 = vst.msk [vmem:[%s2123 + $0x2100] sm:$0x3] %vm1985, %v1937
        %2152 = vst.msk [vmem:[%s2123 + $0x2bc0] sm:$0xff] %vm1978, %v1941
        %2153 = vst.msk [vmem:[%s2123 + $0x2bc8] sm:$0xff] %vm1978, %v1941
        %2154 = vst.msk [vmem:[%s2123 + $0x2bd0] sm:$0xff] %vm1978, %v1941
        %2155 = vst.msk [vmem:[%s2123 + $0x2bd8] sm:$0xff] %vm1978, %v1941
        %2156 = vst.msk [vmem:[%s2123 + $0x2be0] sm:$0xff] %vm1978, %v1941
        %2157 = vst.msk [vmem:[%s2123 + $0x2be8] sm:$0xff] %vm1978, %v1941
        %2158 = vst.msk [vmem:[%s2123 + $0x2bf0] sm:$0x3] %vm1985, %v1941
        %s2159 = scalar_lea.vmem %s1863, 560 [#allocation2]
        %v2160 = vld [vmem:[%s2159] sm:$0xff]
        %v2161 = vld [vmem:[%s2159 + $0x8] sm:$0xff]
        %v2162 = vld [vmem:[%s2159 + $0x10] sm:$0xff]
        %v2163 = vld [vmem:[%s2159 + $0x18] sm:$0xff]
        %v2164 = vld [vmem:[%s2159 + $0x20] sm:$0xff]
        %v2165 = vld [vmem:[%s2159 + $0x28] sm:$0xff]
        %v2166 = vld [vmem:[%s2159 + $0x30] sm:$0x3]
        %v2167 = vld [vmem:[%s2159 + $0x38] sm:$0xff]
        %v2168 = vld [vmem:[%s2159 + $0x40] sm:$0xff]
        %v2169 = vld [vmem:[%s2159 + $0x48] sm:$0xff]
        %v2170 = vld [vmem:[%s2159 + $0x50] sm:$0xff]
        %v2171 = vld [vmem:[%s2159 + $0x58] sm:$0xff]
        %v2172 = vld [vmem:[%s2159 + $0x60] sm:$0xff]
        %v2173 = vld [vmem:[%s2159 + $0x68] sm:$0x3]
        %v2174 = vld [vmem:[%s2159 + $0x70] sm:$0xff]
        %v2175 = vld [vmem:[%s2159 + $0x78] sm:$0xff]
        %v2176 = vld [vmem:[%s2159 + $0x80] sm:$0xff]
        %v2177 = vld [vmem:[%s2159 + $0x88] sm:$0xff]
        %v2178 = vld [vmem:[%s2159 + $0x90] sm:$0xff]
        %v2179 = vld [vmem:[%s2159 + $0x98] sm:$0xff]
        %v2180 = vld [vmem:[%s2159 + $0xa0] sm:$0x3]
        %v2181 = vld [vmem:[%s2159 + $0xa8] sm:$0xff]
        %v2182 = vld [vmem:[%s2159 + $0xb0] sm:$0xff]
        %v2183 = vld [vmem:[%s2159 + $0xb8] sm:$0xff]
        %v2184 = vld [vmem:[%s2159 + $0xc0] sm:$0xff]
        %v2185 = vld [vmem:[%s2159 + $0xc8] sm:$0xff]
        %v2186 = vld [vmem:[%s2159 + $0xd0] sm:$0xff]
        %v2187 = vld [vmem:[%s2159 + $0xd8] sm:$0x3]
        %v2188 = vld [vmem:[%s2159 + $0xe0] sm:$0xff]
        %v2189 = vld [vmem:[%s2159 + $0xe8] sm:$0xff]
        %v2190 = vld [vmem:[%s2159 + $0xf0] sm:$0xff]
        %v2191 = vld [vmem:[%s2159 + $0xf8] sm:$0xff]
        %v2192 = vld [vmem:[%s2159 + $0x100] sm:$0xff]
        %v2193 = vld [vmem:[%s2159 + $0x108] sm:$0xff]
        %v2194 = vld [vmem:[%s2159 + $0x110] sm:$0x3]
        %s2195 = scalar_lea.vmem %s1885, 224 [#allocation3]
        %2196 = vst.msk [vmem:[%s2195] sm:$0xff] %vm1978, %v2160
        %2197 = vst.msk [vmem:[%s2195 + $0x8] sm:$0xff] %vm1978, %v2161
        %2198 = vst.msk [vmem:[%s2195 + $0x10] sm:$0xff] %vm1978, %v2162
        %2199 = vst.msk [vmem:[%s2195 + $0x18] sm:$0xff] %vm1978, %v2163
        %2200 = vst.msk [vmem:[%s2195 + $0x20] sm:$0xff] %vm1978, %v2164
        %2201 = vst.msk [vmem:[%s2195 + $0x28] sm:$0xff] %vm1978, %v2165
        %2202 = vst.msk [vmem:[%s2195 + $0x30] sm:$0x3] %vm1985, %v2166
        %2203 = vst.msk [vmem:[%s2195 + $0xaf0] sm:$0xff] %vm1978, %v2167
        %2204 = vst.msk [vmem:[%s2195 + $0xaf8] sm:$0xff] %vm1978, %v2168
        %2205 = vst.msk [vmem:[%s2195 + $0xb00] sm:$0xff] %vm1978, %v2169
        %2206 = vst.msk [vmem:[%s2195 + $0xb08] sm:$0xff] %vm1978, %v2170
        %2207 = vst.msk [vmem:[%s2195 + $0xb10] sm:$0xff] %vm1978, %v2171
        %2208 = vst.msk [vmem:[%s2195 + $0xb18] sm:$0xff] %vm1978, %v2172
        %2209 = vst.msk [vmem:[%s2195 + $0xb20] sm:$0x3] %vm1985, %v2173
        %2210 = vst.msk [vmem:[%s2195 + $0x15e0] sm:$0xff] %vm1978, %v2174
        %2211 = vst.msk [vmem:[%s2195 + $0x15e8] sm:$0xff] %vm1978, %v2175
        %2212 = vst.msk [vmem:[%s2195 + $0x15f0] sm:$0xff] %vm1978, %v2176
        %2213 = vst.msk [vmem:[%s2195 + $0x15f8] sm:$0xff] %vm1978, %v2177
        %2214 = vst.msk [vmem:[%s2195 + $0x1600] sm:$0xff] %vm1978, %v2178
        %2215 = vst.msk [vmem:[%s2195 + $0x1608] sm:$0xff] %vm1978, %v2179
        %2216 = vst.msk [vmem:[%s2195 + $0x1610] sm:$0x3] %vm1985, %v2180
        %2217 = vst.msk [vmem:[%s2195 + $0x20d0] sm:$0xff] %vm1978, %v2181
        %2218 = vst.msk [vmem:[%s2195 + $0x20d8] sm:$0xff] %vm1978, %v2182
        %2219 = vst.msk [vmem:[%s2195 + $0x20e0] sm:$0xff] %vm1978, %v2183
        %2220 = vst.msk [vmem:[%s2195 + $0x20e8] sm:$0xff] %vm1978, %v2184
        %2221 = vst.msk [vmem:[%s2195 + $0x20f0] sm:$0xff] %vm1978, %v2185
        %2222 = vst.msk [vmem:[%s2195 + $0x20f8] sm:$0xff] %vm1978, %v2186
        %2223 = vst.msk [vmem:[%s2195 + $0x2100] sm:$0x3] %vm1985, %v2187
        %2224 = vst.msk [vmem:[%s2195 + $0x2bc0] sm:$0xff] %vm1978, %v2188
        %2225 = vst.msk [vmem:[%s2195 + $0x2bc8] sm:$0xff] %vm1978, %v2189
        %2226 = vst.msk [vmem:[%s2195 + $0x2bd0] sm:$0xff] %vm1978, %v2190
        %2227 = vst.msk [vmem:[%s2195 + $0x2bd8] sm:$0xff] %vm1978, %v2191
        %2228 = vst.msk [vmem:[%s2195 + $0x2be0] sm:$0xff] %vm1978, %v2192
        %2229 = vst.msk [vmem:[%s2195 + $0x2be8] sm:$0xff] %vm1978, %v2193
        %2230 = vst.msk [vmem:[%s2195 + $0x2bf0] sm:$0x3] %vm1985, %v2194
        %s2231 = scalar_lea.vmem %s1885, 280 [#allocation3]
        %2232 = vst.msk [vmem:[%s2231] sm:$0xff] %vm1978, %v1925
        %2233 = vst.msk [vmem:[%s2231 + $0x8] sm:$0xff] %vm1978, %v1925
        %2234 = vst.msk [vmem:[%s2231 + $0x10] sm:$0xff] %vm1978, %v1925
        %2235 = vst.msk [vmem:[%s2231 + $0x18] sm:$0xff] %vm1978, %v1925
        %2236 = vst.msk [vmem:[%s2231 + $0x20] sm:$0xff] %vm1978, %v1925
        %2237 = vst.msk [vmem:[%s2231 + $0x28] sm:$0xff] %vm1978, %v1925
        %2238 = vst.msk [vmem:[%s2231 + $0x30] sm:$0x3] %vm1985, %v1925
        %2239 = vst.msk [vmem:[%s2231 + $0xaf0] sm:$0xff] %vm1978, %v1929
        %2240 = vst.msk [vmem:[%s2231 + $0xaf8] sm:$0xff] %vm1978, %v1929
        %2241 = vst.msk [vmem:[%s2231 + $0xb00] sm:$0xff] %vm1978, %v1929
        %2242 = vst.msk [vmem:[%s2231 + $0xb08] sm:$0xff] %vm1978, %v1929
        %2243 = vst.msk [vmem:[%s2231 + $0xb10] sm:$0xff] %vm1978, %v1929
        %2244 = vst.msk [vmem:[%s2231 + $0xb18] sm:$0xff] %vm1978, %v1929
        %2245 = vst.msk [vmem:[%s2231 + $0xb20] sm:$0x3] %vm1985, %v1929
        %2246 = vst.msk [vmem:[%s2231 + $0x15e0] sm:$0xff] %vm1978, %v1933
        %2247 = vst.msk [vmem:[%s2231 + $0x15e8] sm:$0xff] %vm1978, %v1933
        %2248 = vst.msk [vmem:[%s2231 + $0x15f0] sm:$0xff] %vm1978, %v1933
        %2249 = vst.msk [vmem:[%s2231 + $0x15f8] sm:$0xff] %vm1978, %v1933
        %2250 = vst.msk [vmem:[%s2231 + $0x1600] sm:$0xff] %vm1978, %v1933
        %2251 = vst.msk [vmem:[%s2231 + $0x1608] sm:$0xff] %vm1978, %v1933
        %2252 = vst.msk [vmem:[%s2231 + $0x1610] sm:$0x3] %vm1985, %v1933
        %2253 = vst.msk [vmem:[%s2231 + $0x20d0] sm:$0xff] %vm1978, %v1937
        %2254 = vst.msk [vmem:[%s2231 + $0x20d8] sm:$0xff] %vm1978, %v1937
        %2255 = vst.msk [vmem:[%s2231 + $0x20e0] sm:$0xff] %vm1978, %v1937
        %2256 = vst.msk [vmem:[%s2231 + $0x20e8] sm:$0xff] %vm1978, %v1937
        %2257 = vst.msk [vmem:[%s2231 + $0x20f0] sm:$0xff] %vm1978, %v1937
        %2258 = vst.msk [vmem:[%s2231 + $0x20f8] sm:$0xff] %vm1978, %v1937
        %2259 = vst.msk [vmem:[%s2231 + $0x2100] sm:$0x3] %vm1985, %v1937
        %2260 = vst.msk [vmem:[%s2231 + $0x2bc0] sm:$0xff] %vm1978, %v1941
        %2261 = vst.msk [vmem:[%s2231 + $0x2bc8] sm:$0xff] %vm1978, %v1941
        %2262 = vst.msk [vmem:[%s2231 + $0x2bd0] sm:$0xff] %vm1978, %v1941
        %2263 = vst.msk [vmem:[%s2231 + $0x2bd8] sm:$0xff] %vm1978, %v1941
        %2264 = vst.msk [vmem:[%s2231 + $0x2be0] sm:$0xff] %vm1978, %v1941
        %2265 = vst.msk [vmem:[%s2231 + $0x2be8] sm:$0xff] %vm1978, %v1941
        %2266 = vst.msk [vmem:[%s2231 + $0x2bf0] sm:$0x3] %vm1985, %v1941
        %s2267 = scalar_lea.vmem %s1885, 336 [#allocation3]
        %2268 = vst.msk [vmem:[%s2267] sm:$0xff] %vm1978, %v1925
        %2269 = vst.msk [vmem:[%s2267 + $0x8] sm:$0xff] %vm1978, %v1925
        %2270 = vst.msk [vmem:[%s2267 + $0x10] sm:$0xff] %vm1978, %v1925
        %2271 = vst.msk [vmem:[%s2267 + $0x18] sm:$0xff] %vm1978, %v1925
        %2272 = vst.msk [vmem:[%s2267 + $0x20] sm:$0xff] %vm1978, %v1925
        %2273 = vst.msk [vmem:[%s2267 + $0x28] sm:$0xff] %vm1978, %v1925
        %2274 = vst.msk [vmem:[%s2267 + $0x30] sm:$0x3] %vm1985, %v1925
        %2275 = vst.msk [vmem:[%s2267 + $0xaf0] sm:$0xff] %vm1978, %v1929
        %2276 = vst.msk [vmem:[%s2267 + $0xaf8] sm:$0xff] %vm1978, %v1929
        %2277 = vst.msk [vmem:[%s2267 + $0xb00] sm:$0xff] %vm1978, %v1929
        %2278 = vst.msk [vmem:[%s2267 + $0xb08] sm:$0xff] %vm1978, %v1929
        %2279 = vst.msk [vmem:[%s2267 + $0xb10] sm:$0xff] %vm1978, %v1929
        %2280 = vst.msk [vmem:[%s2267 + $0xb18] sm:$0xff] %vm1978, %v1929
        %2281 = vst.msk [vmem:[%s2267 + $0xb20] sm:$0x3] %vm1985, %v1929
        %2282 = vst.msk [vmem:[%s2267 + $0x15e0] sm:$0xff] %vm1978, %v1933
        %2283 = vst.msk [vmem:[%s2267 + $0x15e8] sm:$0xff] %vm1978, %v1933
        %2284 = vst.msk [vmem:[%s2267 + $0x15f0] sm:$0xff] %vm1978, %v1933
        %2285 = vst.msk [vmem:[%s2267 + $0x15f8] sm:$0xff] %vm1978, %v1933
        %2286 = vst.msk [vmem:[%s2267 + $0x1600] sm:$0xff] %vm1978, %v1933
        %2287 = vst.msk [vmem:[%s2267 + $0x1608] sm:$0xff] %vm1978, %v1933
        %2288 = vst.msk [vmem:[%s2267 + $0x1610] sm:$0x3] %vm1985, %v1933
        %2289 = vst.msk [vmem:[%s2267 + $0x20d0] sm:$0xff] %vm1978, %v1937
        %2290 = vst.msk [vmem:[%s2267 + $0x20d8] sm:$0xff] %vm1978, %v1937
        %2291 = vst.msk [vmem:[%s2267 + $0x20e0] sm:$0xff] %vm1978, %v1937
        %2292 = vst.msk [vmem:[%s2267 + $0x20e8] sm:$0xff] %vm1978, %v1937
        %2293 = vst.msk [vmem:[%s2267 + $0x20f0] sm:$0xff] %vm1978, %v1937
        %2294 = vst.msk [vmem:[%s2267 + $0x20f8] sm:$0xff] %vm1978, %v1937
        %2295 = vst.msk [vmem:[%s2267 + $0x2100] sm:$0x3] %vm1985, %v1937
        %2296 = vst.msk [vmem:[%s2267 + $0x2bc0] sm:$0xff] %vm1978, %v1941
        %2297 = vst.msk [vmem:[%s2267 + $0x2bc8] sm:$0xff] %vm1978, %v1941
        %2298 = vst.msk [vmem:[%s2267 + $0x2bd0] sm:$0xff] %vm1978, %v1941
        %2299 = vst.msk [vmem:[%s2267 + $0x2bd8] sm:$0xff] %vm1978, %v1941
        %2300 = vst.msk [vmem:[%s2267 + $0x2be0] sm:$0xff] %vm1978, %v1941
        %2301 = vst.msk [vmem:[%s2267 + $0x2be8] sm:$0xff] %vm1978, %v1941
        %2302 = vst.msk [vmem:[%s2267 + $0x2bf0] sm:$0x3] %vm1985, %v1941
        %s2303 = scalar_lea.vmem %s1885, 392 [#allocation3]
        %2304 = vst.msk [vmem:[%s2303] sm:$0xff] %vm1978, %v1925
        %2305 = vst.msk [vmem:[%s2303 + $0x8] sm:$0xff] %vm1978, %v1925
        %2306 = vst.msk [vmem:[%s2303 + $0x10] sm:$0xff] %vm1978, %v1925
        %2307 = vst.msk [vmem:[%s2303 + $0x18] sm:$0xff] %vm1978, %v1925
        %2308 = vst.msk [vmem:[%s2303 + $0x20] sm:$0xff] %vm1978, %v1925
        %2309 = vst.msk [vmem:[%s2303 + $0x28] sm:$0xff] %vm1978, %v1925
        %2310 = vst.msk [vmem:[%s2303 + $0x30] sm:$0x3] %vm1985, %v1925
        %2311 = vst.msk [vmem:[%s2303 + $0xaf0] sm:$0xff] %vm1978, %v1929
        %2312 = vst.msk [vmem:[%s2303 + $0xaf8] sm:$0xff] %vm1978, %v1929
        %2313 = vst.msk [vmem:[%s2303 + $0xb00] sm:$0xff] %vm1978, %v1929
        %2314 = vst.msk [vmem:[%s2303 + $0xb08] sm:$0xff] %vm1978, %v1929
        %2315 = vst.msk [vmem:[%s2303 + $0xb10] sm:$0xff] %vm1978, %v1929
        %2316 = vst.msk [vmem:[%s2303 + $0xb18] sm:$0xff] %vm1978, %v1929
        %2317 = vst.msk [vmem:[%s2303 + $0xb20] sm:$0x3] %vm1985, %v1929
        %2318 = vst.msk [vmem:[%s2303 + $0x15e0] sm:$0xff] %vm1978, %v1933
        %2319 = vst.msk [vmem:[%s2303 + $0x15e8] sm:$0xff] %vm1978, %v1933
        %2320 = vst.msk [vmem:[%s2303 + $0x15f0] sm:$0xff] %vm1978, %v1933
        %2321 = vst.msk [vmem:[%s2303 + $0x15f8] sm:$0xff] %vm1978, %v1933
        %2322 = vst.msk [vmem:[%s2303 + $0x1600] sm:$0xff] %vm1978, %v1933
        %2323 = vst.msk [vmem:[%s2303 + $0x1608] sm:$0xff] %vm1978, %v1933
        %2324 = vst.msk [vmem:[%s2303 + $0x1610] sm:$0x3] %vm1985, %v1933
        %2325 = vst.msk [vmem:[%s2303 + $0x20d0] sm:$0xff] %vm1978, %v1937
        %2326 = vst.msk [vmem:[%s2303 + $0x20d8] sm:$0xff] %vm1978, %v1937
        %2327 = vst.msk [vmem:[%s2303 + $0x20e0] sm:$0xff] %vm1978, %v1937
        %2328 = vst.msk [vmem:[%s2303 + $0x20e8] sm:$0xff] %vm1978, %v1937
        %2329 = vst.msk [vmem:[%s2303 + $0x20f0] sm:$0xff] %vm1978, %v1937
        %2330 = vst.msk [vmem:[%s2303 + $0x20f8] sm:$0xff] %vm1978, %v1937
        %2331 = vst.msk [vmem:[%s2303 + $0x2100] sm:$0x3] %vm1985, %v1937
        %2332 = vst.msk [vmem:[%s2303 + $0x2bc0] sm:$0xff] %vm1978, %v1941
        %2333 = vst.msk [vmem:[%s2303 + $0x2bc8] sm:$0xff] %vm1978, %v1941
        %2334 = vst.msk [vmem:[%s2303 + $0x2bd0] sm:$0xff] %vm1978, %v1941
        %2335 = vst.msk [vmem:[%s2303 + $0x2bd8] sm:$0xff] %vm1978, %v1941
        %2336 = vst.msk [vmem:[%s2303 + $0x2be0] sm:$0xff] %vm1978, %v1941
        %2337 = vst.msk [vmem:[%s2303 + $0x2be8] sm:$0xff] %vm1978, %v1941
        %2338 = vst.msk [vmem:[%s2303 + $0x2bf0] sm:$0x3] %vm1985, %v1941
        %s2339 = scalar_lea.vmem %s1885, 448 [#allocation3]
        %2340 = vst.msk [vmem:[%s2339] sm:$0xff] %vm1978, %v1925
        %2341 = vst.msk [vmem:[%s2339 + $0x8] sm:$0xff] %vm1978, %v1925
        %2342 = vst.msk [vmem:[%s2339 + $0x10] sm:$0xff] %vm1978, %v1925
        %2343 = vst.msk [vmem:[%s2339 + $0x18] sm:$0xff] %vm1978, %v1925
        %2344 = vst.msk [vmem:[%s2339 + $0x20] sm:$0xff] %vm1978, %v1925
        %2345 = vst.msk [vmem:[%s2339 + $0x28] sm:$0xff] %vm1978, %v1925
        %2346 = vst.msk [vmem:[%s2339 + $0x30] sm:$0x3] %vm1985, %v1925
        %2347 = vst.msk [vmem:[%s2339 + $0xaf0] sm:$0xff] %vm1978, %v1929
        %2348 = vst.msk [vmem:[%s2339 + $0xaf8] sm:$0xff] %vm1978, %v1929
        %2349 = vst.msk [vmem:[%s2339 + $0xb00] sm:$0xff] %vm1978, %v1929
        %2350 = vst.msk [vmem:[%s2339 + $0xb08] sm:$0xff] %vm1978, %v1929
        %2351 = vst.msk [vmem:[%s2339 + $0xb10] sm:$0xff] %vm1978, %v1929
        %2352 = vst.msk [vmem:[%s2339 + $0xb18] sm:$0xff] %vm1978, %v1929
        %2353 = vst.msk [vmem:[%s2339 + $0xb20] sm:$0x3] %vm1985, %v1929
        %2354 = vst.msk [vmem:[%s2339 + $0x15e0] sm:$0xff] %vm1978, %v1933
        %2355 = vst.msk [vmem:[%s2339 + $0x15e8] sm:$0xff] %vm1978, %v1933
        %2356 = vst.msk [vmem:[%s2339 + $0x15f0] sm:$0xff] %vm1978, %v1933
        %2357 = vst.msk [vmem:[%s2339 + $0x15f8] sm:$0xff] %vm1978, %v1933
        %2358 = vst.msk [vmem:[%s2339 + $0x1600] sm:$0xff] %vm1978, %v1933
        %2359 = vst.msk [vmem:[%s2339 + $0x1608] sm:$0xff] %vm1978, %v1933
        %2360 = vst.msk [vmem:[%s2339 + $0x1610] sm:$0x3] %vm1985, %v1933
        %2361 = vst.msk [vmem:[%s2339 + $0x20d0] sm:$0xff] %vm1978, %v1937
        %2362 = vst.msk [vmem:[%s2339 + $0x20d8] sm:$0xff] %vm1978, %v1937
        %2363 = vst.msk [vmem:[%s2339 + $0x20e0] sm:$0xff] %vm1978, %v1937
        %2364 = vst.msk [vmem:[%s2339 + $0x20e8] sm:$0xff] %vm1978, %v1937
        %2365 = vst.msk [vmem:[%s2339 + $0x20f0] sm:$0xff] %vm1978, %v1937
        %2366 = vst.msk [vmem:[%s2339 + $0x20f8] sm:$0xff] %vm1978, %v1937
        %2367 = vst.msk [vmem:[%s2339 + $0x2100] sm:$0x3] %vm1985, %v1937
        %2368 = vst.msk [vmem:[%s2339 + $0x2bc0] sm:$0xff] %vm1978, %v1941
        %2369 = vst.msk [vmem:[%s2339 + $0x2bc8] sm:$0xff] %vm1978, %v1941
        %2370 = vst.msk [vmem:[%s2339 + $0x2bd0] sm:$0xff] %vm1978, %v1941
        %2371 = vst.msk [vmem:[%s2339 + $0x2bd8] sm:$0xff] %vm1978, %v1941
        %2372 = vst.msk [vmem:[%s2339 + $0x2be0] sm:$0xff] %vm1978, %v1941
        %2373 = vst.msk [vmem:[%s2339 + $0x2be8] sm:$0xff] %vm1978, %v1941
        %2374 = vst.msk [vmem:[%s2339 + $0x2bf0] sm:$0x3] %vm1985, %v1941
        %s2375 = scalar_lea.vmem %s1885, 504 [#allocation3]
        %2376 = vst.msk [vmem:[%s2375] sm:$0xff] %vm1978, %v1925
        %2377 = vst.msk [vmem:[%s2375 + $0x8] sm:$0xff] %vm1978, %v1925
        %2378 = vst.msk [vmem:[%s2375 + $0x10] sm:$0xff] %vm1978, %v1925
        %2379 = vst.msk [vmem:[%s2375 + $0x18] sm:$0xff] %vm1978, %v1925
        %2380 = vst.msk [vmem:[%s2375 + $0x20] sm:$0xff] %vm1978, %v1925
        %2381 = vst.msk [vmem:[%s2375 + $0x28] sm:$0xff] %vm1978, %v1925
        %2382 = vst.msk [vmem:[%s2375 + $0x30] sm:$0x3] %vm1985, %v1925
        %2383 = vst.msk [vmem:[%s2375 + $0xaf0] sm:$0xff] %vm1978, %v1929
        %2384 = vst.msk [vmem:[%s2375 + $0xaf8] sm:$0xff] %vm1978, %v1929
        %2385 = vst.msk [vmem:[%s2375 + $0xb00] sm:$0xff] %vm1978, %v1929
        %2386 = vst.msk [vmem:[%s2375 + $0xb08] sm:$0xff] %vm1978, %v1929
        %2387 = vst.msk [vmem:[%s2375 + $0xb10] sm:$0xff] %vm1978, %v1929
        %2388 = vst.msk [vmem:[%s2375 + $0xb18] sm:$0xff] %vm1978, %v1929
        %2389 = vst.msk [vmem:[%s2375 + $0xb20] sm:$0x3] %vm1985, %v1929
        %2390 = vst.msk [vmem:[%s2375 + $0x15e0] sm:$0xff] %vm1978, %v1933
        %2391 = vst.msk [vmem:[%s2375 + $0x15e8] sm:$0xff] %vm1978, %v1933
        %2392 = vst.msk [vmem:[%s2375 + $0x15f0] sm:$0xff] %vm1978, %v1933
        %2393 = vst.msk [vmem:[%s2375 + $0x15f8] sm:$0xff] %vm1978, %v1933
        %2394 = vst.msk [vmem:[%s2375 + $0x1600] sm:$0xff] %vm1978, %v1933
        %2395 = vst.msk [vmem:[%s2375 + $0x1608] sm:$0xff] %vm1978, %v1933
        %2396 = vst.msk [vmem:[%s2375 + $0x1610] sm:$0x3] %vm1985, %v1933
        %2397 = vst.msk [vmem:[%s2375 + $0x20d0] sm:$0xff] %vm1978, %v1937
        %2398 = vst.msk [vmem:[%s2375 + $0x20d8] sm:$0xff] %vm1978, %v1937
        %2399 = vst.msk [vmem:[%s2375 + $0x20e0] sm:$0xff] %vm1978, %v1937
        %2400 = vst.msk [vmem:[%s2375 + $0x20e8] sm:$0xff] %vm1978, %v1937
        %2401 = vst.msk [vmem:[%s2375 + $0x20f0] sm:$0xff] %vm1978, %v1937
        %2402 = vst.msk [vmem:[%s2375 + $0x20f8] sm:$0xff] %vm1978, %v1937
        %2403 = vst.msk [vmem:[%s2375 + $0x2100] sm:$0x3] %vm1985, %v1937
        %2404 = vst.msk [vmem:[%s2375 + $0x2bc0] sm:$0xff] %vm1978, %v1941
        %2405 = vst.msk [vmem:[%s2375 + $0x2bc8] sm:$0xff] %vm1978, %v1941
        %2406 = vst.msk [vmem:[%s2375 + $0x2bd0] sm:$0xff] %vm1978, %v1941
        %2407 = vst.msk [vmem:[%s2375 + $0x2bd8] sm:$0xff] %vm1978, %v1941
        %2408 = vst.msk [vmem:[%s2375 + $0x2be0] sm:$0xff] %vm1978, %v1941
        %2409 = vst.msk [vmem:[%s2375 + $0x2be8] sm:$0xff] %vm1978, %v1941
        %2410 = vst.msk [vmem:[%s2375 + $0x2bf0] sm:$0x3] %vm1985, %v1941
        %s2411 = scalar_lea.vmem %s1885, 560 [#allocation3]
        %2412 = vst.msk [vmem:[%s2411] sm:$0xff] %vm1978, %v1925
        %2413 = vst.msk [vmem:[%s2411 + $0x8] sm:$0xff] %vm1978, %v1925
        %2414 = vst.msk [vmem:[%s2411 + $0x10] sm:$0xff] %vm1978, %v1925
        %2415 = vst.msk [vmem:[%s2411 + $0x18] sm:$0xff] %vm1978, %v1925
        %2416 = vst.msk [vmem:[%s2411 + $0x20] sm:$0xff] %vm1978, %v1925
        %2417 = vst.msk [vmem:[%s2411 + $0x28] sm:$0xff] %vm1978, %v1925
        %2418 = vst.msk [vmem:[%s2411 + $0x30] sm:$0x3] %vm1985, %v1925
        %2419 = vst.msk [vmem:[%s2411 + $0xaf0] sm:$0xff] %vm1978, %v1929
        %2420 = vst.msk [vmem:[%s2411 + $0xaf8] sm:$0xff] %vm1978, %v1929
        %2421 = vst.msk [vmem:[%s2411 + $0xb00] sm:$0xff] %vm1978, %v1929
        %2422 = vst.msk [vmem:[%s2411 + $0xb08] sm:$0xff] %vm1978, %v1929
        %2423 = vst.msk [vmem:[%s2411 + $0xb10] sm:$0xff] %vm1978, %v1929
        %2424 = vst.msk [vmem:[%s2411 + $0xb18] sm:$0xff] %vm1978, %v1929
        %2425 = vst.msk [vmem:[%s2411 + $0xb20] sm:$0x3] %vm1985, %v1929
        %2426 = vst.msk [vmem:[%s2411 + $0x15e0] sm:$0xff] %vm1978, %v1933
        %2427 = vst.msk [vmem:[%s2411 + $0x15e8] sm:$0xff] %vm1978, %v1933
        %2428 = vst.msk [vmem:[%s2411 + $0x15f0] sm:$0xff] %vm1978, %v1933
        %2429 = vst.msk [vmem:[%s2411 + $0x15f8] sm:$0xff] %vm1978, %v1933
        %2430 = vst.msk [vmem:[%s2411 + $0x1600] sm:$0xff] %vm1978, %v1933
        %2431 = vst.msk [vmem:[%s2411 + $0x1608] sm:$0xff] %vm1978, %v1933
        %2432 = vst.msk [vmem:[%s2411 + $0x1610] sm:$0x3] %vm1985, %v1933
        %2433 = vst.msk [vmem:[%s2411 + $0x20d0] sm:$0xff] %vm1978, %v1937
        %2434 = vst.msk [vmem:[%s2411 + $0x20d8] sm:$0xff] %vm1978, %v1937
        %2435 = vst.msk [vmem:[%s2411 + $0x20e0] sm:$0xff] %vm1978, %v1937
        %2436 = vst.msk [vmem:[%s2411 + $0x20e8] sm:$0xff] %vm1978, %v1937
        %2437 = vst.msk [vmem:[%s2411 + $0x20f0] sm:$0xff] %vm1978, %v1937
        %2438 = vst.msk [vmem:[%s2411 + $0x20f8] sm:$0xff] %vm1978, %v1937
        %2439 = vst.msk [vmem:[%s2411 + $0x2100] sm:$0x3] %vm1985, %v1937
        %2440 = vst.msk [vmem:[%s2411 + $0x2bc0] sm:$0xff] %vm1978, %v1941
        %2441 = vst.msk [vmem:[%s2411 + $0x2bc8] sm:$0xff] %vm1978, %v1941
        %2442 = vst.msk [vmem:[%s2411 + $0x2bd0] sm:$0xff] %vm1978, %v1941
        %2443 = vst.msk [vmem:[%s2411 + $0x2bd8] sm:$0xff] %vm1978, %v1941
        %2444 = vst.msk [vmem:[%s2411 + $0x2be0] sm:$0xff] %vm1978, %v1941
        %2445 = vst.msk [vmem:[%s2411 + $0x2be8] sm:$0xff] %vm1978, %v1941
        %2446 = vst.msk [vmem:[%s2411 + $0x2bf0] sm:$0x3] %vm1985, %v1941
        %s2447 = scalar_lea.vmem %s1863, 840 [#allocation2]
        %v2448 = vld [vmem:[%s2447] sm:$0xff]
        %v2449 = vld [vmem:[%s2447 + $0x8] sm:$0xff]
        %v2450 = vld [vmem:[%s2447 + $0x10] sm:$0xff]
        %v2451 = vld [vmem:[%s2447 + $0x18] sm:$0xff]
        %v2452 = vld [vmem:[%s2447 + $0x20] sm:$0xff]
        %v2453 = vld [vmem:[%s2447 + $0x28] sm:$0xff]
        %v2454 = vld [vmem:[%s2447 + $0x30] sm:$0x3]
        %v2455 = vld [vmem:[%s2447 + $0x38] sm:$0xff]
        %v2456 = vld [vmem:[%s2447 + $0x40] sm:$0xff]
        %v2457 = vld [vmem:[%s2447 + $0x48] sm:$0xff]
        %v2458 = vld [vmem:[%s2447 + $0x50] sm:$0xff]
        %v2459 = vld [vmem:[%s2447 + $0x58] sm:$0xff]
        %v2460 = vld [vmem:[%s2447 + $0x60] sm:$0xff]
        %v2461 = vld [vmem:[%s2447 + $0x68] sm:$0x3]
        %v2462 = vld [vmem:[%s2447 + $0x70] sm:$0xff]
        %v2463 = vld [vmem:[%s2447 + $0x78] sm:$0xff]
        %v2464 = vld [vmem:[%s2447 + $0x80] sm:$0xff]
        %v2465 = vld [vmem:[%s2447 + $0x88] sm:$0xff]
        %v2466 = vld [vmem:[%s2447 + $0x90] sm:$0xff]
        %v2467 = vld [vmem:[%s2447 + $0x98] sm:$0xff]
        %v2468 = vld [vmem:[%s2447 + $0xa0] sm:$0x3]
        %v2469 = vld [vmem:[%s2447 + $0xa8] sm:$0xff]
        %v2470 = vld [vmem:[%s2447 + $0xb0] sm:$0xff]
        %v2471 = vld [vmem:[%s2447 + $0xb8] sm:$0xff]
        %v2472 = vld [vmem:[%s2447 + $0xc0] sm:$0xff]
        %v2473 = vld [vmem:[%s2447 + $0xc8] sm:$0xff]
        %v2474 = vld [vmem:[%s2447 + $0xd0] sm:$0xff]
        %v2475 = vld [vmem:[%s2447 + $0xd8] sm:$0x3]
        %v2476 = vld [vmem:[%s2447 + $0xe0] sm:$0xff]
        %v2477 = vld [vmem:[%s2447 + $0xe8] sm:$0xff]
        %v2478 = vld [vmem:[%s2447 + $0xf0] sm:$0xff]
        %v2479 = vld [vmem:[%s2447 + $0xf8] sm:$0xff]
        %v2480 = vld [vmem:[%s2447 + $0x100] sm:$0xff]
        %v2481 = vld [vmem:[%s2447 + $0x108] sm:$0xff]
        %v2482 = vld [vmem:[%s2447 + $0x110] sm:$0x3]
        %s2483 = scalar_lea.vmem %s1885, 616 [#allocation3]
        %2484 = vst.msk [vmem:[%s2483] sm:$0xff] %vm1978, %v2448
        %2485 = vst.msk [vmem:[%s2483 + $0x8] sm:$0xff] %vm1978, %v2449
        %2486 = vst.msk [vmem:[%s2483 + $0x10] sm:$0xff] %vm1978, %v2450
        %2487 = vst.msk [vmem:[%s2483 + $0x18] sm:$0xff] %vm1978, %v2451
        %2488 = vst.msk [vmem:[%s2483 + $0x20] sm:$0xff] %vm1978, %v2452
        %2489 = vst.msk [vmem:[%s2483 + $0x28] sm:$0xff] %vm1978, %v2453
        %2490 = vst.msk [vmem:[%s2483 + $0x30] sm:$0x3] %vm1985, %v2454
        %2491 = vst.msk [vmem:[%s2483 + $0xaf0] sm:$0xff] %vm1978, %v2455
        %2492 = vst.msk [vmem:[%s2483 + $0xaf8] sm:$0xff] %vm1978, %v2456
        %2493 = vst.msk [vmem:[%s2483 + $0xb00] sm:$0xff] %vm1978, %v2457
        %2494 = vst.msk [vmem:[%s2483 + $0xb08] sm:$0xff] %vm1978, %v2458
        %2495 = vst.msk [vmem:[%s2483 + $0xb10] sm:$0xff] %vm1978, %v2459
        %2496 = vst.msk [vmem:[%s2483 + $0xb18] sm:$0xff] %vm1978, %v2460
        %2497 = vst.msk [vmem:[%s2483 + $0xb20] sm:$0x3] %vm1985, %v2461
        %2498 = vst.msk [vmem:[%s2483 + $0x15e0] sm:$0xff] %vm1978, %v2462
        %2499 = vst.msk [vmem:[%s2483 + $0x15e8] sm:$0xff] %vm1978, %v2463
        %2500 = vst.msk [vmem:[%s2483 + $0x15f0] sm:$0xff] %vm1978, %v2464
        %2501 = vst.msk [vmem:[%s2483 + $0x15f8] sm:$0xff] %vm1978, %v2465
        %2502 = vst.msk [vmem:[%s2483 + $0x1600] sm:$0xff] %vm1978, %v2466
        %2503 = vst.msk [vmem:[%s2483 + $0x1608] sm:$0xff] %vm1978, %v2467
        %2504 = vst.msk [vmem:[%s2483 + $0x1610] sm:$0x3] %vm1985, %v2468
        %2505 = vst.msk [vmem:[%s2483 + $0x20d0] sm:$0xff] %vm1978, %v2469
        %2506 = vst.msk [vmem:[%s2483 + $0x20d8] sm:$0xff] %vm1978, %v2470
        %2507 = vst.msk [vmem:[%s2483 + $0x20e0] sm:$0xff] %vm1978, %v2471
        %2508 = vst.msk [vmem:[%s2483 + $0x20e8] sm:$0xff] %vm1978, %v2472
        %2509 = vst.msk [vmem:[%s2483 + $0x20f0] sm:$0xff] %vm1978, %v2473
        %2510 = vst.msk [vmem:[%s2483 + $0x20f8] sm:$0xff] %vm1978, %v2474
        %2511 = vst.msk [vmem:[%s2483 + $0x2100] sm:$0x3] %vm1985, %v2475
        %2512 = vst.msk [vmem:[%s2483 + $0x2bc0] sm:$0xff] %vm1978, %v2476
        %2513 = vst.msk [vmem:[%s2483 + $0x2bc8] sm:$0xff] %vm1978, %v2477
        %2514 = vst.msk [vmem:[%s2483 + $0x2bd0] sm:$0xff] %vm1978, %v2478
        %2515 = vst.msk [vmem:[%s2483 + $0x2bd8] sm:$0xff] %vm1978, %v2479
        %2516 = vst.msk [vmem:[%s2483 + $0x2be0] sm:$0xff] %vm1978, %v2480
        %2517 = vst.msk [vmem:[%s2483 + $0x2be8] sm:$0xff] %vm1978, %v2481
        %2518 = vst.msk [vmem:[%s2483 + $0x2bf0] sm:$0x3] %vm1985, %v2482
        %s2519 = scalar_lea.vmem %s1885, 672 [#allocation3]
        %2520 = vst.msk [vmem:[%s2519] sm:$0xff] %vm1978, %v1925
        %2521 = vst.msk [vmem:[%s2519 + $0x8] sm:$0xff] %vm1978, %v1925
        %2522 = vst.msk [vmem:[%s2519 + $0x10] sm:$0xff] %vm1978, %v1925
        %2523 = vst.msk [vmem:[%s2519 + $0x18] sm:$0xff] %vm1978, %v1925
        %2524 = vst.msk [vmem:[%s2519 + $0x20] sm:$0xff] %vm1978, %v1925
        %2525 = vst.msk [vmem:[%s2519 + $0x28] sm:$0xff] %vm1978, %v1925
        %2526 = vst.msk [vmem:[%s2519 + $0x30] sm:$0x3] %vm1985, %v1925
        %2527 = vst.msk [vmem:[%s2519 + $0xaf0] sm:$0xff] %vm1978, %v1929
        %2528 = vst.msk [vmem:[%s2519 + $0xaf8] sm:$0xff] %vm1978, %v1929
        %2529 = vst.msk [vmem:[%s2519 + $0xb00] sm:$0xff] %vm1978, %v1929
        %2530 = vst.msk [vmem:[%s2519 + $0xb08] sm:$0xff] %vm1978, %v1929
        %2531 = vst.msk [vmem:[%s2519 + $0xb10] sm:$0xff] %vm1978, %v1929
        %2532 = vst.msk [vmem:[%s2519 + $0xb18] sm:$0xff] %vm1978, %v1929
        %2533 = vst.msk [vmem:[%s2519 + $0xb20] sm:$0x3] %vm1985, %v1929
        %2534 = vst.msk [vmem:[%s2519 + $0x15e0] sm:$0xff] %vm1978, %v1933
        %2535 = vst.msk [vmem:[%s2519 + $0x15e8] sm:$0xff] %vm1978, %v1933
        %2536 = vst.msk [vmem:[%s2519 + $0x15f0] sm:$0xff] %vm1978, %v1933
        %2537 = vst.msk [vmem:[%s2519 + $0x15f8] sm:$0xff] %vm1978, %v1933
        %2538 = vst.msk [vmem:[%s2519 + $0x1600] sm:$0xff] %vm1978, %v1933
        %2539 = vst.msk [vmem:[%s2519 + $0x1608] sm:$0xff] %vm1978, %v1933
        %2540 = vst.msk [vmem:[%s2519 + $0x1610] sm:$0x3] %vm1985, %v1933
        %2541 = vst.msk [vmem:[%s2519 + $0x20d0] sm:$0xff] %vm1978, %v1937
        %2542 = vst.msk [vmem:[%s2519 + $0x20d8] sm:$0xff] %vm1978, %v1937
        %2543 = vst.msk [vmem:[%s2519 + $0x20e0] sm:$0xff] %vm1978, %v1937
        %2544 = vst.msk [vmem:[%s2519 + $0x20e8] sm:$0xff] %vm1978, %v1937
        %2545 = vst.msk [vmem:[%s2519 + $0x20f0] sm:$0xff] %vm1978, %v1937
        %2546 = vst.msk [vmem:[%s2519 + $0x20f8] sm:$0xff] %vm1978, %v1937
        %2547 = vst.msk [vmem:[%s2519 + $0x2100] sm:$0x3] %vm1985, %v1937
        %2548 = vst.msk [vmem:[%s2519 + $0x2bc0] sm:$0xff] %vm1978, %v1941
        %2549 = vst.msk [vmem:[%s2519 + $0x2bc8] sm:$0xff] %vm1978, %v1941
        %2550 = vst.msk [vmem:[%s2519 + $0x2bd0] sm:$0xff] %vm1978, %v1941
        %2551 = vst.msk [vmem:[%s2519 + $0x2bd8] sm:$0xff] %vm1978, %v1941
        %2552 = vst.msk [vmem:[%s2519 + $0x2be0] sm:$0xff] %vm1978, %v1941
        %2553 = vst.msk [vmem:[%s2519 + $0x2be8] sm:$0xff] %vm1978, %v1941
        %2554 = vst.msk [vmem:[%s2519 + $0x2bf0] sm:$0x3] %vm1985, %v1941
        %s2555 = scalar_lea.vmem %s1863, 1120 [#allocation2]
        %v2556 = vld [vmem:[%s2555] sm:$0xff]
        %v2557 = vld [vmem:[%s2555 + $0x8] sm:$0xff]
        %v2558 = vld [vmem:[%s2555 + $0x10] sm:$0xff]
        %v2559 = vld [vmem:[%s2555 + $0x18] sm:$0xff]
        %v2560 = vld [vmem:[%s2555 + $0x20] sm:$0xff]
        %v2561 = vld [vmem:[%s2555 + $0x28] sm:$0xff]
        %v2562 = vld [vmem:[%s2555 + $0x30] sm:$0x3]
        %v2563 = vld [vmem:[%s2555 + $0x38] sm:$0xff]
        %v2564 = vld [vmem:[%s2555 + $0x40] sm:$0xff]
        %v2565 = vld [vmem:[%s2555 + $0x48] sm:$0xff]
        %v2566 = vld [vmem:[%s2555 + $0x50] sm:$0xff]
        %v2567 = vld [vmem:[%s2555 + $0x58] sm:$0xff]
        %v2568 = vld [vmem:[%s2555 + $0x60] sm:$0xff]
        %v2569 = vld [vmem:[%s2555 + $0x68] sm:$0x3]
        %v2570 = vld [vmem:[%s2555 + $0x70] sm:$0xff]
        %v2571 = vld [vmem:[%s2555 + $0x78] sm:$0xff]
        %v2572 = vld [vmem:[%s2555 + $0x80] sm:$0xff]
        %v2573 = vld [vmem:[%s2555 + $0x88] sm:$0xff]
        %v2574 = vld [vmem:[%s2555 + $0x90] sm:$0xff]
        %v2575 = vld [vmem:[%s2555 + $0x98] sm:$0xff]
        %v2576 = vld [vmem:[%s2555 + $0xa0] sm:$0x3]
        %v2577 = vld [vmem:[%s2555 + $0xa8] sm:$0xff]
        %v2578 = vld [vmem:[%s2555 + $0xb0] sm:$0xff]
        %v2579 = vld [vmem:[%s2555 + $0xb8] sm:$0xff]
        %v2580 = vld [vmem:[%s2555 + $0xc0] sm:$0xff]
        %v2581 = vld [vmem:[%s2555 + $0xc8] sm:$0xff]
        %v2582 = vld [vmem:[%s2555 + $0xd0] sm:$0xff]
        %v2583 = vld [vmem:[%s2555 + $0xd8] sm:$0x3]
        %v2584 = vld [vmem:[%s2555 + $0xe0] sm:$0xff]
        %v2585 = vld [vmem:[%s2555 + $0xe8] sm:$0xff]
        %v2586 = vld [vmem:[%s2555 + $0xf0] sm:$0xff]
        %v2587 = vld [vmem:[%s2555 + $0xf8] sm:$0xff]
        %v2588 = vld [vmem:[%s2555 + $0x100] sm:$0xff]
        %v2589 = vld [vmem:[%s2555 + $0x108] sm:$0xff]
        %v2590 = vld [vmem:[%s2555 + $0x110] sm:$0x3]
        %s2591 = scalar_lea.vmem %s1885, 728 [#allocation3]
        %2592 = vst.msk [vmem:[%s2591] sm:$0xff] %vm1978, %v2556
        %2593 = vst.msk [vmem:[%s2591 + $0x8] sm:$0xff] %vm1978, %v2557
        %2594 = vst.msk [vmem:[%s2591 + $0x10] sm:$0xff] %vm1978, %v2558
        %2595 = vst.msk [vmem:[%s2591 + $0x18] sm:$0xff] %vm1978, %v2559
        %2596 = vst.msk [vmem:[%s2591 + $0x20] sm:$0xff] %vm1978, %v2560
        %2597 = vst.msk [vmem:[%s2591 + $0x28] sm:$0xff] %vm1978, %v2561
        %2598 = vst.msk [vmem:[%s2591 + $0x30] sm:$0x3] %vm1985, %v2562
        %2599 = vst.msk [vmem:[%s2591 + $0xaf0] sm:$0xff] %vm1978, %v2563
        %2600 = vst.msk [vmem:[%s2591 + $0xaf8] sm:$0xff] %vm1978, %v2564
        %2601 = vst.msk [vmem:[%s2591 + $0xb00] sm:$0xff] %vm1978, %v2565
        %2602 = vst.msk [vmem:[%s2591 + $0xb08] sm:$0xff] %vm1978, %v2566
        %2603 = vst.msk [vmem:[%s2591 + $0xb10] sm:$0xff] %vm1978, %v2567
        %2604 = vst.msk [vmem:[%s2591 + $0xb18] sm:$0xff] %vm1978, %v2568
        %2605 = vst.msk [vmem:[%s2591 + $0xb20] sm:$0x3] %vm1985, %v2569
        %2606 = vst.msk [vmem:[%s2591 + $0x15e0] sm:$0xff] %vm1978, %v2570
        %2607 = vst.msk [vmem:[%s2591 + $0x15e8] sm:$0xff] %vm1978, %v2571
        %2608 = vst.msk [vmem:[%s2591 + $0x15f0] sm:$0xff] %vm1978, %v2572
        %2609 = vst.msk [vmem:[%s2591 + $0x15f8] sm:$0xff] %vm1978, %v2573
        %2610 = vst.msk [vmem:[%s2591 + $0x1600] sm:$0xff] %vm1978, %v2574
        %2611 = vst.msk [vmem:[%s2591 + $0x1608] sm:$0xff] %vm1978, %v2575
        %2612 = vst.msk [vmem:[%s2591 + $0x1610] sm:$0x3] %vm1985, %v2576
        %2613 = vst.msk [vmem:[%s2591 + $0x20d0] sm:$0xff] %vm1978, %v2577
        %2614 = vst.msk [vmem:[%s2591 + $0x20d8] sm:$0xff] %vm1978, %v2578
        %2615 = vst.msk [vmem:[%s2591 + $0x20e0] sm:$0xff] %vm1978, %v2579
        %2616 = vst.msk [vmem:[%s2591 + $0x20e8] sm:$0xff] %vm1978, %v2580
        %2617 = vst.msk [vmem:[%s2591 + $0x20f0] sm:$0xff] %vm1978, %v2581
        %2618 = vst.msk [vmem:[%s2591 + $0x20f8] sm:$0xff] %vm1978, %v2582
        %2619 = vst.msk [vmem:[%s2591 + $0x2100] sm:$0x3] %vm1985, %v2583
        %2620 = vst.msk [vmem:[%s2591 + $0x2bc0] sm:$0xff] %vm1978, %v2584
        %2621 = vst.msk [vmem:[%s2591 + $0x2bc8] sm:$0xff] %vm1978, %v2585
        %2622 = vst.msk [vmem:[%s2591 + $0x2bd0] sm:$0xff] %vm1978, %v2586
        %2623 = vst.msk [vmem:[%s2591 + $0x2bd8] sm:$0xff] %vm1978, %v2587
        %2624 = vst.msk [vmem:[%s2591 + $0x2be0] sm:$0xff] %vm1978, %v2588
        %2625 = vst.msk [vmem:[%s2591 + $0x2be8] sm:$0xff] %vm1978, %v2589
        %2626 = vst.msk [vmem:[%s2591 + $0x2bf0] sm:$0x3] %vm1985, %v2590
        %s2627 = scalar_lea.vmem %s1885, 784 [#allocation3]
        %2628 = vst.msk [vmem:[%s2627] sm:$0xff] %vm1978, %v1925
        %2629 = vst.msk [vmem:[%s2627 + $0x8] sm:$0xff] %vm1978, %v1925
        %2630 = vst.msk [vmem:[%s2627 + $0x10] sm:$0xff] %vm1978, %v1925
        %2631 = vst.msk [vmem:[%s2627 + $0x18] sm:$0xff] %vm1978, %v1925
        %2632 = vst.msk [vmem:[%s2627 + $0x20] sm:$0xff] %vm1978, %v1925
        %2633 = vst.msk [vmem:[%s2627 + $0x28] sm:$0xff] %vm1978, %v1925
        %2634 = vst.msk [vmem:[%s2627 + $0x30] sm:$0x3] %vm1985, %v1925
        %2635 = vst.msk [vmem:[%s2627 + $0xaf0] sm:$0xff] %vm1978, %v1929
        %2636 = vst.msk [vmem:[%s2627 + $0xaf8] sm:$0xff] %vm1978, %v1929
        %2637 = vst.msk [vmem:[%s2627 + $0xb00] sm:$0xff] %vm1978, %v1929
        %2638 = vst.msk [vmem:[%s2627 + $0xb08] sm:$0xff] %vm1978, %v1929
        %2639 = vst.msk [vmem:[%s2627 + $0xb10] sm:$0xff] %vm1978, %v1929
        %2640 = vst.msk [vmem:[%s2627 + $0xb18] sm:$0xff] %vm1978, %v1929
        %2641 = vst.msk [vmem:[%s2627 + $0xb20] sm:$0x3] %vm1985, %v1929
        %2642 = vst.msk [vmem:[%s2627 + $0x15e0] sm:$0xff] %vm1978, %v1933
        %2643 = vst.msk [vmem:[%s2627 + $0x15e8] sm:$0xff] %vm1978, %v1933
        %2644 = vst.msk [vmem:[%s2627 + $0x15f0] sm:$0xff] %vm1978, %v1933
        %2645 = vst.msk [vmem:[%s2627 + $0x15f8] sm:$0xff] %vm1978, %v1933
        %2646 = vst.msk [vmem:[%s2627 + $0x1600] sm:$0xff] %vm1978, %v1933
        %2647 = vst.msk [vmem:[%s2627 + $0x1608] sm:$0xff] %vm1978, %v1933
        %2648 = vst.msk [vmem:[%s2627 + $0x1610] sm:$0x3] %vm1985, %v1933
        %2649 = vst.msk [vmem:[%s2627 + $0x20d0] sm:$0xff] %vm1978, %v1937
        %2650 = vst.msk [vmem:[%s2627 + $0x20d8] sm:$0xff] %vm1978, %v1937
        %2651 = vst.msk [vmem:[%s2627 + $0x20e0] sm:$0xff] %vm1978, %v1937
        %2652 = vst.msk [vmem:[%s2627 + $0x20e8] sm:$0xff] %vm1978, %v1937
        %2653 = vst.msk [vmem:[%s2627 + $0x20f0] sm:$0xff] %vm1978, %v1937
        %2654 = vst.msk [vmem:[%s2627 + $0x20f8] sm:$0xff] %vm1978, %v1937
        %2655 = vst.msk [vmem:[%s2627 + $0x2100] sm:$0x3] %vm1985, %v1937
        %2656 = vst.msk [vmem:[%s2627 + $0x2bc0] sm:$0xff] %vm1978, %v1941
        %2657 = vst.msk [vmem:[%s2627 + $0x2bc8] sm:$0xff] %vm1978, %v1941
        %2658 = vst.msk [vmem:[%s2627 + $0x2bd0] sm:$0xff] %vm1978, %v1941
        %2659 = vst.msk [vmem:[%s2627 + $0x2bd8] sm:$0xff] %vm1978, %v1941
        %2660 = vst.msk [vmem:[%s2627 + $0x2be0] sm:$0xff] %vm1978, %v1941
        %2661 = vst.msk [vmem:[%s2627 + $0x2be8] sm:$0xff] %vm1978, %v1941
        %2662 = vst.msk [vmem:[%s2627 + $0x2bf0] sm:$0x3] %vm1985, %v1941
        %s2663 = scalar_lea.vmem %s1863, 1400 [#allocation2]
        %v2664 = vld [vmem:[%s2663] sm:$0xff]
        %v2665 = vld [vmem:[%s2663 + $0x8] sm:$0xff]
        %v2666 = vld [vmem:[%s2663 + $0x10] sm:$0xff]
        %v2667 = vld [vmem:[%s2663 + $0x18] sm:$0xff]
        %v2668 = vld [vmem:[%s2663 + $0x20] sm:$0xff]
        %v2669 = vld [vmem:[%s2663 + $0x28] sm:$0xff]
        %v2670 = vld [vmem:[%s2663 + $0x30] sm:$0x3]
        %v2671 = vld [vmem:[%s2663 + $0x38] sm:$0xff]
        %v2672 = vld [vmem:[%s2663 + $0x40] sm:$0xff]
        %v2673 = vld [vmem:[%s2663 + $0x48] sm:$0xff]
        %v2674 = vld [vmem:[%s2663 + $0x50] sm:$0xff]
        %v2675 = vld [vmem:[%s2663 + $0x58] sm:$0xff]
        %v2676 = vld [vmem:[%s2663 + $0x60] sm:$0xff]
        %v2677 = vld [vmem:[%s2663 + $0x68] sm:$0x3]
        %v2678 = vld [vmem:[%s2663 + $0x70] sm:$0xff]
        %v2679 = vld [vmem:[%s2663 + $0x78] sm:$0xff]
        %v2680 = vld [vmem:[%s2663 + $0x80] sm:$0xff]
        %v2681 = vld [vmem:[%s2663 + $0x88] sm:$0xff]
        %v2682 = vld [vmem:[%s2663 + $0x90] sm:$0xff]
        %v2683 = vld [vmem:[%s2663 + $0x98] sm:$0xff]
        %v2684 = vld [vmem:[%s2663 + $0xa0] sm:$0x3]
        %v2685 = vld [vmem:[%s2663 + $0xa8] sm:$0xff]
        %v2686 = vld [vmem:[%s2663 + $0xb0] sm:$0xff]
        %v2687 = vld [vmem:[%s2663 + $0xb8] sm:$0xff]
        %v2688 = vld [vmem:[%s2663 + $0xc0] sm:$0xff]
        %v2689 = vld [vmem:[%s2663 + $0xc8] sm:$0xff]
        %v2690 = vld [vmem:[%s2663 + $0xd0] sm:$0xff]
        %v2691 = vld [vmem:[%s2663 + $0xd8] sm:$0x3]
        %v2692 = vld [vmem:[%s2663 + $0xe0] sm:$0xff]
        %v2693 = vld [vmem:[%s2663 + $0xe8] sm:$0xff]
        %v2694 = vld [vmem:[%s2663 + $0xf0] sm:$0xff]
        %v2695 = vld [vmem:[%s2663 + $0xf8] sm:$0xff]
        %v2696 = vld [vmem:[%s2663 + $0x100] sm:$0xff]
        %v2697 = vld [vmem:[%s2663 + $0x108] sm:$0xff]
        %v2698 = vld [vmem:[%s2663 + $0x110] sm:$0x3]
        %s2699 = scalar_lea.vmem %s1885, 840 [#allocation3]
        %2700 = vst.msk [vmem:[%s2699] sm:$0xff] %vm1978, %v2664
        %2701 = vst.msk [vmem:[%s2699 + $0x8] sm:$0xff] %vm1978, %v2665
        %2702 = vst.msk [vmem:[%s2699 + $0x10] sm:$0xff] %vm1978, %v2666
        %2703 = vst.msk [vmem:[%s2699 + $0x18] sm:$0xff] %vm1978, %v2667
        %2704 = vst.msk [vmem:[%s2699 + $0x20] sm:$0xff] %vm1978, %v2668
        %2705 = vst.msk [vmem:[%s2699 + $0x28] sm:$0xff] %vm1978, %v2669
        %2706 = vst.msk [vmem:[%s2699 + $0x30] sm:$0x3] %vm1985, %v2670
        %2707 = vst.msk [vmem:[%s2699 + $0xaf0] sm:$0xff] %vm1978, %v2671
        %2708 = vst.msk [vmem:[%s2699 + $0xaf8] sm:$0xff] %vm1978, %v2672
        %2709 = vst.msk [vmem:[%s2699 + $0xb00] sm:$0xff] %vm1978, %v2673
        %2710 = vst.msk [vmem:[%s2699 + $0xb08] sm:$0xff] %vm1978, %v2674
        %2711 = vst.msk [vmem:[%s2699 + $0xb10] sm:$0xff] %vm1978, %v2675
        %2712 = vst.msk [vmem:[%s2699 + $0xb18] sm:$0xff] %vm1978, %v2676
        %2713 = vst.msk [vmem:[%s2699 + $0xb20] sm:$0x3] %vm1985, %v2677
        %2714 = vst.msk [vmem:[%s2699 + $0x15e0] sm:$0xff] %vm1978, %v2678
        %2715 = vst.msk [vmem:[%s2699 + $0x15e8] sm:$0xff] %vm1978, %v2679
        %2716 = vst.msk [vmem:[%s2699 + $0x15f0] sm:$0xff] %vm1978, %v2680
        %2717 = vst.msk [vmem:[%s2699 + $0x15f8] sm:$0xff] %vm1978, %v2681
        %2718 = vst.msk [vmem:[%s2699 + $0x1600] sm:$0xff] %vm1978, %v2682
        %2719 = vst.msk [vmem:[%s2699 + $0x1608] sm:$0xff] %vm1978, %v2683
        %2720 = vst.msk [vmem:[%s2699 + $0x1610] sm:$0x3] %vm1985, %v2684
        %2721 = vst.msk [vmem:[%s2699 + $0x20d0] sm:$0xff] %vm1978, %v2685
        %2722 = vst.msk [vmem:[%s2699 + $0x20d8] sm:$0xff] %vm1978, %v2686
        %2723 = vst.msk [vmem:[%s2699 + $0x20e0] sm:$0xff] %vm1978, %v2687
        %2724 = vst.msk [vmem:[%s2699 + $0x20e8] sm:$0xff] %vm1978, %v2688
        %2725 = vst.msk [vmem:[%s2699 + $0x20f0] sm:$0xff] %vm1978, %v2689
        %2726 = vst.msk [vmem:[%s2699 + $0x20f8] sm:$0xff] %vm1978, %v2690
        %2727 = vst.msk [vmem:[%s2699 + $0x2100] sm:$0x3] %vm1985, %v2691
        %2728 = vst.msk [vmem:[%s2699 + $0x2bc0] sm:$0xff] %vm1978, %v2692
        %2729 = vst.msk [vmem:[%s2699 + $0x2bc8] sm:$0xff] %vm1978, %v2693
        %2730 = vst.msk [vmem:[%s2699 + $0x2bd0] sm:$0xff] %vm1978, %v2694
        %2731 = vst.msk [vmem:[%s2699 + $0x2bd8] sm:$0xff] %vm1978, %v2695
        %2732 = vst.msk [vmem:[%s2699 + $0x2be0] sm:$0xff] %vm1978, %v2696
        %2733 = vst.msk [vmem:[%s2699 + $0x2be8] sm:$0xff] %vm1978, %v2697
        %2734 = vst.msk [vmem:[%s2699 + $0x2bf0] sm:$0x3] %vm1985, %v2698
        %s2735 = scalar_lea.vmem %s1885, 896 [#allocation3]
        %2736 = vst.msk [vmem:[%s2735] sm:$0xff] %vm1978, %v1925
        %2737 = vst.msk [vmem:[%s2735 + $0x8] sm:$0xff] %vm1978, %v1925
        %2738 = vst.msk [vmem:[%s2735 + $0x10] sm:$0xff] %vm1978, %v1925
        %2739 = vst.msk [vmem:[%s2735 + $0x18] sm:$0xff] %vm1978, %v1925
        %2740 = vst.msk [vmem:[%s2735 + $0x20] sm:$0xff] %vm1978, %v1925
        %2741 = vst.msk [vmem:[%s2735 + $0x28] sm:$0xff] %vm1978, %v1925
        %2742 = vst.msk [vmem:[%s2735 + $0x30] sm:$0x3] %vm1985, %v1925
        %2743 = vst.msk [vmem:[%s2735 + $0xaf0] sm:$0xff] %vm1978, %v1929
        %2744 = vst.msk [vmem:[%s2735 + $0xaf8] sm:$0xff] %vm1978, %v1929
        %2745 = vst.msk [vmem:[%s2735 + $0xb00] sm:$0xff] %vm1978, %v1929
        %2746 = vst.msk [vmem:[%s2735 + $0xb08] sm:$0xff] %vm1978, %v1929
        %2747 = vst.msk [vmem:[%s2735 + $0xb10] sm:$0xff] %vm1978, %v1929
        %2748 = vst.msk [vmem:[%s2735 + $0xb18] sm:$0xff] %vm1978, %v1929
        %2749 = vst.msk [vmem:[%s2735 + $0xb20] sm:$0x3] %vm1985, %v1929
        %2750 = vst.msk [vmem:[%s2735 + $0x15e0] sm:$0xff] %vm1978, %v1933
        %2751 = vst.msk [vmem:[%s2735 + $0x15e8] sm:$0xff] %vm1978, %v1933
        %2752 = vst.msk [vmem:[%s2735 + $0x15f0] sm:$0xff] %vm1978, %v1933
        %2753 = vst.msk [vmem:[%s2735 + $0x15f8] sm:$0xff] %vm1978, %v1933
        %2754 = vst.msk [vmem:[%s2735 + $0x1600] sm:$0xff] %vm1978, %v1933
        %2755 = vst.msk [vmem:[%s2735 + $0x1608] sm:$0xff] %vm1978, %v1933
        %2756 = vst.msk [vmem:[%s2735 + $0x1610] sm:$0x3] %vm1985, %v1933
        %2757 = vst.msk [vmem:[%s2735 + $0x20d0] sm:$0xff] %vm1978, %v1937
        %2758 = vst.msk [vmem:[%s2735 + $0x20d8] sm:$0xff] %vm1978, %v1937
        %2759 = vst.msk [vmem:[%s2735 + $0x20e0] sm:$0xff] %vm1978, %v1937
        %2760 = vst.msk [vmem:[%s2735 + $0x20e8] sm:$0xff] %vm1978, %v1937
        %2761 = vst.msk [vmem:[%s2735 + $0x20f0] sm:$0xff] %vm1978, %v1937
        %2762 = vst.msk [vmem:[%s2735 + $0x20f8] sm:$0xff] %vm1978, %v1937
        %2763 = vst.msk [vmem:[%s2735 + $0x2100] sm:$0x3] %vm1985, %v1937
        %2764 = vst.msk [vmem:[%s2735 + $0x2bc0] sm:$0xff] %vm1978, %v1941
        %2765 = vst.msk [vmem:[%s2735 + $0x2bc8] sm:$0xff] %vm1978, %v1941
        %2766 = vst.msk [vmem:[%s2735 + $0x2bd0] sm:$0xff] %vm1978, %v1941
        %2767 = vst.msk [vmem:[%s2735 + $0x2bd8] sm:$0xff] %vm1978, %v1941
        %2768 = vst.msk [vmem:[%s2735 + $0x2be0] sm:$0xff] %vm1978, %v1941
        %2769 = vst.msk [vmem:[%s2735 + $0x2be8] sm:$0xff] %vm1978, %v1941
        %2770 = vst.msk [vmem:[%s2735 + $0x2bf0] sm:$0x3] %vm1985, %v1941
        %s2771 = scalar_lea.vmem %s1885, 952 [#allocation3]
        %2772 = vst.msk [vmem:[%s2771] sm:$0xff] %vm1978, %v1925
        %2773 = vst.msk [vmem:[%s2771 + $0x8] sm:$0xff] %vm1978, %v1925
        %2774 = vst.msk [vmem:[%s2771 + $0x10] sm:$0xff] %vm1978, %v1925
        %2775 = vst.msk [vmem:[%s2771 + $0x18] sm:$0xff] %vm1978, %v1925
        %2776 = vst.msk [vmem:[%s2771 + $0x20] sm:$0xff] %vm1978, %v1925
        %2777 = vst.msk [vmem:[%s2771 + $0x28] sm:$0xff] %vm1978, %v1925
        %2778 = vst.msk [vmem:[%s2771 + $0x30] sm:$0x3] %vm1985, %v1925
        %2779 = vst.msk [vmem:[%s2771 + $0xaf0] sm:$0xff] %vm1978, %v1929
        %2780 = vst.msk [vmem:[%s2771 + $0xaf8] sm:$0xff] %vm1978, %v1929
        %2781 = vst.msk [vmem:[%s2771 + $0xb00] sm:$0xff] %vm1978, %v1929
        %2782 = vst.msk [vmem:[%s2771 + $0xb08] sm:$0xff] %vm1978, %v1929
        %2783 = vst.msk [vmem:[%s2771 + $0xb10] sm:$0xff] %vm1978, %v1929
        %2784 = vst.msk [vmem:[%s2771 + $0xb18] sm:$0xff] %vm1978, %v1929
        %2785 = vst.msk [vmem:[%s2771 + $0xb20] sm:$0x3] %vm1985, %v1929
        %2786 = vst.msk [vmem:[%s2771 + $0x15e0] sm:$0xff] %vm1978, %v1933
        %2787 = vst.msk [vmem:[%s2771 + $0x15e8] sm:$0xff] %vm1978, %v1933
        %2788 = vst.msk [vmem:[%s2771 + $0x15f0] sm:$0xff] %vm1978, %v1933
        %2789 = vst.msk [vmem:[%s2771 + $0x15f8] sm:$0xff] %vm1978, %v1933
        %2790 = vst.msk [vmem:[%s2771 + $0x1600] sm:$0xff] %vm1978, %v1933
        %2791 = vst.msk [vmem:[%s2771 + $0x1608] sm:$0xff] %vm1978, %v1933
        %2792 = vst.msk [vmem:[%s2771 + $0x1610] sm:$0x3] %vm1985, %v1933
        %2793 = vst.msk [vmem:[%s2771 + $0x20d0] sm:$0xff] %vm1978, %v1937
        %2794 = vst.msk [vmem:[%s2771 + $0x20d8] sm:$0xff] %vm1978, %v1937
        %2795 = vst.msk [vmem:[%s2771 + $0x20e0] sm:$0xff] %vm1978, %v1937
        %2796 = vst.msk [vmem:[%s2771 + $0x20e8] sm:$0xff] %vm1978, %v1937
        %2797 = vst.msk [vmem:[%s2771 + $0x20f0] sm:$0xff] %vm1978, %v1937
        %2798 = vst.msk [vmem:[%s2771 + $0x20f8] sm:$0xff] %vm1978, %v1937
        %2799 = vst.msk [vmem:[%s2771 + $0x2100] sm:$0x3] %vm1985, %v1937
        %2800 = vst.msk [vmem:[%s2771 + $0x2bc0] sm:$0xff] %vm1978, %v1941
        %2801 = vst.msk [vmem:[%s2771 + $0x2bc8] sm:$0xff] %vm1978, %v1941
        %2802 = vst.msk [vmem:[%s2771 + $0x2bd0] sm:$0xff] %vm1978, %v1941
        %2803 = vst.msk [vmem:[%s2771 + $0x2bd8] sm:$0xff] %vm1978, %v1941
        %2804 = vst.msk [vmem:[%s2771 + $0x2be0] sm:$0xff] %vm1978, %v1941
        %2805 = vst.msk [vmem:[%s2771 + $0x2be8] sm:$0xff] %vm1978, %v1941
        %2806 = vst.msk [vmem:[%s2771 + $0x2bf0] sm:$0x3] %vm1985, %v1941
        %s2807 = scalar_lea.vmem %s1885, 1008 [#allocation3]
        %2808 = vst.msk [vmem:[%s2807] sm:$0xff] %vm1978, %v1925
        %2809 = vst.msk [vmem:[%s2807 + $0x8] sm:$0xff] %vm1978, %v1925
        %2810 = vst.msk [vmem:[%s2807 + $0x10] sm:$0xff] %vm1978, %v1925
        %2811 = vst.msk [vmem:[%s2807 + $0x18] sm:$0xff] %vm1978, %v1925
        %2812 = vst.msk [vmem:[%s2807 + $0x20] sm:$0xff] %vm1978, %v1925
        %2813 = vst.msk [vmem:[%s2807 + $0x28] sm:$0xff] %vm1978, %v1925
        %2814 = vst.msk [vmem:[%s2807 + $0x30] sm:$0x3] %vm1985, %v1925
        %2815 = vst.msk [vmem:[%s2807 + $0xaf0] sm:$0xff] %vm1978, %v1929
        %2816 = vst.msk [vmem:[%s2807 + $0xaf8] sm:$0xff] %vm1978, %v1929
        %2817 = vst.msk [vmem:[%s2807 + $0xb00] sm:$0xff] %vm1978, %v1929
        %2818 = vst.msk [vmem:[%s2807 + $0xb08] sm:$0xff] %vm1978, %v1929
        %2819 = vst.msk [vmem:[%s2807 + $0xb10] sm:$0xff] %vm1978, %v1929
        %2820 = vst.msk [vmem:[%s2807 + $0xb18] sm:$0xff] %vm1978, %v1929
        %2821 = vst.msk [vmem:[%s2807 + $0xb20] sm:$0x3] %vm1985, %v1929
        %2822 = vst.msk [vmem:[%s2807 + $0x15e0] sm:$0xff] %vm1978, %v1933
        %2823 = vst.msk [vmem:[%s2807 + $0x15e8] sm:$0xff] %vm1978, %v1933
        %2824 = vst.msk [vmem:[%s2807 + $0x15f0] sm:$0xff] %vm1978, %v1933
        %2825 = vst.msk [vmem:[%s2807 + $0x15f8] sm:$0xff] %vm1978, %v1933
        %2826 = vst.msk [vmem:[%s2807 + $0x1600] sm:$0xff] %vm1978, %v1933
        %2827 = vst.msk [vmem:[%s2807 + $0x1608] sm:$0xff] %vm1978, %v1933
        %2828 = vst.msk [vmem:[%s2807 + $0x1610] sm:$0x3] %vm1985, %v1933
        %2829 = vst.msk [vmem:[%s2807 + $0x20d0] sm:$0xff] %vm1978, %v1937
        %2830 = vst.msk [vmem:[%s2807 + $0x20d8] sm:$0xff] %vm1978, %v1937
        %2831 = vst.msk [vmem:[%s2807 + $0x20e0] sm:$0xff] %vm1978, %v1937
        %2832 = vst.msk [vmem:[%s2807 + $0x20e8] sm:$0xff] %vm1978, %v1937
        %2833 = vst.msk [vmem:[%s2807 + $0x20f0] sm:$0xff] %vm1978, %v1937
        %2834 = vst.msk [vmem:[%s2807 + $0x20f8] sm:$0xff] %vm1978, %v1937
        %2835 = vst.msk [vmem:[%s2807 + $0x2100] sm:$0x3] %vm1985, %v1937
        %2836 = vst.msk [vmem:[%s2807 + $0x2bc0] sm:$0xff] %vm1978, %v1941
        %2837 = vst.msk [vmem:[%s2807 + $0x2bc8] sm:$0xff] %vm1978, %v1941
        %2838 = vst.msk [vmem:[%s2807 + $0x2bd0] sm:$0xff] %vm1978, %v1941
        %2839 = vst.msk [vmem:[%s2807 + $0x2bd8] sm:$0xff] %vm1978, %v1941
        %2840 = vst.msk [vmem:[%s2807 + $0x2be0] sm:$0xff] %vm1978, %v1941
        %2841 = vst.msk [vmem:[%s2807 + $0x2be8] sm:$0xff] %vm1978, %v1941
        %2842 = vst.msk [vmem:[%s2807 + $0x2bf0] sm:$0x3] %vm1985, %v1941
        %s2843 = scalar_lea.vmem %s1885, 1064 [#allocation3]
        %2844 = vst.msk [vmem:[%s2843] sm:$0xff] %vm1978, %v1925
        %2845 = vst.msk [vmem:[%s2843 + $0x8] sm:$0xff] %vm1978, %v1925
        %2846 = vst.msk [vmem:[%s2843 + $0x10] sm:$0xff] %vm1978, %v1925
        %2847 = vst.msk [vmem:[%s2843 + $0x18] sm:$0xff] %vm1978, %v1925
        %2848 = vst.msk [vmem:[%s2843 + $0x20] sm:$0xff] %vm1978, %v1925
        %2849 = vst.msk [vmem:[%s2843 + $0x28] sm:$0xff] %vm1978, %v1925
        %2850 = vst.msk [vmem:[%s2843 + $0x30] sm:$0x3] %vm1985, %v1925
        %2851 = vst.msk [vmem:[%s2843 + $0xaf0] sm:$0xff] %vm1978, %v1929
        %2852 = vst.msk [vmem:[%s2843 + $0xaf8] sm:$0xff] %vm1978, %v1929
        %2853 = vst.msk [vmem:[%s2843 + $0xb00] sm:$0xff] %vm1978, %v1929
        %2854 = vst.msk [vmem:[%s2843 + $0xb08] sm:$0xff] %vm1978, %v1929
        %2855 = vst.msk [vmem:[%s2843 + $0xb10] sm:$0xff] %vm1978, %v1929
        %2856 = vst.msk [vmem:[%s2843 + $0xb18] sm:$0xff] %vm1978, %v1929
        %2857 = vst.msk [vmem:[%s2843 + $0xb20] sm:$0x3] %vm1985, %v1929
        %2858 = vst.msk [vmem:[%s2843 + $0x15e0] sm:$0xff] %vm1978, %v1933
        %2859 = vst.msk [vmem:[%s2843 + $0x15e8] sm:$0xff] %vm1978, %v1933
        %2860 = vst.msk [vmem:[%s2843 + $0x15f0] sm:$0xff] %vm1978, %v1933
        %2861 = vst.msk [vmem:[%s2843 + $0x15f8] sm:$0xff] %vm1978, %v1933
        %2862 = vst.msk [vmem:[%s2843 + $0x1600] sm:$0xff] %vm1978, %v1933
        %2863 = vst.msk [vmem:[%s2843 + $0x1608] sm:$0xff] %vm1978, %v1933
        %2864 = vst.msk [vmem:[%s2843 + $0x1610] sm:$0x3] %vm1985, %v1933
        %2865 = vst.msk [vmem:[%s2843 + $0x20d0] sm:$0xff] %vm1978, %v1937
        %2866 = vst.msk [vmem:[%s2843 + $0x20d8] sm:$0xff] %vm1978, %v1937
        %2867 = vst.msk [vmem:[%s2843 + $0x20e0] sm:$0xff] %vm1978, %v1937
        %2868 = vst.msk [vmem:[%s2843 + $0x20e8] sm:$0xff] %vm1978, %v1937
        %2869 = vst.msk [vmem:[%s2843 + $0x20f0] sm:$0xff] %vm1978, %v1937
        %2870 = vst.msk [vmem:[%s2843 + $0x20f8] sm:$0xff] %vm1978, %v1937
        %2871 = vst.msk [vmem:[%s2843 + $0x2100] sm:$0x3] %vm1985, %v1937
        %2872 = vst.msk [vmem:[%s2843 + $0x2bc0] sm:$0xff] %vm1978, %v1941
        %2873 = vst.msk [vmem:[%s2843 + $0x2bc8] sm:$0xff] %vm1978, %v1941
        %2874 = vst.msk [vmem:[%s2843 + $0x2bd0] sm:$0xff] %vm1978, %v1941
        %2875 = vst.msk [vmem:[%s2843 + $0x2bd8] sm:$0xff] %vm1978, %v1941
        %2876 = vst.msk [vmem:[%s2843 + $0x2be0] sm:$0xff] %vm1978, %v1941
        %2877 = vst.msk [vmem:[%s2843 + $0x2be8] sm:$0xff] %vm1978, %v1941
        %2878 = vst.msk [vmem:[%s2843 + $0x2bf0] sm:$0x3] %vm1985, %v1941
        %s2879 = scalar_lea.vmem %s1885, 1120 [#allocation3]
        %2880 = vst.msk [vmem:[%s2879] sm:$0xff] %vm1978, %v1925
        %2881 = vst.msk [vmem:[%s2879 + $0x8] sm:$0xff] %vm1978, %v1925
        %2882 = vst.msk [vmem:[%s2879 + $0x10] sm:$0xff] %vm1978, %v1925
        %2883 = vst.msk [vmem:[%s2879 + $0x18] sm:$0xff] %vm1978, %v1925
        %2884 = vst.msk [vmem:[%s2879 + $0x20] sm:$0xff] %vm1978, %v1925
        %2885 = vst.msk [vmem:[%s2879 + $0x28] sm:$0xff] %vm1978, %v1925
        %2886 = vst.msk [vmem:[%s2879 + $0x30] sm:$0x3] %vm1985, %v1925
        %2887 = vst.msk [vmem:[%s2879 + $0xaf0] sm:$0xff] %vm1978, %v1929
        %2888 = vst.msk [vmem:[%s2879 + $0xaf8] sm:$0xff] %vm1978, %v1929
        %2889 = vst.msk [vmem:[%s2879 + $0xb00] sm:$0xff] %vm1978, %v1929
        %2890 = vst.msk [vmem:[%s2879 + $0xb08] sm:$0xff] %vm1978, %v1929
        %2891 = vst.msk [vmem:[%s2879 + $0xb10] sm:$0xff] %vm1978, %v1929
        %2892 = vst.msk [vmem:[%s2879 + $0xb18] sm:$0xff] %vm1978, %v1929
        %2893 = vst.msk [vmem:[%s2879 + $0xb20] sm:$0x3] %vm1985, %v1929
        %2894 = vst.msk [vmem:[%s2879 + $0x15e0] sm:$0xff] %vm1978, %v1933
        %2895 = vst.msk [vmem:[%s2879 + $0x15e8] sm:$0xff] %vm1978, %v1933
        %2896 = vst.msk [vmem:[%s2879 + $0x15f0] sm:$0xff] %vm1978, %v1933
        %2897 = vst.msk [vmem:[%s2879 + $0x15f8] sm:$0xff] %vm1978, %v1933
        %2898 = vst.msk [vmem:[%s2879 + $0x1600] sm:$0xff] %vm1978, %v1933
        %2899 = vst.msk [vmem:[%s2879 + $0x1608] sm:$0xff] %vm1978, %v1933
        %2900 = vst.msk [vmem:[%s2879 + $0x1610] sm:$0x3] %vm1985, %v1933
        %2901 = vst.msk [vmem:[%s2879 + $0x20d0] sm:$0xff] %vm1978, %v1937
        %2902 = vst.msk [vmem:[%s2879 + $0x20d8] sm:$0xff] %vm1978, %v1937
        %2903 = vst.msk [vmem:[%s2879 + $0x20e0] sm:$0xff] %vm1978, %v1937
        %2904 = vst.msk [vmem:[%s2879 + $0x20e8] sm:$0xff] %vm1978, %v1937
        %2905 = vst.msk [vmem:[%s2879 + $0x20f0] sm:$0xff] %vm1978, %v1937
        %2906 = vst.msk [vmem:[%s2879 + $0x20f8] sm:$0xff] %vm1978, %v1937
        %2907 = vst.msk [vmem:[%s2879 + $0x2100] sm:$0x3] %vm1985, %v1937
        %2908 = vst.msk [vmem:[%s2879 + $0x2bc0] sm:$0xff] %vm1978, %v1941
        %2909 = vst.msk [vmem:[%s2879 + $0x2bc8] sm:$0xff] %vm1978, %v1941
        %2910 = vst.msk [vmem:[%s2879 + $0x2bd0] sm:$0xff] %vm1978, %v1941
        %2911 = vst.msk [vmem:[%s2879 + $0x2bd8] sm:$0xff] %vm1978, %v1941
        %2912 = vst.msk [vmem:[%s2879 + $0x2be0] sm:$0xff] %vm1978, %v1941
        %2913 = vst.msk [vmem:[%s2879 + $0x2be8] sm:$0xff] %vm1978, %v1941
        %2914 = vst.msk [vmem:[%s2879 + $0x2bf0] sm:$0x3] %vm1985, %v1941
        %s2915 = scalar_lea.vmem %s1885, 1176 [#allocation3]
        %2916 = vst.msk [vmem:[%s2915] sm:$0xff] %vm1978, %v1925
        %2917 = vst.msk [vmem:[%s2915 + $0x8] sm:$0xff] %vm1978, %v1925
        %2918 = vst.msk [vmem:[%s2915 + $0x10] sm:$0xff] %vm1978, %v1925
        %2919 = vst.msk [vmem:[%s2915 + $0x18] sm:$0xff] %vm1978, %v1925
        %2920 = vst.msk [vmem:[%s2915 + $0x20] sm:$0xff] %vm1978, %v1925
        %2921 = vst.msk [vmem:[%s2915 + $0x28] sm:$0xff] %vm1978, %v1925
        %2922 = vst.msk [vmem:[%s2915 + $0x30] sm:$0x3] %vm1985, %v1925
        %2923 = vst.msk [vmem:[%s2915 + $0xaf0] sm:$0xff] %vm1978, %v1929
        %2924 = vst.msk [vmem:[%s2915 + $0xaf8] sm:$0xff] %vm1978, %v1929
        %2925 = vst.msk [vmem:[%s2915 + $0xb00] sm:$0xff] %vm1978, %v1929
        %2926 = vst.msk [vmem:[%s2915 + $0xb08] sm:$0xff] %vm1978, %v1929
        %2927 = vst.msk [vmem:[%s2915 + $0xb10] sm:$0xff] %vm1978, %v1929
        %2928 = vst.msk [vmem:[%s2915 + $0xb18] sm:$0xff] %vm1978, %v1929
        %2929 = vst.msk [vmem:[%s2915 + $0xb20] sm:$0x3] %vm1985, %v1929
        %2930 = vst.msk [vmem:[%s2915 + $0x15e0] sm:$0xff] %vm1978, %v1933
        %2931 = vst.msk [vmem:[%s2915 + $0x15e8] sm:$0xff] %vm1978, %v1933
        %2932 = vst.msk [vmem:[%s2915 + $0x15f0] sm:$0xff] %vm1978, %v1933
        %2933 = vst.msk [vmem:[%s2915 + $0x15f8] sm:$0xff] %vm1978, %v1933
        %2934 = vst.msk [vmem:[%s2915 + $0x1600] sm:$0xff] %vm1978, %v1933
        %2935 = vst.msk [vmem:[%s2915 + $0x1608] sm:$0xff] %vm1978, %v1933
        %2936 = vst.msk [vmem:[%s2915 + $0x1610] sm:$0x3] %vm1985, %v1933
        %2937 = vst.msk [vmem:[%s2915 + $0x20d0] sm:$0xff] %vm1978, %v1937
        %2938 = vst.msk [vmem:[%s2915 + $0x20d8] sm:$0xff] %vm1978, %v1937
        %2939 = vst.msk [vmem:[%s2915 + $0x20e0] sm:$0xff] %vm1978, %v1937
        %2940 = vst.msk [vmem:[%s2915 + $0x20e8] sm:$0xff] %vm1978, %v1937
        %2941 = vst.msk [vmem:[%s2915 + $0x20f0] sm:$0xff] %vm1978, %v1937
        %2942 = vst.msk [vmem:[%s2915 + $0x20f8] sm:$0xff] %vm1978, %v1937
        %2943 = vst.msk [vmem:[%s2915 + $0x2100] sm:$0x3] %vm1985, %v1937
        %2944 = vst.msk [vmem:[%s2915 + $0x2bc0] sm:$0xff] %vm1978, %v1941
        %2945 = vst.msk [vmem:[%s2915 + $0x2bc8] sm:$0xff] %vm1978, %v1941
        %2946 = vst.msk [vmem:[%s2915 + $0x2bd0] sm:$0xff] %vm1978, %v1941
        %2947 = vst.msk [vmem:[%s2915 + $0x2bd8] sm:$0xff] %vm1978, %v1941
        %2948 = vst.msk [vmem:[%s2915 + $0x2be0] sm:$0xff] %vm1978, %v1941
        %2949 = vst.msk [vmem:[%s2915 + $0x2be8] sm:$0xff] %vm1978, %v1941
        %2950 = vst.msk [vmem:[%s2915 + $0x2bf0] sm:$0x3] %vm1985, %v1941
        %s2951 = scalar_lea.vmem %s1863, 1680 [#allocation2]
        %v2952 = vld [vmem:[%s2951] sm:$0xff]
        %v2953 = vld [vmem:[%s2951 + $0x8] sm:$0xff]
        %v2954 = vld [vmem:[%s2951 + $0x10] sm:$0xff]
        %v2955 = vld [vmem:[%s2951 + $0x18] sm:$0xff]
        %v2956 = vld [vmem:[%s2951 + $0x20] sm:$0xff]
        %v2957 = vld [vmem:[%s2951 + $0x28] sm:$0xff]
        %v2958 = vld [vmem:[%s2951 + $0x30] sm:$0x3]
        %v2959 = vld [vmem:[%s2951 + $0x38] sm:$0xff]
        %v2960 = vld [vmem:[%s2951 + $0x40] sm:$0xff]
        %v2961 = vld [vmem:[%s2951 + $0x48] sm:$0xff]
        %v2962 = vld [vmem:[%s2951 + $0x50] sm:$0xff]
        %v2963 = vld [vmem:[%s2951 + $0x58] sm:$0xff]
        %v2964 = vld [vmem:[%s2951 + $0x60] sm:$0xff]
        %v2965 = vld [vmem:[%s2951 + $0x68] sm:$0x3]
        %v2966 = vld [vmem:[%s2951 + $0x70] sm:$0xff]
        %v2967 = vld [vmem:[%s2951 + $0x78] sm:$0xff]
        %v2968 = vld [vmem:[%s2951 + $0x80] sm:$0xff]
        %v2969 = vld [vmem:[%s2951 + $0x88] sm:$0xff]
        %v2970 = vld [vmem:[%s2951 + $0x90] sm:$0xff]
        %v2971 = vld [vmem:[%s2951 + $0x98] sm:$0xff]
        %v2972 = vld [vmem:[%s2951 + $0xa0] sm:$0x3]
        %v2973 = vld [vmem:[%s2951 + $0xa8] sm:$0xff]
        %v2974 = vld [vmem:[%s2951 + $0xb0] sm:$0xff]
        %v2975 = vld [vmem:[%s2951 + $0xb8] sm:$0xff]
        %v2976 = vld [vmem:[%s2951 + $0xc0] sm:$0xff]
        %v2977 = vld [vmem:[%s2951 + $0xc8] sm:$0xff]
        %v2978 = vld [vmem:[%s2951 + $0xd0] sm:$0xff]
        %v2979 = vld [vmem:[%s2951 + $0xd8] sm:$0x3]
        %v2980 = vld [vmem:[%s2951 + $0xe0] sm:$0xff]
        %v2981 = vld [vmem:[%s2951 + $0xe8] sm:$0xff]
        %v2982 = vld [vmem:[%s2951 + $0xf0] sm:$0xff]
        %v2983 = vld [vmem:[%s2951 + $0xf8] sm:$0xff]
        %v2984 = vld [vmem:[%s2951 + $0x100] sm:$0xff]
        %v2985 = vld [vmem:[%s2951 + $0x108] sm:$0xff]
        %v2986 = vld [vmem:[%s2951 + $0x110] sm:$0x3]
        %s2987 = scalar_lea.vmem %s1885, 1232 [#allocation3]
        %2988 = vst.msk [vmem:[%s2987] sm:$0xff] %vm1978, %v2952
        %2989 = vst.msk [vmem:[%s2987 + $0x8] sm:$0xff] %vm1978, %v2953
        %2990 = vst.msk [vmem:[%s2987 + $0x10] sm:$0xff] %vm1978, %v2954
        %2991 = vst.msk [vmem:[%s2987 + $0x18] sm:$0xff] %vm1978, %v2955
        %2992 = vst.msk [vmem:[%s2987 + $0x20] sm:$0xff] %vm1978, %v2956
        %2993 = vst.msk [vmem:[%s2987 + $0x28] sm:$0xff] %vm1978, %v2957
        %2994 = vst.msk [vmem:[%s2987 + $0x30] sm:$0x3] %vm1985, %v2958
        %2995 = vst.msk [vmem:[%s2987 + $0xaf0] sm:$0xff] %vm1978, %v2959
        %2996 = vst.msk [vmem:[%s2987 + $0xaf8] sm:$0xff] %vm1978, %v2960
        %2997 = vst.msk [vmem:[%s2987 + $0xb00] sm:$0xff] %vm1978, %v2961
        %2998 = vst.msk [vmem:[%s2987 + $0xb08] sm:$0xff] %vm1978, %v2962
        %2999 = vst.msk [vmem:[%s2987 + $0xb10] sm:$0xff] %vm1978, %v2963
        %3000 = vst.msk [vmem:[%s2987 + $0xb18] sm:$0xff] %vm1978, %v2964
        %3001 = vst.msk [vmem:[%s2987 + $0xb20] sm:$0x3] %vm1985, %v2965
        %3002 = vst.msk [vmem:[%s2987 + $0x15e0] sm:$0xff] %vm1978, %v2966
        %3003 = vst.msk [vmem:[%s2987 + $0x15e8] sm:$0xff] %vm1978, %v2967
        %3004 = vst.msk [vmem:[%s2987 + $0x15f0] sm:$0xff] %vm1978, %v2968
        %3005 = vst.msk [vmem:[%s2987 + $0x15f8] sm:$0xff] %vm1978, %v2969
        %3006 = vst.msk [vmem:[%s2987 + $0x1600] sm:$0xff] %vm1978, %v2970
        %3007 = vst.msk [vmem:[%s2987 + $0x1608] sm:$0xff] %vm1978, %v2971
        %3008 = vst.msk [vmem:[%s2987 + $0x1610] sm:$0x3] %vm1985, %v2972
        %3009 = vst.msk [vmem:[%s2987 + $0x20d0] sm:$0xff] %vm1978, %v2973
        %3010 = vst.msk [vmem:[%s2987 + $0x20d8] sm:$0xff] %vm1978, %v2974
        %3011 = vst.msk [vmem:[%s2987 + $0x20e0] sm:$0xff] %vm1978, %v2975
        %3012 = vst.msk [vmem:[%s2987 + $0x20e8] sm:$0xff] %vm1978, %v2976
        %3013 = vst.msk [vmem:[%s2987 + $0x20f0] sm:$0xff] %vm1978, %v2977
        %3014 = vst.msk [vmem:[%s2987 + $0x20f8] sm:$0xff] %vm1978, %v2978
        %3015 = vst.msk [vmem:[%s2987 + $0x2100] sm:$0x3] %vm1985, %v2979
        %3016 = vst.msk [vmem:[%s2987 + $0x2bc0] sm:$0xff] %vm1978, %v2980
        %3017 = vst.msk [vmem:[%s2987 + $0x2bc8] sm:$0xff] %vm1978, %v2981
        %3018 = vst.msk [vmem:[%s2987 + $0x2bd0] sm:$0xff] %vm1978, %v2982
        %3019 = vst.msk [vmem:[%s2987 + $0x2bd8] sm:$0xff] %vm1978, %v2983
        %3020 = vst.msk [vmem:[%s2987 + $0x2be0] sm:$0xff] %vm1978, %v2984
        %3021 = vst.msk [vmem:[%s2987 + $0x2be8] sm:$0xff] %vm1978, %v2985
        %3022 = vst.msk [vmem:[%s2987 + $0x2bf0] sm:$0x3] %vm1985, %v2986
        %s3023 = scalar_lea.vmem %s1885, 1288 [#allocation3]
        %3024 = vst.msk [vmem:[%s3023] sm:$0xff] %vm1978, %v1925
        %3025 = vst.msk [vmem:[%s3023 + $0x8] sm:$0xff] %vm1978, %v1925
        %3026 = vst.msk [vmem:[%s3023 + $0x10] sm:$0xff] %vm1978, %v1925
        %3027 = vst.msk [vmem:[%s3023 + $0x18] sm:$0xff] %vm1978, %v1925
        %3028 = vst.msk [vmem:[%s3023 + $0x20] sm:$0xff] %vm1978, %v1925
        %3029 = vst.msk [vmem:[%s3023 + $0x28] sm:$0xff] %vm1978, %v1925
        %3030 = vst.msk [vmem:[%s3023 + $0x30] sm:$0x3] %vm1985, %v1925
        %3031 = vst.msk [vmem:[%s3023 + $0xaf0] sm:$0xff] %vm1978, %v1929
        %3032 = vst.msk [vmem:[%s3023 + $0xaf8] sm:$0xff] %vm1978, %v1929
        %3033 = vst.msk [vmem:[%s3023 + $0xb00] sm:$0xff] %vm1978, %v1929
        %3034 = vst.msk [vmem:[%s3023 + $0xb08] sm:$0xff] %vm1978, %v1929
        %3035 = vst.msk [vmem:[%s3023 + $0xb10] sm:$0xff] %vm1978, %v1929
        %3036 = vst.msk [vmem:[%s3023 + $0xb18] sm:$0xff] %vm1978, %v1929
        %3037 = vst.msk [vmem:[%s3023 + $0xb20] sm:$0x3] %vm1985, %v1929
        %3038 = vst.msk [vmem:[%s3023 + $0x15e0] sm:$0xff] %vm1978, %v1933
        %3039 = vst.msk [vmem:[%s3023 + $0x15e8] sm:$0xff] %vm1978, %v1933
        %3040 = vst.msk [vmem:[%s3023 + $0x15f0] sm:$0xff] %vm1978, %v1933
        %3041 = vst.msk [vmem:[%s3023 + $0x15f8] sm:$0xff] %vm1978, %v1933
        %3042 = vst.msk [vmem:[%s3023 + $0x1600] sm:$0xff] %vm1978, %v1933
        %3043 = vst.msk [vmem:[%s3023 + $0x1608] sm:$0xff] %vm1978, %v1933
        %3044 = vst.msk [vmem:[%s3023 + $0x1610] sm:$0x3] %vm1985, %v1933
        %3045 = vst.msk [vmem:[%s3023 + $0x20d0] sm:$0xff] %vm1978, %v1937
        %3046 = vst.msk [vmem:[%s3023 + $0x20d8] sm:$0xff] %vm1978, %v1937
        %3047 = vst.msk [vmem:[%s3023 + $0x20e0] sm:$0xff] %vm1978, %v1937
        %3048 = vst.msk [vmem:[%s3023 + $0x20e8] sm:$0xff] %vm1978, %v1937
        %3049 = vst.msk [vmem:[%s3023 + $0x20f0] sm:$0xff] %vm1978, %v1937
        %3050 = vst.msk [vmem:[%s3023 + $0x20f8] sm:$0xff] %vm1978, %v1937
        %3051 = vst.msk [vmem:[%s3023 + $0x2100] sm:$0x3] %vm1985, %v1937
        %3052 = vst.msk [vmem:[%s3023 + $0x2bc0] sm:$0xff] %vm1978, %v1941
        %3053 = vst.msk [vmem:[%s3023 + $0x2bc8] sm:$0xff] %vm1978, %v1941
        %3054 = vst.msk [vmem:[%s3023 + $0x2bd0] sm:$0xff] %vm1978, %v1941
        %3055 = vst.msk [vmem:[%s3023 + $0x2bd8] sm:$0xff] %vm1978, %v1941
        %3056 = vst.msk [vmem:[%s3023 + $0x2be0] sm:$0xff] %vm1978, %v1941
        %3057 = vst.msk [vmem:[%s3023 + $0x2be8] sm:$0xff] %vm1978, %v1941
        %3058 = vst.msk [vmem:[%s3023 + $0x2bf0] sm:$0x3] %vm1985, %v1941
        %s3059 = scalar_lea.vmem %s1863, 1960 [#allocation2]
        %v3060 = vld [vmem:[%s3059] sm:$0xff]
        %v3061 = vld [vmem:[%s3059 + $0x8] sm:$0xff]
        %v3062 = vld [vmem:[%s3059 + $0x10] sm:$0xff]
        %v3063 = vld [vmem:[%s3059 + $0x18] sm:$0xff]
        %v3064 = vld [vmem:[%s3059 + $0x20] sm:$0xff]
        %v3065 = vld [vmem:[%s3059 + $0x28] sm:$0xff]
        %v3066 = vld [vmem:[%s3059 + $0x30] sm:$0x3]
        %v3067 = vld [vmem:[%s3059 + $0x38] sm:$0xff]
        %v3068 = vld [vmem:[%s3059 + $0x40] sm:$0xff]
        %v3069 = vld [vmem:[%s3059 + $0x48] sm:$0xff]
        %v3070 = vld [vmem:[%s3059 + $0x50] sm:$0xff]
        %v3071 = vld [vmem:[%s3059 + $0x58] sm:$0xff]
        %v3072 = vld [vmem:[%s3059 + $0x60] sm:$0xff]
        %v3073 = vld [vmem:[%s3059 + $0x68] sm:$0x3]
        %v3074 = vld [vmem:[%s3059 + $0x70] sm:$0xff]
        %v3075 = vld [vmem:[%s3059 + $0x78] sm:$0xff]
        %v3076 = vld [vmem:[%s3059 + $0x80] sm:$0xff]
        %v3077 = vld [vmem:[%s3059 + $0x88] sm:$0xff]
        %v3078 = vld [vmem:[%s3059 + $0x90] sm:$0xff]
        %v3079 = vld [vmem:[%s3059 + $0x98] sm:$0xff]
        %v3080 = vld [vmem:[%s3059 + $0xa0] sm:$0x3]
        %v3081 = vld [vmem:[%s3059 + $0xa8] sm:$0xff]
        %v3082 = vld [vmem:[%s3059 + $0xb0] sm:$0xff]
        %v3083 = vld [vmem:[%s3059 + $0xb8] sm:$0xff]
        %v3084 = vld [vmem:[%s3059 + $0xc0] sm:$0xff]
        %v3085 = vld [vmem:[%s3059 + $0xc8] sm:$0xff]
        %v3086 = vld [vmem:[%s3059 + $0xd0] sm:$0xff]
        %v3087 = vld [vmem:[%s3059 + $0xd8] sm:$0x3]
        %v3088 = vld [vmem:[%s3059 + $0xe0] sm:$0xff]
        %v3089 = vld [vmem:[%s3059 + $0xe8] sm:$0xff]
        %v3090 = vld [vmem:[%s3059 + $0xf0] sm:$0xff]
        %v3091 = vld [vmem:[%s3059 + $0xf8] sm:$0xff]
        %v3092 = vld [vmem:[%s3059 + $0x100] sm:$0xff]
        %v3093 = vld [vmem:[%s3059 + $0x108] sm:$0xff]
        %v3094 = vld [vmem:[%s3059 + $0x110] sm:$0x3]
        %s3095 = scalar_lea.vmem %s1885, 1344 [#allocation3]
        %3096 = vst.msk [vmem:[%s3095] sm:$0xff] %vm1978, %v3060
        %3097 = vst.msk [vmem:[%s3095 + $0x8] sm:$0xff] %vm1978, %v3061
        %3098 = vst.msk [vmem:[%s3095 + $0x10] sm:$0xff] %vm1978, %v3062
        %3099 = vst.msk [vmem:[%s3095 + $0x18] sm:$0xff] %vm1978, %v3063
        %3100 = vst.msk [vmem:[%s3095 + $0x20] sm:$0xff] %vm1978, %v3064
        %3101 = vst.msk [vmem:[%s3095 + $0x28] sm:$0xff] %vm1978, %v3065
        %3102 = vst.msk [vmem:[%s3095 + $0x30] sm:$0x3] %vm1985, %v3066
        %3103 = vst.msk [vmem:[%s3095 + $0xaf0] sm:$0xff] %vm1978, %v3067
        %3104 = vst.msk [vmem:[%s3095 + $0xaf8] sm:$0xff] %vm1978, %v3068
        %3105 = vst.msk [vmem:[%s3095 + $0xb00] sm:$0xff] %vm1978, %v3069
        %3106 = vst.msk [vmem:[%s3095 + $0xb08] sm:$0xff] %vm1978, %v3070
        %3107 = vst.msk [vmem:[%s3095 + $0xb10] sm:$0xff] %vm1978, %v3071
        %3108 = vst.msk [vmem:[%s3095 + $0xb18] sm:$0xff] %vm1978, %v3072
        %3109 = vst.msk [vmem:[%s3095 + $0xb20] sm:$0x3] %vm1985, %v3073
        %3110 = vst.msk [vmem:[%s3095 + $0x15e0] sm:$0xff] %vm1978, %v3074
        %3111 = vst.msk [vmem:[%s3095 + $0x15e8] sm:$0xff] %vm1978, %v3075
        %3112 = vst.msk [vmem:[%s3095 + $0x15f0] sm:$0xff] %vm1978, %v3076
        %3113 = vst.msk [vmem:[%s3095 + $0x15f8] sm:$0xff] %vm1978, %v3077
        %3114 = vst.msk [vmem:[%s3095 + $0x1600] sm:$0xff] %vm1978, %v3078
        %3115 = vst.msk [vmem:[%s3095 + $0x1608] sm:$0xff] %vm1978, %v3079
        %3116 = vst.msk [vmem:[%s3095 + $0x1610] sm:$0x3] %vm1985, %v3080
        %3117 = vst.msk [vmem:[%s3095 + $0x20d0] sm:$0xff] %vm1978, %v3081
        %3118 = vst.msk [vmem:[%s3095 + $0x20d8] sm:$0xff] %vm1978, %v3082
        %3119 = vst.msk [vmem:[%s3095 + $0x20e0] sm:$0xff] %vm1978, %v3083
        %3120 = vst.msk [vmem:[%s3095 + $0x20e8] sm:$0xff] %vm1978, %v3084
        %3121 = vst.msk [vmem:[%s3095 + $0x20f0] sm:$0xff] %vm1978, %v3085
        %3122 = vst.msk [vmem:[%s3095 + $0x20f8] sm:$0xff] %vm1978, %v3086
        %3123 = vst.msk [vmem:[%s3095 + $0x2100] sm:$0x3] %vm1985, %v3087
        %3124 = vst.msk [vmem:[%s3095 + $0x2bc0] sm:$0xff] %vm1978, %v3088
        %3125 = vst.msk [vmem:[%s3095 + $0x2bc8] sm:$0xff] %vm1978, %v3089
        %3126 = vst.msk [vmem:[%s3095 + $0x2bd0] sm:$0xff] %vm1978, %v3090
        %3127 = vst.msk [vmem:[%s3095 + $0x2bd8] sm:$0xff] %vm1978, %v3091
        %3128 = vst.msk [vmem:[%s3095 + $0x2be0] sm:$0xff] %vm1978, %v3092
        %3129 = vst.msk [vmem:[%s3095 + $0x2be8] sm:$0xff] %vm1978, %v3093
        %3130 = vst.msk [vmem:[%s3095 + $0x2bf0] sm:$0x3] %vm1985, %v3094
        %s3131 = scalar_lea.vmem %s1885, 1400 [#allocation3]
        %3132 = vst.msk [vmem:[%s3131] sm:$0xff] %vm1978, %v1925
        %3133 = vst.msk [vmem:[%s3131 + $0x8] sm:$0xff] %vm1978, %v1925
        %3134 = vst.msk [vmem:[%s3131 + $0x10] sm:$0xff] %vm1978, %v1925
        %3135 = vst.msk [vmem:[%s3131 + $0x18] sm:$0xff] %vm1978, %v1925
        %3136 = vst.msk [vmem:[%s3131 + $0x20] sm:$0xff] %vm1978, %v1925
        %3137 = vst.msk [vmem:[%s3131 + $0x28] sm:$0xff] %vm1978, %v1925
        %3138 = vst.msk [vmem:[%s3131 + $0x30] sm:$0x3] %vm1985, %v1925
        %3139 = vst.msk [vmem:[%s3131 + $0xaf0] sm:$0xff] %vm1978, %v1929
        %3140 = vst.msk [vmem:[%s3131 + $0xaf8] sm:$0xff] %vm1978, %v1929
        %3141 = vst.msk [vmem:[%s3131 + $0xb00] sm:$0xff] %vm1978, %v1929
        %3142 = vst.msk [vmem:[%s3131 + $0xb08] sm:$0xff] %vm1978, %v1929
        %3143 = vst.msk [vmem:[%s3131 + $0xb10] sm:$0xff] %vm1978, %v1929
        %3144 = vst.msk [vmem:[%s3131 + $0xb18] sm:$0xff] %vm1978, %v1929
        %3145 = vst.msk [vmem:[%s3131 + $0xb20] sm:$0x3] %vm1985, %v1929
        %3146 = vst.msk [vmem:[%s3131 + $0x15e0] sm:$0xff] %vm1978, %v1933
        %3147 = vst.msk [vmem:[%s3131 + $0x15e8] sm:$0xff] %vm1978, %v1933
        %3148 = vst.msk [vmem:[%s3131 + $0x15f0] sm:$0xff] %vm1978, %v1933
        %3149 = vst.msk [vmem:[%s3131 + $0x15f8] sm:$0xff] %vm1978, %v1933
        %3150 = vst.msk [vmem:[%s3131 + $0x1600] sm:$0xff] %vm1978, %v1933
        %3151 = vst.msk [vmem:[%s3131 + $0x1608] sm:$0xff] %vm1978, %v1933
        %3152 = vst.msk [vmem:[%s3131 + $0x1610] sm:$0x3] %vm1985, %v1933
        %3153 = vst.msk [vmem:[%s3131 + $0x20d0] sm:$0xff] %vm1978, %v1937
        %3154 = vst.msk [vmem:[%s3131 + $0x20d8] sm:$0xff] %vm1978, %v1937
        %3155 = vst.msk [vmem:[%s3131 + $0x20e0] sm:$0xff] %vm1978, %v1937
        %3156 = vst.msk [vmem:[%s3131 + $0x20e8] sm:$0xff] %vm1978, %v1937
        %3157 = vst.msk [vmem:[%s3131 + $0x20f0] sm:$0xff] %vm1978, %v1937
        %3158 = vst.msk [vmem:[%s3131 + $0x20f8] sm:$0xff] %vm1978, %v1937
        %3159 = vst.msk [vmem:[%s3131 + $0x2100] sm:$0x3] %vm1985, %v1937
        %3160 = vst.msk [vmem:[%s3131 + $0x2bc0] sm:$0xff] %vm1978, %v1941
        %3161 = vst.msk [vmem:[%s3131 + $0x2bc8] sm:$0xff] %vm1978, %v1941
        %3162 = vst.msk [vmem:[%s3131 + $0x2bd0] sm:$0xff] %vm1978, %v1941
        %3163 = vst.msk [vmem:[%s3131 + $0x2bd8] sm:$0xff] %vm1978, %v1941
        %3164 = vst.msk [vmem:[%s3131 + $0x2be0] sm:$0xff] %vm1978, %v1941
        %3165 = vst.msk [vmem:[%s3131 + $0x2be8] sm:$0xff] %vm1978, %v1941
        %3166 = vst.msk [vmem:[%s3131 + $0x2bf0] sm:$0x3] %vm1985, %v1941
        %s3167 = scalar_lea.vmem %s1863, 2240 [#allocation2]
        %v3168 = vld [vmem:[%s3167] sm:$0xff]
        %v3169 = vld [vmem:[%s3167 + $0x8] sm:$0xff]
        %v3170 = vld [vmem:[%s3167 + $0x10] sm:$0xff]
        %v3171 = vld [vmem:[%s3167 + $0x18] sm:$0xff]
        %v3172 = vld [vmem:[%s3167 + $0x20] sm:$0xff]
        %v3173 = vld [vmem:[%s3167 + $0x28] sm:$0xff]
        %v3174 = vld [vmem:[%s3167 + $0x30] sm:$0x3]
        %v3175 = vld [vmem:[%s3167 + $0x38] sm:$0xff]
        %v3176 = vld [vmem:[%s3167 + $0x40] sm:$0xff]
        %v3177 = vld [vmem:[%s3167 + $0x48] sm:$0xff]
        %v3178 = vld [vmem:[%s3167 + $0x50] sm:$0xff]
        %v3179 = vld [vmem:[%s3167 + $0x58] sm:$0xff]
        %v3180 = vld [vmem:[%s3167 + $0x60] sm:$0xff]
        %v3181 = vld [vmem:[%s3167 + $0x68] sm:$0x3]
        %v3182 = vld [vmem:[%s3167 + $0x70] sm:$0xff]
        %v3183 = vld [vmem:[%s3167 + $0x78] sm:$0xff]
        %v3184 = vld [vmem:[%s3167 + $0x80] sm:$0xff]
        %v3185 = vld [vmem:[%s3167 + $0x88] sm:$0xff]
        %v3186 = vld [vmem:[%s3167 + $0x90] sm:$0xff]
        %v3187 = vld [vmem:[%s3167 + $0x98] sm:$0xff]
        %v3188 = vld [vmem:[%s3167 + $0xa0] sm:$0x3]
        %v3189 = vld [vmem:[%s3167 + $0xa8] sm:$0xff]
        %v3190 = vld [vmem:[%s3167 + $0xb0] sm:$0xff]
        %v3191 = vld [vmem:[%s3167 + $0xb8] sm:$0xff]
        %v3192 = vld [vmem:[%s3167 + $0xc0] sm:$0xff]
        %v3193 = vld [vmem:[%s3167 + $0xc8] sm:$0xff]
        %v3194 = vld [vmem:[%s3167 + $0xd0] sm:$0xff]
        %v3195 = vld [vmem:[%s3167 + $0xd8] sm:$0x3]
        %v3196 = vld [vmem:[%s3167 + $0xe0] sm:$0xff]
        %v3197 = vld [vmem:[%s3167 + $0xe8] sm:$0xff]
        %v3198 = vld [vmem:[%s3167 + $0xf0] sm:$0xff]
        %v3199 = vld [vmem:[%s3167 + $0xf8] sm:$0xff]
        %v3200 = vld [vmem:[%s3167 + $0x100] sm:$0xff]
        %v3201 = vld [vmem:[%s3167 + $0x108] sm:$0xff]
        %v3202 = vld [vmem:[%s3167 + $0x110] sm:$0x3]
        %s3203 = scalar_lea.vmem %s1885, 1456 [#allocation3]
        %3204 = vst.msk [vmem:[%s3203] sm:$0xff] %vm1978, %v3168
        %3205 = vst.msk [vmem:[%s3203 + $0x8] sm:$0xff] %vm1978, %v3169
        %3206 = vst.msk [vmem:[%s3203 + $0x10] sm:$0xff] %vm1978, %v3170
        %3207 = vst.msk [vmem:[%s3203 + $0x18] sm:$0xff] %vm1978, %v3171
        %3208 = vst.msk [vmem:[%s3203 + $0x20] sm:$0xff] %vm1978, %v3172
        %3209 = vst.msk [vmem:[%s3203 + $0x28] sm:$0xff] %vm1978, %v3173
        %3210 = vst.msk [vmem:[%s3203 + $0x30] sm:$0x3] %vm1985, %v3174
        %3211 = vst.msk [vmem:[%s3203 + $0xaf0] sm:$0xff] %vm1978, %v3175
        %3212 = vst.msk [vmem:[%s3203 + $0xaf8] sm:$0xff] %vm1978, %v3176
        %3213 = vst.msk [vmem:[%s3203 + $0xb00] sm:$0xff] %vm1978, %v3177
        %3214 = vst.msk [vmem:[%s3203 + $0xb08] sm:$0xff] %vm1978, %v3178
        %3215 = vst.msk [vmem:[%s3203 + $0xb10] sm:$0xff] %vm1978, %v3179
        %3216 = vst.msk [vmem:[%s3203 + $0xb18] sm:$0xff] %vm1978, %v3180
        %3217 = vst.msk [vmem:[%s3203 + $0xb20] sm:$0x3] %vm1985, %v3181
        %3218 = vst.msk [vmem:[%s3203 + $0x15e0] sm:$0xff] %vm1978, %v3182
        %3219 = vst.msk [vmem:[%s3203 + $0x15e8] sm:$0xff] %vm1978, %v3183
        %3220 = vst.msk [vmem:[%s3203 + $0x15f0] sm:$0xff] %vm1978, %v3184
        %3221 = vst.msk [vmem:[%s3203 + $0x15f8] sm:$0xff] %vm1978, %v3185
        %3222 = vst.msk [vmem:[%s3203 + $0x1600] sm:$0xff] %vm1978, %v3186
        %3223 = vst.msk [vmem:[%s3203 + $0x1608] sm:$0xff] %vm1978, %v3187
        %3224 = vst.msk [vmem:[%s3203 + $0x1610] sm:$0x3] %vm1985, %v3188
        %3225 = vst.msk [vmem:[%s3203 + $0x20d0] sm:$0xff] %vm1978, %v3189
        %3226 = vst.msk [vmem:[%s3203 + $0x20d8] sm:$0xff] %vm1978, %v3190
        %3227 = vst.msk [vmem:[%s3203 + $0x20e0] sm:$0xff] %vm1978, %v3191
        %3228 = vst.msk [vmem:[%s3203 + $0x20e8] sm:$0xff] %vm1978, %v3192
        %3229 = vst.msk [vmem:[%s3203 + $0x20f0] sm:$0xff] %vm1978, %v3193
        %3230 = vst.msk [vmem:[%s3203 + $0x20f8] sm:$0xff] %vm1978, %v3194
        %3231 = vst.msk [vmem:[%s3203 + $0x2100] sm:$0x3] %vm1985, %v3195
        %3232 = vst.msk [vmem:[%s3203 + $0x2bc0] sm:$0xff] %vm1978, %v3196
        %3233 = vst.msk [vmem:[%s3203 + $0x2bc8] sm:$0xff] %vm1978, %v3197
        %3234 = vst.msk [vmem:[%s3203 + $0x2bd0] sm:$0xff] %vm1978, %v3198
        %3235 = vst.msk [vmem:[%s3203 + $0x2bd8] sm:$0xff] %vm1978, %v3199
        %3236 = vst.msk [vmem:[%s3203 + $0x2be0] sm:$0xff] %vm1978, %v3200
        %3237 = vst.msk [vmem:[%s3203 + $0x2be8] sm:$0xff] %vm1978, %v3201
        %3238 = vst.msk [vmem:[%s3203 + $0x2bf0] sm:$0x3] %vm1985, %v3202
        %s3239 = scalar_lea.vmem %s1885, 1512 [#allocation3]
        %3240 = vst.msk [vmem:[%s3239] sm:$0xff] %vm1978, %v1925
        %3241 = vst.msk [vmem:[%s3239 + $0x8] sm:$0xff] %vm1978, %v1925
        %3242 = vst.msk [vmem:[%s3239 + $0x10] sm:$0xff] %vm1978, %v1925
        %3243 = vst.msk [vmem:[%s3239 + $0x18] sm:$0xff] %vm1978, %v1925
        %3244 = vst.msk [vmem:[%s3239 + $0x20] sm:$0xff] %vm1978, %v1925
        %3245 = vst.msk [vmem:[%s3239 + $0x28] sm:$0xff] %vm1978, %v1925
        %3246 = vst.msk [vmem:[%s3239 + $0x30] sm:$0x3] %vm1985, %v1925
        %3247 = vst.msk [vmem:[%s3239 + $0xaf0] sm:$0xff] %vm1978, %v1929
        %3248 = vst.msk [vmem:[%s3239 + $0xaf8] sm:$0xff] %vm1978, %v1929
        %3249 = vst.msk [vmem:[%s3239 + $0xb00] sm:$0xff] %vm1978, %v1929
        %3250 = vst.msk [vmem:[%s3239 + $0xb08] sm:$0xff] %vm1978, %v1929
        %3251 = vst.msk [vmem:[%s3239 + $0xb10] sm:$0xff] %vm1978, %v1929
        %3252 = vst.msk [vmem:[%s3239 + $0xb18] sm:$0xff] %vm1978, %v1929
        %3253 = vst.msk [vmem:[%s3239 + $0xb20] sm:$0x3] %vm1985, %v1929
        %3254 = vst.msk [vmem:[%s3239 + $0x15e0] sm:$0xff] %vm1978, %v1933
        %3255 = vst.msk [vmem:[%s3239 + $0x15e8] sm:$0xff] %vm1978, %v1933
        %3256 = vst.msk [vmem:[%s3239 + $0x15f0] sm:$0xff] %vm1978, %v1933
        %3257 = vst.msk [vmem:[%s3239 + $0x15f8] sm:$0xff] %vm1978, %v1933
        %3258 = vst.msk [vmem:[%s3239 + $0x1600] sm:$0xff] %vm1978, %v1933
        %3259 = vst.msk [vmem:[%s3239 + $0x1608] sm:$0xff] %vm1978, %v1933
        %3260 = vst.msk [vmem:[%s3239 + $0x1610] sm:$0x3] %vm1985, %v1933
        %3261 = vst.msk [vmem:[%s3239 + $0x20d0] sm:$0xff] %vm1978, %v1937
        %3262 = vst.msk [vmem:[%s3239 + $0x20d8] sm:$0xff] %vm1978, %v1937
        %3263 = vst.msk [vmem:[%s3239 + $0x20e0] sm:$0xff] %vm1978, %v1937
        %3264 = vst.msk [vmem:[%s3239 + $0x20e8] sm:$0xff] %vm1978, %v1937
        %3265 = vst.msk [vmem:[%s3239 + $0x20f0] sm:$0xff] %vm1978, %v1937
        %3266 = vst.msk [vmem:[%s3239 + $0x20f8] sm:$0xff] %vm1978, %v1937
        %3267 = vst.msk [vmem:[%s3239 + $0x2100] sm:$0x3] %vm1985, %v1937
        %3268 = vst.msk [vmem:[%s3239 + $0x2bc0] sm:$0xff] %vm1978, %v1941
        %3269 = vst.msk [vmem:[%s3239 + $0x2bc8] sm:$0xff] %vm1978, %v1941
        %3270 = vst.msk [vmem:[%s3239 + $0x2bd0] sm:$0xff] %vm1978, %v1941
        %3271 = vst.msk [vmem:[%s3239 + $0x2bd8] sm:$0xff] %vm1978, %v1941
        %3272 = vst.msk [vmem:[%s3239 + $0x2be0] sm:$0xff] %vm1978, %v1941
        %3273 = vst.msk [vmem:[%s3239 + $0x2be8] sm:$0xff] %vm1978, %v1941
        %3274 = vst.msk [vmem:[%s3239 + $0x2bf0] sm:$0x3] %vm1985, %v1941
        %s3275 = scalar_lea.vmem %s1885, 1568 [#allocation3]
        %3276 = vst.msk [vmem:[%s3275] sm:$0xff] %vm1978, %v1925
        %3277 = vst.msk [vmem:[%s3275 + $0x8] sm:$0xff] %vm1978, %v1925
        %3278 = vst.msk [vmem:[%s3275 + $0x10] sm:$0xff] %vm1978, %v1925
        %3279 = vst.msk [vmem:[%s3275 + $0x18] sm:$0xff] %vm1978, %v1925
        %3280 = vst.msk [vmem:[%s3275 + $0x20] sm:$0xff] %vm1978, %v1925
        %3281 = vst.msk [vmem:[%s3275 + $0x28] sm:$0xff] %vm1978, %v1925
        %3282 = vst.msk [vmem:[%s3275 + $0x30] sm:$0x3] %vm1985, %v1925
        %3283 = vst.msk [vmem:[%s3275 + $0xaf0] sm:$0xff] %vm1978, %v1929
        %3284 = vst.msk [vmem:[%s3275 + $0xaf8] sm:$0xff] %vm1978, %v1929
        %3285 = vst.msk [vmem:[%s3275 + $0xb00] sm:$0xff] %vm1978, %v1929
        %3286 = vst.msk [vmem:[%s3275 + $0xb08] sm:$0xff] %vm1978, %v1929
        %3287 = vst.msk [vmem:[%s3275 + $0xb10] sm:$0xff] %vm1978, %v1929
        %3288 = vst.msk [vmem:[%s3275 + $0xb18] sm:$0xff] %vm1978, %v1929
        %3289 = vst.msk [vmem:[%s3275 + $0xb20] sm:$0x3] %vm1985, %v1929
        %3290 = vst.msk [vmem:[%s3275 + $0x15e0] sm:$0xff] %vm1978, %v1933
        %3291 = vst.msk [vmem:[%s3275 + $0x15e8] sm:$0xff] %vm1978, %v1933
        %3292 = vst.msk [vmem:[%s3275 + $0x15f0] sm:$0xff] %vm1978, %v1933
        %3293 = vst.msk [vmem:[%s3275 + $0x15f8] sm:$0xff] %vm1978, %v1933
        %3294 = vst.msk [vmem:[%s3275 + $0x1600] sm:$0xff] %vm1978, %v1933
        %3295 = vst.msk [vmem:[%s3275 + $0x1608] sm:$0xff] %vm1978, %v1933
        %3296 = vst.msk [vmem:[%s3275 + $0x1610] sm:$0x3] %vm1985, %v1933
        %3297 = vst.msk [vmem:[%s3275 + $0x20d0] sm:$0xff] %vm1978, %v1937
        %3298 = vst.msk [vmem:[%s3275 + $0x20d8] sm:$0xff] %vm1978, %v1937
        %3299 = vst.msk [vmem:[%s3275 + $0x20e0] sm:$0xff] %vm1978, %v1937
        %3300 = vst.msk [vmem:[%s3275 + $0x20e8] sm:$0xff] %vm1978, %v1937
        %3301 = vst.msk [vmem:[%s3275 + $0x20f0] sm:$0xff] %vm1978, %v1937
        %3302 = vst.msk [vmem:[%s3275 + $0x20f8] sm:$0xff] %vm1978, %v1937
        %3303 = vst.msk [vmem:[%s3275 + $0x2100] sm:$0x3] %vm1985, %v1937
        %3304 = vst.msk [vmem:[%s3275 + $0x2bc0] sm:$0xff] %vm1978, %v1941
        %3305 = vst.msk [vmem:[%s3275 + $0x2bc8] sm:$0xff] %vm1978, %v1941
        %3306 = vst.msk [vmem:[%s3275 + $0x2bd0] sm:$0xff] %vm1978, %v1941
        %3307 = vst.msk [vmem:[%s3275 + $0x2bd8] sm:$0xff] %vm1978, %v1941
        %3308 = vst.msk [vmem:[%s3275 + $0x2be0] sm:$0xff] %vm1978, %v1941
        %3309 = vst.msk [vmem:[%s3275 + $0x2be8] sm:$0xff] %vm1978, %v1941
        %3310 = vst.msk [vmem:[%s3275 + $0x2bf0] sm:$0x3] %vm1985, %v1941
        %s3311 = scalar_lea.vmem %s1885, 1624 [#allocation3]
        %3312 = vst.msk [vmem:[%s3311] sm:$0xff] %vm1978, %v1925
        %3313 = vst.msk [vmem:[%s3311 + $0x8] sm:$0xff] %vm1978, %v1925
        %3314 = vst.msk [vmem:[%s3311 + $0x10] sm:$0xff] %vm1978, %v1925
        %3315 = vst.msk [vmem:[%s3311 + $0x18] sm:$0xff] %vm1978, %v1925
        %3316 = vst.msk [vmem:[%s3311 + $0x20] sm:$0xff] %vm1978, %v1925
        %3317 = vst.msk [vmem:[%s3311 + $0x28] sm:$0xff] %vm1978, %v1925
        %3318 = vst.msk [vmem:[%s3311 + $0x30] sm:$0x3] %vm1985, %v1925
        %3319 = vst.msk [vmem:[%s3311 + $0xaf0] sm:$0xff] %vm1978, %v1929
        %3320 = vst.msk [vmem:[%s3311 + $0xaf8] sm:$0xff] %vm1978, %v1929
        %3321 = vst.msk [vmem:[%s3311 + $0xb00] sm:$0xff] %vm1978, %v1929
        %3322 = vst.msk [vmem:[%s3311 + $0xb08] sm:$0xff] %vm1978, %v1929
        %3323 = vst.msk [vmem:[%s3311 + $0xb10] sm:$0xff] %vm1978, %v1929
        %3324 = vst.msk [vmem:[%s3311 + $0xb18] sm:$0xff] %vm1978, %v1929
        %3325 = vst.msk [vmem:[%s3311 + $0xb20] sm:$0x3] %vm1985, %v1929
        %3326 = vst.msk [vmem:[%s3311 + $0x15e0] sm:$0xff] %vm1978, %v1933
        %3327 = vst.msk [vmem:[%s3311 + $0x15e8] sm:$0xff] %vm1978, %v1933
        %3328 = vst.msk [vmem:[%s3311 + $0x15f0] sm:$0xff] %vm1978, %v1933
        %3329 = vst.msk [vmem:[%s3311 + $0x15f8] sm:$0xff] %vm1978, %v1933
        %3330 = vst.msk [vmem:[%s3311 + $0x1600] sm:$0xff] %vm1978, %v1933
        %3331 = vst.msk [vmem:[%s3311 + $0x1608] sm:$0xff] %vm1978, %v1933
        %3332 = vst.msk [vmem:[%s3311 + $0x1610] sm:$0x3] %vm1985, %v1933
        %3333 = vst.msk [vmem:[%s3311 + $0x20d0] sm:$0xff] %vm1978, %v1937
        %3334 = vst.msk [vmem:[%s3311 + $0x20d8] sm:$0xff] %vm1978, %v1937
        %3335 = vst.msk [vmem:[%s3311 + $0x20e0] sm:$0xff] %vm1978, %v1937
        %3336 = vst.msk [vmem:[%s3311 + $0x20e8] sm:$0xff] %vm1978, %v1937
        %3337 = vst.msk [vmem:[%s3311 + $0x20f0] sm:$0xff] %vm1978, %v1937
        %3338 = vst.msk [vmem:[%s3311 + $0x20f8] sm:$0xff] %vm1978, %v1937
        %3339 = vst.msk [vmem:[%s3311 + $0x2100] sm:$0x3] %vm1985, %v1937
        %3340 = vst.msk [vmem:[%s3311 + $0x2bc0] sm:$0xff] %vm1978, %v1941
        %3341 = vst.msk [vmem:[%s3311 + $0x2bc8] sm:$0xff] %vm1978, %v1941
        %3342 = vst.msk [vmem:[%s3311 + $0x2bd0] sm:$0xff] %vm1978, %v1941
        %3343 = vst.msk [vmem:[%s3311 + $0x2bd8] sm:$0xff] %vm1978, %v1941
        %3344 = vst.msk [vmem:[%s3311 + $0x2be0] sm:$0xff] %vm1978, %v1941
        %3345 = vst.msk [vmem:[%s3311 + $0x2be8] sm:$0xff] %vm1978, %v1941
        %3346 = vst.msk [vmem:[%s3311 + $0x2bf0] sm:$0x3] %vm1985, %v1941
        %s3347 = scalar_lea.vmem %s1885, 1680 [#allocation3]
        %3348 = vst.msk [vmem:[%s3347] sm:$0xff] %vm1978, %v1925
        %3349 = vst.msk [vmem:[%s3347 + $0x8] sm:$0xff] %vm1978, %v1925
        %3350 = vst.msk [vmem:[%s3347 + $0x10] sm:$0xff] %vm1978, %v1925
        %3351 = vst.msk [vmem:[%s3347 + $0x18] sm:$0xff] %vm1978, %v1925
        %3352 = vst.msk [vmem:[%s3347 + $0x20] sm:$0xff] %vm1978, %v1925
        %3353 = vst.msk [vmem:[%s3347 + $0x28] sm:$0xff] %vm1978, %v1925
        %3354 = vst.msk [vmem:[%s3347 + $0x30] sm:$0x3] %vm1985, %v1925
        %3355 = vst.msk [vmem:[%s3347 + $0xaf0] sm:$0xff] %vm1978, %v1929
        %3356 = vst.msk [vmem:[%s3347 + $0xaf8] sm:$0xff] %vm1978, %v1929
        %3357 = vst.msk [vmem:[%s3347 + $0xb00] sm:$0xff] %vm1978, %v1929
        %3358 = vst.msk [vmem:[%s3347 + $0xb08] sm:$0xff] %vm1978, %v1929
        %3359 = vst.msk [vmem:[%s3347 + $0xb10] sm:$0xff] %vm1978, %v1929
        %3360 = vst.msk [vmem:[%s3347 + $0xb18] sm:$0xff] %vm1978, %v1929
        %3361 = vst.msk [vmem:[%s3347 + $0xb20] sm:$0x3] %vm1985, %v1929
        %3362 = vst.msk [vmem:[%s3347 + $0x15e0] sm:$0xff] %vm1978, %v1933
        %3363 = vst.msk [vmem:[%s3347 + $0x15e8] sm:$0xff] %vm1978, %v1933
        %3364 = vst.msk [vmem:[%s3347 + $0x15f0] sm:$0xff] %vm1978, %v1933
        %3365 = vst.msk [vmem:[%s3347 + $0x15f8] sm:$0xff] %vm1978, %v1933
        %3366 = vst.msk [vmem:[%s3347 + $0x1600] sm:$0xff] %vm1978, %v1933
        %3367 = vst.msk [vmem:[%s3347 + $0x1608] sm:$0xff] %vm1978, %v1933
        %3368 = vst.msk [vmem:[%s3347 + $0x1610] sm:$0x3] %vm1985, %v1933
        %3369 = vst.msk [vmem:[%s3347 + $0x20d0] sm:$0xff] %vm1978, %v1937
        %3370 = vst.msk [vmem:[%s3347 + $0x20d8] sm:$0xff] %vm1978, %v1937
        %3371 = vst.msk [vmem:[%s3347 + $0x20e0] sm:$0xff] %vm1978, %v1937
        %3372 = vst.msk [vmem:[%s3347 + $0x20e8] sm:$0xff] %vm1978, %v1937
        %3373 = vst.msk [vmem:[%s3347 + $0x20f0] sm:$0xff] %vm1978, %v1937
        %3374 = vst.msk [vmem:[%s3347 + $0x20f8] sm:$0xff] %vm1978, %v1937
        %3375 = vst.msk [vmem:[%s3347 + $0x2100] sm:$0x3] %vm1985, %v1937
        %3376 = vst.msk [vmem:[%s3347 + $0x2bc0] sm:$0xff] %vm1978, %v1941
        %3377 = vst.msk [vmem:[%s3347 + $0x2bc8] sm:$0xff] %vm1978, %v1941
        %3378 = vst.msk [vmem:[%s3347 + $0x2bd0] sm:$0xff] %vm1978, %v1941
        %3379 = vst.msk [vmem:[%s3347 + $0x2bd8] sm:$0xff] %vm1978, %v1941
        %3380 = vst.msk [vmem:[%s3347 + $0x2be0] sm:$0xff] %vm1978, %v1941
        %3381 = vst.msk [vmem:[%s3347 + $0x2be8] sm:$0xff] %vm1978, %v1941
        %3382 = vst.msk [vmem:[%s3347 + $0x2bf0] sm:$0x3] %vm1985, %v1941
        %s3383 = scalar_lea.vmem %s1885, 1736 [#allocation3]
        %3384 = vst.msk [vmem:[%s3383] sm:$0xff] %vm1978, %v1925
        %3385 = vst.msk [vmem:[%s3383 + $0x8] sm:$0xff] %vm1978, %v1925
        %3386 = vst.msk [vmem:[%s3383 + $0x10] sm:$0xff] %vm1978, %v1925
        %3387 = vst.msk [vmem:[%s3383 + $0x18] sm:$0xff] %vm1978, %v1925
        %3388 = vst.msk [vmem:[%s3383 + $0x20] sm:$0xff] %vm1978, %v1925
        %3389 = vst.msk [vmem:[%s3383 + $0x28] sm:$0xff] %vm1978, %v1925
        %3390 = vst.msk [vmem:[%s3383 + $0x30] sm:$0x3] %vm1985, %v1925
        %3391 = vst.msk [vmem:[%s3383 + $0xaf0] sm:$0xff] %vm1978, %v1929
        %3392 = vst.msk [vmem:[%s3383 + $0xaf8] sm:$0xff] %vm1978, %v1929
        %3393 = vst.msk [vmem:[%s3383 + $0xb00] sm:$0xff] %vm1978, %v1929
        %3394 = vst.msk [vmem:[%s3383 + $0xb08] sm:$0xff] %vm1978, %v1929
        %3395 = vst.msk [vmem:[%s3383 + $0xb10] sm:$0xff] %vm1978, %v1929
        %3396 = vst.msk [vmem:[%s3383 + $0xb18] sm:$0xff] %vm1978, %v1929
        %3397 = vst.msk [vmem:[%s3383 + $0xb20] sm:$0x3] %vm1985, %v1929
        %3398 = vst.msk [vmem:[%s3383 + $0x15e0] sm:$0xff] %vm1978, %v1933
        %3399 = vst.msk [vmem:[%s3383 + $0x15e8] sm:$0xff] %vm1978, %v1933
        %3400 = vst.msk [vmem:[%s3383 + $0x15f0] sm:$0xff] %vm1978, %v1933
        %3401 = vst.msk [vmem:[%s3383 + $0x15f8] sm:$0xff] %vm1978, %v1933
        %3402 = vst.msk [vmem:[%s3383 + $0x1600] sm:$0xff] %vm1978, %v1933
        %3403 = vst.msk [vmem:[%s3383 + $0x1608] sm:$0xff] %vm1978, %v1933
        %3404 = vst.msk [vmem:[%s3383 + $0x1610] sm:$0x3] %vm1985, %v1933
        %3405 = vst.msk [vmem:[%s3383 + $0x20d0] sm:$0xff] %vm1978, %v1937
        %3406 = vst.msk [vmem:[%s3383 + $0x20d8] sm:$0xff] %vm1978, %v1937
        %3407 = vst.msk [vmem:[%s3383 + $0x20e0] sm:$0xff] %vm1978, %v1937
        %3408 = vst.msk [vmem:[%s3383 + $0x20e8] sm:$0xff] %vm1978, %v1937
        %3409 = vst.msk [vmem:[%s3383 + $0x20f0] sm:$0xff] %vm1978, %v1937
        %3410 = vst.msk [vmem:[%s3383 + $0x20f8] sm:$0xff] %vm1978, %v1937
        %3411 = vst.msk [vmem:[%s3383 + $0x2100] sm:$0x3] %vm1985, %v1937
        %3412 = vst.msk [vmem:[%s3383 + $0x2bc0] sm:$0xff] %vm1978, %v1941
        %3413 = vst.msk [vmem:[%s3383 + $0x2bc8] sm:$0xff] %vm1978, %v1941
        %3414 = vst.msk [vmem:[%s3383 + $0x2bd0] sm:$0xff] %vm1978, %v1941
        %3415 = vst.msk [vmem:[%s3383 + $0x2bd8] sm:$0xff] %vm1978, %v1941
        %3416 = vst.msk [vmem:[%s3383 + $0x2be0] sm:$0xff] %vm1978, %v1941
        %3417 = vst.msk [vmem:[%s3383 + $0x2be8] sm:$0xff] %vm1978, %v1941
        %3418 = vst.msk [vmem:[%s3383 + $0x2bf0] sm:$0x3] %vm1985, %v1941
        %s3419 = scalar_lea.vmem %s1885, 1792 [#allocation3]
        %3420 = vst.msk [vmem:[%s3419] sm:$0xff] %vm1978, %v1925
        %3421 = vst.msk [vmem:[%s3419 + $0x8] sm:$0xff] %vm1978, %v1925
        %3422 = vst.msk [vmem:[%s3419 + $0x10] sm:$0xff] %vm1978, %v1925
        %3423 = vst.msk [vmem:[%s3419 + $0x18] sm:$0xff] %vm1978, %v1925
        %3424 = vst.msk [vmem:[%s3419 + $0x20] sm:$0xff] %vm1978, %v1925
        %3425 = vst.msk [vmem:[%s3419 + $0x28] sm:$0xff] %vm1978, %v1925
        %3426 = vst.msk [vmem:[%s3419 + $0x30] sm:$0x3] %vm1985, %v1925
        %3427 = vst.msk [vmem:[%s3419 + $0xaf0] sm:$0xff] %vm1978, %v1929
        %3428 = vst.msk [vmem:[%s3419 + $0xaf8] sm:$0xff] %vm1978, %v1929
        %3429 = vst.msk [vmem:[%s3419 + $0xb00] sm:$0xff] %vm1978, %v1929
        %3430 = vst.msk [vmem:[%s3419 + $0xb08] sm:$0xff] %vm1978, %v1929
        %3431 = vst.msk [vmem:[%s3419 + $0xb10] sm:$0xff] %vm1978, %v1929
        %3432 = vst.msk [vmem:[%s3419 + $0xb18] sm:$0xff] %vm1978, %v1929
        %3433 = vst.msk [vmem:[%s3419 + $0xb20] sm:$0x3] %vm1985, %v1929
        %3434 = vst.msk [vmem:[%s3419 + $0x15e0] sm:$0xff] %vm1978, %v1933
        %3435 = vst.msk [vmem:[%s3419 + $0x15e8] sm:$0xff] %vm1978, %v1933
        %3436 = vst.msk [vmem:[%s3419 + $0x15f0] sm:$0xff] %vm1978, %v1933
        %3437 = vst.msk [vmem:[%s3419 + $0x15f8] sm:$0xff] %vm1978, %v1933
        %3438 = vst.msk [vmem:[%s3419 + $0x1600] sm:$0xff] %vm1978, %v1933
        %3439 = vst.msk [vmem:[%s3419 + $0x1608] sm:$0xff] %vm1978, %v1933
        %3440 = vst.msk [vmem:[%s3419 + $0x1610] sm:$0x3] %vm1985, %v1933
        %3441 = vst.msk [vmem:[%s3419 + $0x20d0] sm:$0xff] %vm1978, %v1937
        %3442 = vst.msk [vmem:[%s3419 + $0x20d8] sm:$0xff] %vm1978, %v1937
        %3443 = vst.msk [vmem:[%s3419 + $0x20e0] sm:$0xff] %vm1978, %v1937
        %3444 = vst.msk [vmem:[%s3419 + $0x20e8] sm:$0xff] %vm1978, %v1937
        %3445 = vst.msk [vmem:[%s3419 + $0x20f0] sm:$0xff] %vm1978, %v1937
        %3446 = vst.msk [vmem:[%s3419 + $0x20f8] sm:$0xff] %vm1978, %v1937
        %3447 = vst.msk [vmem:[%s3419 + $0x2100] sm:$0x3] %vm1985, %v1937
        %3448 = vst.msk [vmem:[%s3419 + $0x2bc0] sm:$0xff] %vm1978, %v1941
        %3449 = vst.msk [vmem:[%s3419 + $0x2bc8] sm:$0xff] %vm1978, %v1941
        %3450 = vst.msk [vmem:[%s3419 + $0x2bd0] sm:$0xff] %vm1978, %v1941
        %3451 = vst.msk [vmem:[%s3419 + $0x2bd8] sm:$0xff] %vm1978, %v1941
        %3452 = vst.msk [vmem:[%s3419 + $0x2be0] sm:$0xff] %vm1978, %v1941
        %3453 = vst.msk [vmem:[%s3419 + $0x2be8] sm:$0xff] %vm1978, %v1941
        %3454 = vst.msk [vmem:[%s3419 + $0x2bf0] sm:$0x3] %vm1985, %v1941
        %s3455 = scalar_lea.vmem %s1863, 2520 [#allocation2]
        %v3456 = vld [vmem:[%s3455] sm:$0xff]
        %v3457 = vld [vmem:[%s3455 + $0x8] sm:$0xff]
        %v3458 = vld [vmem:[%s3455 + $0x10] sm:$0xff]
        %v3459 = vld [vmem:[%s3455 + $0x18] sm:$0xff]
        %v3460 = vld [vmem:[%s3455 + $0x20] sm:$0xff]
        %v3461 = vld [vmem:[%s3455 + $0x28] sm:$0xff]
        %v3462 = vld [vmem:[%s3455 + $0x30] sm:$0x3]
        %v3463 = vld [vmem:[%s3455 + $0x38] sm:$0xff]
        %v3464 = vld [vmem:[%s3455 + $0x40] sm:$0xff]
        %v3465 = vld [vmem:[%s3455 + $0x48] sm:$0xff]
        %v3466 = vld [vmem:[%s3455 + $0x50] sm:$0xff]
        %v3467 = vld [vmem:[%s3455 + $0x58] sm:$0xff]
        %v3468 = vld [vmem:[%s3455 + $0x60] sm:$0xff]
        %v3469 = vld [vmem:[%s3455 + $0x68] sm:$0x3]
        %v3470 = vld [vmem:[%s3455 + $0x70] sm:$0xff]
        %v3471 = vld [vmem:[%s3455 + $0x78] sm:$0xff]
        %v3472 = vld [vmem:[%s3455 + $0x80] sm:$0xff]
        %v3473 = vld [vmem:[%s3455 + $0x88] sm:$0xff]
        %v3474 = vld [vmem:[%s3455 + $0x90] sm:$0xff]
        %v3475 = vld [vmem:[%s3455 + $0x98] sm:$0xff]
        %v3476 = vld [vmem:[%s3455 + $0xa0] sm:$0x3]
        %v3477 = vld [vmem:[%s3455 + $0xa8] sm:$0xff]
        %v3478 = vld [vmem:[%s3455 + $0xb0] sm:$0xff]
        %v3479 = vld [vmem:[%s3455 + $0xb8] sm:$0xff]
        %v3480 = vld [vmem:[%s3455 + $0xc0] sm:$0xff]
        %v3481 = vld [vmem:[%s3455 + $0xc8] sm:$0xff]
        %v3482 = vld [vmem:[%s3455 + $0xd0] sm:$0xff]
        %v3483 = vld [vmem:[%s3455 + $0xd8] sm:$0x3]
        %v3484 = vld [vmem:[%s3455 + $0xe0] sm:$0xff]
        %v3485 = vld [vmem:[%s3455 + $0xe8] sm:$0xff]
        %v3486 = vld [vmem:[%s3455 + $0xf0] sm:$0xff]
        %v3487 = vld [vmem:[%s3455 + $0xf8] sm:$0xff]
        %v3488 = vld [vmem:[%s3455 + $0x100] sm:$0xff]
        %v3489 = vld [vmem:[%s3455 + $0x108] sm:$0xff]
        %v3490 = vld [vmem:[%s3455 + $0x110] sm:$0x3]
        %s3491 = scalar_lea.vmem %s1885, 1848 [#allocation3]
        %3492 = vst.msk [vmem:[%s3491] sm:$0xff] %vm1978, %v3456
        %3493 = vst.msk [vmem:[%s3491 + $0x8] sm:$0xff] %vm1978, %v3457
        %3494 = vst.msk [vmem:[%s3491 + $0x10] sm:$0xff] %vm1978, %v3458
        %3495 = vst.msk [vmem:[%s3491 + $0x18] sm:$0xff] %vm1978, %v3459
        %3496 = vst.msk [vmem:[%s3491 + $0x20] sm:$0xff] %vm1978, %v3460
        %3497 = vst.msk [vmem:[%s3491 + $0x28] sm:$0xff] %vm1978, %v3461
        %3498 = vst.msk [vmem:[%s3491 + $0x30] sm:$0x3] %vm1985, %v3462
        %3499 = vst.msk [vmem:[%s3491 + $0xaf0] sm:$0xff] %vm1978, %v3463
        %3500 = vst.msk [vmem:[%s3491 + $0xaf8] sm:$0xff] %vm1978, %v3464
        %3501 = vst.msk [vmem:[%s3491 + $0xb00] sm:$0xff] %vm1978, %v3465
        %3502 = vst.msk [vmem:[%s3491 + $0xb08] sm:$0xff] %vm1978, %v3466
        %3503 = vst.msk [vmem:[%s3491 + $0xb10] sm:$0xff] %vm1978, %v3467
        %3504 = vst.msk [vmem:[%s3491 + $0xb18] sm:$0xff] %vm1978, %v3468
        %3505 = vst.msk [vmem:[%s3491 + $0xb20] sm:$0x3] %vm1985, %v3469
        %3506 = vst.msk [vmem:[%s3491 + $0x15e0] sm:$0xff] %vm1978, %v3470
        %3507 = vst.msk [vmem:[%s3491 + $0x15e8] sm:$0xff] %vm1978, %v3471
        %3508 = vst.msk [vmem:[%s3491 + $0x15f0] sm:$0xff] %vm1978, %v3472
        %3509 = vst.msk [vmem:[%s3491 + $0x15f8] sm:$0xff] %vm1978, %v3473
        %3510 = vst.msk [vmem:[%s3491 + $0x1600] sm:$0xff] %vm1978, %v3474
        %3511 = vst.msk [vmem:[%s3491 + $0x1608] sm:$0xff] %vm1978, %v3475
        %3512 = vst.msk [vmem:[%s3491 + $0x1610] sm:$0x3] %vm1985, %v3476
        %3513 = vst.msk [vmem:[%s3491 + $0x20d0] sm:$0xff] %vm1978, %v3477
        %3514 = vst.msk [vmem:[%s3491 + $0x20d8] sm:$0xff] %vm1978, %v3478
        %3515 = vst.msk [vmem:[%s3491 + $0x20e0] sm:$0xff] %vm1978, %v3479
        %3516 = vst.msk [vmem:[%s3491 + $0x20e8] sm:$0xff] %vm1978, %v3480
        %3517 = vst.msk [vmem:[%s3491 + $0x20f0] sm:$0xff] %vm1978, %v3481
        %3518 = vst.msk [vmem:[%s3491 + $0x20f8] sm:$0xff] %vm1978, %v3482
        %3519 = vst.msk [vmem:[%s3491 + $0x2100] sm:$0x3] %vm1985, %v3483
        %3520 = vst.msk [vmem:[%s3491 + $0x2bc0] sm:$0xff] %vm1978, %v3484
        %3521 = vst.msk [vmem:[%s3491 + $0x2bc8] sm:$0xff] %vm1978, %v3485
        %3522 = vst.msk [vmem:[%s3491 + $0x2bd0] sm:$0xff] %vm1978, %v3486
        %3523 = vst.msk [vmem:[%s3491 + $0x2bd8] sm:$0xff] %vm1978, %v3487
        %3524 = vst.msk [vmem:[%s3491 + $0x2be0] sm:$0xff] %vm1978, %v3488
        %3525 = vst.msk [vmem:[%s3491 + $0x2be8] sm:$0xff] %vm1978, %v3489
        %3526 = vst.msk [vmem:[%s3491 + $0x2bf0] sm:$0x3] %vm1985, %v3490
        %s3527 = scalar_lea.vmem %s1885, 1904 [#allocation3]
        %3528 = vst.msk [vmem:[%s3527] sm:$0xff] %vm1978, %v1925
        %3529 = vst.msk [vmem:[%s3527 + $0x8] sm:$0xff] %vm1978, %v1925
        %3530 = vst.msk [vmem:[%s3527 + $0x10] sm:$0xff] %vm1978, %v1925
        %3531 = vst.msk [vmem:[%s3527 + $0x18] sm:$0xff] %vm1978, %v1925
        %3532 = vst.msk [vmem:[%s3527 + $0x20] sm:$0xff] %vm1978, %v1925
        %3533 = vst.msk [vmem:[%s3527 + $0x28] sm:$0xff] %vm1978, %v1925
        %3534 = vst.msk [vmem:[%s3527 + $0x30] sm:$0x3] %vm1985, %v1925
        %3535 = vst.msk [vmem:[%s3527 + $0xaf0] sm:$0xff] %vm1978, %v1929
        %3536 = vst.msk [vmem:[%s3527 + $0xaf8] sm:$0xff] %vm1978, %v1929
        %3537 = vst.msk [vmem:[%s3527 + $0xb00] sm:$0xff] %vm1978, %v1929
        %3538 = vst.msk [vmem:[%s3527 + $0xb08] sm:$0xff] %vm1978, %v1929
        %3539 = vst.msk [vmem:[%s3527 + $0xb10] sm:$0xff] %vm1978, %v1929
        %3540 = vst.msk [vmem:[%s3527 + $0xb18] sm:$0xff] %vm1978, %v1929
        %3541 = vst.msk [vmem:[%s3527 + $0xb20] sm:$0x3] %vm1985, %v1929
        %3542 = vst.msk [vmem:[%s3527 + $0x15e0] sm:$0xff] %vm1978, %v1933
        %3543 = vst.msk [vmem:[%s3527 + $0x15e8] sm:$0xff] %vm1978, %v1933
        %3544 = vst.msk [vmem:[%s3527 + $0x15f0] sm:$0xff] %vm1978, %v1933
        %3545 = vst.msk [vmem:[%s3527 + $0x15f8] sm:$0xff] %vm1978, %v1933
        %3546 = vst.msk [vmem:[%s3527 + $0x1600] sm:$0xff] %vm1978, %v1933
        %3547 = vst.msk [vmem:[%s3527 + $0x1608] sm:$0xff] %vm1978, %v1933
        %3548 = vst.msk [vmem:[%s3527 + $0x1610] sm:$0x3] %vm1985, %v1933
        %3549 = vst.msk [vmem:[%s3527 + $0x20d0] sm:$0xff] %vm1978, %v1937
        %3550 = vst.msk [vmem:[%s3527 + $0x20d8] sm:$0xff] %vm1978, %v1937
        %3551 = vst.msk [vmem:[%s3527 + $0x20e0] sm:$0xff] %vm1978, %v1937
        %3552 = vst.msk [vmem:[%s3527 + $0x20e8] sm:$0xff] %vm1978, %v1937
        %3553 = vst.msk [vmem:[%s3527 + $0x20f0] sm:$0xff] %vm1978, %v1937
        %3554 = vst.msk [vmem:[%s3527 + $0x20f8] sm:$0xff] %vm1978, %v1937
        %3555 = vst.msk [vmem:[%s3527 + $0x2100] sm:$0x3] %vm1985, %v1937
        %3556 = vst.msk [vmem:[%s3527 + $0x2bc0] sm:$0xff] %vm1978, %v1941
        %3557 = vst.msk [vmem:[%s3527 + $0x2bc8] sm:$0xff] %vm1978, %v1941
        %3558 = vst.msk [vmem:[%s3527 + $0x2bd0] sm:$0xff] %vm1978, %v1941
        %3559 = vst.msk [vmem:[%s3527 + $0x2bd8] sm:$0xff] %vm1978, %v1941
        %3560 = vst.msk [vmem:[%s3527 + $0x2be0] sm:$0xff] %vm1978, %v1941
        %3561 = vst.msk [vmem:[%s3527 + $0x2be8] sm:$0xff] %vm1978, %v1941
        %3562 = vst.msk [vmem:[%s3527 + $0x2bf0] sm:$0x3] %vm1985, %v1941
        %s3563 = scalar_lea.vmem %s1863, 2800 [#allocation2]
        %v3564 = vld [vmem:[%s3563] sm:$0xff]
        %v3565 = vld [vmem:[%s3563 + $0x8] sm:$0xff]
        %v3566 = vld [vmem:[%s3563 + $0x10] sm:$0xff]
        %v3567 = vld [vmem:[%s3563 + $0x18] sm:$0xff]
        %v3568 = vld [vmem:[%s3563 + $0x20] sm:$0xff]
        %v3569 = vld [vmem:[%s3563 + $0x28] sm:$0xff]
        %v3570 = vld [vmem:[%s3563 + $0x30] sm:$0x3]
        %v3571 = vld [vmem:[%s3563 + $0x38] sm:$0xff]
        %v3572 = vld [vmem:[%s3563 + $0x40] sm:$0xff]
        %v3573 = vld [vmem:[%s3563 + $0x48] sm:$0xff]
        %v3574 = vld [vmem:[%s3563 + $0x50] sm:$0xff]
        %v3575 = vld [vmem:[%s3563 + $0x58] sm:$0xff]
        %v3576 = vld [vmem:[%s3563 + $0x60] sm:$0xff]
        %v3577 = vld [vmem:[%s3563 + $0x68] sm:$0x3]
        %v3578 = vld [vmem:[%s3563 + $0x70] sm:$0xff]
        %v3579 = vld [vmem:[%s3563 + $0x78] sm:$0xff]
        %v3580 = vld [vmem:[%s3563 + $0x80] sm:$0xff]
        %v3581 = vld [vmem:[%s3563 + $0x88] sm:$0xff]
        %v3582 = vld [vmem:[%s3563 + $0x90] sm:$0xff]
        %v3583 = vld [vmem:[%s3563 + $0x98] sm:$0xff]
        %v3584 = vld [vmem:[%s3563 + $0xa0] sm:$0x3]
        %v3585 = vld [vmem:[%s3563 + $0xa8] sm:$0xff]
        %v3586 = vld [vmem:[%s3563 + $0xb0] sm:$0xff]
        %v3587 = vld [vmem:[%s3563 + $0xb8] sm:$0xff]
        %v3588 = vld [vmem:[%s3563 + $0xc0] sm:$0xff]
        %v3589 = vld [vmem:[%s3563 + $0xc8] sm:$0xff]
        %v3590 = vld [vmem:[%s3563 + $0xd0] sm:$0xff]
        %v3591 = vld [vmem:[%s3563 + $0xd8] sm:$0x3]
        %v3592 = vld [vmem:[%s3563 + $0xe0] sm:$0xff]
        %v3593 = vld [vmem:[%s3563 + $0xe8] sm:$0xff]
        %v3594 = vld [vmem:[%s3563 + $0xf0] sm:$0xff]
        %v3595 = vld [vmem:[%s3563 + $0xf8] sm:$0xff]
        %v3596 = vld [vmem:[%s3563 + $0x100] sm:$0xff]
        %v3597 = vld [vmem:[%s3563 + $0x108] sm:$0xff]
        %v3598 = vld [vmem:[%s3563 + $0x110] sm:$0x3]
        %s3599 = scalar_lea.vmem %s1885, 1960 [#allocation3]
        %3600 = vst.msk [vmem:[%s3599] sm:$0xff] %vm1978, %v3564
        %3601 = vst.msk [vmem:[%s3599 + $0x8] sm:$0xff] %vm1978, %v3565
        %3602 = vst.msk [vmem:[%s3599 + $0x10] sm:$0xff] %vm1978, %v3566
        %3603 = vst.msk [vmem:[%s3599 + $0x18] sm:$0xff] %vm1978, %v3567
        %3604 = vst.msk [vmem:[%s3599 + $0x20] sm:$0xff] %vm1978, %v3568
        %3605 = vst.msk [vmem:[%s3599 + $0x28] sm:$0xff] %vm1978, %v3569
        %3606 = vst.msk [vmem:[%s3599 + $0x30] sm:$0x3] %vm1985, %v3570
        %3607 = vst.msk [vmem:[%s3599 + $0xaf0] sm:$0xff] %vm1978, %v3571
        %3608 = vst.msk [vmem:[%s3599 + $0xaf8] sm:$0xff] %vm1978, %v3572
        %3609 = vst.msk [vmem:[%s3599 + $0xb00] sm:$0xff] %vm1978, %v3573
        %3610 = vst.msk [vmem:[%s3599 + $0xb08] sm:$0xff] %vm1978, %v3574
        %3611 = vst.msk [vmem:[%s3599 + $0xb10] sm:$0xff] %vm1978, %v3575
        %3612 = vst.msk [vmem:[%s3599 + $0xb18] sm:$0xff] %vm1978, %v3576
        %3613 = vst.msk [vmem:[%s3599 + $0xb20] sm:$0x3] %vm1985, %v3577
        %3614 = vst.msk [vmem:[%s3599 + $0x15e0] sm:$0xff] %vm1978, %v3578
        %3615 = vst.msk [vmem:[%s3599 + $0x15e8] sm:$0xff] %vm1978, %v3579
        %3616 = vst.msk [vmem:[%s3599 + $0x15f0] sm:$0xff] %vm1978, %v3580
        %3617 = vst.msk [vmem:[%s3599 + $0x15f8] sm:$0xff] %vm1978, %v3581
        %3618 = vst.msk [vmem:[%s3599 + $0x1600] sm:$0xff] %vm1978, %v3582
        %3619 = vst.msk [vmem:[%s3599 + $0x1608] sm:$0xff] %vm1978, %v3583
        %3620 = vst.msk [vmem:[%s3599 + $0x1610] sm:$0x3] %vm1985, %v3584
        %3621 = vst.msk [vmem:[%s3599 + $0x20d0] sm:$0xff] %vm1978, %v3585
        %3622 = vst.msk [vmem:[%s3599 + $0x20d8] sm:$0xff] %vm1978, %v3586
        %3623 = vst.msk [vmem:[%s3599 + $0x20e0] sm:$0xff] %vm1978, %v3587
        %3624 = vst.msk [vmem:[%s3599 + $0x20e8] sm:$0xff] %vm1978, %v3588
        %3625 = vst.msk [vmem:[%s3599 + $0x20f0] sm:$0xff] %vm1978, %v3589
        %3626 = vst.msk [vmem:[%s3599 + $0x20f8] sm:$0xff] %vm1978, %v3590
        %3627 = vst.msk [vmem:[%s3599 + $0x2100] sm:$0x3] %vm1985, %v3591
        %3628 = vst.msk [vmem:[%s3599 + $0x2bc0] sm:$0xff] %vm1978, %v3592
        %3629 = vst.msk [vmem:[%s3599 + $0x2bc8] sm:$0xff] %vm1978, %v3593
        %3630 = vst.msk [vmem:[%s3599 + $0x2bd0] sm:$0xff] %vm1978, %v3594
        %3631 = vst.msk [vmem:[%s3599 + $0x2bd8] sm:$0xff] %vm1978, %v3595
        %3632 = vst.msk [vmem:[%s3599 + $0x2be0] sm:$0xff] %vm1978, %v3596
        %3633 = vst.msk [vmem:[%s3599 + $0x2be8] sm:$0xff] %vm1978, %v3597
        %3634 = vst.msk [vmem:[%s3599 + $0x2bf0] sm:$0x3] %vm1985, %v3598
        %s3635 = scalar_lea.vmem %s1885, 2016 [#allocation3]
        %3636 = vst.msk [vmem:[%s3635] sm:$0xff] %vm1978, %v1925
        %3637 = vst.msk [vmem:[%s3635 + $0x8] sm:$0xff] %vm1978, %v1925
        %3638 = vst.msk [vmem:[%s3635 + $0x10] sm:$0xff] %vm1978, %v1925
        %3639 = vst.msk [vmem:[%s3635 + $0x18] sm:$0xff] %vm1978, %v1925
        %3640 = vst.msk [vmem:[%s3635 + $0x20] sm:$0xff] %vm1978, %v1925
        %3641 = vst.msk [vmem:[%s3635 + $0x28] sm:$0xff] %vm1978, %v1925
        %3642 = vst.msk [vmem:[%s3635 + $0x30] sm:$0x3] %vm1985, %v1925
        %3643 = vst.msk [vmem:[%s3635 + $0xaf0] sm:$0xff] %vm1978, %v1929
        %3644 = vst.msk [vmem:[%s3635 + $0xaf8] sm:$0xff] %vm1978, %v1929
        %3645 = vst.msk [vmem:[%s3635 + $0xb00] sm:$0xff] %vm1978, %v1929
        %3646 = vst.msk [vmem:[%s3635 + $0xb08] sm:$0xff] %vm1978, %v1929
        %3647 = vst.msk [vmem:[%s3635 + $0xb10] sm:$0xff] %vm1978, %v1929
        %3648 = vst.msk [vmem:[%s3635 + $0xb18] sm:$0xff] %vm1978, %v1929
        %3649 = vst.msk [vmem:[%s3635 + $0xb20] sm:$0x3] %vm1985, %v1929
        %3650 = vst.msk [vmem:[%s3635 + $0x15e0] sm:$0xff] %vm1978, %v1933
        %3651 = vst.msk [vmem:[%s3635 + $0x15e8] sm:$0xff] %vm1978, %v1933
        %3652 = vst.msk [vmem:[%s3635 + $0x15f0] sm:$0xff] %vm1978, %v1933
        %3653 = vst.msk [vmem:[%s3635 + $0x15f8] sm:$0xff] %vm1978, %v1933
        %3654 = vst.msk [vmem:[%s3635 + $0x1600] sm:$0xff] %vm1978, %v1933
        %3655 = vst.msk [vmem:[%s3635 + $0x1608] sm:$0xff] %vm1978, %v1933
        %3656 = vst.msk [vmem:[%s3635 + $0x1610] sm:$0x3] %vm1985, %v1933
        %3657 = vst.msk [vmem:[%s3635 + $0x20d0] sm:$0xff] %vm1978, %v1937
        %3658 = vst.msk [vmem:[%s3635 + $0x20d8] sm:$0xff] %vm1978, %v1937
        %3659 = vst.msk [vmem:[%s3635 + $0x20e0] sm:$0xff] %vm1978, %v1937
        %3660 = vst.msk [vmem:[%s3635 + $0x20e8] sm:$0xff] %vm1978, %v1937
        %3661 = vst.msk [vmem:[%s3635 + $0x20f0] sm:$0xff] %vm1978, %v1937
        %3662 = vst.msk [vmem:[%s3635 + $0x20f8] sm:$0xff] %vm1978, %v1937
        %3663 = vst.msk [vmem:[%s3635 + $0x2100] sm:$0x3] %vm1985, %v1937
        %3664 = vst.msk [vmem:[%s3635 + $0x2bc0] sm:$0xff] %vm1978, %v1941
        %3665 = vst.msk [vmem:[%s3635 + $0x2bc8] sm:$0xff] %vm1978, %v1941
        %3666 = vst.msk [vmem:[%s3635 + $0x2bd0] sm:$0xff] %vm1978, %v1941
        %3667 = vst.msk [vmem:[%s3635 + $0x2bd8] sm:$0xff] %vm1978, %v1941
        %3668 = vst.msk [vmem:[%s3635 + $0x2be0] sm:$0xff] %vm1978, %v1941
        %3669 = vst.msk [vmem:[%s3635 + $0x2be8] sm:$0xff] %vm1978, %v1941
        %3670 = vst.msk [vmem:[%s3635 + $0x2bf0] sm:$0x3] %vm1985, %v1941
        %s3671 = scalar_lea.vmem %s1863, 3080 [#allocation2]
        %v3672 = vld [vmem:[%s3671] sm:$0xff]
        %v3673 = vld [vmem:[%s3671 + $0x8] sm:$0xff]
        %v3674 = vld [vmem:[%s3671 + $0x10] sm:$0xff]
        %v3675 = vld [vmem:[%s3671 + $0x18] sm:$0xff]
        %v3676 = vld [vmem:[%s3671 + $0x20] sm:$0xff]
        %v3677 = vld [vmem:[%s3671 + $0x28] sm:$0xff]
        %v3678 = vld [vmem:[%s3671 + $0x30] sm:$0x3]
        %v3679 = vld [vmem:[%s3671 + $0x38] sm:$0xff]
        %v3680 = vld [vmem:[%s3671 + $0x40] sm:$0xff]
        %v3681 = vld [vmem:[%s3671 + $0x48] sm:$0xff]
        %v3682 = vld [vmem:[%s3671 + $0x50] sm:$0xff]
        %v3683 = vld [vmem:[%s3671 + $0x58] sm:$0xff]
        %v3684 = vld [vmem:[%s3671 + $0x60] sm:$0xff]
        %v3685 = vld [vmem:[%s3671 + $0x68] sm:$0x3]
        %v3686 = vld [vmem:[%s3671 + $0x70] sm:$0xff]
        %v3687 = vld [vmem:[%s3671 + $0x78] sm:$0xff]
        %v3688 = vld [vmem:[%s3671 + $0x80] sm:$0xff]
        %v3689 = vld [vmem:[%s3671 + $0x88] sm:$0xff]
        %v3690 = vld [vmem:[%s3671 + $0x90] sm:$0xff]
        %v3691 = vld [vmem:[%s3671 + $0x98] sm:$0xff]
        %v3692 = vld [vmem:[%s3671 + $0xa0] sm:$0x3]
        %v3693 = vld [vmem:[%s3671 + $0xa8] sm:$0xff]
        %v3694 = vld [vmem:[%s3671 + $0xb0] sm:$0xff]
        %v3695 = vld [vmem:[%s3671 + $0xb8] sm:$0xff]
        %v3696 = vld [vmem:[%s3671 + $0xc0] sm:$0xff]
        %v3697 = vld [vmem:[%s3671 + $0xc8] sm:$0xff]
        %v3698 = vld [vmem:[%s3671 + $0xd0] sm:$0xff]
        %v3699 = vld [vmem:[%s3671 + $0xd8] sm:$0x3]
        %v3700 = vld [vmem:[%s3671 + $0xe0] sm:$0xff]
        %v3701 = vld [vmem:[%s3671 + $0xe8] sm:$0xff]
        %v3702 = vld [vmem:[%s3671 + $0xf0] sm:$0xff]
        %v3703 = vld [vmem:[%s3671 + $0xf8] sm:$0xff]
        %v3704 = vld [vmem:[%s3671 + $0x100] sm:$0xff]
        %v3705 = vld [vmem:[%s3671 + $0x108] sm:$0xff]
        %v3706 = vld [vmem:[%s3671 + $0x110] sm:$0x3]
        %s3707 = scalar_lea.vmem %s1885, 2072 [#allocation3]
        %3708 = vst.msk [vmem:[%s3707] sm:$0xff] %vm1978, %v3672
        %3709 = vst.msk [vmem:[%s3707 + $0x8] sm:$0xff] %vm1978, %v3673
        %3710 = vst.msk [vmem:[%s3707 + $0x10] sm:$0xff] %vm1978, %v3674
        %3711 = vst.msk [vmem:[%s3707 + $0x18] sm:$0xff] %vm1978, %v3675
        %3712 = vst.msk [vmem:[%s3707 + $0x20] sm:$0xff] %vm1978, %v3676
        %3713 = vst.msk [vmem:[%s3707 + $0x28] sm:$0xff] %vm1978, %v3677
        %3714 = vst.msk [vmem:[%s3707 + $0x30] sm:$0x3] %vm1985, %v3678
        %3715 = vst.msk [vmem:[%s3707 + $0xaf0] sm:$0xff] %vm1978, %v3679
        %3716 = vst.msk [vmem:[%s3707 + $0xaf8] sm:$0xff] %vm1978, %v3680
        %3717 = vst.msk [vmem:[%s3707 + $0xb00] sm:$0xff] %vm1978, %v3681
        %3718 = vst.msk [vmem:[%s3707 + $0xb08] sm:$0xff] %vm1978, %v3682
        %3719 = vst.msk [vmem:[%s3707 + $0xb10] sm:$0xff] %vm1978, %v3683
        %3720 = vst.msk [vmem:[%s3707 + $0xb18] sm:$0xff] %vm1978, %v3684
        %3721 = vst.msk [vmem:[%s3707 + $0xb20] sm:$0x3] %vm1985, %v3685
        %3722 = vst.msk [vmem:[%s3707 + $0x15e0] sm:$0xff] %vm1978, %v3686
        %3723 = vst.msk [vmem:[%s3707 + $0x15e8] sm:$0xff] %vm1978, %v3687
        %3724 = vst.msk [vmem:[%s3707 + $0x15f0] sm:$0xff] %vm1978, %v3688
        %3725 = vst.msk [vmem:[%s3707 + $0x15f8] sm:$0xff] %vm1978, %v3689
        %3726 = vst.msk [vmem:[%s3707 + $0x1600] sm:$0xff] %vm1978, %v3690
        %3727 = vst.msk [vmem:[%s3707 + $0x1608] sm:$0xff] %vm1978, %v3691
        %3728 = vst.msk [vmem:[%s3707 + $0x1610] sm:$0x3] %vm1985, %v3692
        %3729 = vst.msk [vmem:[%s3707 + $0x20d0] sm:$0xff] %vm1978, %v3693
        %3730 = vst.msk [vmem:[%s3707 + $0x20d8] sm:$0xff] %vm1978, %v3694
        %3731 = vst.msk [vmem:[%s3707 + $0x20e0] sm:$0xff] %vm1978, %v3695
        %3732 = vst.msk [vmem:[%s3707 + $0x20e8] sm:$0xff] %vm1978, %v3696
        %3733 = vst.msk [vmem:[%s3707 + $0x20f0] sm:$0xff] %vm1978, %v3697
        %3734 = vst.msk [vmem:[%s3707 + $0x20f8] sm:$0xff] %vm1978, %v3698
        %3735 = vst.msk [vmem:[%s3707 + $0x2100] sm:$0x3] %vm1985, %v3699
        %3736 = vst.msk [vmem:[%s3707 + $0x2bc0] sm:$0xff] %vm1978, %v3700
        %3737 = vst.msk [vmem:[%s3707 + $0x2bc8] sm:$0xff] %vm1978, %v3701
        %3738 = vst.msk [vmem:[%s3707 + $0x2bd0] sm:$0xff] %vm1978, %v3702
        %3739 = vst.msk [vmem:[%s3707 + $0x2bd8] sm:$0xff] %vm1978, %v3703
        %3740 = vst.msk [vmem:[%s3707 + $0x2be0] sm:$0xff] %vm1978, %v3704
        %3741 = vst.msk [vmem:[%s3707 + $0x2be8] sm:$0xff] %vm1978, %v3705
        %3742 = vst.msk [vmem:[%s3707 + $0x2bf0] sm:$0x3] %vm1985, %v3706
        %s3743 = scalar_lea.vmem %s1885, 2128 [#allocation3]
        %3744 = vst.msk [vmem:[%s3743] sm:$0xff] %vm1978, %v1925
        %3745 = vst.msk [vmem:[%s3743 + $0x8] sm:$0xff] %vm1978, %v1925
        %3746 = vst.msk [vmem:[%s3743 + $0x10] sm:$0xff] %vm1978, %v1925
        %3747 = vst.msk [vmem:[%s3743 + $0x18] sm:$0xff] %vm1978, %v1925
        %3748 = vst.msk [vmem:[%s3743 + $0x20] sm:$0xff] %vm1978, %v1925
        %3749 = vst.msk [vmem:[%s3743 + $0x28] sm:$0xff] %vm1978, %v1925
        %3750 = vst.msk [vmem:[%s3743 + $0x30] sm:$0x3] %vm1985, %v1925
        %3751 = vst.msk [vmem:[%s3743 + $0xaf0] sm:$0xff] %vm1978, %v1929
        %3752 = vst.msk [vmem:[%s3743 + $0xaf8] sm:$0xff] %vm1978, %v1929
        %3753 = vst.msk [vmem:[%s3743 + $0xb00] sm:$0xff] %vm1978, %v1929
        %3754 = vst.msk [vmem:[%s3743 + $0xb08] sm:$0xff] %vm1978, %v1929
        %3755 = vst.msk [vmem:[%s3743 + $0xb10] sm:$0xff] %vm1978, %v1929
        %3756 = vst.msk [vmem:[%s3743 + $0xb18] sm:$0xff] %vm1978, %v1929
        %3757 = vst.msk [vmem:[%s3743 + $0xb20] sm:$0x3] %vm1985, %v1929
        %3758 = vst.msk [vmem:[%s3743 + $0x15e0] sm:$0xff] %vm1978, %v1933
        %3759 = vst.msk [vmem:[%s3743 + $0x15e8] sm:$0xff] %vm1978, %v1933
        %3760 = vst.msk [vmem:[%s3743 + $0x15f0] sm:$0xff] %vm1978, %v1933
        %3761 = vst.msk [vmem:[%s3743 + $0x15f8] sm:$0xff] %vm1978, %v1933
        %3762 = vst.msk [vmem:[%s3743 + $0x1600] sm:$0xff] %vm1978, %v1933
        %3763 = vst.msk [vmem:[%s3743 + $0x1608] sm:$0xff] %vm1978, %v1933
        %3764 = vst.msk [vmem:[%s3743 + $0x1610] sm:$0x3] %vm1985, %v1933
        %3765 = vst.msk [vmem:[%s3743 + $0x20d0] sm:$0xff] %vm1978, %v1937
        %3766 = vst.msk [vmem:[%s3743 + $0x20d8] sm:$0xff] %vm1978, %v1937
        %3767 = vst.msk [vmem:[%s3743 + $0x20e0] sm:$0xff] %vm1978, %v1937
        %3768 = vst.msk [vmem:[%s3743 + $0x20e8] sm:$0xff] %vm1978, %v1937
        %3769 = vst.msk [vmem:[%s3743 + $0x20f0] sm:$0xff] %vm1978, %v1937
        %3770 = vst.msk [vmem:[%s3743 + $0x20f8] sm:$0xff] %vm1978, %v1937
        %3771 = vst.msk [vmem:[%s3743 + $0x2100] sm:$0x3] %vm1985, %v1937
        %3772 = vst.msk [vmem:[%s3743 + $0x2bc0] sm:$0xff] %vm1978, %v1941
        %3773 = vst.msk [vmem:[%s3743 + $0x2bc8] sm:$0xff] %vm1978, %v1941
        %3774 = vst.msk [vmem:[%s3743 + $0x2bd0] sm:$0xff] %vm1978, %v1941
        %3775 = vst.msk [vmem:[%s3743 + $0x2bd8] sm:$0xff] %vm1978, %v1941
        %3776 = vst.msk [vmem:[%s3743 + $0x2be0] sm:$0xff] %vm1978, %v1941
        %3777 = vst.msk [vmem:[%s3743 + $0x2be8] sm:$0xff] %vm1978, %v1941
        %3778 = vst.msk [vmem:[%s3743 + $0x2bf0] sm:$0x3] %vm1985, %v1941
        %s3779 = scalar_lea.vmem %s1885, 2184 [#allocation3]
        %3780 = vst.msk [vmem:[%s3779] sm:$0xff] %vm1978, %v1925
        %3781 = vst.msk [vmem:[%s3779 + $0x8] sm:$0xff] %vm1978, %v1925
        %3782 = vst.msk [vmem:[%s3779 + $0x10] sm:$0xff] %vm1978, %v1925
        %3783 = vst.msk [vmem:[%s3779 + $0x18] sm:$0xff] %vm1978, %v1925
        %3784 = vst.msk [vmem:[%s3779 + $0x20] sm:$0xff] %vm1978, %v1925
        %3785 = vst.msk [vmem:[%s3779 + $0x28] sm:$0xff] %vm1978, %v1925
        %3786 = vst.msk [vmem:[%s3779 + $0x30] sm:$0x3] %vm1985, %v1925
        %3787 = vst.msk [vmem:[%s3779 + $0xaf0] sm:$0xff] %vm1978, %v1929
        %3788 = vst.msk [vmem:[%s3779 + $0xaf8] sm:$0xff] %vm1978, %v1929
        %3789 = vst.msk [vmem:[%s3779 + $0xb00] sm:$0xff] %vm1978, %v1929
        %3790 = vst.msk [vmem:[%s3779 + $0xb08] sm:$0xff] %vm1978, %v1929
        %3791 = vst.msk [vmem:[%s3779 + $0xb10] sm:$0xff] %vm1978, %v1929
        %3792 = vst.msk [vmem:[%s3779 + $0xb18] sm:$0xff] %vm1978, %v1929
        %3793 = vst.msk [vmem:[%s3779 + $0xb20] sm:$0x3] %vm1985, %v1929
        %3794 = vst.msk [vmem:[%s3779 + $0x15e0] sm:$0xff] %vm1978, %v1933
        %3795 = vst.msk [vmem:[%s3779 + $0x15e8] sm:$0xff] %vm1978, %v1933
        %3796 = vst.msk [vmem:[%s3779 + $0x15f0] sm:$0xff] %vm1978, %v1933
        %3797 = vst.msk [vmem:[%s3779 + $0x15f8] sm:$0xff] %vm1978, %v1933
        %3798 = vst.msk [vmem:[%s3779 + $0x1600] sm:$0xff] %vm1978, %v1933
        %3799 = vst.msk [vmem:[%s3779 + $0x1608] sm:$0xff] %vm1978, %v1933
        %3800 = vst.msk [vmem:[%s3779 + $0x1610] sm:$0x3] %vm1985, %v1933
        %3801 = vst.msk [vmem:[%s3779 + $0x20d0] sm:$0xff] %vm1978, %v1937
        %3802 = vst.msk [vmem:[%s3779 + $0x20d8] sm:$0xff] %vm1978, %v1937
        %3803 = vst.msk [vmem:[%s3779 + $0x20e0] sm:$0xff] %vm1978, %v1937
        %3804 = vst.msk [vmem:[%s3779 + $0x20e8] sm:$0xff] %vm1978, %v1937
        %3805 = vst.msk [vmem:[%s3779 + $0x20f0] sm:$0xff] %vm1978, %v1937
        %3806 = vst.msk [vmem:[%s3779 + $0x20f8] sm:$0xff] %vm1978, %v1937
        %3807 = vst.msk [vmem:[%s3779 + $0x2100] sm:$0x3] %vm1985, %v1937
        %3808 = vst.msk [vmem:[%s3779 + $0x2bc0] sm:$0xff] %vm1978, %v1941
        %3809 = vst.msk [vmem:[%s3779 + $0x2bc8] sm:$0xff] %vm1978, %v1941
        %3810 = vst.msk [vmem:[%s3779 + $0x2bd0] sm:$0xff] %vm1978, %v1941
        %3811 = vst.msk [vmem:[%s3779 + $0x2bd8] sm:$0xff] %vm1978, %v1941
        %3812 = vst.msk [vmem:[%s3779 + $0x2be0] sm:$0xff] %vm1978, %v1941
        %3813 = vst.msk [vmem:[%s3779 + $0x2be8] sm:$0xff] %vm1978, %v1941
        %3814 = vst.msk [vmem:[%s3779 + $0x2bf0] sm:$0x3] %vm1985, %v1941
        %s3815 = scalar_lea.vmem %s1885, 2240 [#allocation3]
        %3816 = vst.msk [vmem:[%s3815] sm:$0xff] %vm1978, %v1925
        %3817 = vst.msk [vmem:[%s3815 + $0x8] sm:$0xff] %vm1978, %v1925
        %3818 = vst.msk [vmem:[%s3815 + $0x10] sm:$0xff] %vm1978, %v1925
        %3819 = vst.msk [vmem:[%s3815 + $0x18] sm:$0xff] %vm1978, %v1925
        %3820 = vst.msk [vmem:[%s3815 + $0x20] sm:$0xff] %vm1978, %v1925
        %3821 = vst.msk [vmem:[%s3815 + $0x28] sm:$0xff] %vm1978, %v1925
        %3822 = vst.msk [vmem:[%s3815 + $0x30] sm:$0x3] %vm1985, %v1925
        %3823 = vst.msk [vmem:[%s3815 + $0xaf0] sm:$0xff] %vm1978, %v1929
        %3824 = vst.msk [vmem:[%s3815 + $0xaf8] sm:$0xff] %vm1978, %v1929
        %3825 = vst.msk [vmem:[%s3815 + $0xb00] sm:$0xff] %vm1978, %v1929
        %3826 = vst.msk [vmem:[%s3815 + $0xb08] sm:$0xff] %vm1978, %v1929
        %3827 = vst.msk [vmem:[%s3815 + $0xb10] sm:$0xff] %vm1978, %v1929
        %3828 = vst.msk [vmem:[%s3815 + $0xb18] sm:$0xff] %vm1978, %v1929
        %3829 = vst.msk [vmem:[%s3815 + $0xb20] sm:$0x3] %vm1985, %v1929
        %3830 = vst.msk [vmem:[%s3815 + $0x15e0] sm:$0xff] %vm1978, %v1933
        %3831 = vst.msk [vmem:[%s3815 + $0x15e8] sm:$0xff] %vm1978, %v1933
        %3832 = vst.msk [vmem:[%s3815 + $0x15f0] sm:$0xff] %vm1978, %v1933
        %3833 = vst.msk [vmem:[%s3815 + $0x15f8] sm:$0xff] %vm1978, %v1933
        %3834 = vst.msk [vmem:[%s3815 + $0x1600] sm:$0xff] %vm1978, %v1933
        %3835 = vst.msk [vmem:[%s3815 + $0x1608] sm:$0xff] %vm1978, %v1933
        %3836 = vst.msk [vmem:[%s3815 + $0x1610] sm:$0x3] %vm1985, %v1933
        %3837 = vst.msk [vmem:[%s3815 + $0x20d0] sm:$0xff] %vm1978, %v1937
        %3838 = vst.msk [vmem:[%s3815 + $0x20d8] sm:$0xff] %vm1978, %v1937
        %3839 = vst.msk [vmem:[%s3815 + $0x20e0] sm:$0xff] %vm1978, %v1937
        %3840 = vst.msk [vmem:[%s3815 + $0x20e8] sm:$0xff] %vm1978, %v1937
        %3841 = vst.msk [vmem:[%s3815 + $0x20f0] sm:$0xff] %vm1978, %v1937
        %3842 = vst.msk [vmem:[%s3815 + $0x20f8] sm:$0xff] %vm1978, %v1937
        %3843 = vst.msk [vmem:[%s3815 + $0x2100] sm:$0x3] %vm1985, %v1937
        %3844 = vst.msk [vmem:[%s3815 + $0x2bc0] sm:$0xff] %vm1978, %v1941
        %3845 = vst.msk [vmem:[%s3815 + $0x2bc8] sm:$0xff] %vm1978, %v1941
        %3846 = vst.msk [vmem:[%s3815 + $0x2bd0] sm:$0xff] %vm1978, %v1941
        %3847 = vst.msk [vmem:[%s3815 + $0x2bd8] sm:$0xff] %vm1978, %v1941
        %3848 = vst.msk [vmem:[%s3815 + $0x2be0] sm:$0xff] %vm1978, %v1941
        %3849 = vst.msk [vmem:[%s3815 + $0x2be8] sm:$0xff] %vm1978, %v1941
        %3850 = vst.msk [vmem:[%s3815 + $0x2bf0] sm:$0x3] %vm1985, %v1941
        %s3851 = scalar_lea.vmem %s1885, 2296 [#allocation3]
        %3852 = vst.msk [vmem:[%s3851] sm:$0xff] %vm1978, %v1925
        %3853 = vst.msk [vmem:[%s3851 + $0x8] sm:$0xff] %vm1978, %v1925
        %3854 = vst.msk [vmem:[%s3851 + $0x10] sm:$0xff] %vm1978, %v1925
        %3855 = vst.msk [vmem:[%s3851 + $0x18] sm:$0xff] %vm1978, %v1925
        %3856 = vst.msk [vmem:[%s3851 + $0x20] sm:$0xff] %vm1978, %v1925
        %3857 = vst.msk [vmem:[%s3851 + $0x28] sm:$0xff] %vm1978, %v1925
        %3858 = vst.msk [vmem:[%s3851 + $0x30] sm:$0x3] %vm1985, %v1925
        %3859 = vst.msk [vmem:[%s3851 + $0xaf0] sm:$0xff] %vm1978, %v1929
        %3860 = vst.msk [vmem:[%s3851 + $0xaf8] sm:$0xff] %vm1978, %v1929
        %3861 = vst.msk [vmem:[%s3851 + $0xb00] sm:$0xff] %vm1978, %v1929
        %3862 = vst.msk [vmem:[%s3851 + $0xb08] sm:$0xff] %vm1978, %v1929
        %3863 = vst.msk [vmem:[%s3851 + $0xb10] sm:$0xff] %vm1978, %v1929
        %3864 = vst.msk [vmem:[%s3851 + $0xb18] sm:$0xff] %vm1978, %v1929
        %3865 = vst.msk [vmem:[%s3851 + $0xb20] sm:$0x3] %vm1985, %v1929
        %3866 = vst.msk [vmem:[%s3851 + $0x15e0] sm:$0xff] %vm1978, %v1933
        %3867 = vst.msk [vmem:[%s3851 + $0x15e8] sm:$0xff] %vm1978, %v1933
        %3868 = vst.msk [vmem:[%s3851 + $0x15f0] sm:$0xff] %vm1978, %v1933
        %3869 = vst.msk [vmem:[%s3851 + $0x15f8] sm:$0xff] %vm1978, %v1933
        %3870 = vst.msk [vmem:[%s3851 + $0x1600] sm:$0xff] %vm1978, %v1933
        %3871 = vst.msk [vmem:[%s3851 + $0x1608] sm:$0xff] %vm1978, %v1933
        %3872 = vst.msk [vmem:[%s3851 + $0x1610] sm:$0x3] %vm1985, %v1933
        %3873 = vst.msk [vmem:[%s3851 + $0x20d0] sm:$0xff] %vm1978, %v1937
        %3874 = vst.msk [vmem:[%s3851 + $0x20d8] sm:$0xff] %vm1978, %v1937
        %3875 = vst.msk [vmem:[%s3851 + $0x20e0] sm:$0xff] %vm1978, %v1937
        %3876 = vst.msk [vmem:[%s3851 + $0x20e8] sm:$0xff] %vm1978, %v1937
        %3877 = vst.msk [vmem:[%s3851 + $0x20f0] sm:$0xff] %vm1978, %v1937
        %3878 = vst.msk [vmem:[%s3851 + $0x20f8] sm:$0xff] %vm1978, %v1937
        %3879 = vst.msk [vmem:[%s3851 + $0x2100] sm:$0x3] %vm1985, %v1937
        %3880 = vst.msk [vmem:[%s3851 + $0x2bc0] sm:$0xff] %vm1978, %v1941
        %3881 = vst.msk [vmem:[%s3851 + $0x2bc8] sm:$0xff] %vm1978, %v1941
        %3882 = vst.msk [vmem:[%s3851 + $0x2bd0] sm:$0xff] %vm1978, %v1941
        %3883 = vst.msk [vmem:[%s3851 + $0x2bd8] sm:$0xff] %vm1978, %v1941
        %3884 = vst.msk [vmem:[%s3851 + $0x2be0] sm:$0xff] %vm1978, %v1941
        %3885 = vst.msk [vmem:[%s3851 + $0x2be8] sm:$0xff] %vm1978, %v1941
        %3886 = vst.msk [vmem:[%s3851 + $0x2bf0] sm:$0x3] %vm1985, %v1941
        %s3887 = scalar_lea.vmem %s1885, 2352 [#allocation3]
        %3888 = vst.msk [vmem:[%s3887] sm:$0xff] %vm1978, %v1925
        %3889 = vst.msk [vmem:[%s3887 + $0x8] sm:$0xff] %vm1978, %v1925
        %3890 = vst.msk [vmem:[%s3887 + $0x10] sm:$0xff] %vm1978, %v1925
        %3891 = vst.msk [vmem:[%s3887 + $0x18] sm:$0xff] %vm1978, %v1925
        %3892 = vst.msk [vmem:[%s3887 + $0x20] sm:$0xff] %vm1978, %v1925
        %3893 = vst.msk [vmem:[%s3887 + $0x28] sm:$0xff] %vm1978, %v1925
        %3894 = vst.msk [vmem:[%s3887 + $0x30] sm:$0x3] %vm1985, %v1925
        %3895 = vst.msk [vmem:[%s3887 + $0xaf0] sm:$0xff] %vm1978, %v1929
        %3896 = vst.msk [vmem:[%s3887 + $0xaf8] sm:$0xff] %vm1978, %v1929
        %3897 = vst.msk [vmem:[%s3887 + $0xb00] sm:$0xff] %vm1978, %v1929
        %3898 = vst.msk [vmem:[%s3887 + $0xb08] sm:$0xff] %vm1978, %v1929
        %3899 = vst.msk [vmem:[%s3887 + $0xb10] sm:$0xff] %vm1978, %v1929
        %3900 = vst.msk [vmem:[%s3887 + $0xb18] sm:$0xff] %vm1978, %v1929
        %3901 = vst.msk [vmem:[%s3887 + $0xb20] sm:$0x3] %vm1985, %v1929
        %3902 = vst.msk [vmem:[%s3887 + $0x15e0] sm:$0xff] %vm1978, %v1933
        %3903 = vst.msk [vmem:[%s3887 + $0x15e8] sm:$0xff] %vm1978, %v1933
        %3904 = vst.msk [vmem:[%s3887 + $0x15f0] sm:$0xff] %vm1978, %v1933
        %3905 = vst.msk [vmem:[%s3887 + $0x15f8] sm:$0xff] %vm1978, %v1933
        %3906 = vst.msk [vmem:[%s3887 + $0x1600] sm:$0xff] %vm1978, %v1933
        %3907 = vst.msk [vmem:[%s3887 + $0x1608] sm:$0xff] %vm1978, %v1933
        %3908 = vst.msk [vmem:[%s3887 + $0x1610] sm:$0x3] %vm1985, %v1933
        %3909 = vst.msk [vmem:[%s3887 + $0x20d0] sm:$0xff] %vm1978, %v1937
        %3910 = vst.msk [vmem:[%s3887 + $0x20d8] sm:$0xff] %vm1978, %v1937
        %3911 = vst.msk [vmem:[%s3887 + $0x20e0] sm:$0xff] %vm1978, %v1937
        %3912 = vst.msk [vmem:[%s3887 + $0x20e8] sm:$0xff] %vm1978, %v1937
        %3913 = vst.msk [vmem:[%s3887 + $0x20f0] sm:$0xff] %vm1978, %v1937
        %3914 = vst.msk [vmem:[%s3887 + $0x20f8] sm:$0xff] %vm1978, %v1937
        %3915 = vst.msk [vmem:[%s3887 + $0x2100] sm:$0x3] %vm1985, %v1937
        %3916 = vst.msk [vmem:[%s3887 + $0x2bc0] sm:$0xff] %vm1978, %v1941
        %3917 = vst.msk [vmem:[%s3887 + $0x2bc8] sm:$0xff] %vm1978, %v1941
        %3918 = vst.msk [vmem:[%s3887 + $0x2bd0] sm:$0xff] %vm1978, %v1941
        %3919 = vst.msk [vmem:[%s3887 + $0x2bd8] sm:$0xff] %vm1978, %v1941
        %3920 = vst.msk [vmem:[%s3887 + $0x2be0] sm:$0xff] %vm1978, %v1941
        %3921 = vst.msk [vmem:[%s3887 + $0x2be8] sm:$0xff] %vm1978, %v1941
        %3922 = vst.msk [vmem:[%s3887 + $0x2bf0] sm:$0x3] %vm1985, %v1941
        %s3923 = scalar_lea.vmem %s1885, 2408 [#allocation3]
        %3924 = vst.msk [vmem:[%s3923] sm:$0xff] %vm1978, %v1925
        %3925 = vst.msk [vmem:[%s3923 + $0x8] sm:$0xff] %vm1978, %v1925
        %3926 = vst.msk [vmem:[%s3923 + $0x10] sm:$0xff] %vm1978, %v1925
        %3927 = vst.msk [vmem:[%s3923 + $0x18] sm:$0xff] %vm1978, %v1925
        %3928 = vst.msk [vmem:[%s3923 + $0x20] sm:$0xff] %vm1978, %v1925
        %3929 = vst.msk [vmem:[%s3923 + $0x28] sm:$0xff] %vm1978, %v1925
        %3930 = vst.msk [vmem:[%s3923 + $0x30] sm:$0x3] %vm1985, %v1925
        %3931 = vst.msk [vmem:[%s3923 + $0xaf0] sm:$0xff] %vm1978, %v1929
        %3932 = vst.msk [vmem:[%s3923 + $0xaf8] sm:$0xff] %vm1978, %v1929
        %3933 = vst.msk [vmem:[%s3923 + $0xb00] sm:$0xff] %vm1978, %v1929
        %3934 = vst.msk [vmem:[%s3923 + $0xb08] sm:$0xff] %vm1978, %v1929
        %3935 = vst.msk [vmem:[%s3923 + $0xb10] sm:$0xff] %vm1978, %v1929
        %3936 = vst.msk [vmem:[%s3923 + $0xb18] sm:$0xff] %vm1978, %v1929
        %3937 = vst.msk [vmem:[%s3923 + $0xb20] sm:$0x3] %vm1985, %v1929
        %3938 = vst.msk [vmem:[%s3923 + $0x15e0] sm:$0xff] %vm1978, %v1933
        %3939 = vst.msk [vmem:[%s3923 + $0x15e8] sm:$0xff] %vm1978, %v1933
        %3940 = vst.msk [vmem:[%s3923 + $0x15f0] sm:$0xff] %vm1978, %v1933
        %3941 = vst.msk [vmem:[%s3923 + $0x15f8] sm:$0xff] %vm1978, %v1933
        %3942 = vst.msk [vmem:[%s3923 + $0x1600] sm:$0xff] %vm1978, %v1933
        %3943 = vst.msk [vmem:[%s3923 + $0x1608] sm:$0xff] %vm1978, %v1933
        %3944 = vst.msk [vmem:[%s3923 + $0x1610] sm:$0x3] %vm1985, %v1933
        %3945 = vst.msk [vmem:[%s3923 + $0x20d0] sm:$0xff] %vm1978, %v1937
        %3946 = vst.msk [vmem:[%s3923 + $0x20d8] sm:$0xff] %vm1978, %v1937
        %3947 = vst.msk [vmem:[%s3923 + $0x20e0] sm:$0xff] %vm1978, %v1937
        %3948 = vst.msk [vmem:[%s3923 + $0x20e8] sm:$0xff] %vm1978, %v1937
        %3949 = vst.msk [vmem:[%s3923 + $0x20f0] sm:$0xff] %vm1978, %v1937
        %3950 = vst.msk [vmem:[%s3923 + $0x20f8] sm:$0xff] %vm1978, %v1937
        %3951 = vst.msk [vmem:[%s3923 + $0x2100] sm:$0x3] %vm1985, %v1937
        %3952 = vst.msk [vmem:[%s3923 + $0x2bc0] sm:$0xff] %vm1978, %v1941
        %3953 = vst.msk [vmem:[%s3923 + $0x2bc8] sm:$0xff] %vm1978, %v1941
        %3954 = vst.msk [vmem:[%s3923 + $0x2bd0] sm:$0xff] %vm1978, %v1941
        %3955 = vst.msk [vmem:[%s3923 + $0x2bd8] sm:$0xff] %vm1978, %v1941
        %3956 = vst.msk [vmem:[%s3923 + $0x2be0] sm:$0xff] %vm1978, %v1941
        %3957 = vst.msk [vmem:[%s3923 + $0x2be8] sm:$0xff] %vm1978, %v1941
        %3958 = vst.msk [vmem:[%s3923 + $0x2bf0] sm:$0x3] %vm1985, %v1941
        %s3959 = scalar_lea.vmem %s1885, 2464 [#allocation3]
        %3960 = vst.msk [vmem:[%s3959] sm:$0xff] %vm1978, %v1925
        %3961 = vst.msk [vmem:[%s3959 + $0x8] sm:$0xff] %vm1978, %v1925
        %3962 = vst.msk [vmem:[%s3959 + $0x10] sm:$0xff] %vm1978, %v1925
        %3963 = vst.msk [vmem:[%s3959 + $0x18] sm:$0xff] %vm1978, %v1925
        %3964 = vst.msk [vmem:[%s3959 + $0x20] sm:$0xff] %vm1978, %v1925
        %3965 = vst.msk [vmem:[%s3959 + $0x28] sm:$0xff] %vm1978, %v1925
        %3966 = vst.msk [vmem:[%s3959 + $0x30] sm:$0x3] %vm1985, %v1925
        %3967 = vst.msk [vmem:[%s3959 + $0xaf0] sm:$0xff] %vm1978, %v1929
        %3968 = vst.msk [vmem:[%s3959 + $0xaf8] sm:$0xff] %vm1978, %v1929
        %3969 = vst.msk [vmem:[%s3959 + $0xb00] sm:$0xff] %vm1978, %v1929
        %3970 = vst.msk [vmem:[%s3959 + $0xb08] sm:$0xff] %vm1978, %v1929
        %3971 = vst.msk [vmem:[%s3959 + $0xb10] sm:$0xff] %vm1978, %v1929
        %3972 = vst.msk [vmem:[%s3959 + $0xb18] sm:$0xff] %vm1978, %v1929
        %3973 = vst.msk [vmem:[%s3959 + $0xb20] sm:$0x3] %vm1985, %v1929
        %3974 = vst.msk [vmem:[%s3959 + $0x15e0] sm:$0xff] %vm1978, %v1933
        %3975 = vst.msk [vmem:[%s3959 + $0x15e8] sm:$0xff] %vm1978, %v1933
        %3976 = vst.msk [vmem:[%s3959 + $0x15f0] sm:$0xff] %vm1978, %v1933
        %3977 = vst.msk [vmem:[%s3959 + $0x15f8] sm:$0xff] %vm1978, %v1933
        %3978 = vst.msk [vmem:[%s3959 + $0x1600] sm:$0xff] %vm1978, %v1933
        %3979 = vst.msk [vmem:[%s3959 + $0x1608] sm:$0xff] %vm1978, %v1933
        %3980 = vst.msk [vmem:[%s3959 + $0x1610] sm:$0x3] %vm1985, %v1933
        %3981 = vst.msk [vmem:[%s3959 + $0x20d0] sm:$0xff] %vm1978, %v1937
        %3982 = vst.msk [vmem:[%s3959 + $0x20d8] sm:$0xff] %vm1978, %v1937
        %3983 = vst.msk [vmem:[%s3959 + $0x20e0] sm:$0xff] %vm1978, %v1937
        %3984 = vst.msk [vmem:[%s3959 + $0x20e8] sm:$0xff] %vm1978, %v1937
        %3985 = vst.msk [vmem:[%s3959 + $0x20f0] sm:$0xff] %vm1978, %v1937
        %3986 = vst.msk [vmem:[%s3959 + $0x20f8] sm:$0xff] %vm1978, %v1937
        %3987 = vst.msk [vmem:[%s3959 + $0x2100] sm:$0x3] %vm1985, %v1937
        %3988 = vst.msk [vmem:[%s3959 + $0x2bc0] sm:$0xff] %vm1978, %v1941
        %3989 = vst.msk [vmem:[%s3959 + $0x2bc8] sm:$0xff] %vm1978, %v1941
        %3990 = vst.msk [vmem:[%s3959 + $0x2bd0] sm:$0xff] %vm1978, %v1941
        %3991 = vst.msk [vmem:[%s3959 + $0x2bd8] sm:$0xff] %vm1978, %v1941
        %3992 = vst.msk [vmem:[%s3959 + $0x2be0] sm:$0xff] %vm1978, %v1941
        %3993 = vst.msk [vmem:[%s3959 + $0x2be8] sm:$0xff] %vm1978, %v1941
        %3994 = vst.msk [vmem:[%s3959 + $0x2bf0] sm:$0x3] %vm1985, %v1941
        %s3995 = scalar_lea.vmem %s1885, 2520 [#allocation3]
        %3996 = vst.msk [vmem:[%s3995] sm:$0xff] %vm1978, %v1925
        %3997 = vst.msk [vmem:[%s3995 + $0x8] sm:$0xff] %vm1978, %v1925
        %3998 = vst.msk [vmem:[%s3995 + $0x10] sm:$0xff] %vm1978, %v1925
        %3999 = vst.msk [vmem:[%s3995 + $0x18] sm:$0xff] %vm1978, %v1925
        %4000 = vst.msk [vmem:[%s3995 + $0x20] sm:$0xff] %vm1978, %v1925
        %4001 = vst.msk [vmem:[%s3995 + $0x28] sm:$0xff] %vm1978, %v1925
        %4002 = vst.msk [vmem:[%s3995 + $0x30] sm:$0x3] %vm1985, %v1925
        %4003 = vst.msk [vmem:[%s3995 + $0xaf0] sm:$0xff] %vm1978, %v1929
        %4004 = vst.msk [vmem:[%s3995 + $0xaf8] sm:$0xff] %vm1978, %v1929
        %4005 = vst.msk [vmem:[%s3995 + $0xb00] sm:$0xff] %vm1978, %v1929
        %4006 = vst.msk [vmem:[%s3995 + $0xb08] sm:$0xff] %vm1978, %v1929
        %4007 = vst.msk [vmem:[%s3995 + $0xb10] sm:$0xff] %vm1978, %v1929
        %4008 = vst.msk [vmem:[%s3995 + $0xb18] sm:$0xff] %vm1978, %v1929
        %4009 = vst.msk [vmem:[%s3995 + $0xb20] sm:$0x3] %vm1985, %v1929
        %4010 = vst.msk [vmem:[%s3995 + $0x15e0] sm:$0xff] %vm1978, %v1933
        %4011 = vst.msk [vmem:[%s3995 + $0x15e8] sm:$0xff] %vm1978, %v1933
        %4012 = vst.msk [vmem:[%s3995 + $0x15f0] sm:$0xff] %vm1978, %v1933
        %4013 = vst.msk [vmem:[%s3995 + $0x15f8] sm:$0xff] %vm1978, %v1933
        %4014 = vst.msk [vmem:[%s3995 + $0x1600] sm:$0xff] %vm1978, %v1933
        %4015 = vst.msk [vmem:[%s3995 + $0x1608] sm:$0xff] %vm1978, %v1933
        %4016 = vst.msk [vmem:[%s3995 + $0x1610] sm:$0x3] %vm1985, %v1933
        %4017 = vst.msk [vmem:[%s3995 + $0x20d0] sm:$0xff] %vm1978, %v1937
        %4018 = vst.msk [vmem:[%s3995 + $0x20d8] sm:$0xff] %vm1978, %v1937
        %4019 = vst.msk [vmem:[%s3995 + $0x20e0] sm:$0xff] %vm1978, %v1937
        %4020 = vst.msk [vmem:[%s3995 + $0x20e8] sm:$0xff] %vm1978, %v1937
        %4021 = vst.msk [vmem:[%s3995 + $0x20f0] sm:$0xff] %vm1978, %v1937
        %4022 = vst.msk [vmem:[%s3995 + $0x20f8] sm:$0xff] %vm1978, %v1937
        %4023 = vst.msk [vmem:[%s3995 + $0x2100] sm:$0x3] %vm1985, %v1937
        %4024 = vst.msk [vmem:[%s3995 + $0x2bc0] sm:$0xff] %vm1978, %v1941
        %4025 = vst.msk [vmem:[%s3995 + $0x2bc8] sm:$0xff] %vm1978, %v1941
        %4026 = vst.msk [vmem:[%s3995 + $0x2bd0] sm:$0xff] %vm1978, %v1941
        %4027 = vst.msk [vmem:[%s3995 + $0x2bd8] sm:$0xff] %vm1978, %v1941
        %4028 = vst.msk [vmem:[%s3995 + $0x2be0] sm:$0xff] %vm1978, %v1941
        %4029 = vst.msk [vmem:[%s3995 + $0x2be8] sm:$0xff] %vm1978, %v1941
        %4030 = vst.msk [vmem:[%s3995 + $0x2bf0] sm:$0x3] %vm1985, %v1941
        %s4031 = scalar_lea.vmem %s1885, 2576 [#allocation3]
        %4032 = vst.msk [vmem:[%s4031] sm:$0xff] %vm1978, %v1925
        %4033 = vst.msk [vmem:[%s4031 + $0x8] sm:$0xff] %vm1978, %v1925
        %4034 = vst.msk [vmem:[%s4031 + $0x10] sm:$0xff] %vm1978, %v1925
        %4035 = vst.msk [vmem:[%s4031 + $0x18] sm:$0xff] %vm1978, %v1925
        %4036 = vst.msk [vmem:[%s4031 + $0x20] sm:$0xff] %vm1978, %v1925
        %4037 = vst.msk [vmem:[%s4031 + $0x28] sm:$0xff] %vm1978, %v1925
        %4038 = vst.msk [vmem:[%s4031 + $0x30] sm:$0x3] %vm1985, %v1925
        %4039 = vst.msk [vmem:[%s4031 + $0xaf0] sm:$0xff] %vm1978, %v1929
        %4040 = vst.msk [vmem:[%s4031 + $0xaf8] sm:$0xff] %vm1978, %v1929
        %4041 = vst.msk [vmem:[%s4031 + $0xb00] sm:$0xff] %vm1978, %v1929
        %4042 = vst.msk [vmem:[%s4031 + $0xb08] sm:$0xff] %vm1978, %v1929
        %4043 = vst.msk [vmem:[%s4031 + $0xb10] sm:$0xff] %vm1978, %v1929
        %4044 = vst.msk [vmem:[%s4031 + $0xb18] sm:$0xff] %vm1978, %v1929
        %4045 = vst.msk [vmem:[%s4031 + $0xb20] sm:$0x3] %vm1985, %v1929
        %4046 = vst.msk [vmem:[%s4031 + $0x15e0] sm:$0xff] %vm1978, %v1933
        %4047 = vst.msk [vmem:[%s4031 + $0x15e8] sm:$0xff] %vm1978, %v1933
        %4048 = vst.msk [vmem:[%s4031 + $0x15f0] sm:$0xff] %vm1978, %v1933
        %4049 = vst.msk [vmem:[%s4031 + $0x15f8] sm:$0xff] %vm1978, %v1933
        %4050 = vst.msk [vmem:[%s4031 + $0x1600] sm:$0xff] %vm1978, %v1933
        %4051 = vst.msk [vmem:[%s4031 + $0x1608] sm:$0xff] %vm1978, %v1933
        %4052 = vst.msk [vmem:[%s4031 + $0x1610] sm:$0x3] %vm1985, %v1933
        %4053 = vst.msk [vmem:[%s4031 + $0x20d0] sm:$0xff] %vm1978, %v1937
        %4054 = vst.msk [vmem:[%s4031 + $0x20d8] sm:$0xff] %vm1978, %v1937
        %4055 = vst.msk [vmem:[%s4031 + $0x20e0] sm:$0xff] %vm1978, %v1937
        %4056 = vst.msk [vmem:[%s4031 + $0x20e8] sm:$0xff] %vm1978, %v1937
        %4057 = vst.msk [vmem:[%s4031 + $0x20f0] sm:$0xff] %vm1978, %v1937
        %4058 = vst.msk [vmem:[%s4031 + $0x20f8] sm:$0xff] %vm1978, %v1937
        %4059 = vst.msk [vmem:[%s4031 + $0x2100] sm:$0x3] %vm1985, %v1937
        %4060 = vst.msk [vmem:[%s4031 + $0x2bc0] sm:$0xff] %vm1978, %v1941
        %4061 = vst.msk [vmem:[%s4031 + $0x2bc8] sm:$0xff] %vm1978, %v1941
        %4062 = vst.msk [vmem:[%s4031 + $0x2bd0] sm:$0xff] %vm1978, %v1941
        %4063 = vst.msk [vmem:[%s4031 + $0x2bd8] sm:$0xff] %vm1978, %v1941
        %4064 = vst.msk [vmem:[%s4031 + $0x2be0] sm:$0xff] %vm1978, %v1941
        %4065 = vst.msk [vmem:[%s4031 + $0x2be8] sm:$0xff] %vm1978, %v1941
        %4066 = vst.msk [vmem:[%s4031 + $0x2bf0] sm:$0x3] %vm1985, %v1941
        %s4067 = scalar_lea.vmem %s1885, 2632 [#allocation3]
        %4068 = vst.msk [vmem:[%s4067] sm:$0xff] %vm1978, %v1925
        %4069 = vst.msk [vmem:[%s4067 + $0x8] sm:$0xff] %vm1978, %v1925
        %4070 = vst.msk [vmem:[%s4067 + $0x10] sm:$0xff] %vm1978, %v1925
        %4071 = vst.msk [vmem:[%s4067 + $0x18] sm:$0xff] %vm1978, %v1925
        %4072 = vst.msk [vmem:[%s4067 + $0x20] sm:$0xff] %vm1978, %v1925
        %4073 = vst.msk [vmem:[%s4067 + $0x28] sm:$0xff] %vm1978, %v1925
        %4074 = vst.msk [vmem:[%s4067 + $0x30] sm:$0x3] %vm1985, %v1925
        %4075 = vst.msk [vmem:[%s4067 + $0xaf0] sm:$0xff] %vm1978, %v1929
        %4076 = vst.msk [vmem:[%s4067 + $0xaf8] sm:$0xff] %vm1978, %v1929
        %4077 = vst.msk [vmem:[%s4067 + $0xb00] sm:$0xff] %vm1978, %v1929
        %4078 = vst.msk [vmem:[%s4067 + $0xb08] sm:$0xff] %vm1978, %v1929
        %4079 = vst.msk [vmem:[%s4067 + $0xb10] sm:$0xff] %vm1978, %v1929
        %4080 = vst.msk [vmem:[%s4067 + $0xb18] sm:$0xff] %vm1978, %v1929
        %4081 = vst.msk [vmem:[%s4067 + $0xb20] sm:$0x3] %vm1985, %v1929
        %4082 = vst.msk [vmem:[%s4067 + $0x15e0] sm:$0xff] %vm1978, %v1933
        %4083 = vst.msk [vmem:[%s4067 + $0x15e8] sm:$0xff] %vm1978, %v1933
        %4084 = vst.msk [vmem:[%s4067 + $0x15f0] sm:$0xff] %vm1978, %v1933
        %4085 = vst.msk [vmem:[%s4067 + $0x15f8] sm:$0xff] %vm1978, %v1933
        %4086 = vst.msk [vmem:[%s4067 + $0x1600] sm:$0xff] %vm1978, %v1933
        %4087 = vst.msk [vmem:[%s4067 + $0x1608] sm:$0xff] %vm1978, %v1933
        %4088 = vst.msk [vmem:[%s4067 + $0x1610] sm:$0x3] %vm1985, %v1933
        %4089 = vst.msk [vmem:[%s4067 + $0x20d0] sm:$0xff] %vm1978, %v1937
        %4090 = vst.msk [vmem:[%s4067 + $0x20d8] sm:$0xff] %vm1978, %v1937
        %4091 = vst.msk [vmem:[%s4067 + $0x20e0] sm:$0xff] %vm1978, %v1937
        %4092 = vst.msk [vmem:[%s4067 + $0x20e8] sm:$0xff] %vm1978, %v1937
        %4093 = vst.msk [vmem:[%s4067 + $0x20f0] sm:$0xff] %vm1978, %v1937
        %4094 = vst.msk [vmem:[%s4067 + $0x20f8] sm:$0xff] %vm1978, %v1937
        %4095 = vst.msk [vmem:[%s4067 + $0x2100] sm:$0x3] %vm1985, %v1937
        %4096 = vst.msk [vmem:[%s4067 + $0x2bc0] sm:$0xff] %vm1978, %v1941
        %4097 = vst.msk [vmem:[%s4067 + $0x2bc8] sm:$0xff] %vm1978, %v1941
        %4098 = vst.msk [vmem:[%s4067 + $0x2bd0] sm:$0xff] %vm1978, %v1941
        %4099 = vst.msk [vmem:[%s4067 + $0x2bd8] sm:$0xff] %vm1978, %v1941
        %4100 = vst.msk [vmem:[%s4067 + $0x2be0] sm:$0xff] %vm1978, %v1941
        %4101 = vst.msk [vmem:[%s4067 + $0x2be8] sm:$0xff] %vm1978, %v1941
        %4102 = vst.msk [vmem:[%s4067 + $0x2bf0] sm:$0x3] %vm1985, %v1941
        %s4103 = scalar_lea.vmem %s1885, 2688 [#allocation3]
        %4104 = vst.msk [vmem:[%s4103] sm:$0xff] %vm1978, %v1925
        %4105 = vst.msk [vmem:[%s4103 + $0x8] sm:$0xff] %vm1978, %v1925
        %4106 = vst.msk [vmem:[%s4103 + $0x10] sm:$0xff] %vm1978, %v1925
        %4107 = vst.msk [vmem:[%s4103 + $0x18] sm:$0xff] %vm1978, %v1925
        %4108 = vst.msk [vmem:[%s4103 + $0x20] sm:$0xff] %vm1978, %v1925
        %4109 = vst.msk [vmem:[%s4103 + $0x28] sm:$0xff] %vm1978, %v1925
        %4110 = vst.msk [vmem:[%s4103 + $0x30] sm:$0x3] %vm1985, %v1925
        %4111 = vst.msk [vmem:[%s4103 + $0xaf0] sm:$0xff] %vm1978, %v1929
        %4112 = vst.msk [vmem:[%s4103 + $0xaf8] sm:$0xff] %vm1978, %v1929
        %4113 = vst.msk [vmem:[%s4103 + $0xb00] sm:$0xff] %vm1978, %v1929
        %4114 = vst.msk [vmem:[%s4103 + $0xb08] sm:$0xff] %vm1978, %v1929
        %4115 = vst.msk [vmem:[%s4103 + $0xb10] sm:$0xff] %vm1978, %v1929
        %4116 = vst.msk [vmem:[%s4103 + $0xb18] sm:$0xff] %vm1978, %v1929
        %4117 = vst.msk [vmem:[%s4103 + $0xb20] sm:$0x3] %vm1985, %v1929
        %4118 = vst.msk [vmem:[%s4103 + $0x15e0] sm:$0xff] %vm1978, %v1933
        %4119 = vst.msk [vmem:[%s4103 + $0x15e8] sm:$0xff] %vm1978, %v1933
        %4120 = vst.msk [vmem:[%s4103 + $0x15f0] sm:$0xff] %vm1978, %v1933
        %4121 = vst.msk [vmem:[%s4103 + $0x15f8] sm:$0xff] %vm1978, %v1933
        %4122 = vst.msk [vmem:[%s4103 + $0x1600] sm:$0xff] %vm1978, %v1933
        %4123 = vst.msk [vmem:[%s4103 + $0x1608] sm:$0xff] %vm1978, %v1933
        %4124 = vst.msk [vmem:[%s4103 + $0x1610] sm:$0x3] %vm1985, %v1933
        %4125 = vst.msk [vmem:[%s4103 + $0x20d0] sm:$0xff] %vm1978, %v1937
        %4126 = vst.msk [vmem:[%s4103 + $0x20d8] sm:$0xff] %vm1978, %v1937
        %4127 = vst.msk [vmem:[%s4103 + $0x20e0] sm:$0xff] %vm1978, %v1937
        %4128 = vst.msk [vmem:[%s4103 + $0x20e8] sm:$0xff] %vm1978, %v1937
        %4129 = vst.msk [vmem:[%s4103 + $0x20f0] sm:$0xff] %vm1978, %v1937
        %4130 = vst.msk [vmem:[%s4103 + $0x20f8] sm:$0xff] %vm1978, %v1937
        %4131 = vst.msk [vmem:[%s4103 + $0x2100] sm:$0x3] %vm1985, %v1937
        %4132 = vst.msk [vmem:[%s4103 + $0x2bc0] sm:$0xff] %vm1978, %v1941
        %4133 = vst.msk [vmem:[%s4103 + $0x2bc8] sm:$0xff] %vm1978, %v1941
        %4134 = vst.msk [vmem:[%s4103 + $0x2bd0] sm:$0xff] %vm1978, %v1941
        %4135 = vst.msk [vmem:[%s4103 + $0x2bd8] sm:$0xff] %vm1978, %v1941
        %4136 = vst.msk [vmem:[%s4103 + $0x2be0] sm:$0xff] %vm1978, %v1941
        %4137 = vst.msk [vmem:[%s4103 + $0x2be8] sm:$0xff] %vm1978, %v1941
        %4138 = vst.msk [vmem:[%s4103 + $0x2bf0] sm:$0x3] %vm1985, %v1941
        %s4139 = scalar_lea.vmem %s1885, 2744 [#allocation3]
        %4140 = vst.msk [vmem:[%s4139] sm:$0xff] %vm1978, %v1925
        %4141 = vst.msk [vmem:[%s4139 + $0x8] sm:$0xff] %vm1978, %v1925
        %4142 = vst.msk [vmem:[%s4139 + $0x10] sm:$0xff] %vm1978, %v1925
        %4143 = vst.msk [vmem:[%s4139 + $0x18] sm:$0xff] %vm1978, %v1925
        %4144 = vst.msk [vmem:[%s4139 + $0x20] sm:$0xff] %vm1978, %v1925
        %4145 = vst.msk [vmem:[%s4139 + $0x28] sm:$0xff] %vm1978, %v1925
        %4146 = vst.msk [vmem:[%s4139 + $0x30] sm:$0x3] %vm1985, %v1925
        %4147 = vst.msk [vmem:[%s4139 + $0xaf0] sm:$0xff] %vm1978, %v1929
        %4148 = vst.msk [vmem:[%s4139 + $0xaf8] sm:$0xff] %vm1978, %v1929
        %4149 = vst.msk [vmem:[%s4139 + $0xb00] sm:$0xff] %vm1978, %v1929
        %4150 = vst.msk [vmem:[%s4139 + $0xb08] sm:$0xff] %vm1978, %v1929
        %4151 = vst.msk [vmem:[%s4139 + $0xb10] sm:$0xff] %vm1978, %v1929
        %4152 = vst.msk [vmem:[%s4139 + $0xb18] sm:$0xff] %vm1978, %v1929
        %4153 = vst.msk [vmem:[%s4139 + $0xb20] sm:$0x3] %vm1985, %v1929
        %4154 = vst.msk [vmem:[%s4139 + $0x15e0] sm:$0xff] %vm1978, %v1933
        %4155 = vst.msk [vmem:[%s4139 + $0x15e8] sm:$0xff] %vm1978, %v1933
        %4156 = vst.msk [vmem:[%s4139 + $0x15f0] sm:$0xff] %vm1978, %v1933
        %4157 = vst.msk [vmem:[%s4139 + $0x15f8] sm:$0xff] %vm1978, %v1933
        %4158 = vst.msk [vmem:[%s4139 + $0x1600] sm:$0xff] %vm1978, %v1933
        %4159 = vst.msk [vmem:[%s4139 + $0x1608] sm:$0xff] %vm1978, %v1933
        %4160 = vst.msk [vmem:[%s4139 + $0x1610] sm:$0x3] %vm1985, %v1933
        %4161 = vst.msk [vmem:[%s4139 + $0x20d0] sm:$0xff] %vm1978, %v1937
        %4162 = vst.msk [vmem:[%s4139 + $0x20d8] sm:$0xff] %vm1978, %v1937
        %4163 = vst.msk [vmem:[%s4139 + $0x20e0] sm:$0xff] %vm1978, %v1937
        %4164 = vst.msk [vmem:[%s4139 + $0x20e8] sm:$0xff] %vm1978, %v1937
        %4165 = vst.msk [vmem:[%s4139 + $0x20f0] sm:$0xff] %vm1978, %v1937
        %4166 = vst.msk [vmem:[%s4139 + $0x20f8] sm:$0xff] %vm1978, %v1937
        %4167 = vst.msk [vmem:[%s4139 + $0x2100] sm:$0x3] %vm1985, %v1937
        %4168 = vst.msk [vmem:[%s4139 + $0x2bc0] sm:$0xff] %vm1978, %v1941
        %4169 = vst.msk [vmem:[%s4139 + $0x2bc8] sm:$0xff] %vm1978, %v1941
        %4170 = vst.msk [vmem:[%s4139 + $0x2bd0] sm:$0xff] %vm1978, %v1941
        %4171 = vst.msk [vmem:[%s4139 + $0x2bd8] sm:$0xff] %vm1978, %v1941
        %4172 = vst.msk [vmem:[%s4139 + $0x2be0] sm:$0xff] %vm1978, %v1941
        %4173 = vst.msk [vmem:[%s4139 + $0x2be8] sm:$0xff] %vm1978, %v1941
        %4174 = vst.msk [vmem:[%s4139 + $0x2bf0] sm:$0x3] %vm1985, %v1941
        %s4175 = sand.u32 %s92, 1
        %s4176 = scalar_lea.sflag [#allocation4], %s4175
        %s4177 = sand.u32 %s92, 1
        %s4178 = smul.addr %s4177, 14000
        %s4179 = scalar_lea.vmem [#allocation3], %s4178
        // Predicated region
        $region67: #{conv_transpose3d_tanh.3} parent=61 // pred_check
          %p4180 = pneg %p102
        $region68: #{conv_transpose3d_tanh.3} parent=61 // pred_check_branch
          %4182 = sbr.rel (%p4180) target = $region70
        $region69: #{conv_transpose3d_tanh.3} parent=61 // pred_region
          %s4183 = smul.u32 5, %s21
          %s4185 = ssub.s32 224000, 224000
          %4186 = vsyncadd %s4176, %s4185
          %s4187 = smul.addr %s4183, 350
          %s4188 = smul.addr %s20, 17500
          %s4189 = sadd.s32 %s4187, %s4188
          %s4190 = smul.addr %s4189, 128
          %s4191 = scalar_lea.hbm %s2, %s4190
          %s4192 = sshll.u32 %s4179, 4
          %s4193 = int_to_ptr.vmem [resolvable:$true] %s4192
          %4198 = dma.vmem_to_hbm [thread:$0]  %s4193, 224000, %s4191, %s4176, 128, 128, 8
        $region70: #{conv_transpose3d_tanh.3} parent=61 // pred_fallthru
          _
      $region62: #{conv_transpose3d_tanh.3} parent=5 // pred_fallthru
        _
      %p4199 = scmp.le.s32.totalorder 2, %s11
      // Predicated region
      $region71: #{conv_transpose3d_tanh.3} parent=5 // pred_check
        %p4200 = pneg %p4199
      $region72: #{conv_transpose3d_tanh.3} parent=5 // pred_check_branch
        %4202 = sbr.rel (%p4200) target = $region74
      $region73: #{conv_transpose3d_tanh.3} parent=5 // pred_region
        %s4203 = ssub.s32 %s11, 2
        // Predicated region
        $region75: #{conv_transpose3d_tanh.3} parent=73 // pred_check
          %p4204 = pneg %p108
        $region76: #{conv_transpose3d_tanh.3} parent=73 // pred_check_branch
          %4206 = sbr.rel (%p4204) target = $region78
        $region77: #{conv_transpose3d_tanh.3} parent=73 // pred_region
          %s4207 = sand.u32 %s93, 1
          %s4208 = scalar_lea.sflag [#allocation4], %s4207
          %s4209 = sand.u32 %s93, 1
          %s4210 = smul.addr %s4209, 14000
          %s4211 = scalar_lea.vmem [#allocation3], %s4210
          %4212 = dma.done %s4208, 224000
        $region78: #{conv_transpose3d_tanh.3} parent=73 // pred_fallthru
          _
      $region74: #{conv_transpose3d_tanh.3} parent=5 // pred_fallthru
        _
    $region6: #{conv_transpose3d_tanh.3} parent=1 // loop_footer
      %s15 = sadd.s32 1, %s11
    $region7: #{conv_transpose3d_tanh.3} parent=1 // loop_footer_branch
      %10 = sbr.rel target = $region3
    $region8: #{conv_transpose3d_tanh.3} parent=1 // loop_exit
      _
    %4213 = vsyncpa [#allocation4], 1
    %s4214 = scalar_lea.sflag [#allocation4], 1
    %4215 = vsyncpa %s4214, 1

</llo_original>
